<compile_context>
chip_gen: v5e
topology: v5e:2x2
jax: 0.10.0
libtpu: 0.0.40
codegen_flags: <defaults>
</compile_context>

<pallas_src>
import math
from functools import partial

import jax
import jax.numpy as jnp
from jax.experimental import pallas as pl
from jax.experimental.pallas import tpu as pltpu

# ----- small config (structurally identical to BaseBackbone) -----------------
B = 2
IN_CHANS = 3
PATCH = 4          # stands in for patch_size = 16
STRIDE = 2         # stands in for stride_size = 8 (overlapping patch embed)
X_P = 4            # x_patch_number_hw  (16 in the real model)
Z_P = 2            # z_patch_number_hw  ( 8 in the real model)
EMBED_DIM = 128    # embed_dim          (384 in the real model)
NUM_HEADS = 4
HEAD_DIM = EMBED_DIM // NUM_HEADS
MLP_HIDDEN = 4 * EMBED_DIM
DEPTH = 2
LN_EPS = 1e-6

X_IMG = STRIDE * (2 * X_P - 2) + PATCH   # 16 -> (2*X_P-1)^2 = 49 patches
Z_IMG = STRIDE * (2 * Z_P - 2) + PATCH   #  8 -> (2*Z_P-1)^2 =  9 patches

SEQ_LEN = X_P ** 2 + (X_P - 1) ** 2 + 2 * Z_P ** 2 + 2 * (Z_P - 1) ** 2   # 35
SEQ_PAD = ((SEQ_LEN + 7) // 8) * 8                                        # 40


# =====================  Pallas kernels  ======================================

def _matmul_bias_kernel(x_ref, w_ref, b_ref, o_ref):
    acc = jnp.dot(x_ref[...], w_ref[...], preferred_element_type=jnp.float32)
    o_ref[...] = (acc + b_ref[...]).astype(o_ref.dtype)


def matmul_bias(x, w, b, out_dtype=jnp.float32):
    """y = x @ w + b   (x:[M,K] bf16, w:[K,N] bf16, b:[N] f32) -> f32."""
    M = x.shape[0]
    N = w.shape[1]
    # TODO(synk): at production sizes (M ~ B*725, K = 768) add an M-dim grid
    # with 8-aligned row tiles and set vmem_limit_bytes explicitly.
    return pl.pallas_call(
        _matmul_bias_kernel,
        out_shape=jax.ShapeDtypeStruct((M, N), out_dtype),
        in_specs=[pl.BlockSpec(memory_space=pltpu.MemorySpace.VMEM)] * 3,
        out_specs=pl.BlockSpec(memory_space=pltpu.MemorySpace.VMEM),
    )(x, w, b.reshape(1, N))


def _ln(x, g, b, eps):
    mu = jnp.mean(x, axis=-1, keepdims=True)
    var = jnp.mean(jnp.square(x - mu), axis=-1, keepdims=True)
    return (x - mu) * jax.lax.rsqrt(var + eps) * g + b


def _block_kernel(*refs, num_heads, head_dim, n_valid, scale, eps,
                  with_pos, with_final_norm):
    """Fused pre-LN ViT block for one batch element ([Lp, C] tile in VMEM)."""
    it = iter(refs)
    x_ref = next(it)
    pos_ref = next(it) if with_pos else None
    ln1g, ln1b = next(it), next(it)
    wqkv, bqkv = next(it), next(it)
    wproj, bproj = next(it), next(it)
    ln2g, ln2b = next(it), next(it)
    w1, b1 = next(it), next(it)
    w2, b2 = next(it), next(it)
    ng, nb = (next(it), next(it)) if with_final_norm else (None, None)
    o_ref = next(it)

    x = x_ref[0].astype(jnp.float32)                       # [Lp, C]
    if with_pos:
        x = x + pos_ref[0].astype(jnp.float32)             # folded pos-embed add

    Lp, C = x.shape

    # ---- multi-head self-attention (pre-LN) ---------------------------------
    h = _ln(x, ln1g[...], ln1b[...], eps)
    qkv = jnp.dot(h.astype(jnp.bfloat16), wqkv[...],
                  preferred_element_type=jnp.float32) + bqkv[...]     # [Lp, 3C]

    q = (qkv[:, :C] * scale).astype(jnp.bfloat16)          # scale folded into q
    k = qkv[:, C:2 * C].astype(jnp.bfloat16)
    v = qkv[:, 2 * C:].astype(jnp.bfloat16)

    # mask out the padded key positions (tokens >= n_valid)
    col = jax.lax.broadcasted_iota(jnp.int32, (1, Lp), 1)
    key_bias = jnp.where(col < n_valid, jnp.float32(0.0), jnp.float32(-1e30))

    attn_acc = jnp.zeros((Lp, C), jnp.float32)
    for hd in range(num_heads):                            # heads looped in-kernel
        lo, hi = hd * head_dim, (hd + 1) * head_dim
        qh, kh, vh = q[:, lo:hi], k[:, lo:hi], v[:, lo:hi]
        s = jax.lax.dot_general(qh, kh, (((1,), (1,)), ((), ())),
                                preferred_element_type=jnp.float32)   # q @ k.T
        s = s + key_bias
        s = s - jnp.max(s, axis=-1, keepdims=True)
        p = jnp.exp(s)
        p = p * pl.reciprocal(jnp.sum(p, axis=-1, keepdims=True), approx=True)
        oh = jnp.dot(p.astype(jnp.bfloat16), vh,
                     preferred_element_type=jnp.float32)              # [Lp, Dh]
        # concat(heads) @ w_proj  ==  sum_h  o_h @ w_proj[rows of head h]
        attn_acc = attn_acc + jnp.dot(oh.astype(jnp.bfloat16), wproj[lo:hi, :],
                                      preferred_element_type=jnp.float32)
    x = x + attn_acc + bproj[...]                          # residual folded in

    # ---- MLP (pre-LN) --------------------------------------------------------
    h2 = _ln(x, ln2g[...], ln2b[...], eps)
    hh = jnp.dot(h2.astype(jnp.bfloat16), w1[...],
                 preferred_element_type=jnp.float32) + b1[...]
    # exact GELU (matches torch.nn.GELU default, erf-based); f32 accumulation
    hh = 0.5 * hh * (1.0 + jax.lax.erf(hh * (1.0 / math.sqrt(2.0))))
    m = jnp.dot(hh.astype(jnp.bfloat16), w2[...],
                preferred_element_type=jnp.float32) + b2[...]
    x = x + m                                              # residual folded in

    if with_final_norm:                                    # self.norm folded in
        x = _ln(x, ng[...], nb[...], eps)

    o_ref[0] = x.astype(o_ref.dtype)


def fused_block(x, blk, *, pos=None, final_norm=None, n_valid=SEQ_LEN):
    """One pallas_call per transformer block; grid over batch (parallel)."""
    Bn, Lp, C = x.shape
    H = blk['w1'].shape[1]
    bf = lambda w: w.astype(jnp.bfloat16)

    inputs = [x]
    in_specs = [pl.BlockSpec((1, Lp, C), lambda b: (b, 0, 0))]
    if pos is not None:
        inputs.append(pos)
        in_specs.append(pl.BlockSpec((1, Lp, C), lambda b: (0, 0, 0)))

    def add2d(a):
        inputs.append(a)
        in_specs.append(pl.BlockSpec(a.shape, lambda b: (0, 0)))

    add2d(blk['ln1_g'].reshape(1, C)); add2d(blk['ln1_b'].reshape(1, C))
    add2d(bf(blk['w_qkv']));           add2d(blk['b_qkv'].reshape(1, 3 * C))
    add2d(bf(blk['w_proj']));          add2d(blk['b_proj'].reshape(1, C))
    add2d(blk['ln2_g'].reshape(1, C)); add2d(blk['ln2_b'].reshape(1, C))
    add2d(bf(blk['w1']));              add2d(blk['b1'].reshape(1, H))
    add2d(bf(blk['w2']));              add2d(blk['b2'].reshape(1, C))
    if final_norm is not None:
        g, b = final_norm
        add2d(g.reshape(1, C)); add2d(b.reshape(1, C))

    kernel = partial(_block_kernel,
                     num_heads=NUM_HEADS, head_dim=HEAD_DIM,
                     n_valid=n_valid, scale=HEAD_DIM ** -0.5, eps=LN_EPS,
                     with_pos=pos is not None,
                     with_final_norm=final_norm is not None)

    # TODO(synk): for the real model (C=384, L~725, depth 12) add a token-tile
    # grid axis and an explicit vmem_limit_bytes (critical on v7x's 64 MiB VMEM).
    return pl.pallas_call(
        kernel,
        out_shape=jax.ShapeDtypeStruct((Bn, Lp, C), x.dtype),
        grid=(Bn,),
        in_specs=in_specs,
        out_specs=pl.BlockSpec((1, Lp, C), lambda b: (b, 0, 0)),
        compiler_params=pltpu.CompilerParams(
            dimension_semantics=("parallel",)),
    )(*inputs)


# =====================  model pieces (glue in JAX, compute in Pallas)  =======

def _im2col(img, K, S):
    """[B, Cin, H, W] -> ([B*Ho*Wo, Cin*K*K], Ho*Wo)."""
    Bn, Cin, Hh, Ww = img.shape
    Ho = (Hh - K) // S + 1
    Wo = (Ww - K) // S + 1
    ii = (jnp.arange(Ho) * S)[:, None] + jnp.arange(K)[None, :]     # [Ho, K]
    jj = (jnp.arange(Wo) * S)[:, None] + jnp.arange(K)[None, :]     # [Wo, K]
    p = img[:, :, ii, :]                                            # [B,Cin,Ho,K,W]
    p = p[:, :, :, :, jj]                                           # [B,Cin,Ho,K,Wo,K]
    p = p.transpose(0, 2, 4, 1, 3, 5).reshape(Bn * Ho * Wo, Cin * K * K)
    return p, Ho * Wo
    # TODO(synk): at production sizes replace this XLA im2col (large HBM
    # intermediate) with lax.conv_general_dilated or an in-kernel DMA gather.


def forward_features(params, z_pair, x, identity=None):
    """Mirrors BaseBackbone.forward_features; `identity` is unused (as in the source)."""
    z0, z1 = z_pair
    Bn = x.shape[0]
    C = EMBED_DIM
    x_all = 2 * X_P - 1
    z_all = 2 * Z_P - 1

    # --- shared patch embed: one conv-as-matmul for x, z0, z1 ----------------
    px, nx = _im2col(x, PATCH, STRIDE)
    pz0, nz = _im2col(z0, PATCH, STRIDE)
    pz1, _ = _im2col(z1, PATCH, STRIDE)
    patches = jnp.concatenate([px, pz0, pz1], axis=0).astype(jnp.bfloat16)
    w_pe = params['pe_w'].reshape(C, -1).T.astype(jnp.bfloat16)      # [Cin*K*K, C]
    emb = matmul_bias(patches, w_pe, params['pe_b'])                 # [B*(nx+2nz), C]

    x_t = emb[:Bn * nx].reshape(Bn, x_all, x_all, C)
    z_t = emb[Bn * nx:Bn * (nx + nz)].reshape(Bn, z_all, z_all, C)
    z1_t = emb[Bn * (nx + nz):].reshape(Bn, z_all, z_all, C)

    x_next = x_t[:, 1::2, 1::2, :].reshape(Bn, (X_P - 1) ** 2, C)
    z_next = z_t[:, 1::2, 1::2, :].reshape(Bn, (Z_P - 1) ** 2, C)
    z1_next = z1_t[:, 1::2, 1::2, :].reshape(Bn, (Z_P - 1) ** 2, C)
    x_e = x_t[:, 0::2, 0::2, :].reshape(Bn, X_P ** 2, C)
    z_e = z_t[:, 0::2, 0::2, :].reshape(Bn, Z_P ** 2, C)
    z1_e = z1_t[:, 0::2, 0::2, :].reshape(Bn, Z_P ** 2, C)

    # per-segment "+= pos_embed_*" followed by concat == concat then one add;
    # the add itself is folded into the first fused block kernel.
    tokens = jnp.concatenate([x_e, x_next, z_e, z1_e, z_next, z1_next], axis=1)
    pos = jnp.concatenate([params['pos_x'], params['pos_x_next'],
                           params['pos_z'], params['pos_z_1'],
                           params['pos_z_next'], params['pos_z_next_1']], axis=1)

    L = tokens.shape[1]
    pad = SEQ_PAD - L                       # pad L=35 -> 40 (8-aligned sublanes)
    tokens = jnp.pad(tokens, ((0, 0), (0, pad), (0, 0)))
    pos = jnp.pad(pos, ((0, 0), (0, pad), (0, 0)))

    # self.pos_drop: dropout -> identity at inference
    n_blocks = len(params['blocks'])
    for i, blk in enumerate(params['blocks']):
        tokens = fused_block(
            tokens, blk,
            pos=pos if i == 0 else None,
            final_norm=((params['norm_g'], params['norm_b'])
                        if i == n_blocks - 1 else None),
            n_valid=L)
    return tokens[:, :L, :]


# TODO(synk): finetune_track (bicubic pos-embed interpolation) is setup-only and
# not part of the forward pass; pos_embed_{x,z,...} are initialized directly.


# =====================  deterministic parameter init  ========================

def init_params(key):
    C = EMBED_DIM
    keys = iter(jax.random.split(key, 64))

    def nrm(shape, std=0.02):
        return std * jax.random.normal(next(keys), shape, jnp.float32)

    params = dict(
        pe_w=nrm((C, IN_CHANS, PATCH, PATCH)),
        pe_b=jnp.zeros((C,), jnp.float32),
        pos_x=nrm((1, X_P ** 2, C)),
        pos_x_next=nrm((1, (X_P - 1) ** 2, C)),
        pos_z=nrm((1, Z_P ** 2, C)),
        pos_z_1=nrm((1, Z_P ** 2, C)),
        pos_z_next=nrm((1, (Z_P - 1) ** 2, C)),
        pos_z_next_1=nrm((1, (Z_P - 1) ** 2, C)),
        norm_g=jnp.ones((C,), jnp.float32),
        norm_b=jnp.zeros((C,), jnp.float32),
        blocks=[],
    )
    for _ in range(DEPTH):
        params['blocks'].append(dict(
            ln1_g=jnp.ones((C,), jnp.float32), ln1_b=jnp.zeros((C,), jnp.float32),
            w_qkv=nrm((C, 3 * C)), b_qkv=jnp.zeros((3 * C,), jnp.float32),
            w_proj=nrm((C, C)), b_proj=jnp.zeros((C,), jnp.float32),
            ln2_g=jnp.ones((C,), jnp.float32), ln2_b=jnp.zeros((C,), jnp.float32),
            w1=nrm((C, MLP_HIDDEN)), b1=jnp.zeros((MLP_HIDDEN,), jnp.float32),
            w2=nrm((MLP_HIDDEN, C)), b2=jnp.zeros((C,), jnp.float32),
        ))
    return params


# =====================  main  ================================================

if __name__ == "__main__":
    key = jax.random.PRNGKey(0)
    k1, k2, k3, kp = jax.random.split(key, 4)
    z0 = jax.random.normal(k1, (B, IN_CHANS, Z_IMG, Z_IMG), jnp.float32)
    z1 = jax.random.normal(k2, (B, IN_CHANS, Z_IMG, Z_IMG), jnp.float32)
    xs = jax.random.normal(k3, (B, IN_CHANS, X_IMG, X_IMG), jnp.float32)
    params = init_params(kp)

    fwd = jax.jit(lambda a, b_, c: forward_features(params, (a, b_), c, identity=None))
    out = fwd(z0, z1, xs)
    out = jax.block_until_ready(out)

    L_expected = X_P ** 2 + (X_P - 1) ** 2 + 2 * Z_P ** 2 + 2 * (Z_P - 1) ** 2  # 35
    assert out.shape == (B, L_expected, EMBED_DIM), out.shape
    assert bool(jnp.all(jnp.isfinite(out)))
    print("KERNEL_OK")
</pallas_src>

<mosaic_0001>
module attributes {stable_mosaic.version = 11 : i64} {
  func.func @_matmul_bias_kernel(%arg0: memref<134x48xbf16, #tpu.memory_space<vmem>>, %arg1: memref<48x128xbf16, #tpu.memory_space<vmem>>, %arg2: memref<1x128xf32, #tpu.memory_space<vmem>>, %arg3: memref<134x128xf32, #tpu.memory_space<vmem>>) attributes {dimension_semantics = [], scalar_prefetch = 0 : i64, scratch_operands = 0 : i64, tpu.core_type = #tpu.core_type<tc>} {
    %c0 = arith.constant 0 : index
    %c0_0 = arith.constant 0 : index
    %0 = vector.load %arg0[%c0, %c0_0] : memref<134x48xbf16, #tpu.memory_space<vmem>>, vector<134x48xbf16>
    %c0_1 = arith.constant 0 : index
    %c0_2 = arith.constant 0 : index
    %1 = vector.load %arg1[%c0_1, %c0_2] : memref<48x128xbf16, #tpu.memory_space<vmem>>, vector<48x128xbf16>
    %cst = arith.constant dense<0.000000e+00> : vector<134x128xf32>
    %2 = tpu.matmul %0, %1, %cst {dimension_numbers = #tpu.dot_dimension_numbers<[1], [0], [0], [1], [0, 0, 1, 1], [], []>} : vector<134x48xbf16>, vector<48x128xbf16>, vector<134x128xf32> -> vector<134x128xf32>
    %c0_3 = arith.constant 0 : index
    %c0_4 = arith.constant 0 : index
    %3 = vector.load %arg2[%c0_3, %c0_4] : memref<1x128xf32, #tpu.memory_space<vmem>>, vector<1x128xf32>
    %4 = vector.broadcast %3 : vector<1x128xf32> to vector<134x128xf32>
    %5 = arith.addf %2, %4 : vector<134x128xf32>
    %c0_5 = arith.constant 0 : index
    %c0_6 = arith.constant 0 : index
    %6 = vector.load %arg3[%c0_5, %c0_6] : memref<134x128xf32, #tpu.memory_space<vmem>>, vector<134x128xf32>
    tpu.vector_store %arg3[%c0_5, %c0_6], %5 {strides = array<i32>} : memref<134x128xf32, #tpu.memory_space<vmem>>, vector<134x128xf32>,
    return
  }
}

module attributes {stable_mosaic.version = 11 : i64} {
  func.func @_block_kernel(%arg0: i32, %arg1: memref<1x40x128xf32, #tpu.memory_space<vmem>>, %arg2: memref<1x40x128xf32, #tpu.memory_space<vmem>>, %arg3: memref<1x128xf32, #tpu.memory_space<vmem>>, %arg4: memref<1x128xf32, #tpu.memory_space<vmem>>, %arg5: memref<128x384xbf16, #tpu.memory_space<vmem>>, %arg6: memref<1x384xf32, #tpu.memory_space<vmem>>, %arg7: memref<128x128xbf16, #tpu.memory_space<vmem>>, %arg8: memref<1x128xf32, #tpu.memory_space<vmem>>, %arg9: memref<1x128xf32, #tpu.memory_space<vmem>>, %arg10: memref<1x128xf32, #tpu.memory_space<vmem>>, %arg11: memref<128x512xbf16, #tpu.memory_space<vmem>>, %arg12: memref<1x512xf32, #tpu.memory_space<vmem>>, %arg13: memref<512x128xbf16, #tpu.memory_space<vmem>>, %arg14: memref<1x128xf32, #tpu.memory_space<vmem>>, %arg15: memref<1x40x128xf32, #tpu.memory_space<vmem>>) attributes {dimension_semantics = [#tpu.dimension_semantics<parallel>], iteration_bounds = array<i64: 2>, scalar_prefetch = 0 : i64, scratch_operands = 0 : i64, tpu.core_type = #tpu.core_type<tc>, window_params = [{transform_indices = @transform_0, window_bounds = array<i64: 1, 40, 128>}, {pipeline_mode = #tpu.pipeline_mode<synchronous>, transform_indices = @transform_1, window_bounds = array<i64: 1, 40, 128>}, {pipeline_mode = #tpu.pipeline_mode<synchronous>, transform_indices = @transform_2, window_bounds = array<i64: 1, 128>}, {pipeline_mode = #tpu.pipeline_mode<synchronous>, transform_indices = @transform_3, window_bounds = array<i64: 1, 128>}, {pipeline_mode = #tpu.pipeline_mode<synchronous>, transform_indices = @transform_4, window_bounds = array<i64: 128, 384>}, {pipeline_mode = #tpu.pipeline_mode<synchronous>, transform_indices = @transform_5, window_bounds = array<i64: 1, 384>}, {pipeline_mode = #tpu.pipeline_mode<synchronous>, transform_indices = @transform_6, window_bounds = array<i64: 128, 128>}, {pipeline_mode = #tpu.pipeline_mode<synchronous>, transform_indices = @transform_7, window_bounds = array<i64: 1, 128>}, {pipeline_mode = #tpu.pipeline_mode<synchronous>, transform_indices = @transform_8, window_bounds = array<i64: 1, 128>}, {pipeline_mode = #tpu.pipeline_mode<synchronous>, transform_indices = @transform_9, window_bounds = array<i64: 1, 128>}, {pipeline_mode = #tpu.pipeline_mode<synchronous>, transform_indices = @transform_10, window_bounds = array<i64: 128, 512>}, {pipeline_mode = #tpu.pipeline_mode<synchronous>, transform_indices = @transform_11, window_bounds = array<i64: 1, 512>}, {pipeline_mode = #tpu.pipeline_mode<synchronous>, transform_indices = @transform_12, window_bounds = array<i64: 512, 128>}, {pipeline_mode = #tpu.pipeline_mode<synchronous>, transform_indices = @transform_13, window_bounds = array<i64: 1, 128>}, {transform_indices = @transform_14, window_bounds = array<i64: 1, 40, 128>}]} {
    %c0 = arith.constant 0 : index
    %c0_0 = arith.constant 0 : index
    %c0_1 = arith.constant 0 : index
    %0 = vector.load %arg1[%c0, %c0_0, %c0_1] : memref<1x40x128xf32, #tpu.memory_space<vmem>>, vector<1x40x128xf32>
    %1 = vector.shape_cast %0 : vector<1x40x128xf32> to vector<40x128xf32>
    %c0_2 = arith.constant 0 : index
    %c0_3 = arith.constant 0 : index
    %c0_4 = arith.constant 0 : index
    %2 = vector.load %arg2[%c0_2, %c0_3, %c0_4] : memref<1x40x128xf32, #tpu.memory_space<vmem>>, vector<1x40x128xf32>
    %3 = vector.shape_cast %2 : vector<1x40x128xf32> to vector<40x128xf32>
    %4 = arith.addf %1, %3 : vector<40x128xf32>
    %c0_5 = arith.constant 0 : index
    %c0_6 = arith.constant 0 : index
    %5 = vector.load %arg3[%c0_5, %c0_6] : memref<1x128xf32, #tpu.memory_space<vmem>>, vector<1x128xf32>
    %c0_7 = arith.constant 0 : index
    %c0_8 = arith.constant 0 : index
    %6 = vector.load %arg4[%c0_7, %c0_8] : memref<1x128xf32, #tpu.memory_space<vmem>>, vector<1x128xf32>
    %cst = arith.constant dense<0.000000e+00> : vector<40xf32>
    %7 = vector.multi_reduction <add>, %4, %cst [1] : vector<40x128xf32> to vector<40xf32>
    %8 = vector.shape_cast %7 : vector<40xf32> to vector<40x1xf32>
    %cst_9 = arith.constant 1.280000e+02 : f32
    %9 = vector.broadcast %cst_9 : f32 to vector<40x1xf32>
    %10 = arith.divf %8, %9 : vector<40x1xf32>
    %11 = vector.broadcast %10 : vector<40x1xf32> to vector<40x128xf32>
    %12 = arith.subf %4, %11 : vector<40x128xf32>
    %13 = arith.mulf %12, %12 : vector<40x128xf32>
    %cst_10 = arith.constant dense<0.000000e+00> : vector<40xf32>
    %14 = vector.multi_reduction <add>, %13, %cst_10 [1] : vector<40x128xf32> to vector<40xf32>
    %15 = vector.shape_cast %14 : vector<40xf32> to vector<40x1xf32>
    %cst_11 = arith.constant 1.280000e+02 : f32
    %16 = vector.broadcast %cst_11 : f32 to vector<40x1xf32>
    %17 = arith.divf %15, %16 : vector<40x1xf32>
    %18 = vector.broadcast %10 : vector<40x1xf32> to vector<40x128xf32>
    %19 = arith.subf %4, %18 : vector<40x128xf32>
    %cst_12 = arith.constant 9.99999997E-7 : f32
    %20 = vector.broadcast %cst_12 : f32 to vector<40x1xf32>
    %21 = arith.addf %17, %20 : vector<40x1xf32>
    %22 = math.rsqrt %21 : vector<40x1xf32>
    %23 = vector.broadcast %22 : vector<40x1xf32> to vector<40x128xf32>
    %24 = arith.mulf %19, %23 : vector<40x128xf32>
    %25 = vector.broadcast %5 : vector<1x128xf32> to vector<40x128xf32>
    %26 = arith.mulf %24, %25 : vector<40x128xf32>
    %27 = vector.broadcast %6 : vector<1x128xf32> to vector<40x128xf32>
    %28 = arith.addf %26, %27 : vector<40x128xf32>
    %29 = arith.truncf %28 : vector<40x128xf32> to vector<40x128xbf16>
    %c0_13 = arith.constant 0 : index
    %c0_14 = arith.constant 0 : index
    %30 = vector.load %arg5[%c0_13, %c0_14] : memref<128x384xbf16, #tpu.memory_space<vmem>>, vector<128x384xbf16>
    %cst_15 = arith.constant dense<0.000000e+00> : vector<40x384xf32>
    %31 = tpu.matmul %29, %30, %cst_15 {dimension_numbers = #tpu.dot_dimension_numbers<[1], [0], [0], [1], [0, 0, 1, 1], [], []>} : vector<40x128xbf16>, vector<128x384xbf16>, vector<40x384xf32> -> vector<40x384xf32>
    %c0_16 = arith.constant 0 : index
    %c0_17 = arith.constant 0 : index
    %32 = vector.load %arg6[%c0_16, %c0_17] : memref<1x384xf32, #tpu.memory_space<vmem>>, vector<1x384xf32>
    %33 = vector.broadcast %32 : vector<1x384xf32> to vector<40x384xf32>
    %34 = arith.addf %31, %33 : vector<40x384xf32>
    %35 = vector.extract_strided_slice %34 {offsets = [0, 0], sizes = [40, 128], strides = [1, 1]} : vector<40x384xf32> to vector<40x128xf32>
    %cst_18 = arith.constant 0.176776692 : f32
    %36 = vector.broadcast %cst_18 : f32 to vector<40x128xf32>
    %37 = arith.mulf %35, %36 : vector<40x128xf32>
    %38 = arith.truncf %37 : vector<40x128xf32> to vector<40x128xbf16>
    %39 = vector.extract_strided_slice %34 {offsets = [0, 128], sizes = [40, 128], strides = [1, 1]} : vector<40x384xf32> to vector<40x128xf32>
    %40 = arith.truncf %39 : vector<40x128xf32> to vector<40x128xbf16>
    %41 = vector.extract_strided_slice %34 {offsets = [0, 256], sizes = [40, 128], strides = [1, 1]} : vector<40x384xf32> to vector<40x128xf32>
    %42 = arith.truncf %41 : vector<40x128xf32> to vector<40x128xbf16>
    %43 = tpu.iota {dimensions = array<i32: 1>} : vector<1x40xi32>
    %c35_i32 = arith.constant 35 : i32
    %44 = vector.broadcast %c35_i32 : i32 to vector<1x40xi32>
    %45 = arith.cmpi slt, %43, %44 : vector<1x40xi32>
    %cst_19 = arith.constant 0.000000e+00 : f32
    %cst_20 = arith.constant -1.000000e+30 : f32
    %46 = vector.broadcast %cst_19 : f32 to vector<1x40xf32>
    %47 = vector.broadcast %cst_20 : f32 to vector<1x40xf32>
    %48 = arith.select %45, %46, %47 : vector<1x40xi1>, vector<1x40xf32>
    %cst_21 = arith.constant 0.000000e+00 : f32
    %49 = vector.broadcast %cst_21 : f32 to vector<40x128xf32>
    %50 = vector.extract_strided_slice %38 {offsets = [0, 0], sizes = [40, 32], strides = [1, 1]} : vector<40x128xbf16> to vector<40x32xbf16>
    %51 = vector.extract_strided_slice %40 {offsets = [0, 0], sizes = [40, 32], strides = [1, 1]} : vector<40x128xbf16> to vector<40x32xbf16>
    %52 = vector.extract_strided_slice %42 {offsets = [0, 0], sizes = [40, 32], strides = [1, 1]} : vector<40x128xbf16> to vector<40x32xbf16>
    %cst_22 = arith.constant dense<0.000000e+00> : vector<40x40xf32>
    %53 = tpu.matmul %50, %51, %cst_22 {dimension_numbers = #tpu.dot_dimension_numbers<[1], [1], [0], [0], [0, 0, 1, 0], [], []>} : vector<40x32xbf16>, vector<40x32xbf16>, vector<40x40xf32> -> vector<40x40xf32>
    %54 = vector.broadcast %48 : vector<1x40xf32> to vector<40x40xf32>
    %55 = arith.addf %53, %54 : vector<40x40xf32>
    %cst_23 = arith.constant dense<0xFF800000> : vector<40xf32>
    %56 = vector.multi_reduction <maximumf>, %55, %cst_23 [1] : vector<40x40xf32> to vector<40xf32>
    %57 = vector.shape_cast %56 : vector<40xf32> to vector<40x1xf32>
    %58 = vector.broadcast %57 : vector<40x1xf32> to vector<40x40xf32>
    %59 = arith.subf %55, %58 : vector<40x40xf32>
    %60 = math.exp %59 : vector<40x40xf32>
    %cst_24 = arith.constant dense<0.000000e+00> : vector<40xf32>
    %61 = vector.multi_reduction <add>, %60, %cst_24 [1] : vector<40x40xf32> to vector<40xf32>
    %62 = vector.shape_cast %61 : vector<40xf32> to vector<40x1xf32>
    %63 = tpu.reciprocal %62 {approx = true} : vector<40x1xf32> -> vector<40x1xf32>
    %64 = vector.broadcast %63 : vector<40x1xf32> to vector<40x40xf32>
    %65 = arith.mulf %60, %64 : vector<40x40xf32>
    %66 = arith.truncf %65 : vector<40x40xf32> to vector<40x40xbf16>
    %cst_25 = arith.constant dense<0.000000e+00> : vector<40x32xf32>
    %67 = tpu.matmul %66, %52, %cst_25 {dimension_numbers = #tpu.dot_dimension_numbers<[1], [0], [0], [1], [0, 0, 1, 1], [], []>} : vector<40x40xbf16>, vector<40x32xbf16>, vector<40x32xf32> -> vector<40x32xf32>
    %68 = arith.truncf %67 : vector<40x32xf32> to vector<40x32xbf16>
    %c0_26 = arith.constant 0 : index
    %c0_27 = arith.constant 0 : index
    %69 = vector.load %arg7[%c0_26, %c0_27] : memref<128x128xbf16, #tpu.memory_space<vmem>>, vector<32x128xbf16>
    %cst_28 = arith.constant dense<0.000000e+00> : vector<40x128xf32>
    %70 = tpu.matmul %68, %69, %cst_28 {dimension_numbers = #tpu.dot_dimension_numbers<[1], [0], [0], [1], [0, 0, 1, 1], [], []>} : vector<40x32xbf16>, vector<32x128xbf16>, vector<40x128xf32> -> vector<40x128xf32>
    %71 = arith.addf %49, %70 : vector<40x128xf32>
    %72 = vector.extract_strided_slice %38 {offsets = [0, 32], sizes = [40, 32], strides = [1, 1]} : vector<40x128xbf16> to vector<40x32xbf16>
    %73 = vector.extract_strided_slice %40 {offsets = [0, 32], sizes = [40, 32], strides = [1, 1]} : vector<40x128xbf16> to vector<40x32xbf16>
    %74 = vector.extract_strided_slice %42 {offsets = [0, 32], sizes = [40, 32], strides = [1, 1]} : vector<40x128xbf16> to vector<40x32xbf16>
    %cst_29 = arith.constant dense<0.000000e+00> : vector<40x40xf32>
    %75 = tpu.matmul %72, %73, %cst_29 {dimension_numbers = #tpu.dot_dimension_numbers<[1], [1], [0], [0], [0, 0, 1, 0], [], []>} : vector<40x32xbf16>, vector<40x32xbf16>, vector<40x40xf32> -> vector<40x40xf32>
    %76 = vector.broadcast %48 : vector<1x40xf32> to vector<40x40xf32>
    %77 = arith.addf %75, %76 : vector<40x40xf32>
    %cst_30 = arith.constant dense<0xFF800000> : vector<40xf32>
    %78 = vector.multi_reduction <maximumf>, %77, %cst_30 [1] : vector<40x40xf32> to vector<40xf32>
    %79 = vector.shape_cast %78 : vector<40xf32> to vector<40x1xf32>
    %80 = vector.broadcast %79 : vector<40x1xf32> to vector<40x40xf32>
    %81 = arith.subf %77, %80 : vector<40x40xf32>
    %82 = math.exp %81 : vector<40x40xf32>
    %cst_31 = arith.constant dense<0.000000e+00> : vector<40xf32>
    %83 = vector.multi_reduction <add>, %82, %cst_31 [1] : vector<40x40xf32> to vector<40xf32>
    %84 = vector.shape_cast %83 : vector<40xf32> to vector<40x1xf32>
    %85 = tpu.reciprocal %84 {approx = true} : vector<40x1xf32> -> vector<40x1xf32>
    %86 = vector.broadcast %85 : vector<40x1xf32> to vector<40x40xf32>
    %87 = arith.mulf %82, %86 : vector<40x40xf32>
    %88 = arith.truncf %87 : vector<40x40xf32> to vector<40x40xbf16>
    %cst_32 = arith.constant dense<0.000000e+00> : vector<40x32xf32>
    %89 = tpu.matmul %88, %74, %cst_32 {dimension_numbers = #tpu.dot_dimension_numbers<[1], [0], [0], [1], [0, 0, 1, 1], [], []>} : vector<40x40xbf16>, vector<40x32xbf16>, vector<40x32xf32> -> vector<40x32xf32>
    %90 = arith.truncf %89 : vector<40x32xf32> to vector<40x32xbf16>
    %c32 = arith.constant 32 : index
    %c0_33 = arith.constant 0 : index
    %91 = vector.load %arg7[%c32, %c0_33] : memref<128x128xbf16, #tpu.memory_space<vmem>>, vector<32x128xbf16>
    %cst_34 = arith.constant dense<0.000000e+00> : vector<40x128xf32>
    %92 = tpu.matmul %90, %91, %cst_34 {dimension_numbers = #tpu.dot_dimension_numbers<[1], [0], [0], [1], [0, 0, 1, 1], [], []>} : vector<40x32xbf16>, vector<32x128xbf16>, vector<40x128xf32> -> vector<40x128xf32>
    %93 = arith.addf %71, %92 : vector<40x128xf32>
    %94 = vector.extract_strided_slice %38 {offsets = [0, 64], sizes = [40, 32], strides = [1, 1]} : vector<40x128xbf16> to vector<40x32xbf16>
    %95 = vector.extract_strided_slice %40 {offsets = [0, 64], sizes = [40, 32], strides = [1, 1]} : vector<40x128xbf16> to vector<40x32xbf16>
    %96 = vector.extract_strided_slice %42 {offsets = [0, 64], sizes = [40, 32], strides = [1, 1]} : vector<40x128xbf16> to vector<40x32xbf16>
    %cst_35 = arith.constant dense<0.000000e+00> : vector<40x40xf32>
    %97 = tpu.matmul %94, %95, %cst_35 {dimension_numbers = #tpu.dot_dimension_numbers<[1], [1], [0], [0], [0, 0, 1, 0], [], []>} : vector<40x32xbf16>, vector<40x32xbf16>, vector<40x40xf32> -> vector<40x40xf32>
    %98 = vector.broadcast %48 : vector<1x40xf32> to vector<40x40xf32>
    %99 = arith.addf %97, %98 : vector<40x40xf32>
    %cst_36 = arith.constant dense<0xFF800000> : vector<40xf32>
    %100 = vector.multi_reduction <maximumf>, %99, %cst_36 [1] : vector<40x40xf32> to vector<40xf32>
    %101 = vector.shape_cast %100 : vector<40xf32> to vector<40x1xf32>
    %102 = vector.broadcast %101 : vector<40x1xf32> to vector<40x40xf32>
    %103 = arith.subf %99, %102 : vector<40x40xf32>
    %104 = math.exp %103 : vector<40x40xf32>
    %cst_37 = arith.constant dense<0.000000e+00> : vector<40xf32>
    %105 = vector.multi_reduction <add>, %104, %cst_37 [1] : vector<40x40xf32> to vector<40xf32>
    %106 = vector.shape_cast %105 : vector<40xf32> to vector<40x1xf32>
    %107 = tpu.reciprocal %106 {approx = true} : vector<40x1xf32> -> vector<40x1xf32>
    %108 = vector.broadcast %107 : vector<40x1xf32> to vector<40x40xf32>
    %109 = arith.mulf %104, %108 : vector<40x40xf32>
    %110 = arith.truncf %109 : vector<40x40xf32> to vector<40x40xbf16>
    %cst_38 = arith.constant dense<0.000000e+00> : vector<40x32xf32>
    %111 = tpu.matmul %110, %96, %cst_38 {dimension_numbers = #tpu.dot_dimension_numbers<[1], [0], [0], [1], [0, 0, 1, 1], [], []>} : vector<40x40xbf16>, vector<40x32xbf16>, vector<40x32xf32> -> vector<40x32xf32>
    %112 = arith.truncf %111 : vector<40x32xf32> to vector<40x32xbf16>
    %c64 = arith.constant 64 : index
    %c0_39 = arith.constant 0 : index
    %113 = vector.load %arg7[%c64, %c0_39] : memref<128x128xbf16, #tpu.memory_space<vmem>>, vector<32x128xbf16>
    %cst_40 = arith.constant dense<0.000000e+00> : vector<40x128xf32>
    %114 = tpu.matmul %112, %113, %cst_40 {dimension_numbers = #tpu.dot_dimension_numbers<[1], [0], [0], [1], [0, 0, 1, 1], [], []>} : vector<40x32xbf16>, vector<32x128xbf16>, vector<40x128xf32> -> vector<40x128xf32>
    %115 = arith.addf %93, %114 : vector<40x128xf32>
    %116 = vector.extract_strided_slice %38 {offsets = [0, 96], sizes = [40, 32], strides = [1, 1]} : vector<40x128xbf16> to vector<40x32xbf16>
    %117 = vector.extract_strided_slice %40 {offsets = [0, 96], sizes = [40, 32], strides = [1, 1]} : vector<40x128xbf16> to vector<40x32xbf16>
    %118 = vector.extract_strided_slice %42 {offsets = [0, 96], sizes = [40, 32], strides = [1, 1]} : vector<40x128xbf16> to vector<40x32xbf16>
    %cst_41 = arith.constant dense<0.000000e+00> : vector<40x40xf32>
    %119 = tpu.matmul %116, %117, %cst_41 {dimension_numbers = #tpu.dot_dimension_numbers<[1], [1], [0], [0], [0, 0, 1, 0], [], []>} : vector<40x32xbf16>, vector<40x32xbf16>, vector<40x40xf32> -> vector<40x40xf32>
    %120 = vector.broadcast %48 : vector<1x40xf32> to vector<40x40xf32>
    %121 = arith.addf %119, %120 : vector<40x40xf32>
    %cst_42 = arith.constant dense<0xFF800000> : vector<40xf32>
    %122 = vector.multi_reduction <maximumf>, %121, %cst_42 [1] : vector<40x40xf32> to vector<40xf32>
    %123 = vector.shape_cast %122 : vector<40xf32> to vector<40x1xf32>
    %124 = vector.broadcast %123 : vector<40x1xf32> to vector<40x40xf32>
    %125 = arith.subf %121, %124 : vector<40x40xf32>
    %126 = math.exp %125 : vector<40x40xf32>
    %cst_43 = arith.constant dense<0.000000e+00> : vector<40xf32>
    %127 = vector.multi_reduction <add>, %126, %cst_43 [1] : vector<40x40xf32> to vector<40xf32>
    %128 = vector.shape_cast %127 : vector<40xf32> to vector<40x1xf32>
    %129 = tpu.reciprocal %128 {approx = true} : vector<40x1xf32> -> vector<40x1xf32>
    %130 = vector.broadcast %129 : vector<40x1xf32> to vector<40x40xf32>
    %131 = arith.mulf %126, %130 : vector<40x40xf32>
    %132 = arith.truncf %131 : vector<40x40xf32> to vector<40x40xbf16>
    %cst_44 = arith.constant dense<0.000000e+00> : vector<40x32xf32>
    %133 = tpu.matmul %132, %118, %cst_44 {dimension_numbers = #tpu.dot_dimension_numbers<[1], [0], [0], [1], [0, 0, 1, 1], [], []>} : vector<40x40xbf16>, vector<40x32xbf16>, vector<40x32xf32> -> vector<40x32xf32>
    %134 = arith.truncf %133 : vector<40x32xf32> to vector<40x32xbf16>
    %c96 = arith.constant 96 : index
    %c0_45 = arith.constant 0 : index
    %135 = vector.load %arg7[%c96, %c0_45] : memref<128x128xbf16, #tpu.memory_space<vmem>>, vector<32x128xbf16>
    %cst_46 = arith.constant dense<0.000000e+00> : vector<40x128xf32>
    %136 = tpu.matmul %134, %135, %cst_46 {dimension_numbers = #tpu.dot_dimension_numbers<[1], [0], [0], [1], [0, 0, 1, 1], [], []>} : vector<40x32xbf16>, vector<32x128xbf16>, vector<40x128xf32> -> vector<40x128xf32>
    %137 = arith.addf %115, %136 : vector<40x128xf32>
    %138 = arith.addf %4, %137 : vector<40x128xf32>
    %c0_47 = arith.constant 0 : index
    %c0_48 = arith.constant 0 : index
    %139 = vector.load %arg8[%c0_47, %c0_48] : memref<1x128xf32, #tpu.memory_space<vmem>>, vector<1x128xf32>
    %140 = vector.broadcast %139 : vector<1x128xf32> to vector<40x128xf32>
    %141 = arith.addf %138, %140 : vector<40x128xf32>
    %c0_49 = arith.constant 0 : index
    %c0_50 = arith.constant 0 : index
    %142 = vector.load %arg9[%c0_49, %c0_50] : memref<1x128xf32, #tpu.memory_space<vmem>>, vector<1x128xf32>
    %c0_51 = arith.constant 0 : index
    %c0_52 = arith.constant 0 : index
    %143 = vector.load %arg10[%c0_51, %c0_52] : memref<1x128xf32, #tpu.memory_space<vmem>>, vector<1x128xf32>
    %cst_53 = arith.constant dense<0.000000e+00> : vector<40xf32>
    %144 = vector.multi_reduction <add>, %141, %cst_53 [1] : vector<40x128xf32> to vector<40xf32>
    %145 = vector.shape_cast %144 : vector<40xf32> to vector<40x1xf32>
    %cst_54 = arith.constant 1.280000e+02 : f32
    %146 = vector.broadcast %cst_54 : f32 to vector<40x1xf32>
    %147 = arith.divf %145, %146 : vector<40x1xf32>
    %148 = vector.broadcast %147 : vector<40x1xf32> to vector<40x128xf32>
    %149 = arith.subf %141, %148 : vector<40x128xf32>
    %150 = arith.mulf %149, %149 : vector<40x128xf32>
    %cst_55 = arith.constant dense<0.000000e+00> : vector<40xf32>
    %151 = vector.multi_reduction <add>, %150, %cst_55 [1] : vector<40x128xf32> to vector<40xf32>
    %152 = vector.shape_cast %151 : vector<40xf32> to vector<40x1xf32>
    %cst_56 = arith.constant 1.280000e+02 : f32
    %153 = vector.broadcast %cst_56 : f32 to vector<40x1xf32>
    %154 = arith.divf %152, %153 : vector<40x1xf32>
    %155 = vector.broadcast %147 : vector<40x1xf32> to vector<40x128xf32>
    %156 = arith.subf %141, %155 : vector<40x128xf32>
    %cst_57 = arith.constant 9.99999997E-7 : f32
    %157 = vector.broadcast %cst_57 : f32 to vector<40x1xf32>
    %158 = arith.addf %154, %157 : vector<40x1xf32>
    %159 = math.rsqrt %158 : vector<40x1xf32>
    %160 = vector.broadcast %159 : vector<40x1xf32> to vector<40x128xf32>
    %161 = arith.mulf %156, %160 : vector<40x128xf32>
    %162 = vector.broadcast %142 : vector<1x128xf32> to vector<40x128xf32>
    %163 = arith.mulf %161, %162 : vector<40x128xf32>
    %164 = vector.broadcast %143 : vector<1x128xf32> to vector<40x128xf32>
    %165 = arith.addf %163, %164 : vector<40x128xf32>
    %166 = arith.truncf %165 : vector<40x128xf32> to vector<40x128xbf16>
    %c0_58 = arith.constant 0 : index
    %c0_59 = arith.constant 0 : index
    %167 = vector.load %arg11[%c0_58, %c0_59] : memref<128x512xbf16, #tpu.memory_space<vmem>>, vector<128x512xbf16>
    %cst_60 = arith.constant dense<0.000000e+00> : vector<40x512xf32>
    %168 = tpu.matmul %166, %167, %cst_60 {dimension_numbers = #tpu.dot_dimension_numbers<[1], [0], [0], [1], [0, 0, 1, 1], [], []>} : vector<40x128xbf16>, vector<128x512xbf16>, vector<40x512xf32> -> vector<40x512xf32>
    %c0_61 = arith.constant 0 : index
    %c0_62 = arith.constant 0 : index
    %169 = vector.load %arg12[%c0_61, %c0_62] : memref<1x512xf32, #tpu.memory_space<vmem>>, vector<1x512xf32>
    %170 = vector.broadcast %169 : vector<1x512xf32> to vector<40x512xf32>
    %171 = arith.addf %168, %170 : vector<40x512xf32>
    %cst_63 = arith.constant 5.000000e-01 : f32
    %172 = vector.broadcast %cst_63 : f32 to vector<40x512xf32>
    %173 = arith.mulf %172, %171 : vector<40x512xf32>
    %cst_64 = arith.constant 0.707106769 : f32
    %174 = vector.broadcast %cst_64 : f32 to vector<40x512xf32>
    %175 = arith.mulf %171, %174 : vector<40x512xf32>
    %176 = math.erf %175 : vector<40x512xf32>
    %cst_65 = arith.constant 1.000000e+00 : f32
    %177 = vector.broadcast %cst_65 : f32 to vector<40x512xf32>
    %178 = arith.addf %177, %176 : vector<40x512xf32>
    %179 = arith.mulf %173, %178 : vector<40x512xf32>
    %180 = arith.truncf %179 : vector<40x512xf32> to vector<40x512xbf16>
    %c0_66 = arith.constant 0 : index
    %c0_67 = arith.constant 0 : index
    %181 = vector.load %arg13[%c0_66, %c0_67] : memref<512x128xbf16, #tpu.memory_space<vmem>>, vector<512x128xbf16>
    %cst_68 = arith.constant dense<0.000000e+00> : vector<40x128xf32>
    %182 = tpu.matmul %180, %181, %cst_68 {dimension_numbers = #tpu.dot_dimension_numbers<[1], [0], [0], [1], [0, 0, 1, 1], [], []>} : vector<40x512xbf16>, vector<512x128xbf16>, vector<40x128xf32> -> vector<40x128xf32>
    %c0_69 = arith.constant 0 : index
    %c0_70 = arith.constant 0 : index
    %183 = vector.load %arg14[%c0_69, %c0_70] : memref<1x128xf32, #tpu.memory_space<vmem>>, vector<1x128xf32>
    %184 = vector.broadcast %183 : vector<1x128xf32> to vector<40x128xf32>
    %185 = arith.addf %182, %184 : vector<40x128xf32>
    %186 = arith.addf %141, %185 : vector<40x128xf32>
    %c0_71 = arith.constant 0 : index
    %c0_72 = arith.constant 0 : index
    %c0_73 = arith.constant 0 : index
    %187 = vector.load %arg15[%c0_71, %c0_72, %c0_73] : memref<1x40x128xf32, #tpu.memory_space<vmem>>, vector<1x40x128xf32>
    %188 = vector.shape_cast %187 : vector<1x40x128xf32> to vector<40x128xf32>
    %189 = vector.shape_cast %186 : vector<40x128xf32> to vector<1x40x128xf32>
    tpu.vector_store %arg15[%c0_71, %c0_72, %c0_73], %189 {strides = array<i32>} : memref<1x40x128xf32, #tpu.memory_space<vmem>>, vector<1x40x128xf32>,
    return
  }
  func.func @transform_0(%arg0: i32) -> (i32, i32, i32) {
    %c0_i32 = arith.constant 0 : i32
    %c0_i32_0 = arith.constant 0 : i32
    %c0_i32_1 = arith.constant 0 : i32
    return %arg0, %c0_i32, %c0_i32_0 : i32, i32, i32
  }
  func.func @transform_1(%arg0: i32) -> (i32, i32, i32) {
    %c0_i32 = arith.constant 0 : i32
    %c0_i32_0 = arith.constant 0 : i32
    %c0_i32_1 = arith.constant 0 : i32
    %c0_i32_2 = arith.constant 0 : i32
    return %c0_i32, %c0_i32_0, %c0_i32_1 : i32, i32, i32
  }
  func.func @transform_2(%arg0: i32) -> (i32, i32) {
    %c0_i32 = arith.constant 0 : i32
    %c0_i32_0 = arith.constant 0 : i32
    %c0_i32_1 = arith.constant 0 : i32
    return %c0_i32, %c0_i32_0 : i32, i32
  }
  func.func @transform_3(%arg0: i32) -> (i32, i32) {
    %c0_i32 = arith.constant 0 : i32
    %c0_i32_0 = arith.constant 0 : i32
    %c0_i32_1 = arith.constant 0 : i32
    return %c0_i32, %c0_i32_0 : i32, i32
  }
  func.func @transform_4(%arg0: i32) -> (i32, i32) {
    %c0_i32 = arith.constant 0 : i32
    %c0_i32_0 = arith.constant 0 : i32
    %c0_i32_1 = arith.constant 0 : i32
    return %c0_i32, %c0_i32_0 : i32, i32
  }
  func.func @transform_5(%arg0: i32) -> (i32, i32) {
    %c0_i32 = arith.constant 0 : i32
    %c0_i32_0 = arith.constant 0 : i32
    %c0_i32_1 = arith.constant 0 : i32
    return %c0_i32, %c0_i32_0 : i32, i32
  }
  func.func @transform_6(%arg0: i32) -> (i32, i32) {
    %c0_i32 = arith.constant 0 : i32
    %c0_i32_0 = arith.constant 0 : i32
    %c0_i32_1 = arith.constant 0 : i32
    return %c0_i32, %c0_i32_0 : i32, i32
  }
  func.func @transform_7(%arg0: i32) -> (i32, i32) {
    %c0_i32 = arith.constant 0 : i32
    %c0_i32_0 = arith.constant 0 : i32
    %c0_i32_1 = arith.constant 0 : i32
    return %c0_i32, %c0_i32_0 : i32, i32
  }
  func.func @transform_8(%arg0: i32) -> (i32, i32) {
    %c0_i32 = arith.constant 0 : i32
    %c0_i32_0 = arith.constant 0 : i32
    %c0_i32_1 = arith.constant 0 : i32
    return %c0_i32, %c0_i32_0 : i32, i32
  }
  func.func @transform_9(%arg0: i32) -> (i32, i32) {
    %c0_i32 = arith.constant 0 : i32
    %c0_i32_0 = arith.constant 0 : i32
    %c0_i32_1 = arith.constant 0 : i32
    return %c0_i32, %c0_i32_0 : i32, i32
  }
  func.func @transform_10(%arg0: i32) -> (i32, i32) {
    %c0_i32 = arith.constant 0 : i32
    %c0_i32_0 = arith.constant 0 : i32
    %c0_i32_1 = arith.constant 0 : i32
    return %c0_i32, %c0_i32_0 : i32, i32
  }
  func.func @transform_11(%arg0: i32) -> (i32, i32) {
    %c0_i32 = arith.constant 0 : i32
    %c0_i32_0 = arith.constant 0 : i32
    %c0_i32_1 = arith.constant 0 : i32
    return %c0_i32, %c0_i32_0 : i32, i32
  }
  func.func @transform_12(%arg0: i32) -> (i32, i32) {
    %c0_i32 = arith.constant 0 : i32
    %c0_i32_0 = arith.constant 0 : i32
    %c0_i32_1 = arith.constant 0 : i32
    return %c0_i32, %c0_i32_0 : i32, i32
  }
  func.func @transform_13(%arg0: i32) -> (i32, i32) {
    %c0_i32 = arith.constant 0 : i32
    %c0_i32_0 = arith.constant 0 : i32
    %c0_i32_1 = arith.constant 0 : i32
    return %c0_i32, %c0_i32_0 : i32, i32
  }
  func.func @transform_14(%arg0: i32) -> (i32, i32, i32) {
    %c0_i32 = arith.constant 0 : i32
    %c0_i32_0 = arith.constant 0 : i32
    %c0_i32_1 = arith.constant 0 : i32
    return %arg0, %c0_i32, %c0_i32_0 : i32, i32, i32
  }
}

module attributes {stable_mosaic.version = 11 : i64} {
  func.func @_block_kernel(%arg0: i32, %arg1: memref<1x40x128xf32, #tpu.memory_space<vmem>>, %arg2: memref<1x128xf32, #tpu.memory_space<vmem>>, %arg3: memref<1x128xf32, #tpu.memory_space<vmem>>, %arg4: memref<128x384xbf16, #tpu.memory_space<vmem>>, %arg5: memref<1x384xf32, #tpu.memory_space<vmem>>, %arg6: memref<128x128xbf16, #tpu.memory_space<vmem>>, %arg7: memref<1x128xf32, #tpu.memory_space<vmem>>, %arg8: memref<1x128xf32, #tpu.memory_space<vmem>>, %arg9: memref<1x128xf32, #tpu.memory_space<vmem>>, %arg10: memref<128x512xbf16, #tpu.memory_space<vmem>>, %arg11: memref<1x512xf32, #tpu.memory_space<vmem>>, %arg12: memref<512x128xbf16, #tpu.memory_space<vmem>>, %arg13: memref<1x128xf32, #tpu.memory_space<vmem>>, %arg14: memref<1x128xf32, #tpu.memory_space<vmem>>, %arg15: memref<1x128xf32, #tpu.memory_space<vmem>>, %arg16: memref<1x40x128xf32, #tpu.memory_space<vmem>>) attributes {dimension_semantics = [#tpu.dimension_semantics<parallel>], iteration_bounds = array<i64: 2>, scalar_prefetch = 0 : i64, scratch_operands = 0 : i64, tpu.core_type = #tpu.core_type<tc>, window_params = [{transform_indices = @transform_0, window_bounds = array<i64: 1, 40, 128>}, {pipeline_mode = #tpu.pipeline_mode<synchronous>, transform_indices = @transform_1, window_bounds = array<i64: 1, 128>}, {pipeline_mode = #tpu.pipeline_mode<synchronous>, transform_indices = @transform_2, window_bounds = array<i64: 1, 128>}, {pipeline_mode = #tpu.pipeline_mode<synchronous>, transform_indices = @transform_3, window_bounds = array<i64: 128, 384>}, {pipeline_mode = #tpu.pipeline_mode<synchronous>, transform_indices = @transform_4, window_bounds = array<i64: 1, 384>}, {pipeline_mode = #tpu.pipeline_mode<synchronous>, transform_indices = @transform_5, window_bounds = array<i64: 128, 128>}, {pipeline_mode = #tpu.pipeline_mode<synchronous>, transform_indices = @transform_6, window_bounds = array<i64: 1, 128>}, {pipeline_mode = #tpu.pipeline_mode<synchronous>, transform_indices = @transform_7, window_bounds = array<i64: 1, 128>}, {pipeline_mode = #tpu.pipeline_mode<synchronous>, transform_indices = @transform_8, window_bounds = array<i64: 1, 128>}, {pipeline_mode = #tpu.pipeline_mode<synchronous>, transform_indices = @transform_9, window_bounds = array<i64: 128, 512>}, {pipeline_mode = #tpu.pipeline_mode<synchronous>, transform_indices = @transform_10, window_bounds = array<i64: 1, 512>}, {pipeline_mode = #tpu.pipeline_mode<synchronous>, transform_indices = @transform_11, window_bounds = array<i64: 512, 128>}, {pipeline_mode = #tpu.pipeline_mode<synchronous>, transform_indices = @transform_12, window_bounds = array<i64: 1, 128>}, {pipeline_mode = #tpu.pipeline_mode<synchronous>, transform_indices = @transform_13, window_bounds = array<i64: 1, 128>}, {pipeline_mode = #tpu.pipeline_mode<synchronous>, transform_indices = @transform_14, window_bounds = array<i64: 1, 128>}, {transform_indices = @transform_15, window_bounds = array<i64: 1, 40, 128>}]} {
    %c0 = arith.constant 0 : index
    %c0_0 = arith.constant 0 : index
    %c0_1 = arith.constant 0 : index
    %0 = vector.load %arg1[%c0, %c0_0, %c0_1] : memref<1x40x128xf32, #tpu.memory_space<vmem>>, vector<1x40x128xf32>
    %1 = vector.shape_cast %0 : vector<1x40x128xf32> to vector<40x128xf32>
    %c0_2 = arith.constant 0 : index
    %c0_3 = arith.constant 0 : index
    %2 = vector.load %arg2[%c0_2, %c0_3] : memref<1x128xf32, #tpu.memory_space<vmem>>, vector<1x128xf32>
    %c0_4 = arith.constant 0 : index
    %c0_5 = arith.constant 0 : index
    %3 = vector.load %arg3[%c0_4, %c0_5] : memref<1x128xf32, #tpu.memory_space<vmem>>, vector<1x128xf32>
    %cst = arith.constant dense<0.000000e+00> : vector<40xf32>
    %4 = vector.multi_reduction <add>, %1, %cst [1] : vector<40x128xf32> to vector<40xf32>
    %5 = vector.shape_cast %4 : vector<40xf32> to vector<40x1xf32>
    %cst_6 = arith.constant 1.280000e+02 : f32
    %6 = vector.broadcast %cst_6 : f32 to vector<40x1xf32>
    %7 = arith.divf %5, %6 : vector<40x1xf32>
    %8 = vector.broadcast %7 : vector<40x1xf32> to vector<40x128xf32>
    %9 = arith.subf %1, %8 : vector<40x128xf32>
    %10 = arith.mulf %9, %9 : vector<40x128xf32>
    %cst_7 = arith.constant dense<0.000000e+00> : vector<40xf32>
    %11 = vector.multi_reduction <add>, %10, %cst_7 [1] : vector<40x128xf32> to vector<40xf32>
    %12 = vector.shape_cast %11 : vector<40xf32> to vector<40x1xf32>
    %cst_8 = arith.constant 1.280000e+02 : f32
    %13 = vector.broadcast %cst_8 : f32 to vector<40x1xf32>
    %14 = arith.divf %12, %13 : vector<40x1xf32>
    %15 = vector.broadcast %7 : vector<40x1xf32> to vector<40x128xf32>
    %16 = arith.subf %1, %15 : vector<40x128xf32>
    %cst_9 = arith.constant 9.99999997E-7 : f32
    %17 = vector.broadcast %cst_9 : f32 to vector<40x1xf32>
    %18 = arith.addf %14, %17 : vector<40x1xf32>
    %19 = math.rsqrt %18 : vector<40x1xf32>
    %20 = vector.broadcast %19 : vector<40x1xf32> to vector<40x128xf32>
    %21 = arith.mulf %16, %20 : vector<40x128xf32>
    %22 = vector.broadcast %2 : vector<1x128xf32> to vector<40x128xf32>
    %23 = arith.mulf %21, %22 : vector<40x128xf32>
    %24 = vector.broadcast %3 : vector<1x128xf32> to vector<40x128xf32>
    %25 = arith.addf %23, %24 : vector<40x128xf32>
    %26 = arith.truncf %25 : vector<40x128xf32> to vector<40x128xbf16>
    %c0_10 = arith.constant 0 : index
    %c0_11 = arith.constant 0 : index
    %27 = vector.load %arg4[%c0_10, %c0_11] : memref<128x384xbf16, #tpu.memory_space<vmem>>, vector<128x384xbf16>
    %cst_12 = arith.constant dense<0.000000e+00> : vector<40x384xf32>
    %28 = tpu.matmul %26, %27, %cst_12 {dimension_numbers = #tpu.dot_dimension_numbers<[1], [0], [0], [1], [0, 0, 1, 1], [], []>} : vector<40x128xbf16>, vector<128x384xbf16>, vector<40x384xf32> -> vector<40x384xf32>
    %c0_13 = arith.constant 0 : index
    %c0_14 = arith.constant 0 : index
    %29 = vector.load %arg5[%c0_13, %c0_14] : memref<1x384xf32, #tpu.memory_space<vmem>>, vector<1x384xf32>
    %30 = vector.broadcast %29 : vector<1x384xf32> to vector<40x384xf32>
    %31 = arith.addf %28, %30 : vector<40x384xf32>
    %32 = vector.extract_strided_slice %31 {offsets = [0, 0], sizes = [40, 128], strides = [1, 1]} : vector<40x384xf32> to vector<40x128xf32>
    %cst_15 = arith.constant 0.176776692 : f32
    %33 = vector.broadcast %cst_15 : f32 to vector<40x128xf32>
    %34 = arith.mulf %32, %33 : vector<40x128xf32>
    %35 = arith.truncf %34 : vector<40x128xf32> to vector<40x128xbf16>
    %36 = vector.extract_strided_slice %31 {offsets = [0, 128], sizes = [40, 128], strides = [1, 1]} : vector<40x384xf32> to vector<40x128xf32>
    %37 = arith.truncf %36 : vector<40x128xf32> to vector<40x128xbf16>
    %38 = vector.extract_strided_slice %31 {offsets = [0, 256], sizes = [40, 128], strides = [1, 1]} : vector<40x384xf32> to vector<40x128xf32>
    %39 = arith.truncf %38 : vector<40x128xf32> to vector<40x128xbf16>
    %40 = tpu.iota {dimensions = array<i32: 1>} : vector<1x40xi32>
    %c35_i32 = arith.constant 35 : i32
    %41 = vector.broadcast %c35_i32 : i32 to vector<1x40xi32>
    %42 = arith.cmpi slt, %40, %41 : vector<1x40xi32>
    %cst_16 = arith.constant 0.000000e+00 : f32
    %cst_17 = arith.constant -1.000000e+30 : f32
    %43 = vector.broadcast %cst_16 : f32 to vector<1x40xf32>
    %44 = vector.broadcast %cst_17 : f32 to vector<1x40xf32>
    %45 = arith.select %42, %43, %44 : vector<1x40xi1>, vector<1x40xf32>
    %cst_18 = arith.constant 0.000000e+00 : f32
    %46 = vector.broadcast %cst_18 : f32 to vector<40x128xf32>
    %47 = vector.extract_strided_slice %35 {offsets = [0, 0], sizes = [40, 32], strides = [1, 1]} : vector<40x128xbf16> to vector<40x32xbf16>
    %48 = vector.extract_strided_slice %37 {offsets = [0, 0], sizes = [40, 32], strides = [1, 1]} : vector<40x128xbf16> to vector<40x32xbf16>
    %49 = vector.extract_strided_slice %39 {offsets = [0, 0], sizes = [40, 32], strides = [1, 1]} : vector<40x128xbf16> to vector<40x32xbf16>
    %cst_19 = arith.constant dense<0.000000e+00> : vector<40x40xf32>
    %50 = tpu.matmul %47, %48, %cst_19 {dimension_numbers = #tpu.dot_dimension_numbers<[1], [1], [0], [0], [0, 0, 1, 0], [], []>} : vector<40x32xbf16>, vector<40x32xbf16>, vector<40x40xf32> -> vector<40x40xf32>
    %51 = vector.broadcast %45 : vector<1x40xf32> to vector<40x40xf32>
    %52 = arith.addf %50, %51 : vector<40x40xf32>
    %cst_20 = arith.constant dense<0xFF800000> : vector<40xf32>
    %53 = vector.multi_reduction <maximumf>, %52, %cst_20 [1] : vector<40x40xf32> to vector<40xf32>
    %54 = vector.shape_cast %53 : vector<40xf32> to vector<40x1xf32>
    %55 = vector.broadcast %54 : vector<40x1xf32> to vector<40x40xf32>
    %56 = arith.subf %52, %55 : vector<40x40xf32>
    %57 = math.exp %56 : vector<40x40xf32>
    %cst_21 = arith.constant dense<0.000000e+00> : vector<40xf32>
    %58 = vector.multi_reduction <add>, %57, %cst_21 [1] : vector<40x40xf32> to vector<40xf32>
    %59 = vector.shape_cast %58 : vector<40xf32> to vector<40x1xf32>
    %60 = tpu.reciprocal %59 {approx = true} : vector<40x1xf32> -> vector<40x1xf32>
    %61 = vector.broadcast %60 : vector<40x1xf32> to vector<40x40xf32>
    %62 = arith.mulf %57, %61 : vector<40x40xf32>
    %63 = arith.truncf %62 : vector<40x40xf32> to vector<40x40xbf16>
    %cst_22 = arith.constant dense<0.000000e+00> : vector<40x32xf32>
    %64 = tpu.matmul %63, %49, %cst_22 {dimension_numbers = #tpu.dot_dimension_numbers<[1], [0], [0], [1], [0, 0, 1, 1], [], []>} : vector<40x40xbf16>, vector<40x32xbf16>, vector<40x32xf32> -> vector<40x32xf32>
    %65 = arith.truncf %64 : vector<40x32xf32> to vector<40x32xbf16>
    %c0_23 = arith.constant 0 : index
    %c0_24 = arith.constant 0 : index
    %66 = vector.load %arg6[%c0_23, %c0_24] : memref<128x128xbf16, #tpu.memory_space<vmem>>, vector<32x128xbf16>
    %cst_25 = arith.constant dense<0.000000e+00> : vector<40x128xf32>
    %67 = tpu.matmul %65, %66, %cst_25 {dimension_numbers = #tpu.dot_dimension_numbers<[1], [0], [0], [1], [0, 0, 1, 1], [], []>} : vector<40x32xbf16>, vector<32x128xbf16>, vector<40x128xf32> -> vector<40x128xf32>
    %68 = arith.addf %46, %67 : vector<40x128xf32>
    %69 = vector.extract_strided_slice %35 {offsets = [0, 32], sizes = [40, 32], strides = [1, 1]} : vector<40x128xbf16> to vector<40x32xbf16>
    %70 = vector.extract_strided_slice %37 {offsets = [0, 32], sizes = [40, 32], strides = [1, 1]} : vector<40x128xbf16> to vector<40x32xbf16>
    %71 = vector.extract_strided_slice %39 {offsets = [0, 32], sizes = [40, 32], strides = [1, 1]} : vector<40x128xbf16> to vector<40x32xbf16>
    %cst_26 = arith.constant dense<0.000000e+00> : vector<40x40xf32>
    %72 = tpu.matmul %69, %70, %cst_26 {dimension_numbers = #tpu.dot_dimension_numbers<[1], [1], [0], [0], [0, 0, 1, 0], [], []>} : vector<40x32xbf16>, vector<40x32xbf16>, vector<40x40xf32> -> vector<40x40xf32>
    %73 = vector.broadcast %45 : vector<1x40xf32> to vector<40x40xf32>
    %74 = arith.addf %72, %73 : vector<40x40xf32>
    %cst_27 = arith.constant dense<0xFF800000> : vector<40xf32>
    %75 = vector.multi_reduction <maximumf>, %74, %cst_27 [1] : vector<40x40xf32> to vector<40xf32>
    %76 = vector.shape_cast %75 : vector<40xf32> to vector<40x1xf32>
    %77 = vector.broadcast %76 : vector<40x1xf32> to vector<40x40xf32>
    %78 = arith.subf %74, %77 : vector<40x40xf32>
    %79 = math.exp %78 : vector<40x40xf32>
    %cst_28 = arith.constant dense<0.000000e+00> : vector<40xf32>
    %80 = vector.multi_reduction <add>, %79, %cst_28 [1] : vector<40x40xf32> to vector<40xf32>
    %81 = vector.shape_cast %80 : vector<40xf32> to vector<40x1xf32>
    %82 = tpu.reciprocal %81 {approx = true} : vector<40x1xf32> -> vector<40x1xf32>
    %83 = vector.broadcast %82 : vector<40x1xf32> to vector<40x40xf32>
    %84 = arith.mulf %79, %83 : vector<40x40xf32>
    %85 = arith.truncf %84 : vector<40x40xf32> to vector<40x40xbf16>
    %cst_29 = arith.constant dense<0.000000e+00> : vector<40x32xf32>
    %86 = tpu.matmul %85, %71, %cst_29 {dimension_numbers = #tpu.dot_dimension_numbers<[1], [0], [0], [1], [0, 0, 1, 1], [], []>} : vector<40x40xbf16>, vector<40x32xbf16>, vector<40x32xf32> -> vector<40x32xf32>
    %87 = arith.truncf %86 : vector<40x32xf32> to vector<40x32xbf16>
    %c32 = arith.constant 32 : index
    %c0_30 = arith.constant 0 : index
    %88 = vector.load %arg6[%c32, %c0_30] : memref<128x128xbf16, #tpu.memory_space<vmem>>, vector<32x128xbf16>
    %cst_31 = arith.constant dense<0.000000e+00> : vector<40x128xf32>
    %89 = tpu.matmul %87, %88, %cst_31 {dimension_numbers = #tpu.dot_dimension_numbers<[1], [0], [0], [1], [0, 0, 1, 1], [], []>} : vector<40x32xbf16>, vector<32x128xbf16>, vector<40x128xf32> -> vector<40x128xf32>
    %90 = arith.addf %68, %89 : vector<40x128xf32>
    %91 = vector.extract_strided_slice %35 {offsets = [0, 64], sizes = [40, 32], strides = [1, 1]} : vector<40x128xbf16> to vector<40x32xbf16>
    %92 = vector.extract_strided_slice %37 {offsets = [0, 64], sizes = [40, 32], strides = [1, 1]} : vector<40x128xbf16> to vector<40x32xbf16>
    %93 = vector.extract_strided_slice %39 {offsets = [0, 64], sizes = [40, 32], strides = [1, 1]} : vector<40x128xbf16> to vector<40x32xbf16>
    %cst_32 = arith.constant dense<0.000000e+00> : vector<40x40xf32>
    %94 = tpu.matmul %91, %92, %cst_32 {dimension_numbers = #tpu.dot_dimension_numbers<[1], [1], [0], [0], [0, 0, 1, 0], [], []>} : vector<40x32xbf16>, vector<40x32xbf16>, vector<40x40xf32> -> vector<40x40xf32>
    %95 = vector.broadcast %45 : vector<1x40xf32> to vector<40x40xf32>
    %96 = arith.addf %94, %95 : vector<40x40xf32>
    %cst_33 = arith.constant dense<0xFF800000> : vector<40xf32>
    %97 = vector.multi_reduction <maximumf>, %96, %cst_33 [1] : vector<40x40xf32> to vector<40xf32>
    %98 = vector.shape_cast %97 : vector<40xf32> to vector<40x1xf32>
    %99 = vector.broadcast %98 : vector<40x1xf32> to vector<40x40xf32>
    %100 = arith.subf %96, %99 : vector<40x40xf32>
    %101 = math.exp %100 : vector<40x40xf32>
    %cst_34 = arith.constant dense<0.000000e+00> : vector<40xf32>
    %102 = vector.multi_reduction <add>, %101, %cst_34 [1] : vector<40x40xf32> to vector<40xf32>
    %103 = vector.shape_cast %102 : vector<40xf32> to vector<40x1xf32>
    %104 = tpu.reciprocal %103 {approx = true} : vector<40x1xf32> -> vector<40x1xf32>
    %105 = vector.broadcast %104 : vector<40x1xf32> to vector<40x40xf32>
    %106 = arith.mulf %101, %105 : vector<40x40xf32>
    %107 = arith.truncf %106 : vector<40x40xf32> to vector<40x40xbf16>
    %cst_35 = arith.constant dense<0.000000e+00> : vector<40x32xf32>
    %108 = tpu.matmul %107, %93, %cst_35 {dimension_numbers = #tpu.dot_dimension_numbers<[1], [0], [0], [1], [0, 0, 1, 1], [], []>} : vector<40x40xbf16>, vector<40x32xbf16>, vector<40x32xf32> -> vector<40x32xf32>
    %109 = arith.truncf %108 : vector<40x32xf32> to vector<40x32xbf16>
    %c64 = arith.constant 64 : index
    %c0_36 = arith.constant 0 : index
    %110 = vector.load %arg6[%c64, %c0_36] : memref<128x128xbf16, #tpu.memory_space<vmem>>, vector<32x128xbf16>
    %cst_37 = arith.constant dense<0.000000e+00> : vector<40x128xf32>
    %111 = tpu.matmul %109, %110, %cst_37 {dimension_numbers = #tpu.dot_dimension_numbers<[1], [0], [0], [1], [0, 0, 1, 1], [], []>} : vector<40x32xbf16>, vector<32x128xbf16>, vector<40x128xf32> -> vector<40x128xf32>
    %112 = arith.addf %90, %111 : vector<40x128xf32>
    %113 = vector.extract_strided_slice %35 {offsets = [0, 96], sizes = [40, 32], strides = [1, 1]} : vector<40x128xbf16> to vector<40x32xbf16>
    %114 = vector.extract_strided_slice %37 {offsets = [0, 96], sizes = [40, 32], strides = [1, 1]} : vector<40x128xbf16> to vector<40x32xbf16>
    %115 = vector.extract_strided_slice %39 {offsets = [0, 96], sizes = [40, 32], strides = [1, 1]} : vector<40x128xbf16> to vector<40x32xbf16>
    %cst_38 = arith.constant dense<0.000000e+00> : vector<40x40xf32>
    %116 = tpu.matmul %113, %114, %cst_38 {dimension_numbers = #tpu.dot_dimension_numbers<[1], [1], [0], [0], [0, 0, 1, 0], [], []>} : vector<40x32xbf16>, vector<40x32xbf16>, vector<40x40xf32> -> vector<40x40xf32>
    %117 = vector.broadcast %45 : vector<1x40xf32> to vector<40x40xf32>
    %118 = arith.addf %116, %117 : vector<40x40xf32>
    %cst_39 = arith.constant dense<0xFF800000> : vector<40xf32>
    %119 = vector.multi_reduction <maximumf>, %118, %cst_39 [1] : vector<40x40xf32> to vector<40xf32>
    %120 = vector.shape_cast %119 : vector<40xf32> to vector<40x1xf32>
    %121 = vector.broadcast %120 : vector<40x1xf32> to vector<40x40xf32>
    %122 = arith.subf %118, %121 : vector<40x40xf32>
    %123 = math.exp %122 : vector<40x40xf32>
    %cst_40 = arith.constant dense<0.000000e+00> : vector<40xf32>
    %124 = vector.multi_reduction <add>, %123, %cst_40 [1] : vector<40x40xf32> to vector<40xf32>
    %125 = vector.shape_cast %124 : vector<40xf32> to vector<40x1xf32>
    %126 = tpu.reciprocal %125 {approx = true} : vector<40x1xf32> -> vector<40x1xf32>
    %127 = vector.broadcast %126 : vector<40x1xf32> to vector<40x40xf32>
    %128 = arith.mulf %123, %127 : vector<40x40xf32>
    %129 = arith.truncf %128 : vector<40x40xf32> to vector<40x40xbf16>
    %cst_41 = arith.constant dense<0.000000e+00> : vector<40x32xf32>
    %130 = tpu.matmul %129, %115, %cst_41 {dimension_numbers = #tpu.dot_dimension_numbers<[1], [0], [0], [1], [0, 0, 1, 1], [], []>} : vector<40x40xbf16>, vector<40x32xbf16>, vector<40x32xf32> -> vector<40x32xf32>
    %131 = arith.truncf %130 : vector<40x32xf32> to vector<40x32xbf16>
    %c96 = arith.constant 96 : index
    %c0_42 = arith.constant 0 : index
    %132 = vector.load %arg6[%c96, %c0_42] : memref<128x128xbf16, #tpu.memory_space<vmem>>, vector<32x128xbf16>
    %cst_43 = arith.constant dense<0.000000e+00> : vector<40x128xf32>
    %133 = tpu.matmul %131, %132, %cst_43 {dimension_numbers = #tpu.dot_dimension_numbers<[1], [0], [0], [1], [0, 0, 1, 1], [], []>} : vector<40x32xbf16>, vector<32x128xbf16>, vector<40x128xf32> -> vector<40x128xf32>
    %134 = arith.addf %112, %133 : vector<40x128xf32>
    %135 = arith.addf %1, %134 : vector<40x128xf32>
    %c0_44 = arith.constant 0 : index
    %c0_45 = arith.constant 0 : index
    %136 = vector.load %arg7[%c0_44, %c0_45] : memref<1x128xf32, #tpu.memory_space<vmem>>, vector<1x128xf32>
    %137 = vector.broadcast %136 : vector<1x128xf32> to vector<40x128xf32>
    %138 = arith.addf %135, %137 : vector<40x128xf32>
    %c0_46 = arith.constant 0 : index
    %c0_47 = arith.constant 0 : index
    %139 = vector.load %arg8[%c0_46, %c0_47] : memref<1x128xf32, #tpu.memory_space<vmem>>, vector<1x128xf32>
    %c0_48 = arith.constant 0 : index
    %c0_49 = arith.constant 0 : index
    %140 = vector.load %arg9[%c0_48, %c0_49] : memref<1x128xf32, #tpu.memory_space<vmem>>, vector<1x128xf32>
    %cst_50 = arith.constant dense<0.000000e+00> : vector<40xf32>
    %141 = vector.multi_reduction <add>, %138, %cst_50 [1] : vector<40x128xf32> to vector<40xf32>
    %142 = vector.shape_cast %141 : vector<40xf32> to vector<40x1xf32>
    %cst_51 = arith.constant 1.280000e+02 : f32
    %143 = vector.broadcast %cst_51 : f32 to vector<40x1xf32>
    %144 = arith.divf %142, %143 : vector<40x1xf32>
    %145 = vector.broadcast %144 : vector<40x1xf32> to vector<40x128xf32>
    %146 = arith.subf %138, %145 : vector<40x128xf32>
    %147 = arith.mulf %146, %146 : vector<40x128xf32>
    %cst_52 = arith.constant dense<0.000000e+00> : vector<40xf32>
    %148 = vector.multi_reduction <add>, %147, %cst_52 [1] : vector<40x128xf32> to vector<40xf32>
    %149 = vector.shape_cast %148 : vector<40xf32> to vector<40x1xf32>
    %cst_53 = arith.constant 1.280000e+02 : f32
    %150 = vector.broadcast %cst_53 : f32 to vector<40x1xf32>
    %151 = arith.divf %149, %150 : vector<40x1xf32>
    %152 = vector.broadcast %144 : vector<40x1xf32> to vector<40x128xf32>
    %153 = arith.subf %138, %152 : vector<40x128xf32>
    %cst_54 = arith.constant 9.99999997E-7 : f32
    %154 = vector.broadcast %cst_54 : f32 to vector<40x1xf32>
    %155 = arith.addf %151, %154 : vector<40x1xf32>
    %156 = math.rsqrt %155 : vector<40x1xf32>
    %157 = vector.broadcast %156 : vector<40x1xf32> to vector<40x128xf32>
    %158 = arith.mulf %153, %157 : vector<40x128xf32>
    %159 = vector.broadcast %139 : vector<1x128xf32> to vector<40x128xf32>
    %160 = arith.mulf %158, %159 : vector<40x128xf32>
    %161 = vector.broadcast %140 : vector<1x128xf32> to vector<40x128xf32>
    %162 = arith.addf %160, %161 : vector<40x128xf32>
    %163 = arith.truncf %162 : vector<40x128xf32> to vector<40x128xbf16>
    %c0_55 = arith.constant 0 : index
    %c0_56 = arith.constant 0 : index
    %164 = vector.load %arg10[%c0_55, %c0_56] : memref<128x512xbf16, #tpu.memory_space<vmem>>, vector<128x512xbf16>
    %cst_57 = arith.constant dense<0.000000e+00> : vector<40x512xf32>
    %165 = tpu.matmul %163, %164, %cst_57 {dimension_numbers = #tpu.dot_dimension_numbers<[1], [0], [0], [1], [0, 0, 1, 1], [], []>} : vector<40x128xbf16>, vector<128x512xbf16>, vector<40x512xf32> -> vector<40x512xf32>
    %c0_58 = arith.constant 0 : index
    %c0_59 = arith.constant 0 : index
    %166 = vector.load %arg11[%c0_58, %c0_59] : memref<1x512xf32, #tpu.memory_space<vmem>>, vector<1x512xf32>
    %167 = vector.broadcast %166 : vector<1x512xf32> to vector<40x512xf32>
    %168 = arith.addf %165, %167 : vector<40x512xf32>
    %cst_60 = arith.constant 5.000000e-01 : f32
    %169 = vector.broadcast %cst_60 : f32 to vector<40x512xf32>
    %170 = arith.mulf %169, %168 : vector<40x512xf32>
    %cst_61 = arith.constant 0.707106769 : f32
    %171 = vector.broadcast %cst_61 : f32 to vector<40x512xf32>
    %172 = arith.mulf %168, %171 : vector<40x512xf32>
    %173 = math.erf %172 : vector<40x512xf32>
    %cst_62 = arith.constant 1.000000e+00 : f32
    %174 = vector.broadcast %cst_62 : f32 to vector<40x512xf32>
    %175 = arith.addf %174, %173 : vector<40x512xf32>
    %176 = arith.mulf %170, %175 : vector<40x512xf32>
    %177 = arith.truncf %176 : vector<40x512xf32> to vector<40x512xbf16>
    %c0_63 = arith.constant 0 : index
    %c0_64 = arith.constant 0 : index
    %178 = vector.load %arg12[%c0_63, %c0_64] : memref<512x128xbf16, #tpu.memory_space<vmem>>, vector<512x128xbf16>
    %cst_65 = arith.constant dense<0.000000e+00> : vector<40x128xf32>
    %179 = tpu.matmul %177, %178, %cst_65 {dimension_numbers = #tpu.dot_dimension_numbers<[1], [0], [0], [1], [0, 0, 1, 1], [], []>} : vector<40x512xbf16>, vector<512x128xbf16>, vector<40x128xf32> -> vector<40x128xf32>
    %c0_66 = arith.constant 0 : index
    %c0_67 = arith.constant 0 : index
    %180 = vector.load %arg13[%c0_66, %c0_67] : memref<1x128xf32, #tpu.memory_space<vmem>>, vector<1x128xf32>
    %181 = vector.broadcast %180 : vector<1x128xf32> to vector<40x128xf32>
    %182 = arith.addf %179, %181 : vector<40x128xf32>
    %183 = arith.addf %138, %182 : vector<40x128xf32>
    %c0_68 = arith.constant 0 : index
    %c0_69 = arith.constant 0 : index
    %184 = vector.load %arg14[%c0_68, %c0_69] : memref<1x128xf32, #tpu.memory_space<vmem>>, vector<1x128xf32>
    %c0_70 = arith.constant 0 : index
    %c0_71 = arith.constant 0 : index
    %185 = vector.load %arg15[%c0_70, %c0_71] : memref<1x128xf32, #tpu.memory_space<vmem>>, vector<1x128xf32>
    %cst_72 = arith.constant dense<0.000000e+00> : vector<40xf32>
    %186 = vector.multi_reduction <add>, %183, %cst_72 [1] : vector<40x128xf32> to vector<40xf32>
    %187 = vector.shape_cast %186 : vector<40xf32> to vector<40x1xf32>
    %cst_73 = arith.constant 1.280000e+02 : f32
    %188 = vector.broadcast %cst_73 : f32 to vector<40x1xf32>
    %189 = arith.divf %187, %188 : vector<40x1xf32>
    %190 = vector.broadcast %189 : vector<40x1xf32> to vector<40x128xf32>
    %191 = arith.subf %183, %190 : vector<40x128xf32>
    %192 = arith.mulf %191, %191 : vector<40x128xf32>
    %cst_74 = arith.constant dense<0.000000e+00> : vector<40xf32>
    %193 = vector.multi_reduction <add>, %192, %cst_74 [1] : vector<40x128xf32> to vector<40xf32>
    %194 = vector.shape_cast %193 : vector<40xf32> to vector<40x1xf32>
    %cst_75 = arith.constant 1.280000e+02 : f32
    %195 = vector.broadcast %cst_75 : f32 to vector<40x1xf32>
    %196 = arith.divf %194, %195 : vector<40x1xf32>
    %197 = vector.broadcast %189 : vector<40x1xf32> to vector<40x128xf32>
    %198 = arith.subf %183, %197 : vector<40x128xf32>
    %cst_76 = arith.constant 9.99999997E-7 : f32
    %199 = vector.broadcast %cst_76 : f32 to vector<40x1xf32>
    %200 = arith.addf %196, %199 : vector<40x1xf32>
    %201 = math.rsqrt %200 : vector<40x1xf32>
    %202 = vector.broadcast %201 : vector<40x1xf32> to vector<40x128xf32>
    %203 = arith.mulf %198, %202 : vector<40x128xf32>
    %204 = vector.broadcast %184 : vector<1x128xf32> to vector<40x128xf32>
    %205 = arith.mulf %203, %204 : vector<40x128xf32>
    %206 = vector.broadcast %185 : vector<1x128xf32> to vector<40x128xf32>
    %207 = arith.addf %205, %206 : vector<40x128xf32>
    %c0_77 = arith.constant 0 : index
    %c0_78 = arith.constant 0 : index
    %c0_79 = arith.constant 0 : index
    %208 = vector.load %arg16[%c0_77, %c0_78, %c0_79] : memref<1x40x128xf32, #tpu.memory_space<vmem>>, vector<1x40x128xf32>
    %209 = vector.shape_cast %208 : vector<1x40x128xf32> to vector<40x128xf32>
    %210 = vector.shape_cast %207 : vector<40x128xf32> to vector<1x40x128xf32>
    tpu.vector_store %arg16[%c0_77, %c0_78, %c0_79], %210 {strides = array<i32>} : memref<1x40x128xf32, #tpu.memory_space<vmem>>, vector<1x40x128xf32>,
    return
  }
  func.func @transform_0(%arg0: i32) -> (i32, i32, i32) {
    %c0_i32 = arith.constant 0 : i32
    %c0_i32_0 = arith.constant 0 : i32
    %c0_i32_1 = arith.constant 0 : i32
    return %arg0, %c0_i32, %c0_i32_0 : i32, i32, i32
  }
  func.func @transform_1(%arg0: i32) -> (i32, i32) {
    %c0_i32 = arith.constant 0 : i32
    %c0_i32_0 = arith.constant 0 : i32
    %c0_i32_1 = arith.constant 0 : i32
    return %c0_i32, %c0_i32_0 : i32, i32
  }
  func.func @transform_2(%arg0: i32) -> (i32, i32) {
    %c0_i32 = arith.constant 0 : i32
    %c0_i32_0 = arith.constant 0 : i32
    %c0_i32_1 = arith.constant 0 : i32
    return %c0_i32, %c0_i32_0 : i32, i32
  }
  func.func @transform_3(%arg0: i32) -> (i32, i32) {
    %c0_i32 = arith.constant 0 : i32
    %c0_i32_0 = arith.constant 0 : i32
    %c0_i32_1 = arith.constant 0 : i32
    return %c0_i32, %c0_i32_0 : i32, i32
  }
  func.func @transform_4(%arg0: i32) -> (i32, i32) {
    %c0_i32 = arith.constant 0 : i32
    %c0_i32_0 = arith.constant 0 : i32
    %c0_i32_1 = arith.constant 0 : i32
    return %c0_i32, %c0_i32_0 : i32, i32
  }
  func.func @transform_5(%arg0: i32) -> (i32, i32) {
    %c0_i32 = arith.constant 0 : i32
    %c0_i32_0 = arith.constant 0 : i32
    %c0_i32_1 = arith.constant 0 : i32
    return %c0_i32, %c0_i32_0 : i32, i32
  }
  func.func @transform_6(%arg0: i32) -> (i32, i32) {
    %c0_i32 = arith.constant 0 : i32
    %c0_i32_0 = arith.constant 0 : i32
    %c0_i32_1 = arith.constant 0 : i32
    return %c0_i32, %c0_i32_0 : i32, i32
  }
  func.func @transform_7(%arg0: i32) -> (i32, i32) {
    %c0_i32 = arith.constant 0 : i32
    %c0_i32_0 = arith.constant 0 : i32
    %c0_i32_1 = arith.constant 0 : i32
    return %c0_i32, %c0_i32_0 : i32, i32
  }
  func.func @transform_8(%arg0: i32) -> (i32, i32) {
    %c0_i32 = arith.constant 0 : i32
    %c0_i32_0 = arith.constant 0 : i32
    %c0_i32_1 = arith.constant 0 : i32
    return %c0_i32, %c0_i32_0 : i32, i32
  }
  func.func @transform_9(%arg0: i32) -> (i32, i32) {
    %c0_i32 = arith.constant 0 : i32
    %c0_i32_0 = arith.constant 0 : i32
    %c0_i32_1 = arith.constant 0 : i32
    return %c0_i32, %c0_i32_0 : i32, i32
  }
  func.func @transform_10(%arg0: i32) -> (i32, i32) {
    %c0_i32 = arith.constant 0 : i32
    %c0_i32_0 = arith.constant 0 : i32
    %c0_i32_1 = arith.constant 0 : i32
    return %c0_i32, %c0_i32_0 : i32, i32
  }
  func.func @transform_11(%arg0: i32) -> (i32, i32) {
    %c0_i32 = arith.constant 0 : i32
    %c0_i32_0 = arith.constant 0 : i32
    %c0_i32_1 = arith.constant 0 : i32
    return %c0_i32, %c0_i32_0 : i32, i32
  }
  func.func @transform_12(%arg0: i32) -> (i32, i32) {
    %c0_i32 = arith.constant 0 : i32
    %c0_i32_0 = arith.constant 0 : i32
    %c0_i32_1 = arith.constant 0 : i32
    return %c0_i32, %c0_i32_0 : i32, i32
  }
  func.func @transform_13(%arg0: i32) -> (i32, i32) {
    %c0_i32 = arith.constant 0 : i32
    %c0_i32_0 = arith.constant 0 : i32
    %c0_i32_1 = arith.constant 0 : i32
    return %c0_i32, %c0_i32_0 : i32, i32
  }
  func.func @transform_14(%arg0: i32) -> (i32, i32) {
    %c0_i32 = arith.constant 0 : i32
    %c0_i32_0 = arith.constant 0 : i32
    %c0_i32_1 = arith.constant 0 : i32
    return %c0_i32, %c0_i32_0 : i32, i32
  }
  func.func @transform_15(%arg0: i32) -> (i32, i32, i32) {
    %c0_i32 = arith.constant 0 : i32
    %c0_i32_0 = arith.constant 0 : i32
    %c0_i32_1 = arith.constant 0 : i32
    return %arg0, %c0_i32, %c0_i32_0 : i32, i32, i32
  }
}

</mosaic_0001>

<llo_original>
// kernel: _lambda_.3
$region0: #{_lambda_.3}
  #allocation0 [shape = 'u32[]', space=smem, size = 0x4, offset = 0x4, fixed_abs, tag = 'smem constant byte address 0x4 - core index']
  #allocation1 [shape = 'u32[72,128]{1,0:T(1,128)}', space=vmem, size = 0x9000, scoped, tag = 'internal scratch']
  %s0 = inlined_call_operand.vmem [shape: bf16[134,48], index: 0, kind: input, shape index: {}]
  %s1 = inlined_call_operand.vmem [shape: bf16[48,128], index: 1, kind: input, shape index: {}]
  %s2 = inlined_call_operand.vmem [shape: f32[1,128], index: 2, kind: input, shape index: {}]
  %s3 = inlined_call_operand.vmem [shape: f32[134,128], index: 3, kind: output, shape index: {}]
  %s4 = sld [smem:[#allocation0]]
  $region22: #{_lambda_.3} parent=0
    _
  %s6 = ssub.s32 1, %s4
  %s7 = scalar_select 0, %s6, %s4
  // Predicated region
  $region2: #{_lambda_.3} parent=0 // pred_check
    _
  $region3: #{_lambda_.3} parent=0 // pred_check_branch
    %9 = sbr.rel (0) target = $region5
  $region4: #{_lambda_.3} parent=0 // pred_region
    _
  $region5: #{_lambda_.3} parent=0 // pred_fallthru
    _
  // Predicated region
  $region6: #{_lambda_.3} parent=0 // pred_check
    _
  $region7: #{_lambda_.3} parent=0 // pred_check_branch
    %11 = sbr.rel (0) target = $region9
  $region8: #{_lambda_.3} parent=0 // pred_region
    _
  $region9: #{_lambda_.3} parent=0 // pred_fallthru
    _
  // Predicated region
  $region10: #{_lambda_.3} parent=0 // pred_check
    _
  $region11: #{_lambda_.3} parent=0 // pred_check_branch
    %13 = sbr.rel (0) target = $region13
  $region12: #{_lambda_.3} parent=0 // pred_region
    _
  $region13: #{_lambda_.3} parent=0 // pred_fallthru
    _
  %v15 = vld [vmem:[%s0] sm:$0xf]
  %v16 = vld [vmem:[%s0 + $0x4] sm:$0xf]
  %v17 = vld [vmem:[%s0 + $0x8] sm:$0xf]
  %v18 = vld [vmem:[%s0 + $0xc] sm:$0xf]
  %v19 = vld [vmem:[%s0 + $0x10] sm:$0xf]
  %v20 = vld [vmem:[%s0 + $0x14] sm:$0xf]
  %v21 = vld [vmem:[%s0 + $0x18] sm:$0xf]
  %v22 = vld [vmem:[%s0 + $0x1c] sm:$0xf]
  %v23 = vld [vmem:[%s0 + $0x20] sm:$0xf]
  %v24 = vld [vmem:[%s0 + $0x24] sm:$0xf]
  %v25 = vld [vmem:[%s0 + $0x28] sm:$0xf]
  %v26 = vld [vmem:[%s0 + $0x2c] sm:$0xf]
  %v27 = vld [vmem:[%s0 + $0x30] sm:$0xf]
  %v28 = vld [vmem:[%s0 + $0x34] sm:$0xf]
  %v29 = vld [vmem:[%s0 + $0x38] sm:$0xf]
  %v30 = vld [vmem:[%s0 + $0x3c] sm:$0xf]
  %v31 = vld [vmem:[%s0 + $0x40] sm:$0x7]
  %v32 = vld [vmem:[%s1] sm:$0xf]
  %v33 = vld [vmem:[%s1 + $0x4] sm:$0xf]
  %v34 = vld [vmem:[%s1 + $0x8] sm:$0xf]
  %v35 = vld [vmem:[%s1 + $0xc] sm:$0xf]
  %v36 = vld [vmem:[%s1 + $0x10] sm:$0xf]
  %v37 = vld [vmem:[%s1 + $0x14] sm:$0xf]
  %v38 = vld [vmem:[%s2] sm:$0x1]
  %v40 = vperm.slane %v38, 0
  %v59 = vunpack.c.l.b16 %v15
  %v60 = vunpack.c.l.b16 %v16
  %v61 = vunpack.c.l.b16 %v17
  %v62 = vunpack.c.l.b16 %v18
  %v63 = vunpack.c.l.b16 %v19
  %v64 = vunpack.c.l.b16 %v20
  %v65 = vunpack.c.l.b16 %v21
  %v66 = vunpack.c.l.b16 %v22
  %v67 = vunpack.c.l.b16 %v23
  %v68 = vunpack.c.l.b16 %v24
  %v69 = vunpack.c.l.b16 %v25
  %v70 = vunpack.c.l.b16 %v26
  %v71 = vunpack.c.l.b16 %v27
  %v72 = vunpack.c.l.b16 %v28
  %v73 = vunpack.c.l.b16 %v29
  %v74 = vunpack.c.l.b16 %v30
  %v75 = vunpack.c.l.b16 %v31
  %v76 = vpack.c.b16 %v60, %v59
  %v77 = vpack.c.b16 %v62, %v61
  %v78 = vpack.c.b16 %v64, %v63
  %v79 = vpack.c.b16 %v66, %v65
  %v80 = vpack.c.b16 %v68, %v67
  %v81 = vpack.c.b16 %v70, %v69
  %v82 = vpack.c.b16 %v72, %v71
  %v83 = vpack.c.b16 %v74, %v73
  %v84 = vpack.c.b16 %v75, %v75
  %v91 = vunpack.c.l.b16 %v32
  %v92 = vunpack.c.l.b16 %v33
  %v93 = vunpack.c.l.b16 %v34
  %v94 = vunpack.c.l.b16 %v35
  %v95 = vunpack.c.l.b16 %v36
  %v96 = vunpack.c.l.b16 %v37
  %v97 = vpack.c.b16 %v92, %v91
  %v98 = vpack.c.b16 %v94, %v93
  %v99 = vpack.c.b16 %v96, %v95
  %vm103 = vcmask 392192
  %v105 = vsel %vm103, %v76, 0
  %v108 = vsel %vm103, %v77, 0
  %v111 = vsel %vm103, %v78, 0
  %v114 = vsel %vm103, %v79, 0
  %v117 = vsel %vm103, %v80, 0
  %v120 = vsel %vm103, %v81, 0
  %v123 = vsel %vm103, %v82, 0
  %v126 = vsel %vm103, %v83, 0
  %v129 = vsel %vm103, %v84, 0
  %131 = vmatpush.bf16.msra.mxu0 0
  %132 = vmatpush.bf16.msra.mxu0 0
  %133 = vmatpush.bf16.msra.mxu0 0
  %134 = vmatpush.bf16.msra.mxu0 0
  %135 = vmatpush.bf16.msra.mxu0 0
  %136 = vmatpush.bf16.msra.mxu0 %v99
  %137 = vmatpush.bf16.msra.mxu0 %v98
  %138 = vmatpush.bf16.msra.mxu0 %v97
  %139 = vmatmul.bf16.gmra.mxu0 %v105
  %v140 = vpop.f32.mrf.mxu0
  %v141 = vadd.f32 %v40, %v140
  %v142 = vpop.f32.mrf.mxu0
  %v143 = vadd.f32 %v40, %v142
  %144 = vmatmul.bf16.gmra.mxu0 %v108
  %v145 = vpop.f32.mrf.mxu0
  %v146 = vadd.f32 %v40, %v145
  %v147 = vpop.f32.mrf.mxu0
  %v148 = vadd.f32 %v40, %v147
  %149 = vmatmul.bf16.gmra.mxu0 %v111
  %v150 = vpop.f32.mrf.mxu0
  %v151 = vadd.f32 %v40, %v150
  %v152 = vpop.f32.mrf.mxu0
  %v153 = vadd.f32 %v40, %v152
  %154 = vmatmul.bf16.gmra.mxu0 %v114
  %v155 = vpop.f32.mrf.mxu0
  %v156 = vadd.f32 %v40, %v155
  %v157 = vpop.f32.mrf.mxu0
  %v158 = vadd.f32 %v40, %v157
  %159 = vmatmul.bf16.gmra.mxu0 %v117
  %v160 = vpop.f32.mrf.mxu0
  %v161 = vadd.f32 %v40, %v160
  %v162 = vpop.f32.mrf.mxu0
  %v163 = vadd.f32 %v40, %v162
  %164 = vmatmul.bf16.gmra.mxu0 %v120
  %v165 = vpop.f32.mrf.mxu0
  %v166 = vadd.f32 %v40, %v165
  %v167 = vpop.f32.mrf.mxu0
  %v168 = vadd.f32 %v40, %v167
  %169 = vmatmul.bf16.gmra.mxu0 %v123
  %v170 = vpop.f32.mrf.mxu0
  %v171 = vadd.f32 %v40, %v170
  %v172 = vpop.f32.mrf.mxu0
  %v173 = vadd.f32 %v40, %v172
  %174 = vmatmul.bf16.gmra.mxu0 %v126
  %v175 = vpop.f32.mrf.mxu0
  %v176 = vadd.f32 %v40, %v175
  %v177 = vpop.f32.mrf.mxu0
  %v178 = vadd.f32 %v40, %v177
  %179 = vmatmul.bf16.gmra.mxu0 %v129
  %v180 = vpop.f32.mrf.mxu0
  %v181 = vadd.f32 %v40, %v180
  %v182 = vpop.f32.mrf.mxu0
  %183 = vdwg.mxu0
  %184 = vst [vmem:[%s3] sm:$0xff] %v141
  %185 = vst [vmem:[%s3 + $0x8] sm:$0xff] %v143
  %186 = vst [vmem:[%s3 + $0x10] sm:$0xff] %v146
  %187 = vst [vmem:[%s3 + $0x18] sm:$0xff] %v148
  %188 = vst [vmem:[%s3 + $0x20] sm:$0xff] %v151
  %189 = vst [vmem:[%s3 + $0x28] sm:$0xff] %v153
  %190 = vst [vmem:[%s3 + $0x30] sm:$0xff] %v156
  %191 = vst [vmem:[%s3 + $0x38] sm:$0xff] %v158
  %192 = vst [vmem:[%s3 + $0x40] sm:$0xff] %v161
  %193 = vst [vmem:[%s3 + $0x48] sm:$0xff] %v163
  %194 = vst [vmem:[%s3 + $0x50] sm:$0xff] %v166
  %195 = vst [vmem:[%s3 + $0x58] sm:$0xff] %v168
  %196 = vst [vmem:[%s3 + $0x60] sm:$0xff] %v171
  %197 = vst [vmem:[%s3 + $0x68] sm:$0xff] %v173
  %198 = vst [vmem:[%s3 + $0x70] sm:$0xff] %v176
  %199 = vst [vmem:[%s3 + $0x78] sm:$0xff] %v178
  %200 = vst [vmem:[%s3 + $0x80] sm:$0x3f] %v181
  // Predicated region
  $region14: #{_lambda_.3} parent=0 // pred_check
    _
  $region15: #{_lambda_.3} parent=0 // pred_check_branch
    %202 = sbr.rel (0) target = $region17
  $region16: #{_lambda_.3} parent=0 // pred_region
    _
  $region17: #{_lambda_.3} parent=0 // pred_fallthru
    _
  // Predicated region
  $region18: #{_lambda_.3} parent=0 // pred_check
    _
  $region19: #{_lambda_.3} parent=0 // pred_check_branch
    %204 = sbr.rel (0) target = $region21
  $region20: #{_lambda_.3} parent=0 // pred_region
    _
  $region21: #{_lambda_.3} parent=0 // pred_fallthru
    _

// kernel: _lambda_.4
$region0: #{_lambda_.4}
  #allocation0 [shape = 'u32[]', space=smem, size = 0x4, offset = 0x4, fixed_abs, tag = 'smem constant byte address 0x4 - core index']
  #allocation1 [shape = 'u32[72,128]{1,0:T(1,128)}', space=vmem, size = 0x9000, scoped, tag = 'internal scratch']
  %s0 = inlined_call_operand.vmem [shape: f32[2,40,128], index: 0, kind: input, shape index: {}]
  %s1 = inlined_call_operand.vmem [shape: f32[1,40,128], index: 1, kind: input, shape index: {}]
  %s2 = inlined_call_operand.vmem [shape: f32[1,128], index: 2, kind: input, shape index: {}, may-alias: {2,8}]
  %s3 = inlined_call_operand.vmem [shape: f32[1,128], index: 3, kind: input, shape index: {}, may-alias: {3,7,9,13}]
  %s4 = inlined_call_operand.vmem [shape: bf16[128,384], index: 4, kind: input, shape index: {}]
  %s5 = inlined_call_operand.vmem [shape: f32[1,384], index: 5, kind: input, shape index: {}]
  %s6 = inlined_call_operand.vmem [shape: bf16[128,128], index: 6, kind: input, shape index: {}]
  %s7 = inlined_call_operand.vmem [shape: f32[1,128], index: 7, kind: input, shape index: {}, may-alias: {3,7,9,13}]
  %s8 = inlined_call_operand.vmem [shape: f32[1,128], index: 8, kind: input, shape index: {}, may-alias: {2,8}]
  %s9 = inlined_call_operand.vmem [shape: f32[1,128], index: 9, kind: input, shape index: {}, may-alias: {3,7,9,13}]
  %s10 = inlined_call_operand.vmem [shape: bf16[128,512], index: 10, kind: input, shape index: {}]
  %s11 = inlined_call_operand.vmem [shape: f32[1,512], index: 11, kind: input, shape index: {}]
  %s12 = inlined_call_operand.vmem [shape: bf16[512,128], index: 12, kind: input, shape index: {}]
  %s13 = inlined_call_operand.vmem [shape: f32[1,128], index: 13, kind: input, shape index: {}, may-alias: {3,7,9,13}]
  %s14 = inlined_call_operand.vmem [shape: f32[2,40,128], index: 14, kind: output, shape index: {}]
  %s15 = sld [smem:[#allocation0]]
  $region89: #{_lambda_.4} parent=0
    _
  %s17 = ssub.s32 1, %s15
  %s18 = scalar_select 0, %s17, %s15
  loop: start=0, step=1, limit=4
  $region2: #{_lambda_.4} parent=0 // loop_pre_header
    _
  $region3: #{_lambda_.4} parent=0 // loop_header
    %s20 = sphi 0, %s24
    %p21 = scmp.ge.s32.totalorder %s20, 4
    %s30 = sphi 0, %s32
    %s33 = sphi 0, %s30
    %s34 = sphi 0, %s33
    %s50 = sphi 0, %s34
    %s54 = sphi 0, %s54
    %s56 = sphi 0, %s54
    %s57 = sphi 0, %s56
    %s71 = sphi 0, %s57
    %s75 = sphi 0, %s75
    %s77 = sphi 0, %s75
    %s78 = sphi 0, %s77
    %s92 = sphi 0, %s78
    %s96 = sphi 0, %s96
    %s98 = sphi 0, %s96
    %s99 = sphi 0, %s98
    %s113 = sphi 0, %s99
    %s117 = sphi 0, %s117
    %s119 = sphi 0, %s117
    %s120 = sphi 0, %s119
    %s134 = sphi 0, %s120
    %s138 = sphi 0, %s138
    %s140 = sphi 0, %s138
    %s141 = sphi 0, %s140
    %s155 = sphi 0, %s141
    %s159 = sphi 0, %s159
    %s161 = sphi 0, %s159
    %s162 = sphi 0, %s161
    %s176 = sphi 0, %s162
    %s180 = sphi 0, %s180
    %s182 = sphi 0, %s180
    %s183 = sphi 0, %s182
    %s197 = sphi 0, %s183
    %s201 = sphi 0, %s201
    %s203 = sphi 0, %s201
    %s204 = sphi 0, %s203
    %s218 = sphi 0, %s204
    %s222 = sphi 0, %s222
    %s224 = sphi 0, %s222
    %s225 = sphi 0, %s224
    %s239 = sphi 0, %s225
    %s243 = sphi 0, %s243
    %s245 = sphi 0, %s243
    %s246 = sphi 0, %s245
    %s260 = sphi 0, %s246
    %s264 = sphi 0, %s264
    %s266 = sphi 0, %s264
    %s267 = sphi 0, %s266
    %s281 = sphi 0, %s267
    %s285 = sphi 0, %s285
    %s287 = sphi 0, %s285
    %s288 = sphi 0, %s287
    %s302 = sphi 0, %s288
    %s306 = sphi 0, %s306
    %s308 = sphi 0, %s306
    %s309 = sphi 0, %s308
    %s323 = sphi 0, %s309
    %s329 = sphi 0, %s331
    %s332 = sphi 0, %s329
    %s333 = sphi 0, %s332
    %s349 = sphi 0, %s333
  $region4: #{_lambda_.4} parent=0 // loop_header_branch
    %23 = sbr.rel (%p21) target = $region8
  $region5: #{_lambda_.4} parent=0 // loop_body
    %s25 = ssub.s32 %s20, 1
    %s26 = ssub.s32 %s20, 2
    %s27 = sadd.s32 %s20, 1
    %s28 = ssub.s32 %s20, %s27
    %p29 = scmp.eq.s32.totalorder %s28, 0
    %s31 = sadd.s32 %s30, 1
    %s32 = scalar_select %p29, %s30, %s31
    %p35 = pneg %p29
    %p36 = scmp.eq.s32.totalorder %s20, 1
    %p37 = por %p35, %p36
    %p38 = scmp.ne.s32.totalorder %s30, %s33
    %p39 = scmp.eq.s32.totalorder %s20, 0
    %p40 = por %p38, %p39
    %p41 = scmp.ne.s32.totalorder %s30, %s33
    %p42 = scmp.eq.s32.totalorder %s25, 1
    %p43 = por %p41, %p42
    %p44 = scmp.ne.s32.totalorder %s33, %s34
    %p45 = scmp.eq.s32.totalorder %s25, 0
    %p46 = por %p44, %p45
    %p47 = scmp.ne.s32.totalorder %s33, %s34
    %p48 = scmp.eq.s32.totalorder %s26, 1
    %p49 = por %p47, %p48
    %p51 = scmp.ne.s32.totalorder %s34, %s50
    %p52 = scmp.eq.s32.totalorder %s26, 0
    %p53 = por %p51, %p52
    %s55 = sadd.s32 %s54, 1
    %p58 = scmp.eq.s32.totalorder %s20, 1
    %p59 = scmp.ne.s32.totalorder %s54, %s56
    %p60 = scmp.eq.s32.totalorder %s20, 0
    %p61 = por %p59, %p60
    %p62 = scmp.ne.s32.totalorder %s54, %s56
    %p63 = scmp.eq.s32.totalorder %s25, 1
    %p64 = por %p62, %p63
    %p65 = scmp.ne.s32.totalorder %s56, %s57
    %p66 = scmp.eq.s32.totalorder %s25, 0
    %p67 = por %p65, %p66
    %p68 = scmp.ne.s32.totalorder %s56, %s57
    %p69 = scmp.eq.s32.totalorder %s26, 1
    %p70 = por %p68, %p69
    %p72 = scmp.ne.s32.totalorder %s57, %s71
    %p73 = scmp.eq.s32.totalorder %s26, 0
    %p74 = por %p72, %p73
    %s76 = sadd.s32 %s75, 1
    %p79 = scmp.eq.s32.totalorder %s20, 1
    %p80 = scmp.ne.s32.totalorder %s75, %s77
    %p81 = scmp.eq.s32.totalorder %s20, 0
    %p82 = por %p80, %p81
    %p83 = scmp.ne.s32.totalorder %s75, %s77
    %p84 = scmp.eq.s32.totalorder %s25, 1
    %p85 = por %p83, %p84
    %p86 = scmp.ne.s32.totalorder %s77, %s78
    %p87 = scmp.eq.s32.totalorder %s25, 0
    %p88 = por %p86, %p87
    %p89 = scmp.ne.s32.totalorder %s77, %s78
    %p90 = scmp.eq.s32.totalorder %s26, 1
    %p91 = por %p89, %p90
    %p93 = scmp.ne.s32.totalorder %s78, %s92
    %p94 = scmp.eq.s32.totalorder %s26, 0
    %p95 = por %p93, %p94
    %s97 = sadd.s32 %s96, 1
    %p100 = scmp.eq.s32.totalorder %s20, 1
    %p101 = scmp.ne.s32.totalorder %s96, %s98
    %p102 = scmp.eq.s32.totalorder %s20, 0
    %p103 = por %p101, %p102
    %p104 = scmp.ne.s32.totalorder %s96, %s98
    %p105 = scmp.eq.s32.totalorder %s25, 1
    %p106 = por %p104, %p105
    %p107 = scmp.ne.s32.totalorder %s98, %s99
    %p108 = scmp.eq.s32.totalorder %s25, 0
    %p109 = por %p107, %p108
    %p110 = scmp.ne.s32.totalorder %s98, %s99
    %p111 = scmp.eq.s32.totalorder %s26, 1
    %p112 = por %p110, %p111
    %p114 = scmp.ne.s32.totalorder %s99, %s113
    %p115 = scmp.eq.s32.totalorder %s26, 0
    %p116 = por %p114, %p115
    %s118 = sadd.s32 %s117, 1
    %p121 = scmp.eq.s32.totalorder %s20, 1
    %p122 = scmp.ne.s32.totalorder %s117, %s119
    %p123 = scmp.eq.s32.totalorder %s20, 0
    %p124 = por %p122, %p123
    %p125 = scmp.ne.s32.totalorder %s117, %s119
    %p126 = scmp.eq.s32.totalorder %s25, 1
    %p127 = por %p125, %p126
    %p128 = scmp.ne.s32.totalorder %s119, %s120
    %p129 = scmp.eq.s32.totalorder %s25, 0
    %p130 = por %p128, %p129
    %p131 = scmp.ne.s32.totalorder %s119, %s120
    %p132 = scmp.eq.s32.totalorder %s26, 1
    %p133 = por %p131, %p132
    %p135 = scmp.ne.s32.totalorder %s120, %s134
    %p136 = scmp.eq.s32.totalorder %s26, 0
    %p137 = por %p135, %p136
    %s139 = sadd.s32 %s138, 1
    %p142 = scmp.eq.s32.totalorder %s20, 1
    %p143 = scmp.ne.s32.totalorder %s138, %s140
    %p144 = scmp.eq.s32.totalorder %s20, 0
    %p145 = por %p143, %p144
    %p146 = scmp.ne.s32.totalorder %s138, %s140
    %p147 = scmp.eq.s32.totalorder %s25, 1
    %p148 = por %p146, %p147
    %p149 = scmp.ne.s32.totalorder %s140, %s141
    %p150 = scmp.eq.s32.totalorder %s25, 0
    %p151 = por %p149, %p150
    %p152 = scmp.ne.s32.totalorder %s140, %s141
    %p153 = scmp.eq.s32.totalorder %s26, 1
    %p154 = por %p152, %p153
    %p156 = scmp.ne.s32.totalorder %s141, %s155
    %p157 = scmp.eq.s32.totalorder %s26, 0
    %p158 = por %p156, %p157
    %s160 = sadd.s32 %s159, 1
    %p163 = scmp.eq.s32.totalorder %s20, 1
    %p164 = scmp.ne.s32.totalorder %s159, %s161
    %p165 = scmp.eq.s32.totalorder %s20, 0
    %p166 = por %p164, %p165
    %p167 = scmp.ne.s32.totalorder %s159, %s161
    %p168 = scmp.eq.s32.totalorder %s25, 1
    %p169 = por %p167, %p168
    %p170 = scmp.ne.s32.totalorder %s161, %s162
    %p171 = scmp.eq.s32.totalorder %s25, 0
    %p172 = por %p170, %p171
    %p173 = scmp.ne.s32.totalorder %s161, %s162
    %p174 = scmp.eq.s32.totalorder %s26, 1
    %p175 = por %p173, %p174
    %p177 = scmp.ne.s32.totalorder %s162, %s176
    %p178 = scmp.eq.s32.totalorder %s26, 0
    %p179 = por %p177, %p178
    %s181 = sadd.s32 %s180, 1
    %p184 = scmp.eq.s32.totalorder %s20, 1
    %p185 = scmp.ne.s32.totalorder %s180, %s182
    %p186 = scmp.eq.s32.totalorder %s20, 0
    %p187 = por %p185, %p186
    %p188 = scmp.ne.s32.totalorder %s180, %s182
    %p189 = scmp.eq.s32.totalorder %s25, 1
    %p190 = por %p188, %p189
    %p191 = scmp.ne.s32.totalorder %s182, %s183
    %p192 = scmp.eq.s32.totalorder %s25, 0
    %p193 = por %p191, %p192
    %p194 = scmp.ne.s32.totalorder %s182, %s183
    %p195 = scmp.eq.s32.totalorder %s26, 1
    %p196 = por %p194, %p195
    %p198 = scmp.ne.s32.totalorder %s183, %s197
    %p199 = scmp.eq.s32.totalorder %s26, 0
    %p200 = por %p198, %p199
    %s202 = sadd.s32 %s201, 1
    %p205 = scmp.eq.s32.totalorder %s20, 1
    %p206 = scmp.ne.s32.totalorder %s201, %s203
    %p207 = scmp.eq.s32.totalorder %s20, 0
    %p208 = por %p206, %p207
    %p209 = scmp.ne.s32.totalorder %s201, %s203
    %p210 = scmp.eq.s32.totalorder %s25, 1
    %p211 = por %p209, %p210
    %p212 = scmp.ne.s32.totalorder %s203, %s204
    %p213 = scmp.eq.s32.totalorder %s25, 0
    %p214 = por %p212, %p213
    %p215 = scmp.ne.s32.totalorder %s203, %s204
    %p216 = scmp.eq.s32.totalorder %s26, 1
    %p217 = por %p215, %p216
    %p219 = scmp.ne.s32.totalorder %s204, %s218
    %p220 = scmp.eq.s32.totalorder %s26, 0
    %p221 = por %p219, %p220
    %s223 = sadd.s32 %s222, 1
    %p226 = scmp.eq.s32.totalorder %s20, 1
    %p227 = scmp.ne.s32.totalorder %s222, %s224
    %p228 = scmp.eq.s32.totalorder %s20, 0
    %p229 = por %p227, %p228
    %p230 = scmp.ne.s32.totalorder %s222, %s224
    %p231 = scmp.eq.s32.totalorder %s25, 1
    %p232 = por %p230, %p231
    %p233 = scmp.ne.s32.totalorder %s224, %s225
    %p234 = scmp.eq.s32.totalorder %s25, 0
    %p235 = por %p233, %p234
    %p236 = scmp.ne.s32.totalorder %s224, %s225
    %p237 = scmp.eq.s32.totalorder %s26, 1
    %p238 = por %p236, %p237
    %p240 = scmp.ne.s32.totalorder %s225, %s239
    %p241 = scmp.eq.s32.totalorder %s26, 0
    %p242 = por %p240, %p241
    %s244 = sadd.s32 %s243, 1
    %p247 = scmp.eq.s32.totalorder %s20, 1
    %p248 = scmp.ne.s32.totalorder %s243, %s245
    %p249 = scmp.eq.s32.totalorder %s20, 0
    %p250 = por %p248, %p249
    %p251 = scmp.ne.s32.totalorder %s243, %s245
    %p252 = scmp.eq.s32.totalorder %s25, 1
    %p253 = por %p251, %p252
    %p254 = scmp.ne.s32.totalorder %s245, %s246
    %p255 = scmp.eq.s32.totalorder %s25, 0
    %p256 = por %p254, %p255
    %p257 = scmp.ne.s32.totalorder %s245, %s246
    %p258 = scmp.eq.s32.totalorder %s26, 1
    %p259 = por %p257, %p258
    %p261 = scmp.ne.s32.totalorder %s246, %s260
    %p262 = scmp.eq.s32.totalorder %s26, 0
    %p263 = por %p261, %p262
    %s265 = sadd.s32 %s264, 1
    %p268 = scmp.eq.s32.totalorder %s20, 1
    %p269 = scmp.ne.s32.totalorder %s264, %s266
    %p270 = scmp.eq.s32.totalorder %s20, 0
    %p271 = por %p269, %p270
    %p272 = scmp.ne.s32.totalorder %s264, %s266
    %p273 = scmp.eq.s32.totalorder %s25, 1
    %p274 = por %p272, %p273
    %p275 = scmp.ne.s32.totalorder %s266, %s267
    %p276 = scmp.eq.s32.totalorder %s25, 0
    %p277 = por %p275, %p276
    %p278 = scmp.ne.s32.totalorder %s266, %s267
    %p279 = scmp.eq.s32.totalorder %s26, 1
    %p280 = por %p278, %p279
    %p282 = scmp.ne.s32.totalorder %s267, %s281
    %p283 = scmp.eq.s32.totalorder %s26, 0
    %p284 = por %p282, %p283
    %s286 = sadd.s32 %s285, 1
    %p289 = scmp.eq.s32.totalorder %s20, 1
    %p290 = scmp.ne.s32.totalorder %s285, %s287
    %p291 = scmp.eq.s32.totalorder %s20, 0
    %p292 = por %p290, %p291
    %p293 = scmp.ne.s32.totalorder %s285, %s287
    %p294 = scmp.eq.s32.totalorder %s25, 1
    %p295 = por %p293, %p294
    %p296 = scmp.ne.s32.totalorder %s287, %s288
    %p297 = scmp.eq.s32.totalorder %s25, 0
    %p298 = por %p296, %p297
    %p299 = scmp.ne.s32.totalorder %s287, %s288
    %p300 = scmp.eq.s32.totalorder %s26, 1
    %p301 = por %p299, %p300
    %p303 = scmp.ne.s32.totalorder %s288, %s302
    %p304 = scmp.eq.s32.totalorder %s26, 0
    %p305 = por %p303, %p304
    %s307 = sadd.s32 %s306, 1
    %p310 = scmp.eq.s32.totalorder %s20, 1
    %p311 = scmp.ne.s32.totalorder %s306, %s308
    %p312 = scmp.eq.s32.totalorder %s20, 0
    %p313 = por %p311, %p312
    %p314 = scmp.ne.s32.totalorder %s306, %s308
    %p315 = scmp.eq.s32.totalorder %s25, 1
    %p316 = por %p314, %p315
    %p317 = scmp.ne.s32.totalorder %s308, %s309
    %p318 = scmp.eq.s32.totalorder %s25, 0
    %p319 = por %p317, %p318
    %p320 = scmp.ne.s32.totalorder %s308, %s309
    %p321 = scmp.eq.s32.totalorder %s26, 1
    %p322 = por %p320, %p321
    %p324 = scmp.ne.s32.totalorder %s309, %s323
    %p325 = scmp.eq.s32.totalorder %s26, 0
    %p326 = por %p324, %p325
    %s327 = ssub.s32 %s20, %s27
    %p328 = scmp.eq.s32.totalorder %s327, 0
    %s330 = sadd.s32 %s329, 1
    %s331 = scalar_select %p328, %s329, %s330
    %p334 = pneg %p328
    %p335 = scmp.eq.s32.totalorder %s20, 1
    %p336 = por %p334, %p335
    %p337 = scmp.ne.s32.totalorder %s329, %s332
    %p338 = scmp.eq.s32.totalorder %s20, 0
    %p339 = por %p337, %p338
    %p340 = scmp.ne.s32.totalorder %s329, %s332
    %p341 = scmp.eq.s32.totalorder %s25, 1
    %p342 = por %p340, %p341
    %p343 = scmp.ne.s32.totalorder %s332, %s333
    %p344 = scmp.eq.s32.totalorder %s25, 0
    %p345 = por %p343, %p344
    %p346 = scmp.ne.s32.totalorder %s332, %s333
    %p347 = scmp.eq.s32.totalorder %s26, 1
    %p348 = por %p346, %p347
    %p350 = scmp.ne.s32.totalorder %s333, %s349
    %p351 = scmp.eq.s32.totalorder %s26, 0
    %p352 = por %p350, %p351
    %p353 = scmp.le.s32.totalorder 1, %s20
    %p354 = scmp.lt.s32.totalorder %s20, 3
    %p355 = pnand %p353, %p354
    %p356 = pneg %p355
    // Predicated region
    $region9: #{_lambda_.4} parent=5 // pred_check
      _
    $region10: #{_lambda_.4} parent=5 // pred_check_branch
      %358 = sbr.rel (%p355) target = $region12
    $region11: #{_lambda_.4} parent=5 // pred_region
      %s359 = ssub.s32 %s20, 1
      // Predicated region
      $region13: #{_lambda_.4} parent=11 // pred_check
        %p360 = pneg %p67
      $region14: #{_lambda_.4} parent=11 // pred_check_branch
        %362 = sbr.rel (%p360) target = $region16
      $region15: #{_lambda_.4} parent=11 // pred_region
        _
      $region16: #{_lambda_.4} parent=11 // pred_fallthru
        _
      // Predicated region
      $region17: #{_lambda_.4} parent=11 // pred_check
        %p363 = pneg %p88
      $region18: #{_lambda_.4} parent=11 // pred_check_branch
        %365 = sbr.rel (%p363) target = $region20
      $region19: #{_lambda_.4} parent=11 // pred_region
        _
      $region20: #{_lambda_.4} parent=11 // pred_fallthru
        _
      // Predicated region
      $region21: #{_lambda_.4} parent=11 // pred_check
        %p366 = pneg %p109
      $region22: #{_lambda_.4} parent=11 // pred_check_branch
        %368 = sbr.rel (%p366) target = $region24
      $region23: #{_lambda_.4} parent=11 // pred_region
        _
      $region24: #{_lambda_.4} parent=11 // pred_fallthru
        _
      // Predicated region
      $region25: #{_lambda_.4} parent=11 // pred_check
        %p369 = pneg %p130
      $region26: #{_lambda_.4} parent=11 // pred_check_branch
        %371 = sbr.rel (%p369) target = $region28
      $region27: #{_lambda_.4} parent=11 // pred_region
        _
      $region28: #{_lambda_.4} parent=11 // pred_fallthru
        _
      // Predicated region
      $region29: #{_lambda_.4} parent=11 // pred_check
        %p372 = pneg %p151
      $region30: #{_lambda_.4} parent=11 // pred_check_branch
        %374 = sbr.rel (%p372) target = $region32
      $region31: #{_lambda_.4} parent=11 // pred_region
        _
      $region32: #{_lambda_.4} parent=11 // pred_fallthru
        _
      // Predicated region
      $region33: #{_lambda_.4} parent=11 // pred_check
        %p375 = pneg %p172
      $region34: #{_lambda_.4} parent=11 // pred_check_branch
        %377 = sbr.rel (%p375) target = $region36
      $region35: #{_lambda_.4} parent=11 // pred_region
        _
      $region36: #{_lambda_.4} parent=11 // pred_fallthru
        _
      // Predicated region
      $region37: #{_lambda_.4} parent=11 // pred_check
        %p378 = pneg %p193
      $region38: #{_lambda_.4} parent=11 // pred_check_branch
        %380 = sbr.rel (%p378) target = $region40
      $region39: #{_lambda_.4} parent=11 // pred_region
        _
      $region40: #{_lambda_.4} parent=11 // pred_fallthru
        _
      // Predicated region
      $region41: #{_lambda_.4} parent=11 // pred_check
        %p381 = pneg %p214
      $region42: #{_lambda_.4} parent=11 // pred_check_branch
        %383 = sbr.rel (%p381) target = $region44
      $region43: #{_lambda_.4} parent=11 // pred_region
        _
      $region44: #{_lambda_.4} parent=11 // pred_fallthru
        _
      // Predicated region
      $region45: #{_lambda_.4} parent=11 // pred_check
        %p384 = pneg %p235
      $region46: #{_lambda_.4} parent=11 // pred_check_branch
        %386 = sbr.rel (%p384) target = $region48
      $region47: #{_lambda_.4} parent=11 // pred_region
        _
      $region48: #{_lambda_.4} parent=11 // pred_fallthru
        _
      // Predicated region
      $region49: #{_lambda_.4} parent=11 // pred_check
        %p387 = pneg %p256
      $region50: #{_lambda_.4} parent=11 // pred_check_branch
        %389 = sbr.rel (%p387) target = $region52
      $region51: #{_lambda_.4} parent=11 // pred_region
        _
      $region52: #{_lambda_.4} parent=11 // pred_fallthru
        _
      // Predicated region
      $region53: #{_lambda_.4} parent=11 // pred_check
        %p390 = pneg %p277
      $region54: #{_lambda_.4} parent=11 // pred_check_branch
        %392 = sbr.rel (%p390) target = $region56
      $region55: #{_lambda_.4} parent=11 // pred_region
        _
      $region56: #{_lambda_.4} parent=11 // pred_fallthru
        _
      // Predicated region
      $region57: #{_lambda_.4} parent=11 // pred_check
        %p393 = pneg %p298
      $region58: #{_lambda_.4} parent=11 // pred_check_branch
        %395 = sbr.rel (%p393) target = $region60
      $region59: #{_lambda_.4} parent=11 // pred_region
        _
      $region60: #{_lambda_.4} parent=11 // pred_fallthru
        _
      // Predicated region
      $region61: #{_lambda_.4} parent=11 // pred_check
        %p396 = pneg %p319
      $region62: #{_lambda_.4} parent=11 // pred_check_branch
        %398 = sbr.rel (%p396) target = $region64
      $region63: #{_lambda_.4} parent=11 // pred_region
        _
      $region64: #{_lambda_.4} parent=11 // pred_fallthru
        _
    $region12: #{_lambda_.4} parent=5 // pred_fallthru
      _
    %p399 = scmp.lt.s32.totalorder %s20, 2
    // Predicated region
    $region65: #{_lambda_.4} parent=5 // pred_check
      %p400 = pneg %p399
    $region66: #{_lambda_.4} parent=5 // pred_check_branch
      %402 = sbr.rel (%p400) target = $region68
    $region67: #{_lambda_.4} parent=5 // pred_region
      // Predicated region
      $region69: #{_lambda_.4} parent=67 // pred_check
        %p403 = pneg %p40
      $region70: #{_lambda_.4} parent=67 // pred_check_branch
        %405 = sbr.rel (%p403) target = $region72
      $region71: #{_lambda_.4} parent=67 // pred_region
        %p406 = scmp.lt.s32.totalorder %s20, 1
        %s407 = scalar_select %p406, %s20, 1
        %s408 = smul.addr %s407, 5
        %s409 = smul.addr %s408, 8
        %s410 = scalar_lea.vmem %s0, %s409
      $region72: #{_lambda_.4} parent=67 // pred_fallthru
        _
    $region68: #{_lambda_.4} parent=5 // pred_fallthru
      _
    %p411 = scmp.le.s32.totalorder 1, %s20
    %p412 = scmp.lt.s32.totalorder %s20, 3
    %p413 = pnand %p411, %p412
    %p414 = pneg %p413
    // Predicated region
    $region73: #{_lambda_.4} parent=5 // pred_check
      _
    $region74: #{_lambda_.4} parent=5 // pred_check_branch
      %416 = sbr.rel (%p413) target = $region76
    $region75: #{_lambda_.4} parent=5 // pred_region
      %s417 = ssub.s32 %s20, 1
      %p418 = scmp.lt.s32.totalorder %s25, 1
      %s419 = scalar_select %p418, %s25, 1
      %s420 = smul.addr %s419, 5
      %s421 = smul.addr %s420, 8
      %s422 = scalar_lea.vmem %s0, %s421
      %p423 = pneg %p46
      %p424 = pneg %p43
      %p425 = pneg %p67
      %p426 = pneg %p64
      %p427 = pneg %p88
      %p428 = pneg %p85
      %p429 = pneg %p109
      %p430 = pneg %p106
      %p431 = pneg %p130
      %p432 = pneg %p127
      %p433 = pneg %p151
      %p434 = pneg %p148
      %p435 = pneg %p172
      %p436 = pneg %p169
      %p437 = pneg %p193
      %p438 = pneg %p190
      %p439 = pneg %p214
      %p440 = pneg %p211
      %p441 = pneg %p235
      %p442 = pneg %p232
      %p443 = pneg %p256
      %p444 = pneg %p253
      %p445 = pneg %p277
      %p446 = pneg %p274
      %p447 = pneg %p298
      %p448 = pneg %p295
      %p449 = pneg %p319
      %p450 = pneg %p316
      %p451 = pneg %p345
      %p452 = pneg %p342
      %p453 = scmp.lt.s32.totalorder %s25, 1
      %s454 = scalar_select %p453, %s25, 1
      %s455 = smul.addr %s454, 5
      %s456 = smul.addr %s455, 8
      %s457 = scalar_lea.vmem %s14, %s456
      %p458 = scmp.lt.s32.totalorder %s25, 1
      %s459 = scalar_select %p458, %s25, 1
      %s460 = smul.addr %s459, 5
      %s461 = smul.addr %s460, 8
      %s462 = scalar_lea.vmem %s0, %s461
      %p463 = scmp.lt.s32.totalorder %s25, 1
      %s464 = scalar_select %p463, %s25, 1
      %s465 = smul.addr %s464, 5
      %s466 = smul.addr %s465, 8
      %s467 = scalar_lea.vmem %s14, %s466
      %v469 = vld [vmem:[%s462] sm:$0xff]
      %v470 = vld [vmem:[%s462 + $0x8] sm:$0xff]
      %v471 = vld [vmem:[%s462 + $0x10] sm:$0xff]
      %v472 = vld [vmem:[%s462 + $0x18] sm:$0xff]
      %v473 = vld [vmem:[%s462 + $0x20] sm:$0xff]
      %v474 = vld [vmem:[%s1] sm:$0xff]
      %v475 = vld [vmem:[%s1 + $0x8] sm:$0xff]
      %v476 = vld [vmem:[%s1 + $0x10] sm:$0xff]
      %v477 = vld [vmem:[%s1 + $0x18] sm:$0xff]
      %v478 = vld [vmem:[%s1 + $0x20] sm:$0xff]
      %v479 = vadd.f32 %v469, %v474
      %v480 = vadd.f32 %v470, %v475
      %v481 = vadd.f32 %v471, %v476
      %v482 = vadd.f32 %v472, %v477
      %v483 = vadd.f32 %v473, %v478
      %v484 = vld [vmem:[%s2] sm:$0x1]
      %v485 = vld [vmem:[%s3] sm:$0x1]
      %486 = vadd.xlane.f32.xlu0 %v479
      %v487 = vpop.xlane.xlu0 %486
      %488 = vadd.xlane.f32.xlu0 %v480
      %v489 = vpop.xlane.xlu0 %488
      %490 = vadd.xlane.f32.xlu0 %v481
      %v491 = vpop.xlane.xlu0 %490
      %492 = vadd.xlane.f32.xlu0 %v482
      %v493 = vpop.xlane.xlu0 %492
      %494 = vadd.xlane.f32.xlu0 %v483
      %v495 = vpop.xlane.xlu0 %494
      %v496 = vrcp.pop 128.0
      %v497 = vmul.f32 128.0, %v496
      %v498 = vsub.f32 1.0, %v497
      %v499 = vmul.f32 %v496, %v498
      %v500 = vadd.f32 %v496, %v499
      %vm501 = vweird.f32 %v496
      %v502 = vsel %vm501, %v496, %v500
      %v503 = vmul.f32 %v487, %v502
      %v504 = vmul.f32 %v489, %v502
      %v505 = vmul.f32 %v491, %v502
      %v506 = vmul.f32 %v493, %v502
      %v507 = vmul.f32 %v495, %v502
      %v508 = vsub.f32 %v479, %v503
      %v509 = vsub.f32 %v480, %v504
      %v510 = vsub.f32 %v481, %v505
      %v511 = vsub.f32 %v482, %v506
      %v512 = vsub.f32 %v483, %v507
      %v513 = vmul.f32 %v508, %v508
      %v514 = vmul.f32 %v509, %v509
      %v515 = vmul.f32 %v510, %v510
      %v516 = vmul.f32 %v511, %v511
      %v517 = vmul.f32 %v512, %v512
      %518 = vadd.xlane.f32.xlu0 %v513
      %v519 = vpop.xlane.xlu0 %518
      %520 = vadd.xlane.f32.xlu0 %v514
      %v521 = vpop.xlane.xlu0 %520
      %522 = vadd.xlane.f32.xlu0 %v515
      %v523 = vpop.xlane.xlu0 %522
      %524 = vadd.xlane.f32.xlu0 %v516
      %v525 = vpop.xlane.xlu0 %524
      %526 = vadd.xlane.f32.xlu0 %v517
      %v527 = vpop.xlane.xlu0 %526
      %v528 = vmul.f32 %v519, %v502
      %v529 = vmul.f32 %v521, %v502
      %v530 = vmul.f32 %v523, %v502
      %v531 = vmul.f32 %v525, %v502
      %v532 = vmul.f32 %v527, %v502
      %v533 = vadd.f32 %v528, 1e-06
      %v534 = vadd.f32 %v529, 1e-06
      %v535 = vadd.f32 %v530, 1e-06
      %v536 = vadd.f32 %v531, 1e-06
      %v537 = vadd.f32 %v532, 1e-06
      %v538 = vrsqrt.pop %v533
      %v539 = vmul.f32 %v538, %v533
      %v540 = vmul.f32 %v539, %v538
      %v541 = vmul.f32 0.5, %v540
      %v542 = vsub.f32 1.5, %v541
      %v543 = vmul.f32 %v538, %v542
      %vm544 = vweird.f32 %v533
      %vm545 = vweird.f32 %v538
      %vm546 = vmor %vm544, %vm545
      %v547 = vsel %vm546, %v538, %v543
      %v548 = vrsqrt.pop %v534
      %v549 = vmul.f32 %v548, %v534
      %v550 = vmul.f32 %v549, %v548
      %v551 = vmul.f32 0.5, %v550
      %v552 = vsub.f32 1.5, %v551
      %v553 = vmul.f32 %v548, %v552
      %vm554 = vweird.f32 %v534
      %vm555 = vweird.f32 %v548
      %vm556 = vmor %vm554, %vm555
      %v557 = vsel %vm556, %v548, %v553
      %v558 = vrsqrt.pop %v535
      %v559 = vmul.f32 %v558, %v535
      %v560 = vmul.f32 %v559, %v558
      %v561 = vmul.f32 0.5, %v560
      %v562 = vsub.f32 1.5, %v561
      %v563 = vmul.f32 %v558, %v562
      %vm564 = vweird.f32 %v535
      %vm565 = vweird.f32 %v558
      %vm566 = vmor %vm564, %vm565
      %v567 = vsel %vm566, %v558, %v563
      %v568 = vrsqrt.pop %v536
      %v569 = vmul.f32 %v568, %v536
      %v570 = vmul.f32 %v569, %v568
      %v571 = vmul.f32 0.5, %v570
      %v572 = vsub.f32 1.5, %v571
      %v573 = vmul.f32 %v568, %v572
      %vm574 = vweird.f32 %v536
      %vm575 = vweird.f32 %v568
      %vm576 = vmor %vm574, %vm575
      %v577 = vsel %vm576, %v568, %v573
      %v578 = vrsqrt.pop %v537
      %v579 = vmul.f32 %v578, %v537
      %v580 = vmul.f32 %v579, %v578
      %v581 = vmul.f32 0.5, %v580
      %v582 = vsub.f32 1.5, %v581
      %v583 = vmul.f32 %v578, %v582
      %vm584 = vweird.f32 %v537
      %vm585 = vweird.f32 %v578
      %vm586 = vmor %vm584, %vm585
      %v587 = vsel %vm586, %v578, %v583
      %v588 = vmul.f32 %v508, %v547
      %v589 = vmul.f32 %v509, %v557
      %v590 = vmul.f32 %v510, %v567
      %v591 = vmul.f32 %v511, %v577
      %v592 = vmul.f32 %v512, %v587
      %v594 = vperm.slane %v484, 0
      %v596 = vmul.f32 %v588, %v594
      %v597 = vmul.f32 %v589, %v594
      %v598 = vmul.f32 %v590, %v594
      %v599 = vmul.f32 %v591, %v594
      %v600 = vmul.f32 %v592, %v594
      %v602 = vperm.slane %v485, 0
      %v604 = vadd.f32 %v596, %v602
      %v605 = vadd.f32 %v597, %v602
      %v606 = vadd.f32 %v598, %v602
      %v607 = vadd.f32 %v599, %v602
      %v608 = vadd.f32 %v600, %v602
      %v609 = vpack.c.bf16 %v605, %v604
      %v610 = vpack.c.bf16 %v607, %v606
      %v611 = vpack.c.bf16 %v608, %v608
      %v612 = vld [vmem:[%s4] sm:$0xff]
      %v613 = vld [vmem:[%s4 + $0x8] sm:$0xf]
      %v614 = vld [vmem:[%s4 + $0xc] sm:$0xff]
      %v615 = vld [vmem:[%s4 + $0x14] sm:$0xf]
      %v616 = vld [vmem:[%s4 + $0x18] sm:$0xff]
      %v617 = vld [vmem:[%s4 + $0x20] sm:$0xf]
      %v618 = vld [vmem:[%s4 + $0x24] sm:$0xff]
      %v619 = vld [vmem:[%s4 + $0x2c] sm:$0xf]
      %v620 = vld [vmem:[%s4 + $0x30] sm:$0xff]
      %v621 = vld [vmem:[%s4 + $0x38] sm:$0xf]
      %v622 = vld [vmem:[%s4 + $0x3c] sm:$0xff]
      %v623 = vld [vmem:[%s4 + $0x44] sm:$0xf]
      %v624 = vld [vmem:[%s4 + $0x48] sm:$0xff]
      %v625 = vld [vmem:[%s4 + $0x50] sm:$0xf]
      %v626 = vld [vmem:[%s4 + $0x54] sm:$0xff]
      %v627 = vld [vmem:[%s4 + $0x5c] sm:$0xf]
      %v628 = vld [vmem:[%s4 + $0x60] sm:$0xff]
      %v629 = vld [vmem:[%s4 + $0x68] sm:$0xf]
      %v630 = vld [vmem:[%s4 + $0x6c] sm:$0xff]
      %v631 = vld [vmem:[%s4 + $0x74] sm:$0xf]
      %v632 = vld [vmem:[%s4 + $0x78] sm:$0xff]
      %v633 = vld [vmem:[%s4 + $0x80] sm:$0xf]
      %v634 = vld [vmem:[%s4 + $0x84] sm:$0xff]
      %v635 = vld [vmem:[%s4 + $0x8c] sm:$0xf]
      %v636 = vld [vmem:[%s4 + $0x90] sm:$0xff]
      %v637 = vld [vmem:[%s4 + $0x98] sm:$0xf]
      %v638 = vld [vmem:[%s4 + $0x9c] sm:$0xff]
      %v639 = vld [vmem:[%s4 + $0xa4] sm:$0xf]
      %v640 = vld [vmem:[%s4 + $0xa8] sm:$0xff]
      %v641 = vld [vmem:[%s4 + $0xb0] sm:$0xf]
      %v642 = vld [vmem:[%s4 + $0xb4] sm:$0xff]
      %v643 = vld [vmem:[%s4 + $0xbc] sm:$0xf]
      %v644 = vld [vmem:[%s5] sm:$0x7]
      %v646 = vperm.slane %v644, 0
      %v647 = vperm.slane %v644, 1
      %v648 = vperm.slane %v644, 2
      %v684 = vunpack.c.l.b16 %v612
      %v685 = vunpack.c.h.b16 %v612
      %v686 = vunpack.c.l.b16 %v613
      %v687 = vunpack.c.l.b16 %v614
      %v688 = vunpack.c.h.b16 %v614
      %v689 = vunpack.c.l.b16 %v615
      %v690 = vunpack.c.l.b16 %v616
      %v691 = vunpack.c.h.b16 %v616
      %v692 = vunpack.c.l.b16 %v617
      %v693 = vunpack.c.l.b16 %v618
      %v694 = vunpack.c.h.b16 %v618
      %v695 = vunpack.c.l.b16 %v619
      %v696 = vunpack.c.l.b16 %v620
      %v697 = vunpack.c.h.b16 %v620
      %v698 = vunpack.c.l.b16 %v621
      %v699 = vunpack.c.l.b16 %v622
      %v700 = vunpack.c.h.b16 %v622
      %v701 = vunpack.c.l.b16 %v623
      %v702 = vunpack.c.l.b16 %v624
      %v703 = vunpack.c.h.b16 %v624
      %v704 = vunpack.c.l.b16 %v625
      %v705 = vunpack.c.l.b16 %v626
      %v706 = vunpack.c.h.b16 %v626
      %v707 = vunpack.c.l.b16 %v627
      %v708 = vunpack.c.l.b16 %v628
      %v709 = vunpack.c.h.b16 %v628
      %v710 = vunpack.c.l.b16 %v629
      %v711 = vunpack.c.l.b16 %v630
      %v712 = vunpack.c.h.b16 %v630
      %v713 = vunpack.c.l.b16 %v631
      %v714 = vunpack.c.l.b16 %v632
      %v715 = vunpack.c.h.b16 %v632
      %v716 = vunpack.c.l.b16 %v633
      %v717 = vunpack.c.l.b16 %v634
      %v718 = vunpack.c.h.b16 %v634
      %v719 = vunpack.c.l.b16 %v635
      %v720 = vunpack.c.l.b16 %v636
      %v721 = vunpack.c.h.b16 %v636
      %v722 = vunpack.c.l.b16 %v637
      %v723 = vunpack.c.l.b16 %v638
      %v724 = vunpack.c.h.b16 %v638
      %v725 = vunpack.c.l.b16 %v639
      %v726 = vunpack.c.l.b16 %v640
      %v727 = vunpack.c.h.b16 %v640
      %v728 = vunpack.c.l.b16 %v641
      %v729 = vunpack.c.l.b16 %v642
      %v730 = vunpack.c.h.b16 %v642
      %v731 = vunpack.c.l.b16 %v643
      %v732 = vpack.c.b16 %v687, %v684
      %v733 = vpack.c.b16 %v688, %v685
      %v734 = vpack.c.b16 %v689, %v686
      %v735 = vpack.c.b16 %v693, %v690
      %v736 = vpack.c.b16 %v694, %v691
      %v737 = vpack.c.b16 %v695, %v692
      %v738 = vpack.c.b16 %v699, %v696
      %v739 = vpack.c.b16 %v700, %v697
      %v740 = vpack.c.b16 %v701, %v698
      %v741 = vpack.c.b16 %v705, %v702
      %v742 = vpack.c.b16 %v706, %v703
      %v743 = vpack.c.b16 %v707, %v704
      %v744 = vpack.c.b16 %v711, %v708
      %v745 = vpack.c.b16 %v712, %v709
      %v746 = vpack.c.b16 %v713, %v710
      %v747 = vpack.c.b16 %v717, %v714
      %v748 = vpack.c.b16 %v718, %v715
      %v749 = vpack.c.b16 %v719, %v716
      %v750 = vpack.c.b16 %v723, %v720
      %v751 = vpack.c.b16 %v724, %v721
      %v752 = vpack.c.b16 %v725, %v722
      %v753 = vpack.c.b16 %v729, %v726
      %v754 = vpack.c.b16 %v730, %v727
      %v755 = vpack.c.b16 %v731, %v728
      %780 = vmatpush.bf16.msra.mxu0 %v753
      %781 = vmatpush.bf16.msra.mxu0 %v750
      %782 = vmatpush.bf16.msra.mxu0 %v747
      %783 = vmatpush.bf16.msra.mxu0 %v744
      %784 = vmatpush.bf16.msra.mxu0 %v741
      %785 = vmatpush.bf16.msra.mxu0 %v738
      %786 = vmatpush.bf16.msra.mxu0 %v735
      %787 = vmatpush.bf16.msra.mxu0 %v732
      %788 = vmatmul.bf16.gmra.mxu0 %v609
      %v789 = vpop.f32.mrf.mxu0
      %v790 = vadd.f32 %v646, %v789
      %v791 = vpop.f32.mrf.mxu0
      %v792 = vadd.f32 %v646, %v791
      %793 = vmatmul.bf16.gmra.mxu0 %v610
      %v794 = vpop.f32.mrf.mxu0
      %v795 = vadd.f32 %v646, %v794
      %v796 = vpop.f32.mrf.mxu0
      %v797 = vadd.f32 %v646, %v796
      %798 = vmatmul.bf16.gmra.mxu0 %v611
      %v799 = vpop.f32.mrf.mxu0
      %v800 = vadd.f32 %v646, %v799
      %v801 = vpop.f32.mrf.mxu0
      %802 = vdwg.mxu0
      %803 = vmatpush.bf16.msra.mxu0 %v754
      %804 = vmatpush.bf16.msra.mxu0 %v751
      %805 = vmatpush.bf16.msra.mxu0 %v748
      %806 = vmatpush.bf16.msra.mxu0 %v745
      %807 = vmatpush.bf16.msra.mxu0 %v742
      %808 = vmatpush.bf16.msra.mxu0 %v739
      %809 = vmatpush.bf16.msra.mxu0 %v736
      %810 = vmatpush.bf16.msra.mxu0 %v733
      %811 = vmatmul.bf16.gmra.mxu0 %v609
      %v812 = vpop.f32.mrf.mxu0
      %v813 = vadd.f32 %v647, %v812
      %v814 = vpop.f32.mrf.mxu0
      %v815 = vadd.f32 %v647, %v814
      %816 = vmatmul.bf16.gmra.mxu0 %v610
      %v817 = vpop.f32.mrf.mxu0
      %v818 = vadd.f32 %v647, %v817
      %v819 = vpop.f32.mrf.mxu0
      %v820 = vadd.f32 %v647, %v819
      %821 = vmatmul.bf16.gmra.mxu0 %v611
      %v822 = vpop.f32.mrf.mxu0
      %v823 = vadd.f32 %v647, %v822
      %v824 = vpop.f32.mrf.mxu0
      %825 = vdwg.mxu0
      %826 = vmatpush.bf16.msra.mxu0 %v755
      %827 = vmatpush.bf16.msra.mxu0 %v752
      %828 = vmatpush.bf16.msra.mxu0 %v749
      %829 = vmatpush.bf16.msra.mxu0 %v746
      %830 = vmatpush.bf16.msra.mxu0 %v743
      %831 = vmatpush.bf16.msra.mxu0 %v740
      %832 = vmatpush.bf16.msra.mxu0 %v737
      %833 = vmatpush.bf16.msra.mxu0 %v734
      %834 = vmatmul.bf16.gmra.mxu0 %v609
      %v835 = vpop.f32.mrf.mxu0
      %v836 = vadd.f32 %v648, %v835
      %v837 = vpop.f32.mrf.mxu0
      %v838 = vadd.f32 %v648, %v837
      %839 = vmatmul.bf16.gmra.mxu0 %v610
      %v840 = vpop.f32.mrf.mxu0
      %v841 = vadd.f32 %v648, %v840
      %v842 = vpop.f32.mrf.mxu0
      %v843 = vadd.f32 %v648, %v842
      %844 = vmatmul.bf16.gmra.mxu0 %v611
      %v845 = vpop.f32.mrf.mxu0
      %v846 = vadd.f32 %v648, %v845
      %v847 = vpop.f32.mrf.mxu0
      %848 = vdwg.mxu0
      %v849 = vmul.f32 %v790, 0.17677669
      %v850 = vmul.f32 %v792, 0.17677669
      %v851 = vmul.f32 %v795, 0.17677669
      %v852 = vmul.f32 %v797, 0.17677669
      %v853 = vmul.f32 %v800, 0.17677669
      %v854 = vpack.c.bf16 %v849, %v849
      %v855 = vpack.c.bf16 %v850, %v850
      %v856 = vpack.c.bf16 %v851, %v851
      %v857 = vpack.c.bf16 %v852, %v852
      %v858 = vpack.c.bf16 %v853, %v853
      %v859 = vpack.c.bf16 %v813, %v813
      %v860 = vpack.c.bf16 %v815, %v815
      %v861 = vpack.c.bf16 %v818, %v818
      %v862 = vpack.c.bf16 %v820, %v820
      %v863 = vpack.c.bf16 %v823, %v823
      %v864 = vpack.c.bf16 %v836, %v836
      %v865 = vpack.c.bf16 %v838, %v838
      %v866 = vpack.c.bf16 %v841, %v841
      %v867 = vpack.c.bf16 %v843, %v843
      %v868 = vpack.c.bf16 %v846, %v846
      %v869 = vlaneseq
      %v870 = vand.u32 %v869, 127
      %vm871 = vcmp.lt.s32.totalorder %v870, 35
      %v872 = vsel %vm871, 0.0, -1e+30
      %v878 = vunpack.c.l.b16 %v854
      %v879 = vunpack.c.l.b16 %v855
      %v880 = vunpack.c.l.b16 %v856
      %v881 = vunpack.c.l.b16 %v857
      %v882 = vunpack.c.l.b16 %v858
      %v883 = vpack.c.b16 %v879, %v878
      %v884 = vpack.c.b16 %v881, %v880
      %v885 = vpack.c.b16 %v882, %v882
      %v891 = vunpack.c.l.b16 %v859
      %v892 = vunpack.c.l.b16 %v860
      %v893 = vunpack.c.l.b16 %v861
      %v894 = vunpack.c.l.b16 %v862
      %v895 = vunpack.c.l.b16 %v863
      %v896 = vpack.c.b16 %v892, %v891
      %v897 = vpack.c.b16 %v894, %v893
      %v898 = vpack.c.b16 %v895, %v895
      %vm899 = vcmask 261120
      %v901 = vsel %vm899, %v883, 0
      %v904 = vsel %vm899, %v884, 0
      %v907 = vsel %vm899, %v885, 0
      %v910 = vsel %vm899, %v896, 0
      %v913 = vsel %vm899, %v897, 0
      %v916 = vsel %vm899, %v898, 0
      %918 = vmatpush.bf16.xpose.msra.mxu0 0
      %919 = vmatpush.bf16.xpose.msra.mxu0 0
      %920 = vmatpush.bf16.xpose.msra.mxu0 0
      %921 = vmatpush.bf16.xpose.msra.mxu0 0
      %922 = vmatpush.bf16.xpose.msra.mxu0 0
      %923 = vmatpush.bf16.xpose.msra.mxu0 %v916
      %924 = vmatpush.bf16.xpose.msra.mxu0 %v913
      %925 = vmatpush.bf16.xpose.msra.mxu0 %v910
      %926 = vmatmul.bf16.gmra.mxu0 %v901
      %v927 = vpop.f32.mrf.mxu0
      %v928 = vadd.f32 %v872, %v927
      %v929 = vpop.f32.mrf.mxu0
      %v930 = vadd.f32 %v872, %v929
      %931 = vmatmul.bf16.gmra.mxu0 %v904
      %v932 = vpop.f32.mrf.mxu0
      %v933 = vadd.f32 %v872, %v932
      %v934 = vpop.f32.mrf.mxu0
      %v935 = vadd.f32 %v872, %v934
      %936 = vmatmul.bf16.gmra.mxu0 %v907
      %v937 = vpop.f32.mrf.mxu0
      %v938 = vadd.f32 %v872, %v937
      %v939 = vpop.f32.mrf.mxu0
      %940 = vdwg.mxu0
      %vm941 = vcmask 326656
      %v942 = vsel %vm941, %v928, -inf
      %943 = vmax.xlane.f32.xlu0 %v942
      %v944 = vpop.xlane.xlu0 %943
      %v945 = vsel %vm941, %v930, -inf
      %946 = vmax.xlane.f32.xlu0 %v945
      %v947 = vpop.xlane.xlu0 %946
      %v948 = vsel %vm941, %v933, -inf
      %949 = vmax.xlane.f32.xlu0 %v948
      %v950 = vpop.xlane.xlu0 %949
      %v951 = vsel %vm941, %v935, -inf
      %952 = vmax.xlane.f32.xlu0 %v951
      %v953 = vpop.xlane.xlu0 %952
      %v954 = vsel %vm941, %v938, -inf
      %955 = vmax.xlane.f32.xlu0 %v954
      %v956 = vpop.xlane.xlu0 %955
      %v957 = vsub.f32 %v928, %v944
      %v958 = vsub.f32 %v930, %v947
      %v959 = vsub.f32 %v933, %v950
      %v960 = vsub.f32 %v935, %v953
      %v961 = vsub.f32 %v938, %v956
      %v962 = vmul.f32 %v957, 1.442695
      %v963 = vpow.pop %v962
      %v964 = vmul.f32 %v958, 1.442695
      %v965 = vpow.pop %v964
      %v966 = vmul.f32 %v959, 1.442695
      %v967 = vpow.pop %v966
      %v968 = vmul.f32 %v960, 1.442695
      %v969 = vpow.pop %v968
      %v970 = vmul.f32 %v961, 1.442695
      %v971 = vpow.pop %v970
      %v972 = vsel %vm941, %v963, 0.0
      %973 = vadd.xlane.f32.xlu0 %v972
      %v974 = vpop.xlane.xlu0 %973
      %v975 = vsel %vm941, %v965, 0.0
      %976 = vadd.xlane.f32.xlu0 %v975
      %v977 = vpop.xlane.xlu0 %976
      %v978 = vsel %vm941, %v967, 0.0
      %979 = vadd.xlane.f32.xlu0 %v978
      %v980 = vpop.xlane.xlu0 %979
      %v981 = vsel %vm941, %v969, 0.0
      %982 = vadd.xlane.f32.xlu0 %v981
      %v983 = vpop.xlane.xlu0 %982
      %v984 = vsel %vm941, %v971, 0.0
      %985 = vadd.xlane.f32.xlu0 %v984
      %v986 = vpop.xlane.xlu0 %985
      %v987 = vrcp.pop %v974
      %v988 = vrcp.pop %v977
      %v989 = vrcp.pop %v980
      %v990 = vrcp.pop %v983
      %v991 = vrcp.pop %v986
      %v992 = vmul.f32 %v963, %v987
      %v993 = vmul.f32 %v965, %v988
      %v994 = vmul.f32 %v967, %v989
      %v995 = vmul.f32 %v969, %v990
      %v996 = vmul.f32 %v971, %v991
      %v997 = vpack.c.bf16 %v993, %v992
      %v998 = vpack.c.bf16 %v995, %v994
      %v999 = vpack.c.bf16 %v996, %v996
      %v1005 = vunpack.c.l.b16 %v864
      %v1006 = vunpack.c.l.b16 %v865
      %v1007 = vunpack.c.l.b16 %v866
      %v1008 = vunpack.c.l.b16 %v867
      %v1009 = vunpack.c.l.b16 %v868
      %v1010 = vpack.c.b16 %v1006, %v1005
      %v1011 = vpack.c.b16 %v1008, %v1007
      %v1012 = vpack.c.b16 %v1009, %v1009
      %v1016 = vsel %vm941, %v997, 0
      %v1019 = vsel %vm941, %v998, 0
      %v1022 = vsel %vm941, %v999, 0
      %vm1024 = vcmask 1043456
      %v1026 = vsel %vm1024, %v1012, 0
      %1028 = vmatpush.bf16.msra.mxu0 0
      %1029 = vmatpush.bf16.msra.mxu0 0
      %1030 = vmatpush.bf16.msra.mxu0 0
      %1031 = vmatpush.bf16.msra.mxu0 0
      %1032 = vmatpush.bf16.msra.mxu0 0
      %1033 = vmatpush.bf16.msra.mxu0 %v1026
      %1034 = vmatpush.bf16.msra.mxu0 %v1011
      %1035 = vmatpush.bf16.msra.mxu0 %v1010
      %1036 = vmatmul.bf16.gmra.mxu0 %v1016
      %v1037 = vpop.f32.mrf.mxu0
      %v1038 = vadd.f32 0.0, %v1037
      %v1039 = vpop.f32.mrf.mxu0
      %v1040 = vadd.f32 0.0, %v1039
      %1041 = vmatmul.bf16.gmra.mxu0 %v1019
      %v1042 = vpop.f32.mrf.mxu0
      %v1043 = vadd.f32 0.0, %v1042
      %v1044 = vpop.f32.mrf.mxu0
      %v1045 = vadd.f32 0.0, %v1044
      %1046 = vmatmul.bf16.gmra.mxu0 %v1022
      %v1047 = vpop.f32.mrf.mxu0
      %v1048 = vadd.f32 0.0, %v1047
      %v1049 = vpop.f32.mrf.mxu0
      %1050 = vdwg.mxu0
      %v1051 = vpack.c.bf16 %v1040, %v1038
      %v1052 = vpack.c.bf16 %v1045, %v1043
      %v1053 = vpack.c.bf16 %v1048, %v1048
      %v1054 = vld [vmem:[%s6] sm:$0xf]
      %v1055 = vld [vmem:[%s6 + $0x4] sm:$0xf]
      %v1056 = vld [vmem:[%s6 + $0x8] sm:$0xf]
      %v1057 = vld [vmem:[%s6 + $0xc] sm:$0xf]
      %1058 = vrot.lane.b32.xlu0 %v883, 96
      %v1059 = vpop.permute.xlu0 %1058
      %1060 = vrot.lane.b32.xlu0 %v884, 96
      %v1061 = vpop.permute.xlu0 %1060
      %1062 = vrot.lane.b32.xlu0 %v885, 96
      %v1063 = vpop.permute.xlu0 %1062
      %1064 = vrot.lane.b32.xlu0 %v896, 96
      %v1065 = vpop.permute.xlu0 %1064
      %1066 = vrot.lane.b32.xlu0 %v897, 96
      %v1067 = vpop.permute.xlu0 %1066
      %1068 = vrot.lane.b32.xlu0 %v898, 96
      %v1069 = vpop.permute.xlu0 %1068
      %v1071 = vsel %vm899, %v1059, 0
      %v1074 = vsel %vm899, %v1061, 0
      %v1077 = vsel %vm899, %v1063, 0
      %v1080 = vsel %vm899, %v1065, 0
      %v1083 = vsel %vm899, %v1067, 0
      %v1086 = vsel %vm899, %v1069, 0
      %1088 = vmatpush.bf16.xpose.msra.mxu0 0
      %1089 = vmatpush.bf16.xpose.msra.mxu0 0
      %1090 = vmatpush.bf16.xpose.msra.mxu0 0
      %1091 = vmatpush.bf16.xpose.msra.mxu0 0
      %1092 = vmatpush.bf16.xpose.msra.mxu0 0
      %1093 = vmatpush.bf16.xpose.msra.mxu0 %v1086
      %1094 = vmatpush.bf16.xpose.msra.mxu0 %v1083
      %1095 = vmatpush.bf16.xpose.msra.mxu0 %v1080
      %1096 = vmatmul.bf16.gmra.mxu0 %v1071
      %v1097 = vpop.f32.mrf.mxu0
      %v1098 = vadd.f32 %v872, %v1097
      %v1099 = vpop.f32.mrf.mxu0
      %v1100 = vadd.f32 %v872, %v1099
      %1101 = vmatmul.bf16.gmra.mxu0 %v1074
      %v1102 = vpop.f32.mrf.mxu0
      %v1103 = vadd.f32 %v872, %v1102
      %v1104 = vpop.f32.mrf.mxu0
      %v1105 = vadd.f32 %v872, %v1104
      %1106 = vmatmul.bf16.gmra.mxu0 %v1077
      %v1107 = vpop.f32.mrf.mxu0
      %v1108 = vadd.f32 %v872, %v1107
      %v1109 = vpop.f32.mrf.mxu0
      %1110 = vdwg.mxu0
      %v1111 = vsel %vm941, %v1098, -inf
      %1112 = vmax.xlane.f32.xlu0 %v1111
      %v1113 = vpop.xlane.xlu0 %1112
      %v1114 = vsel %vm941, %v1100, -inf
      %1115 = vmax.xlane.f32.xlu0 %v1114
      %v1116 = vpop.xlane.xlu0 %1115
      %v1117 = vsel %vm941, %v1103, -inf
      %1118 = vmax.xlane.f32.xlu0 %v1117
      %v1119 = vpop.xlane.xlu0 %1118
      %v1120 = vsel %vm941, %v1105, -inf
      %1121 = vmax.xlane.f32.xlu0 %v1120
      %v1122 = vpop.xlane.xlu0 %1121
      %v1123 = vsel %vm941, %v1108, -inf
      %1124 = vmax.xlane.f32.xlu0 %v1123
      %v1125 = vpop.xlane.xlu0 %1124
      %v1126 = vsub.f32 %v1098, %v1113
      %v1127 = vsub.f32 %v1100, %v1116
      %v1128 = vsub.f32 %v1103, %v1119
      %v1129 = vsub.f32 %v1105, %v1122
      %v1130 = vsub.f32 %v1108, %v1125
      %v1131 = vmul.f32 %v1126, 1.442695
      %v1132 = vpow.pop %v1131
      %v1133 = vmul.f32 %v1127, 1.442695
      %v1134 = vpow.pop %v1133
      %v1135 = vmul.f32 %v1128, 1.442695
      %v1136 = vpow.pop %v1135
      %v1137 = vmul.f32 %v1129, 1.442695
      %v1138 = vpow.pop %v1137
      %v1139 = vmul.f32 %v1130, 1.442695
      %v1140 = vpow.pop %v1139
      %v1141 = vsel %vm941, %v1132, 0.0
      %1142 = vadd.xlane.f32.xlu0 %v1141
      %v1143 = vpop.xlane.xlu0 %1142
      %v1144 = vsel %vm941, %v1134, 0.0
      %1145 = vadd.xlane.f32.xlu0 %v1144
      %v1146 = vpop.xlane.xlu0 %1145
      %v1147 = vsel %vm941, %v1136, 0.0
      %1148 = vadd.xlane.f32.xlu0 %v1147
      %v1149 = vpop.xlane.xlu0 %1148
      %v1150 = vsel %vm941, %v1138, 0.0
      %1151 = vadd.xlane.f32.xlu0 %v1150
      %v1152 = vpop.xlane.xlu0 %1151
      %v1153 = vsel %vm941, %v1140, 0.0
      %1154 = vadd.xlane.f32.xlu0 %v1153
      %v1155 = vpop.xlane.xlu0 %1154
      %v1156 = vrcp.pop %v1143
      %v1157 = vrcp.pop %v1146
      %v1158 = vrcp.pop %v1149
      %v1159 = vrcp.pop %v1152
      %v1160 = vrcp.pop %v1155
      %v1161 = vmul.f32 %v1132, %v1156
      %v1162 = vmul.f32 %v1134, %v1157
      %v1163 = vmul.f32 %v1136, %v1158
      %v1164 = vmul.f32 %v1138, %v1159
      %v1165 = vmul.f32 %v1140, %v1160
      %v1166 = vpack.c.bf16 %v1162, %v1161
      %v1167 = vpack.c.bf16 %v1164, %v1163
      %v1168 = vpack.c.bf16 %v1165, %v1165
      %1169 = vrot.lane.b32.xlu0 %v1010, 96
      %v1170 = vpop.permute.xlu0 %1169
      %1171 = vrot.lane.b32.xlu0 %v1011, 96
      %v1172 = vpop.permute.xlu0 %1171
      %1173 = vrot.lane.b32.xlu0 %v1012, 96
      %v1174 = vpop.permute.xlu0 %1173
      %v1178 = vsel %vm941, %v1166, 0
      %v1181 = vsel %vm941, %v1167, 0
      %v1184 = vsel %vm941, %v1168, 0
      %v1187 = vsel %vm1024, %v1174, 0
      %1189 = vmatpush.bf16.msra.mxu0 0
      %1190 = vmatpush.bf16.msra.mxu0 0
      %1191 = vmatpush.bf16.msra.mxu0 0
      %1192 = vmatpush.bf16.msra.mxu0 0
      %1193 = vmatpush.bf16.msra.mxu0 0
      %1194 = vmatpush.bf16.msra.mxu0 %v1187
      %1195 = vmatpush.bf16.msra.mxu0 %v1172
      %1196 = vmatpush.bf16.msra.mxu0 %v1170
      %1197 = vmatmul.bf16.gmra.mxu0 %v1178
      %v1198 = vpop.f32.mrf.mxu0
      %v1199 = vadd.f32 0.0, %v1198
      %v1200 = vpop.f32.mrf.mxu0
      %v1201 = vadd.f32 0.0, %v1200
      %1202 = vmatmul.bf16.gmra.mxu0 %v1181
      %v1203 = vpop.f32.mrf.mxu0
      %v1204 = vadd.f32 0.0, %v1203
      %v1205 = vpop.f32.mrf.mxu0
      %v1206 = vadd.f32 0.0, %v1205
      %1207 = vmatmul.bf16.gmra.mxu0 %v1184
      %v1208 = vpop.f32.mrf.mxu0
      %v1209 = vadd.f32 0.0, %v1208
      %v1210 = vpop.f32.mrf.mxu0
      %1211 = vdwg.mxu0
      %v1212 = vpack.c.bf16 %v1201, %v1199
      %v1213 = vpack.c.bf16 %v1206, %v1204
      %v1214 = vpack.c.bf16 %v1209, %v1209
      %v1215 = vld [vmem:[%s6 + $0x10] sm:$0xf]
      %v1216 = vld [vmem:[%s6 + $0x14] sm:$0xf]
      %v1217 = vld [vmem:[%s6 + $0x18] sm:$0xf]
      %v1218 = vld [vmem:[%s6 + $0x1c] sm:$0xf]
      %v1223 = vunpack.c.l.b16 %v1215
      %v1224 = vunpack.c.l.b16 %v1216
      %v1225 = vunpack.c.l.b16 %v1217
      %v1226 = vunpack.c.l.b16 %v1218
      %v1227 = vpack.c.b16 %v1224, %v1223
      %v1228 = vpack.c.b16 %v1226, %v1225
      %v1232 = vsel %vm899, %v1212, 0
      %v1235 = vsel %vm899, %v1213, 0
      %v1238 = vsel %vm899, %v1214, 0
      %1240 = vmatpush.bf16.msra.mxu0 0
      %1241 = vmatpush.bf16.msra.mxu0 0
      %1242 = vmatpush.bf16.msra.mxu0 0
      %1243 = vmatpush.bf16.msra.mxu0 0
      %1244 = vmatpush.bf16.msra.mxu0 0
      %1245 = vmatpush.bf16.msra.mxu0 0
      %1246 = vmatpush.bf16.msra.mxu0 %v1228
      %1247 = vmatpush.bf16.msra.mxu0 %v1227
      %1248 = vmatmul.bf16.gmra.mxu0 %v1232
      %v1249 = vpop.f32.mrf.mxu0
      %v1250 = vadd.f32 0.0, %v1249
      %v1251 = vpop.f32.mrf.mxu0
      %v1252 = vadd.f32 0.0, %v1251
      %1253 = vmatmul.bf16.gmra.mxu0 %v1235
      %v1254 = vpop.f32.mrf.mxu0
      %v1255 = vadd.f32 0.0, %v1254
      %v1256 = vpop.f32.mrf.mxu0
      %v1257 = vadd.f32 0.0, %v1256
      %1258 = vmatmul.bf16.gmra.mxu0 %v1238
      %v1259 = vpop.f32.mrf.mxu0
      %v1260 = vadd.f32 0.0, %v1259
      %v1261 = vpop.f32.mrf.mxu0
      %1262 = vdwg.mxu0
      %v1267 = vunpack.c.l.b16 %v1054
      %v1268 = vunpack.c.l.b16 %v1055
      %v1269 = vunpack.c.l.b16 %v1056
      %v1270 = vunpack.c.l.b16 %v1057
      %v1271 = vpack.c.b16 %v1268, %v1267
      %v1272 = vpack.c.b16 %v1270, %v1269
      %v1276 = vsel %vm899, %v1051, 0
      %v1279 = vsel %vm899, %v1052, 0
      %v1282 = vsel %vm899, %v1053, 0
      %1284 = vmatpush.bf16.msra.mxu0 0
      %1285 = vmatpush.bf16.msra.mxu0 0
      %1286 = vmatpush.bf16.msra.mxu0 0
      %1287 = vmatpush.bf16.msra.mxu0 0
      %1288 = vmatpush.bf16.msra.mxu0 0
      %1289 = vmatpush.bf16.msra.mxu0 0
      %1290 = vmatpush.bf16.msra.mxu0 %v1272
      %1291 = vmatpush.bf16.msra.mxu0 %v1271
      %1292 = vmatmul.bf16.gmra.mxu0 %v1276
      %v1293 = vpop.f32.mrf.mxu0
      %v1294 = vadd.f32 %v1250, %v1293
      %v1295 = vpop.f32.mrf.mxu0
      %v1296 = vadd.f32 %v1252, %v1295
      %1297 = vmatmul.bf16.gmra.mxu0 %v1279
      %v1298 = vpop.f32.mrf.mxu0
      %v1299 = vadd.f32 %v1255, %v1298
      %v1300 = vpop.f32.mrf.mxu0
      %v1301 = vadd.f32 %v1257, %v1300
      %1302 = vmatmul.bf16.gmra.mxu0 %v1282
      %v1303 = vpop.f32.mrf.mxu0
      %v1304 = vadd.f32 %v1260, %v1303
      %v1305 = vpop.f32.mrf.mxu0
      %1306 = vdwg.mxu0
      %1307 = vrot.lane.b32.xlu0 %v883, 64
      %v1308 = vpop.permute.xlu0 %1307
      %1309 = vrot.lane.b32.xlu0 %v884, 64
      %v1310 = vpop.permute.xlu0 %1309
      %1311 = vrot.lane.b32.xlu0 %v885, 64
      %v1312 = vpop.permute.xlu0 %1311
      %1313 = vrot.lane.b32.xlu0 %v896, 64
      %v1314 = vpop.permute.xlu0 %1313
      %1315 = vrot.lane.b32.xlu0 %v897, 64
      %v1316 = vpop.permute.xlu0 %1315
      %1317 = vrot.lane.b32.xlu0 %v898, 64
      %v1318 = vpop.permute.xlu0 %1317
      %v1320 = vsel %vm899, %v1308, 0
      %v1323 = vsel %vm899, %v1310, 0
      %v1326 = vsel %vm899, %v1312, 0
      %v1329 = vsel %vm899, %v1314, 0
      %v1332 = vsel %vm899, %v1316, 0
      %v1335 = vsel %vm899, %v1318, 0
      %1337 = vmatpush.bf16.xpose.msra.mxu0 0
      %1338 = vmatpush.bf16.xpose.msra.mxu0 0
      %1339 = vmatpush.bf16.xpose.msra.mxu0 0
      %1340 = vmatpush.bf16.xpose.msra.mxu0 0
      %1341 = vmatpush.bf16.xpose.msra.mxu0 0
      %1342 = vmatpush.bf16.xpose.msra.mxu0 %v1335
      %1343 = vmatpush.bf16.xpose.msra.mxu0 %v1332
      %1344 = vmatpush.bf16.xpose.msra.mxu0 %v1329
      %1345 = vmatmul.bf16.gmra.mxu0 %v1320
      %v1346 = vpop.f32.mrf.mxu0
      %v1347 = vadd.f32 %v872, %v1346
      %v1348 = vpop.f32.mrf.mxu0
      %v1349 = vadd.f32 %v872, %v1348
      %1350 = vmatmul.bf16.gmra.mxu0 %v1323
      %v1351 = vpop.f32.mrf.mxu0
      %v1352 = vadd.f32 %v872, %v1351
      %v1353 = vpop.f32.mrf.mxu0
      %v1354 = vadd.f32 %v872, %v1353
      %1355 = vmatmul.bf16.gmra.mxu0 %v1326
      %v1356 = vpop.f32.mrf.mxu0
      %v1357 = vadd.f32 %v872, %v1356
      %v1358 = vpop.f32.mrf.mxu0
      %1359 = vdwg.mxu0
      %v1360 = vsel %vm941, %v1347, -inf
      %1361 = vmax.xlane.f32.xlu0 %v1360
      %v1362 = vpop.xlane.xlu0 %1361
      %v1363 = vsel %vm941, %v1349, -inf
      %1364 = vmax.xlane.f32.xlu0 %v1363
      %v1365 = vpop.xlane.xlu0 %1364
      %v1366 = vsel %vm941, %v1352, -inf
      %1367 = vmax.xlane.f32.xlu0 %v1366
      %v1368 = vpop.xlane.xlu0 %1367
      %v1369 = vsel %vm941, %v1354, -inf
      %1370 = vmax.xlane.f32.xlu0 %v1369
      %v1371 = vpop.xlane.xlu0 %1370
      %v1372 = vsel %vm941, %v1357, -inf
      %1373 = vmax.xlane.f32.xlu0 %v1372
      %v1374 = vpop.xlane.xlu0 %1373
      %v1375 = vsub.f32 %v1347, %v1362
      %v1376 = vsub.f32 %v1349, %v1365
      %v1377 = vsub.f32 %v1352, %v1368
      %v1378 = vsub.f32 %v1354, %v1371
      %v1379 = vsub.f32 %v1357, %v1374
      %v1380 = vmul.f32 %v1375, 1.442695
      %v1381 = vpow.pop %v1380
      %v1382 = vmul.f32 %v1376, 1.442695
      %v1383 = vpow.pop %v1382
      %v1384 = vmul.f32 %v1377, 1.442695
      %v1385 = vpow.pop %v1384
      %v1386 = vmul.f32 %v1378, 1.442695
      %v1387 = vpow.pop %v1386
      %v1388 = vmul.f32 %v1379, 1.442695
      %v1389 = vpow.pop %v1388
      %v1390 = vsel %vm941, %v1381, 0.0
      %1391 = vadd.xlane.f32.xlu0 %v1390
      %v1392 = vpop.xlane.xlu0 %1391
      %v1393 = vsel %vm941, %v1383, 0.0
      %1394 = vadd.xlane.f32.xlu0 %v1393
      %v1395 = vpop.xlane.xlu0 %1394
      %v1396 = vsel %vm941, %v1385, 0.0
      %1397 = vadd.xlane.f32.xlu0 %v1396
      %v1398 = vpop.xlane.xlu0 %1397
      %v1399 = vsel %vm941, %v1387, 0.0
      %1400 = vadd.xlane.f32.xlu0 %v1399
      %v1401 = vpop.xlane.xlu0 %1400
      %v1402 = vsel %vm941, %v1389, 0.0
      %1403 = vadd.xlane.f32.xlu0 %v1402
      %v1404 = vpop.xlane.xlu0 %1403
      %v1405 = vrcp.pop %v1392
      %v1406 = vrcp.pop %v1395
      %v1407 = vrcp.pop %v1398
      %v1408 = vrcp.pop %v1401
      %v1409 = vrcp.pop %v1404
      %v1410 = vmul.f32 %v1381, %v1405
      %v1411 = vmul.f32 %v1383, %v1406
      %v1412 = vmul.f32 %v1385, %v1407
      %v1413 = vmul.f32 %v1387, %v1408
      %v1414 = vmul.f32 %v1389, %v1409
      %v1415 = vpack.c.bf16 %v1411, %v1410
      %v1416 = vpack.c.bf16 %v1413, %v1412
      %v1417 = vpack.c.bf16 %v1414, %v1414
      %1418 = vrot.lane.b32.xlu0 %v1010, 64
      %v1419 = vpop.permute.xlu0 %1418
      %1420 = vrot.lane.b32.xlu0 %v1011, 64
      %v1421 = vpop.permute.xlu0 %1420
      %1422 = vrot.lane.b32.xlu0 %v1012, 64
      %v1423 = vpop.permute.xlu0 %1422
      %v1427 = vsel %vm941, %v1415, 0
      %v1430 = vsel %vm941, %v1416, 0
      %v1433 = vsel %vm941, %v1417, 0
      %v1436 = vsel %vm1024, %v1423, 0
      %1438 = vmatpush.bf16.msra.mxu0 0
      %1439 = vmatpush.bf16.msra.mxu0 0
      %1440 = vmatpush.bf16.msra.mxu0 0
      %1441 = vmatpush.bf16.msra.mxu0 0
      %1442 = vmatpush.bf16.msra.mxu0 0
      %1443 = vmatpush.bf16.msra.mxu0 %v1436
      %1444 = vmatpush.bf16.msra.mxu0 %v1421
      %1445 = vmatpush.bf16.msra.mxu0 %v1419
      %1446 = vmatmul.bf16.gmra.mxu0 %v1427
      %v1447 = vpop.f32.mrf.mxu0
      %v1448 = vadd.f32 0.0, %v1447
      %v1449 = vpop.f32.mrf.mxu0
      %v1450 = vadd.f32 0.0, %v1449
      %1451 = vmatmul.bf16.gmra.mxu0 %v1430
      %v1452 = vpop.f32.mrf.mxu0
      %v1453 = vadd.f32 0.0, %v1452
      %v1454 = vpop.f32.mrf.mxu0
      %v1455 = vadd.f32 0.0, %v1454
      %1456 = vmatmul.bf16.gmra.mxu0 %v1433
      %v1457 = vpop.f32.mrf.mxu0
      %v1458 = vadd.f32 0.0, %v1457
      %v1459 = vpop.f32.mrf.mxu0
      %1460 = vdwg.mxu0
      %v1461 = vpack.c.bf16 %v1450, %v1448
      %v1462 = vpack.c.bf16 %v1455, %v1453
      %v1463 = vpack.c.bf16 %v1458, %v1458
      %v1464 = vld [vmem:[%s6 + $0x20] sm:$0xf]
      %v1465 = vld [vmem:[%s6 + $0x24] sm:$0xf]
      %v1466 = vld [vmem:[%s6 + $0x28] sm:$0xf]
      %v1467 = vld [vmem:[%s6 + $0x2c] sm:$0xf]
      %v1472 = vunpack.c.l.b16 %v1464
      %v1473 = vunpack.c.l.b16 %v1465
      %v1474 = vunpack.c.l.b16 %v1466
      %v1475 = vunpack.c.l.b16 %v1467
      %v1476 = vpack.c.b16 %v1473, %v1472
      %v1477 = vpack.c.b16 %v1475, %v1474
      %v1481 = vsel %vm899, %v1461, 0
      %v1484 = vsel %vm899, %v1462, 0
      %v1487 = vsel %vm899, %v1463, 0
      %1489 = vmatpush.bf16.msra.mxu0 0
      %1490 = vmatpush.bf16.msra.mxu0 0
      %1491 = vmatpush.bf16.msra.mxu0 0
      %1492 = vmatpush.bf16.msra.mxu0 0
      %1493 = vmatpush.bf16.msra.mxu0 0
      %1494 = vmatpush.bf16.msra.mxu0 0
      %1495 = vmatpush.bf16.msra.mxu0 %v1477
      %1496 = vmatpush.bf16.msra.mxu0 %v1476
      %1497 = vmatmul.bf16.gmra.mxu0 %v1481
      %v1498 = vpop.f32.mrf.mxu0
      %v1499 = vadd.f32 0.0, %v1498
      %v1500 = vpop.f32.mrf.mxu0
      %v1501 = vadd.f32 0.0, %v1500
      %1502 = vmatmul.bf16.gmra.mxu0 %v1484
      %v1503 = vpop.f32.mrf.mxu0
      %v1504 = vadd.f32 0.0, %v1503
      %v1505 = vpop.f32.mrf.mxu0
      %v1506 = vadd.f32 0.0, %v1505
      %1507 = vmatmul.bf16.gmra.mxu0 %v1487
      %v1508 = vpop.f32.mrf.mxu0
      %v1509 = vadd.f32 0.0, %v1508
      %v1510 = vpop.f32.mrf.mxu0
      %1511 = vdwg.mxu0
      %v1512 = vadd.f32 %v1294, %v1499
      %v1513 = vadd.f32 %v1296, %v1501
      %v1514 = vadd.f32 %v1299, %v1504
      %v1515 = vadd.f32 %v1301, %v1506
      %v1516 = vadd.f32 %v1304, %v1509
      %1517 = vrot.lane.b32.xlu0 %v883, 32
      %v1518 = vpop.permute.xlu0 %1517
      %1519 = vrot.lane.b32.xlu0 %v884, 32
      %v1520 = vpop.permute.xlu0 %1519
      %1521 = vrot.lane.b32.xlu0 %v885, 32
      %v1522 = vpop.permute.xlu0 %1521
      %1523 = vrot.lane.b32.xlu0 %v896, 32
      %v1524 = vpop.permute.xlu0 %1523
      %1525 = vrot.lane.b32.xlu0 %v897, 32
      %v1526 = vpop.permute.xlu0 %1525
      %1527 = vrot.lane.b32.xlu0 %v898, 32
      %v1528 = vpop.permute.xlu0 %1527
      %v1530 = vsel %vm899, %v1518, 0
      %v1533 = vsel %vm899, %v1520, 0
      %v1536 = vsel %vm899, %v1522, 0
      %v1539 = vsel %vm899, %v1524, 0
      %v1542 = vsel %vm899, %v1526, 0
      %v1545 = vsel %vm899, %v1528, 0
      %1547 = vmatpush.bf16.xpose.msra.mxu0 0
      %1548 = vmatpush.bf16.xpose.msra.mxu0 0
      %1549 = vmatpush.bf16.xpose.msra.mxu0 0
      %1550 = vmatpush.bf16.xpose.msra.mxu0 0
      %1551 = vmatpush.bf16.xpose.msra.mxu0 0
      %1552 = vmatpush.bf16.xpose.msra.mxu0 %v1545
      %1553 = vmatpush.bf16.xpose.msra.mxu0 %v1542
      %1554 = vmatpush.bf16.xpose.msra.mxu0 %v1539
      %1555 = vmatmul.bf16.gmra.mxu0 %v1530
      %v1556 = vpop.f32.mrf.mxu0
      %v1557 = vadd.f32 %v872, %v1556
      %v1558 = vpop.f32.mrf.mxu0
      %v1559 = vadd.f32 %v872, %v1558
      %1560 = vmatmul.bf16.gmra.mxu0 %v1533
      %v1561 = vpop.f32.mrf.mxu0
      %v1562 = vadd.f32 %v872, %v1561
      %v1563 = vpop.f32.mrf.mxu0
      %v1564 = vadd.f32 %v872, %v1563
      %1565 = vmatmul.bf16.gmra.mxu0 %v1536
      %v1566 = vpop.f32.mrf.mxu0
      %v1567 = vadd.f32 %v872, %v1566
      %v1568 = vpop.f32.mrf.mxu0
      %1569 = vdwg.mxu0
      %v1570 = vsel %vm941, %v1557, -inf
      %1571 = vmax.xlane.f32.xlu0 %v1570
      %v1572 = vpop.xlane.xlu0 %1571
      %v1573 = vsel %vm941, %v1559, -inf
      %1574 = vmax.xlane.f32.xlu0 %v1573
      %v1575 = vpop.xlane.xlu0 %1574
      %v1576 = vsel %vm941, %v1562, -inf
      %1577 = vmax.xlane.f32.xlu0 %v1576
      %v1578 = vpop.xlane.xlu0 %1577
      %v1579 = vsel %vm941, %v1564, -inf
      %1580 = vmax.xlane.f32.xlu0 %v1579
      %v1581 = vpop.xlane.xlu0 %1580
      %v1582 = vsel %vm941, %v1567, -inf
      %1583 = vmax.xlane.f32.xlu0 %v1582
      %v1584 = vpop.xlane.xlu0 %1583
      %v1585 = vsub.f32 %v1557, %v1572
      %v1586 = vsub.f32 %v1559, %v1575
      %v1587 = vsub.f32 %v1562, %v1578
      %v1588 = vsub.f32 %v1564, %v1581
      %v1589 = vsub.f32 %v1567, %v1584
      %v1590 = vmul.f32 %v1585, 1.442695
      %v1591 = vpow.pop %v1590
      %v1592 = vmul.f32 %v1586, 1.442695
      %v1593 = vpow.pop %v1592
      %v1594 = vmul.f32 %v1587, 1.442695
      %v1595 = vpow.pop %v1594
      %v1596 = vmul.f32 %v1588, 1.442695
      %v1597 = vpow.pop %v1596
      %v1598 = vmul.f32 %v1589, 1.442695
      %v1599 = vpow.pop %v1598
      %v1600 = vsel %vm941, %v1591, 0.0
      %1601 = vadd.xlane.f32.xlu0 %v1600
      %v1602 = vpop.xlane.xlu0 %1601
      %v1603 = vsel %vm941, %v1593, 0.0
      %1604 = vadd.xlane.f32.xlu0 %v1603
      %v1605 = vpop.xlane.xlu0 %1604
      %v1606 = vsel %vm941, %v1595, 0.0
      %1607 = vadd.xlane.f32.xlu0 %v1606
      %v1608 = vpop.xlane.xlu0 %1607
      %v1609 = vsel %vm941, %v1597, 0.0
      %1610 = vadd.xlane.f32.xlu0 %v1609
      %v1611 = vpop.xlane.xlu0 %1610
      %v1612 = vsel %vm941, %v1599, 0.0
      %1613 = vadd.xlane.f32.xlu0 %v1612
      %v1614 = vpop.xlane.xlu0 %1613
      %v1615 = vrcp.pop %v1602
      %v1616 = vrcp.pop %v1605
      %v1617 = vrcp.pop %v1608
      %v1618 = vrcp.pop %v1611
      %v1619 = vrcp.pop %v1614
      %v1620 = vmul.f32 %v1591, %v1615
      %v1621 = vmul.f32 %v1593, %v1616
      %v1622 = vmul.f32 %v1595, %v1617
      %v1623 = vmul.f32 %v1597, %v1618
      %v1624 = vmul.f32 %v1599, %v1619
      %v1625 = vpack.c.bf16 %v1621, %v1620
      %v1626 = vpack.c.bf16 %v1623, %v1622
      %v1627 = vpack.c.bf16 %v1624, %v1624
      %1628 = vrot.lane.b32.xlu0 %v1010, 32
      %v1629 = vpop.permute.xlu0 %1628
      %1630 = vrot.lane.b32.xlu0 %v1011, 32
      %v1631 = vpop.permute.xlu0 %1630
      %1632 = vrot.lane.b32.xlu0 %v1012, 32
      %v1633 = vpop.permute.xlu0 %1632
      %v1637 = vsel %vm941, %v1625, 0
      %v1640 = vsel %vm941, %v1626, 0
      %v1643 = vsel %vm941, %v1627, 0
      %v1646 = vsel %vm1024, %v1633, 0
      %1648 = vmatpush.bf16.msra.mxu0 0
      %1649 = vmatpush.bf16.msra.mxu0 0
      %1650 = vmatpush.bf16.msra.mxu0 0
      %1651 = vmatpush.bf16.msra.mxu0 0
      %1652 = vmatpush.bf16.msra.mxu0 0
      %1653 = vmatpush.bf16.msra.mxu0 %v1646
      %1654 = vmatpush.bf16.msra.mxu0 %v1631
      %1655 = vmatpush.bf16.msra.mxu0 %v1629
      %1656 = vmatmul.bf16.gmra.mxu0 %v1637
      %v1657 = vpop.f32.mrf.mxu0
      %v1658 = vadd.f32 0.0, %v1657
      %v1659 = vpop.f32.mrf.mxu0
      %v1660 = vadd.f32 0.0, %v1659
      %1661 = vmatmul.bf16.gmra.mxu0 %v1640
      %v1662 = vpop.f32.mrf.mxu0
      %v1663 = vadd.f32 0.0, %v1662
      %v1664 = vpop.f32.mrf.mxu0
      %v1665 = vadd.f32 0.0, %v1664
      %1666 = vmatmul.bf16.gmra.mxu0 %v1643
      %v1667 = vpop.f32.mrf.mxu0
      %v1668 = vadd.f32 0.0, %v1667
      %v1669 = vpop.f32.mrf.mxu0
      %1670 = vdwg.mxu0
      %v1671 = vpack.c.bf16 %v1660, %v1658
      %v1672 = vpack.c.bf16 %v1665, %v1663
      %v1673 = vpack.c.bf16 %v1668, %v1668
      %v1674 = vld [vmem:[%s6 + $0x30] sm:$0xf]
      %v1675 = vld [vmem:[%s6 + $0x34] sm:$0xf]
      %v1676 = vld [vmem:[%s6 + $0x38] sm:$0xf]
      %v1677 = vld [vmem:[%s6 + $0x3c] sm:$0xf]
      %v1682 = vunpack.c.l.b16 %v1674
      %v1683 = vunpack.c.l.b16 %v1675
      %v1684 = vunpack.c.l.b16 %v1676
      %v1685 = vunpack.c.l.b16 %v1677
      %v1686 = vpack.c.b16 %v1683, %v1682
      %v1687 = vpack.c.b16 %v1685, %v1684
      %v1691 = vsel %vm899, %v1671, 0
      %v1694 = vsel %vm899, %v1672, 0
      %v1697 = vsel %vm899, %v1673, 0
      %1699 = vmatpush.bf16.msra.mxu0 0
      %1700 = vmatpush.bf16.msra.mxu0 0
      %1701 = vmatpush.bf16.msra.mxu0 0
      %1702 = vmatpush.bf16.msra.mxu0 0
      %1703 = vmatpush.bf16.msra.mxu0 0
      %1704 = vmatpush.bf16.msra.mxu0 0
      %1705 = vmatpush.bf16.msra.mxu0 %v1687
      %1706 = vmatpush.bf16.msra.mxu0 %v1686
      %1707 = vmatmul.bf16.gmra.mxu0 %v1691
      %v1708 = vpop.f32.mrf.mxu0
      %v1709 = vadd.f32 0.0, %v1708
      %v1710 = vpop.f32.mrf.mxu0
      %v1711 = vadd.f32 0.0, %v1710
      %1712 = vmatmul.bf16.gmra.mxu0 %v1694
      %v1713 = vpop.f32.mrf.mxu0
      %v1714 = vadd.f32 0.0, %v1713
      %v1715 = vpop.f32.mrf.mxu0
      %v1716 = vadd.f32 0.0, %v1715
      %1717 = vmatmul.bf16.gmra.mxu0 %v1697
      %v1718 = vpop.f32.mrf.mxu0
      %v1719 = vadd.f32 0.0, %v1718
      %v1720 = vpop.f32.mrf.mxu0
      %1721 = vdwg.mxu0
      %v1722 = vadd.f32 %v1512, %v1709
      %v1723 = vadd.f32 %v1513, %v1711
      %v1724 = vadd.f32 %v1514, %v1714
      %v1725 = vadd.f32 %v1515, %v1716
      %v1726 = vadd.f32 %v1516, %v1719
      %v1727 = vadd.f32 %v479, %v1722
      %v1728 = vadd.f32 %v480, %v1723
      %v1729 = vadd.f32 %v481, %v1724
      %v1730 = vadd.f32 %v482, %v1725
      %v1731 = vadd.f32 %v483, %v1726
      %v1732 = vld [vmem:[%s7] sm:$0x1]
      %v1734 = vperm.slane %v1732, 0
      %v1736 = vadd.f32 %v1727, %v1734
      %v1737 = vadd.f32 %v1728, %v1734
      %v1738 = vadd.f32 %v1729, %v1734
      %v1739 = vadd.f32 %v1730, %v1734
      %v1740 = vadd.f32 %v1731, %v1734
      %v1741 = vld [vmem:[%s8] sm:$0x1]
      %v1742 = vld [vmem:[%s9] sm:$0x1]
      %1743 = vadd.xlane.f32.xlu0 %v1736
      %v1744 = vpop.xlane.xlu0 %1743
      %1745 = vadd.xlane.f32.xlu0 %v1737
      %v1746 = vpop.xlane.xlu0 %1745
      %1747 = vadd.xlane.f32.xlu0 %v1738
      %v1748 = vpop.xlane.xlu0 %1747
      %1749 = vadd.xlane.f32.xlu0 %v1739
      %v1750 = vpop.xlane.xlu0 %1749
      %1751 = vadd.xlane.f32.xlu0 %v1740
      %v1752 = vpop.xlane.xlu0 %1751
      %v1753 = vmul.f32 %v1744, %v502
      %v1754 = vmul.f32 %v1746, %v502
      %v1755 = vmul.f32 %v1748, %v502
      %v1756 = vmul.f32 %v1750, %v502
      %v1757 = vmul.f32 %v1752, %v502
      %v1758 = vsub.f32 %v1736, %v1753
      %v1759 = vsub.f32 %v1737, %v1754
      %v1760 = vsub.f32 %v1738, %v1755
      %v1761 = vsub.f32 %v1739, %v1756
      %v1762 = vsub.f32 %v1740, %v1757
      %v1763 = vmul.f32 %v1758, %v1758
      %v1764 = vmul.f32 %v1759, %v1759
      %v1765 = vmul.f32 %v1760, %v1760
      %v1766 = vmul.f32 %v1761, %v1761
      %v1767 = vmul.f32 %v1762, %v1762
      %1768 = vadd.xlane.f32.xlu0 %v1763
      %v1769 = vpop.xlane.xlu0 %1768
      %1770 = vadd.xlane.f32.xlu0 %v1764
      %v1771 = vpop.xlane.xlu0 %1770
      %1772 = vadd.xlane.f32.xlu0 %v1765
      %v1773 = vpop.xlane.xlu0 %1772
      %1774 = vadd.xlane.f32.xlu0 %v1766
      %v1775 = vpop.xlane.xlu0 %1774
      %1776 = vadd.xlane.f32.xlu0 %v1767
      %v1777 = vpop.xlane.xlu0 %1776
      %v1778 = vmul.f32 %v1769, %v502
      %v1779 = vmul.f32 %v1771, %v502
      %v1780 = vmul.f32 %v1773, %v502
      %v1781 = vmul.f32 %v1775, %v502
      %v1782 = vmul.f32 %v1777, %v502
      %v1783 = vadd.f32 %v1778, 1e-06
      %v1784 = vadd.f32 %v1779, 1e-06
      %v1785 = vadd.f32 %v1780, 1e-06
      %v1786 = vadd.f32 %v1781, 1e-06
      %v1787 = vadd.f32 %v1782, 1e-06
      %v1788 = vrsqrt.pop %v1783
      %v1789 = vmul.f32 %v1788, %v1783
      %v1790 = vmul.f32 %v1789, %v1788
      %v1791 = vmul.f32 0.5, %v1790
      %v1792 = vsub.f32 1.5, %v1791
      %v1793 = vmul.f32 %v1788, %v1792
      %vm1794 = vweird.f32 %v1783
      %vm1795 = vweird.f32 %v1788
      %vm1796 = vmor %vm1794, %vm1795
      %v1797 = vsel %vm1796, %v1788, %v1793
      %v1798 = vrsqrt.pop %v1784
      %v1799 = vmul.f32 %v1798, %v1784
      %v1800 = vmul.f32 %v1799, %v1798
      %v1801 = vmul.f32 0.5, %v1800
      %v1802 = vsub.f32 1.5, %v1801
      %v1803 = vmul.f32 %v1798, %v1802
      %vm1804 = vweird.f32 %v1784
      %vm1805 = vweird.f32 %v1798
      %vm1806 = vmor %vm1804, %vm1805
      %v1807 = vsel %vm1806, %v1798, %v1803
      %v1808 = vrsqrt.pop %v1785
      %v1809 = vmul.f32 %v1808, %v1785
      %v1810 = vmul.f32 %v1809, %v1808
      %v1811 = vmul.f32 0.5, %v1810
      %v1812 = vsub.f32 1.5, %v1811
      %v1813 = vmul.f32 %v1808, %v1812
      %vm1814 = vweird.f32 %v1785
      %vm1815 = vweird.f32 %v1808
      %vm1816 = vmor %vm1814, %vm1815
      %v1817 = vsel %vm1816, %v1808, %v1813
      %v1818 = vrsqrt.pop %v1786
      %v1819 = vmul.f32 %v1818, %v1786
      %v1820 = vmul.f32 %v1819, %v1818
      %v1821 = vmul.f32 0.5, %v1820
      %v1822 = vsub.f32 1.5, %v1821
      %v1823 = vmul.f32 %v1818, %v1822
      %vm1824 = vweird.f32 %v1786
      %vm1825 = vweird.f32 %v1818
      %vm1826 = vmor %vm1824, %vm1825
      %v1827 = vsel %vm1826, %v1818, %v1823
      %v1828 = vrsqrt.pop %v1787
      %v1829 = vmul.f32 %v1828, %v1787
      %v1830 = vmul.f32 %v1829, %v1828
      %v1831 = vmul.f32 0.5, %v1830
      %v1832 = vsub.f32 1.5, %v1831
      %v1833 = vmul.f32 %v1828, %v1832
      %vm1834 = vweird.f32 %v1787
      %vm1835 = vweird.f32 %v1828
      %vm1836 = vmor %vm1834, %vm1835
      %v1837 = vsel %vm1836, %v1828, %v1833
      %v1838 = vmul.f32 %v1758, %v1797
      %v1839 = vmul.f32 %v1759, %v1807
      %v1840 = vmul.f32 %v1760, %v1817
      %v1841 = vmul.f32 %v1761, %v1827
      %v1842 = vmul.f32 %v1762, %v1837
      %v1844 = vperm.slane %v1741, 0
      %v1846 = vmul.f32 %v1838, %v1844
      %v1847 = vmul.f32 %v1839, %v1844
      %v1848 = vmul.f32 %v1840, %v1844
      %v1849 = vmul.f32 %v1841, %v1844
      %v1850 = vmul.f32 %v1842, %v1844
      %v1852 = vperm.slane %v1742, 0
      %v1854 = vadd.f32 %v1846, %v1852
      %v1855 = vadd.f32 %v1847, %v1852
      %v1856 = vadd.f32 %v1848, %v1852
      %v1857 = vadd.f32 %v1849, %v1852
      %v1858 = vadd.f32 %v1850, %v1852
      %v1859 = vpack.c.bf16 %v1855, %v1854
      %v1860 = vpack.c.bf16 %v1857, %v1856
      %v1861 = vpack.c.bf16 %v1858, %v1858
      %v1862 = vld [vmem:[%s10] sm:$0xff]
      %v1863 = vld [vmem:[%s10 + $0x8] sm:$0xff]
      %v1864 = vld [vmem:[%s10 + $0x10] sm:$0xff]
      %v1865 = vld [vmem:[%s10 + $0x18] sm:$0xff]
      %v1866 = vld [vmem:[%s10 + $0x20] sm:$0xff]
      %v1867 = vld [vmem:[%s10 + $0x28] sm:$0xff]
      %v1868 = vld [vmem:[%s10 + $0x30] sm:$0xff]
      %v1869 = vld [vmem:[%s10 + $0x38] sm:$0xff]
      %v1870 = vld [vmem:[%s10 + $0x40] sm:$0xff]
      %v1871 = vld [vmem:[%s10 + $0x48] sm:$0xff]
      %v1872 = vld [vmem:[%s10 + $0x50] sm:$0xff]
      %v1873 = vld [vmem:[%s10 + $0x58] sm:$0xff]
      %v1874 = vld [vmem:[%s10 + $0x60] sm:$0xff]
      %v1875 = vld [vmem:[%s10 + $0x68] sm:$0xff]
      %v1876 = vld [vmem:[%s10 + $0x70] sm:$0xff]
      %v1877 = vld [vmem:[%s10 + $0x78] sm:$0xff]
      %v1878 = vld [vmem:[%s10 + $0x80] sm:$0xff]
      %v1879 = vld [vmem:[%s10 + $0x88] sm:$0xff]
      %v1880 = vld [vmem:[%s10 + $0x90] sm:$0xff]
      %v1881 = vld [vmem:[%s10 + $0x98] sm:$0xff]
      %v1882 = vld [vmem:[%s10 + $0xa0] sm:$0xff]
      %v1883 = vld [vmem:[%s10 + $0xa8] sm:$0xff]
      %v1884 = vld [vmem:[%s10 + $0xb0] sm:$0xff]
      %v1885 = vld [vmem:[%s10 + $0xb8] sm:$0xff]
      %v1886 = vld [vmem:[%s10 + $0xc0] sm:$0xff]
      %v1887 = vld [vmem:[%s10 + $0xc8] sm:$0xff]
      %v1888 = vld [vmem:[%s10 + $0xd0] sm:$0xff]
      %v1889 = vld [vmem:[%s10 + $0xd8] sm:$0xff]
      %v1890 = vld [vmem:[%s10 + $0xe0] sm:$0xff]
      %v1891 = vld [vmem:[%s10 + $0xe8] sm:$0xff]
      %v1892 = vld [vmem:[%s10 + $0xf0] sm:$0xff]
      %v1893 = vld [vmem:[%s10 + $0xf8] sm:$0xff]
      %v1894 = vld [vmem:[%s11] sm:$0xf]
      %v1896 = vperm.slane %v1894, 0
      %v1897 = vperm.slane %v1894, 1
      %v1898 = vperm.slane %v1894, 2
      %v1899 = vperm.slane %v1894, 3
      %v1936 = vunpack.c.l.b16 %v1862
      %v1937 = vunpack.c.h.b16 %v1862
      %v1938 = vunpack.c.l.b16 %v1863
      %v1939 = vunpack.c.h.b16 %v1863
      %v1940 = vunpack.c.l.b16 %v1864
      %v1941 = vunpack.c.h.b16 %v1864
      %v1942 = vunpack.c.l.b16 %v1865
      %v1943 = vunpack.c.h.b16 %v1865
      %v1944 = vunpack.c.l.b16 %v1866
      %v1945 = vunpack.c.h.b16 %v1866
      %v1946 = vunpack.c.l.b16 %v1867
      %v1947 = vunpack.c.h.b16 %v1867
      %v1948 = vunpack.c.l.b16 %v1868
      %v1949 = vunpack.c.h.b16 %v1868
      %v1950 = vunpack.c.l.b16 %v1869
      %v1951 = vunpack.c.h.b16 %v1869
      %v1952 = vunpack.c.l.b16 %v1870
      %v1953 = vunpack.c.h.b16 %v1870
      %v1954 = vunpack.c.l.b16 %v1871
      %v1955 = vunpack.c.h.b16 %v1871
      %v1956 = vunpack.c.l.b16 %v1872
      %v1957 = vunpack.c.h.b16 %v1872
      %v1958 = vunpack.c.l.b16 %v1873
      %v1959 = vunpack.c.h.b16 %v1873
      %v1960 = vunpack.c.l.b16 %v1874
      %v1961 = vunpack.c.h.b16 %v1874
      %v1962 = vunpack.c.l.b16 %v1875
      %v1963 = vunpack.c.h.b16 %v1875
      %v1964 = vunpack.c.l.b16 %v1876
      %v1965 = vunpack.c.h.b16 %v1876
      %v1966 = vunpack.c.l.b16 %v1877
      %v1967 = vunpack.c.h.b16 %v1877
      %v1968 = vunpack.c.l.b16 %v1878
      %v1969 = vunpack.c.h.b16 %v1878
      %v1970 = vunpack.c.l.b16 %v1879
      %v1971 = vunpack.c.h.b16 %v1879
      %v1972 = vunpack.c.l.b16 %v1880
      %v1973 = vunpack.c.h.b16 %v1880
      %v1974 = vunpack.c.l.b16 %v1881
      %v1975 = vunpack.c.h.b16 %v1881
      %v1976 = vunpack.c.l.b16 %v1882
      %v1977 = vunpack.c.h.b16 %v1882
      %v1978 = vunpack.c.l.b16 %v1883
      %v1979 = vunpack.c.h.b16 %v1883
      %v1980 = vunpack.c.l.b16 %v1884
      %v1981 = vunpack.c.h.b16 %v1884
      %v1982 = vunpack.c.l.b16 %v1885
      %v1983 = vunpack.c.h.b16 %v1885
      %v1984 = vunpack.c.l.b16 %v1886
      %v1985 = vunpack.c.h.b16 %v1886
      %v1986 = vunpack.c.l.b16 %v1887
      %v1987 = vunpack.c.h.b16 %v1887
      %v1988 = vunpack.c.l.b16 %v1888
      %v1989 = vunpack.c.h.b16 %v1888
      %v1990 = vunpack.c.l.b16 %v1889
      %v1991 = vunpack.c.h.b16 %v1889
      %v1992 = vunpack.c.l.b16 %v1890
      %v1993 = vunpack.c.h.b16 %v1890
      %v1994 = vunpack.c.l.b16 %v1891
      %v1995 = vunpack.c.h.b16 %v1891
      %v1996 = vunpack.c.l.b16 %v1892
      %v1997 = vunpack.c.h.b16 %v1892
      %v1998 = vunpack.c.l.b16 %v1893
      %v1999 = vunpack.c.h.b16 %v1893
      %v2000 = vpack.c.b16 %v1940, %v1936
      %v2001 = vpack.c.b16 %v1941, %v1937
      %v2002 = vpack.c.b16 %v1942, %v1938
      %v2003 = vpack.c.b16 %v1943, %v1939
      %v2004 = vpack.c.b16 %v1948, %v1944
      %v2005 = vpack.c.b16 %v1949, %v1945
      %v2006 = vpack.c.b16 %v1950, %v1946
      %v2007 = vpack.c.b16 %v1951, %v1947
      %v2008 = vpack.c.b16 %v1956, %v1952
      %v2009 = vpack.c.b16 %v1957, %v1953
      %v2010 = vpack.c.b16 %v1958, %v1954
      %v2011 = vpack.c.b16 %v1959, %v1955
      %v2012 = vpack.c.b16 %v1964, %v1960
      %v2013 = vpack.c.b16 %v1965, %v1961
      %v2014 = vpack.c.b16 %v1966, %v1962
      %v2015 = vpack.c.b16 %v1967, %v1963
      %v2016 = vpack.c.b16 %v1972, %v1968
      %v2017 = vpack.c.b16 %v1973, %v1969
      %v2018 = vpack.c.b16 %v1974, %v1970
      %v2019 = vpack.c.b16 %v1975, %v1971
      %v2020 = vpack.c.b16 %v1980, %v1976
      %v2021 = vpack.c.b16 %v1981, %v1977
      %v2022 = vpack.c.b16 %v1982, %v1978
      %v2023 = vpack.c.b16 %v1983, %v1979
      %v2024 = vpack.c.b16 %v1988, %v1984
      %v2025 = vpack.c.b16 %v1989, %v1985
      %v2026 = vpack.c.b16 %v1990, %v1986
      %v2027 = vpack.c.b16 %v1991, %v1987
      %v2028 = vpack.c.b16 %v1996, %v1992
      %v2029 = vpack.c.b16 %v1997, %v1993
      %v2030 = vpack.c.b16 %v1998, %v1994
      %v2031 = vpack.c.b16 %v1999, %v1995
      %2064 = vmatpush.bf16.msra.mxu0 %v2028
      %2065 = vmatpush.bf16.msra.mxu0 %v2024
      %2066 = vmatpush.bf16.msra.mxu0 %v2020
      %2067 = vmatpush.bf16.msra.mxu0 %v2016
      %2068 = vmatpush.bf16.msra.mxu0 %v2012
      %2069 = vmatpush.bf16.msra.mxu0 %v2008
      %2070 = vmatpush.bf16.msra.mxu0 %v2004
      %2071 = vmatpush.bf16.msra.mxu0 %v2000
      %2072 = vmatmul.bf16.gmra.mxu0 %v1859
      %v2073 = vpop.f32.mrf.mxu0
      %v2074 = vadd.f32 %v1896, %v2073
      %v2075 = vpop.f32.mrf.mxu0
      %v2076 = vadd.f32 %v1896, %v2075
      %2077 = vmatmul.bf16.gmra.mxu0 %v1860
      %v2078 = vpop.f32.mrf.mxu0
      %v2079 = vadd.f32 %v1896, %v2078
      %v2080 = vpop.f32.mrf.mxu0
      %v2081 = vadd.f32 %v1896, %v2080
      %2082 = vmatmul.bf16.gmra.mxu0 %v1861
      %v2083 = vpop.f32.mrf.mxu0
      %v2084 = vadd.f32 %v1896, %v2083
      %v2085 = vpop.f32.mrf.mxu0
      %2086 = vdwg.mxu0
      %2087 = vmatpush.bf16.msra.mxu0 %v2029
      %2088 = vmatpush.bf16.msra.mxu0 %v2025
      %2089 = vmatpush.bf16.msra.mxu0 %v2021
      %2090 = vmatpush.bf16.msra.mxu0 %v2017
      %2091 = vmatpush.bf16.msra.mxu0 %v2013
      %2092 = vmatpush.bf16.msra.mxu0 %v2009
      %2093 = vmatpush.bf16.msra.mxu0 %v2005
      %2094 = vmatpush.bf16.msra.mxu0 %v2001
      %2095 = vmatmul.bf16.gmra.mxu0 %v1859
      %v2096 = vpop.f32.mrf.mxu0
      %v2097 = vadd.f32 %v1897, %v2096
      %v2098 = vpop.f32.mrf.mxu0
      %v2099 = vadd.f32 %v1897, %v2098
      %2100 = vmatmul.bf16.gmra.mxu0 %v1860
      %v2101 = vpop.f32.mrf.mxu0
      %v2102 = vadd.f32 %v1897, %v2101
      %v2103 = vpop.f32.mrf.mxu0
      %v2104 = vadd.f32 %v1897, %v2103
      %2105 = vmatmul.bf16.gmra.mxu0 %v1861
      %v2106 = vpop.f32.mrf.mxu0
      %v2107 = vadd.f32 %v1897, %v2106
      %v2108 = vpop.f32.mrf.mxu0
      %2109 = vdwg.mxu0
      %2110 = vmatpush.bf16.msra.mxu0 %v2030
      %2111 = vmatpush.bf16.msra.mxu0 %v2026
      %2112 = vmatpush.bf16.msra.mxu0 %v2022
      %2113 = vmatpush.bf16.msra.mxu0 %v2018
      %2114 = vmatpush.bf16.msra.mxu0 %v2014
      %2115 = vmatpush.bf16.msra.mxu0 %v2010
      %2116 = vmatpush.bf16.msra.mxu0 %v2006
      %2117 = vmatpush.bf16.msra.mxu0 %v2002
      %2118 = vmatmul.bf16.gmra.mxu0 %v1859
      %v2119 = vpop.f32.mrf.mxu0
      %v2120 = vadd.f32 %v1898, %v2119
      %v2121 = vpop.f32.mrf.mxu0
      %v2122 = vadd.f32 %v1898, %v2121
      %2123 = vmatmul.bf16.gmra.mxu0 %v1860
      %v2124 = vpop.f32.mrf.mxu0
      %v2125 = vadd.f32 %v1898, %v2124
      %v2126 = vpop.f32.mrf.mxu0
      %v2127 = vadd.f32 %v1898, %v2126
      %2128 = vmatmul.bf16.gmra.mxu0 %v1861
      %v2129 = vpop.f32.mrf.mxu0
      %v2130 = vadd.f32 %v1898, %v2129
      %v2131 = vpop.f32.mrf.mxu0
      %2132 = vdwg.mxu0
      %2133 = vmatpush.bf16.msra.mxu0 %v2031
      %2134 = vmatpush.bf16.msra.mxu0 %v2027
      %2135 = vmatpush.bf16.msra.mxu0 %v2023
      %2136 = vmatpush.bf16.msra.mxu0 %v2019
      %2137 = vmatpush.bf16.msra.mxu0 %v2015
      %2138 = vmatpush.bf16.msra.mxu0 %v2011
      %2139 = vmatpush.bf16.msra.mxu0 %v2007
      %2140 = vmatpush.bf16.msra.mxu0 %v2003
      %2141 = vmatmul.bf16.gmra.mxu0 %v1859
      %v2142 = vpop.f32.mrf.mxu0
      %v2143 = vadd.f32 %v1899, %v2142
      %v2144 = vpop.f32.mrf.mxu0
      %v2145 = vadd.f32 %v1899, %v2144
      %2146 = vmatmul.bf16.gmra.mxu0 %v1860
      %v2147 = vpop.f32.mrf.mxu0
      %v2148 = vadd.f32 %v1899, %v2147
      %v2149 = vpop.f32.mrf.mxu0
      %v2150 = vadd.f32 %v1899, %v2149
      %2151 = vmatmul.bf16.gmra.mxu0 %v1861
      %v2152 = vpop.f32.mrf.mxu0
      %v2153 = vadd.f32 %v1899, %v2152
      %v2154 = vpop.f32.mrf.mxu0
      %2155 = vdwg.mxu0
      %v2156 = vmul.f32 %v2074, 0.5
      %v2157 = vmul.f32 %v2097, 0.5
      %v2158 = vmul.f32 %v2120, 0.5
      %v2159 = vmul.f32 %v2143, 0.5
      %v2160 = vmul.f32 %v2076, 0.5
      %v2161 = vmul.f32 %v2099, 0.5
      %v2162 = vmul.f32 %v2122, 0.5
      %v2163 = vmul.f32 %v2145, 0.5
      %v2164 = vmul.f32 %v2079, 0.5
      %v2165 = vmul.f32 %v2102, 0.5
      %v2166 = vmul.f32 %v2125, 0.5
      %v2167 = vmul.f32 %v2148, 0.5
      %v2168 = vmul.f32 %v2081, 0.5
      %v2169 = vmul.f32 %v2104, 0.5
      %v2170 = vmul.f32 %v2127, 0.5
      %v2171 = vmul.f32 %v2150, 0.5
      %v2172 = vmul.f32 %v2084, 0.5
      %v2173 = vmul.f32 %v2107, 0.5
      %v2174 = vmul.f32 %v2130, 0.5
      %v2175 = vmul.f32 %v2153, 0.5
      %v2176 = vmul.f32 %v2074, 0.70710677
      %v2177 = vmul.f32 %v2097, 0.70710677
      %v2178 = vmul.f32 %v2120, 0.70710677
      %v2179 = vmul.f32 %v2143, 0.70710677
      %v2180 = vmul.f32 %v2076, 0.70710677
      %v2181 = vmul.f32 %v2099, 0.70710677
      %v2182 = vmul.f32 %v2122, 0.70710677
      %v2183 = vmul.f32 %v2145, 0.70710677
      %v2184 = vmul.f32 %v2079, 0.70710677
      %v2185 = vmul.f32 %v2102, 0.70710677
      %v2186 = vmul.f32 %v2125, 0.70710677
      %v2187 = vmul.f32 %v2148, 0.70710677
      %v2188 = vmul.f32 %v2081, 0.70710677
      %v2189 = vmul.f32 %v2104, 0.70710677
      %v2190 = vmul.f32 %v2127, 0.70710677
      %v2191 = vmul.f32 %v2150, 0.70710677
      %v2192 = vmul.f32 %v2084, 0.70710677
      %v2193 = vmul.f32 %v2107, 0.70710677
      %v2194 = vmul.f32 %v2130, 0.70710677
      %v2195 = vmul.f32 %v2153, 0.70710677
      %v2196 = vmul.f32 %v2176, %v2176
      %v2197 = vmin.f32 16.0, %v2196
      %v2198 = vmul.f32 %v2197, 2.1237322e-06
      %v2199 = vadd.f32 %v2198, 0.00028619796
      %v2200 = vmul.f32 %v2197, %v2199
      %v2201 = vadd.f32 %v2200, 0.0036580483
      %v2202 = vmul.f32 %v2197, %v2201
      %v2203 = vadd.f32 %v2202, 0.05243302
      %v2204 = vmul.f32 %v2197, %v2203
      %v2205 = vadd.f32 %v2204, 0.18741608
      %v2206 = vmul.f32 %v2197, %v2205
      %v2207 = vadd.f32 %v2206, 1.1283791
      %v2208 = vmul.f32 %v2176, %v2207
      %v2209 = vmul.f32 %v2197, 3.8918573e-05
      %v2210 = vadd.f32 %v2209, 0.001143296
      %v2211 = vmul.f32 %v2197, %v2210
      %v2212 = vadd.f32 %v2211, 0.014752088
      %v2213 = vmul.f32 %v2197, %v2212
      %v2214 = vadd.f32 %v2213, 0.112945676
      %v2215 = vmul.f32 %v2197, %v2214
      %v2216 = vadd.f32 %v2215, 0.4994258
      %v2217 = vmul.f32 %v2197, %v2216
      %v2218 = vadd.f32 %v2217, 1.0
      %v2219 = vrcp.pop %v2218
      %v2220 = vmul.f32 %v2218, %v2219
      %v2221 = vsub.f32 1.0, %v2220
      %v2222 = vmul.f32 %v2219, %v2221
      %v2223 = vadd.f32 %v2219, %v2222
      %vm2224 = vweird.f32 %v2218
      %vm2225 = vweird.f32 %v2219
      %vm2226 = vmor %vm2224, %vm2225
      %v2227 = vsel %vm2226, %v2219, %v2223
      %v2228 = vand.u32 2147483647, %v2218
      %vm2229 = vcmp.eq.f32.partialorder %v2228, 8.507059e+37
      %v2230 = vand.u32 %v2218, 2147483648
      %v2231 = vor.u32 1.1754944e-38, %v2230
      %v2232 = vsel %vm2229, %v2231, %v2227
      %v2233 = vmul.f32 %v2208, %v2232
      %v2234 = vmin.f32 %v2233, 1.0
      %v2235 = vmax.f32 %v2234, -1.0
      %v2236 = vmul.f32 %v2177, %v2177
      %v2237 = vmin.f32 16.0, %v2236
      %v2238 = vmul.f32 %v2237, 2.1237322e-06
      %v2239 = vadd.f32 %v2238, 0.00028619796
      %v2240 = vmul.f32 %v2237, %v2239
      %v2241 = vadd.f32 %v2240, 0.0036580483
      %v2242 = vmul.f32 %v2237, %v2241
      %v2243 = vadd.f32 %v2242, 0.05243302
      %v2244 = vmul.f32 %v2237, %v2243
      %v2245 = vadd.f32 %v2244, 0.18741608
      %v2246 = vmul.f32 %v2237, %v2245
      %v2247 = vadd.f32 %v2246, 1.1283791
      %v2248 = vmul.f32 %v2177, %v2247
      %v2249 = vmul.f32 %v2237, 3.8918573e-05
      %v2250 = vadd.f32 %v2249, 0.001143296
      %v2251 = vmul.f32 %v2237, %v2250
      %v2252 = vadd.f32 %v2251, 0.014752088
      %v2253 = vmul.f32 %v2237, %v2252
      %v2254 = vadd.f32 %v2253, 0.112945676
      %v2255 = vmul.f32 %v2237, %v2254
      %v2256 = vadd.f32 %v2255, 0.4994258
      %v2257 = vmul.f32 %v2237, %v2256
      %v2258 = vadd.f32 %v2257, 1.0
      %v2259 = vrcp.pop %v2258
      %v2260 = vmul.f32 %v2258, %v2259
      %v2261 = vsub.f32 1.0, %v2260
      %v2262 = vmul.f32 %v2259, %v2261
      %v2263 = vadd.f32 %v2259, %v2262
      %vm2264 = vweird.f32 %v2258
      %vm2265 = vweird.f32 %v2259
      %vm2266 = vmor %vm2264, %vm2265
      %v2267 = vsel %vm2266, %v2259, %v2263
      %v2268 = vand.u32 2147483647, %v2258
      %vm2269 = vcmp.eq.f32.partialorder %v2268, 8.507059e+37
      %v2270 = vand.u32 %v2258, 2147483648
      %v2271 = vor.u32 1.1754944e-38, %v2270
      %v2272 = vsel %vm2269, %v2271, %v2267
      %v2273 = vmul.f32 %v2248, %v2272
      %v2274 = vmin.f32 %v2273, 1.0
      %v2275 = vmax.f32 %v2274, -1.0
      %v2276 = vmul.f32 %v2178, %v2178
      %v2277 = vmin.f32 16.0, %v2276
      %v2278 = vmul.f32 %v2277, 2.1237322e-06
      %v2279 = vadd.f32 %v2278, 0.00028619796
      %v2280 = vmul.f32 %v2277, %v2279
      %v2281 = vadd.f32 %v2280, 0.0036580483
      %v2282 = vmul.f32 %v2277, %v2281
      %v2283 = vadd.f32 %v2282, 0.05243302
      %v2284 = vmul.f32 %v2277, %v2283
      %v2285 = vadd.f32 %v2284, 0.18741608
      %v2286 = vmul.f32 %v2277, %v2285
      %v2287 = vadd.f32 %v2286, 1.1283791
      %v2288 = vmul.f32 %v2178, %v2287
      %v2289 = vmul.f32 %v2277, 3.8918573e-05
      %v2290 = vadd.f32 %v2289, 0.001143296
      %v2291 = vmul.f32 %v2277, %v2290
      %v2292 = vadd.f32 %v2291, 0.014752088
      %v2293 = vmul.f32 %v2277, %v2292
      %v2294 = vadd.f32 %v2293, 0.112945676
      %v2295 = vmul.f32 %v2277, %v2294
      %v2296 = vadd.f32 %v2295, 0.4994258
      %v2297 = vmul.f32 %v2277, %v2296
      %v2298 = vadd.f32 %v2297, 1.0
      %v2299 = vrcp.pop %v2298
      %v2300 = vmul.f32 %v2298, %v2299
      %v2301 = vsub.f32 1.0, %v2300
      %v2302 = vmul.f32 %v2299, %v2301
      %v2303 = vadd.f32 %v2299, %v2302
      %vm2304 = vweird.f32 %v2298
      %vm2305 = vweird.f32 %v2299
      %vm2306 = vmor %vm2304, %vm2305
      %v2307 = vsel %vm2306, %v2299, %v2303
      %v2308 = vand.u32 2147483647, %v2298
      %vm2309 = vcmp.eq.f32.partialorder %v2308, 8.507059e+37
      %v2310 = vand.u32 %v2298, 2147483648
      %v2311 = vor.u32 1.1754944e-38, %v2310
      %v2312 = vsel %vm2309, %v2311, %v2307
      %v2313 = vmul.f32 %v2288, %v2312
      %v2314 = vmin.f32 %v2313, 1.0
      %v2315 = vmax.f32 %v2314, -1.0
      %v2316 = vmul.f32 %v2179, %v2179
      %v2317 = vmin.f32 16.0, %v2316
      %v2318 = vmul.f32 %v2317, 2.1237322e-06
      %v2319 = vadd.f32 %v2318, 0.00028619796
      %v2320 = vmul.f32 %v2317, %v2319
      %v2321 = vadd.f32 %v2320, 0.0036580483
      %v2322 = vmul.f32 %v2317, %v2321
      %v2323 = vadd.f32 %v2322, 0.05243302
      %v2324 = vmul.f32 %v2317, %v2323
      %v2325 = vadd.f32 %v2324, 0.18741608
      %v2326 = vmul.f32 %v2317, %v2325
      %v2327 = vadd.f32 %v2326, 1.1283791
      %v2328 = vmul.f32 %v2179, %v2327
      %v2329 = vmul.f32 %v2317, 3.8918573e-05
      %v2330 = vadd.f32 %v2329, 0.001143296
      %v2331 = vmul.f32 %v2317, %v2330
      %v2332 = vadd.f32 %v2331, 0.014752088
      %v2333 = vmul.f32 %v2317, %v2332
      %v2334 = vadd.f32 %v2333, 0.112945676
      %v2335 = vmul.f32 %v2317, %v2334
      %v2336 = vadd.f32 %v2335, 0.4994258
      %v2337 = vmul.f32 %v2317, %v2336
      %v2338 = vadd.f32 %v2337, 1.0
      %v2339 = vrcp.pop %v2338
      %v2340 = vmul.f32 %v2338, %v2339
      %v2341 = vsub.f32 1.0, %v2340
      %v2342 = vmul.f32 %v2339, %v2341
      %v2343 = vadd.f32 %v2339, %v2342
      %vm2344 = vweird.f32 %v2338
      %vm2345 = vweird.f32 %v2339
      %vm2346 = vmor %vm2344, %vm2345
      %v2347 = vsel %vm2346, %v2339, %v2343
      %v2348 = vand.u32 2147483647, %v2338
      %vm2349 = vcmp.eq.f32.partialorder %v2348, 8.507059e+37
      %v2350 = vand.u32 %v2338, 2147483648
      %v2351 = vor.u32 1.1754944e-38, %v2350
      %v2352 = vsel %vm2349, %v2351, %v2347
      %v2353 = vmul.f32 %v2328, %v2352
      %v2354 = vmin.f32 %v2353, 1.0
      %v2355 = vmax.f32 %v2354, -1.0
      %v2356 = vmul.f32 %v2180, %v2180
      %v2357 = vmin.f32 16.0, %v2356
      %v2358 = vmul.f32 %v2357, 2.1237322e-06
      %v2359 = vadd.f32 %v2358, 0.00028619796
      %v2360 = vmul.f32 %v2357, %v2359
      %v2361 = vadd.f32 %v2360, 0.0036580483
      %v2362 = vmul.f32 %v2357, %v2361
      %v2363 = vadd.f32 %v2362, 0.05243302
      %v2364 = vmul.f32 %v2357, %v2363
      %v2365 = vadd.f32 %v2364, 0.18741608
      %v2366 = vmul.f32 %v2357, %v2365
      %v2367 = vadd.f32 %v2366, 1.1283791
      %v2368 = vmul.f32 %v2180, %v2367
      %v2369 = vmul.f32 %v2357, 3.8918573e-05
      %v2370 = vadd.f32 %v2369, 0.001143296
      %v2371 = vmul.f32 %v2357, %v2370
      %v2372 = vadd.f32 %v2371, 0.014752088
      %v2373 = vmul.f32 %v2357, %v2372
      %v2374 = vadd.f32 %v2373, 0.112945676
      %v2375 = vmul.f32 %v2357, %v2374
      %v2376 = vadd.f32 %v2375, 0.4994258
      %v2377 = vmul.f32 %v2357, %v2376
      %v2378 = vadd.f32 %v2377, 1.0
      %v2379 = vrcp.pop %v2378
      %v2380 = vmul.f32 %v2378, %v2379
      %v2381 = vsub.f32 1.0, %v2380
      %v2382 = vmul.f32 %v2379, %v2381
      %v2383 = vadd.f32 %v2379, %v2382
      %vm2384 = vweird.f32 %v2378
      %vm2385 = vweird.f32 %v2379
      %vm2386 = vmor %vm2384, %vm2385
      %v2387 = vsel %vm2386, %v2379, %v2383
      %v2388 = vand.u32 2147483647, %v2378
      %vm2389 = vcmp.eq.f32.partialorder %v2388, 8.507059e+37
      %v2390 = vand.u32 %v2378, 2147483648
      %v2391 = vor.u32 1.1754944e-38, %v2390
      %v2392 = vsel %vm2389, %v2391, %v2387
      %v2393 = vmul.f32 %v2368, %v2392
      %v2394 = vmin.f32 %v2393, 1.0
      %v2395 = vmax.f32 %v2394, -1.0
      %v2396 = vmul.f32 %v2181, %v2181
      %v2397 = vmin.f32 16.0, %v2396
      %v2398 = vmul.f32 %v2397, 2.1237322e-06
      %v2399 = vadd.f32 %v2398, 0.00028619796
      %v2400 = vmul.f32 %v2397, %v2399
      %v2401 = vadd.f32 %v2400, 0.0036580483
      %v2402 = vmul.f32 %v2397, %v2401
      %v2403 = vadd.f32 %v2402, 0.05243302
      %v2404 = vmul.f32 %v2397, %v2403
      %v2405 = vadd.f32 %v2404, 0.18741608
      %v2406 = vmul.f32 %v2397, %v2405
      %v2407 = vadd.f32 %v2406, 1.1283791
      %v2408 = vmul.f32 %v2181, %v2407
      %v2409 = vmul.f32 %v2397, 3.8918573e-05
      %v2410 = vadd.f32 %v2409, 0.001143296
      %v2411 = vmul.f32 %v2397, %v2410
      %v2412 = vadd.f32 %v2411, 0.014752088
      %v2413 = vmul.f32 %v2397, %v2412
      %v2414 = vadd.f32 %v2413, 0.112945676
      %v2415 = vmul.f32 %v2397, %v2414
      %v2416 = vadd.f32 %v2415, 0.4994258
      %v2417 = vmul.f32 %v2397, %v2416
      %v2418 = vadd.f32 %v2417, 1.0
      %v2419 = vrcp.pop %v2418
      %v2420 = vmul.f32 %v2418, %v2419
      %v2421 = vsub.f32 1.0, %v2420
      %v2422 = vmul.f32 %v2419, %v2421
      %v2423 = vadd.f32 %v2419, %v2422
      %vm2424 = vweird.f32 %v2418
      %vm2425 = vweird.f32 %v2419
      %vm2426 = vmor %vm2424, %vm2425
      %v2427 = vsel %vm2426, %v2419, %v2423
      %v2428 = vand.u32 2147483647, %v2418
      %vm2429 = vcmp.eq.f32.partialorder %v2428, 8.507059e+37
      %v2430 = vand.u32 %v2418, 2147483648
      %v2431 = vor.u32 1.1754944e-38, %v2430
      %v2432 = vsel %vm2429, %v2431, %v2427
      %v2433 = vmul.f32 %v2408, %v2432
      %v2434 = vmin.f32 %v2433, 1.0
      %v2435 = vmax.f32 %v2434, -1.0
      %v2436 = vmul.f32 %v2182, %v2182
      %v2437 = vmin.f32 16.0, %v2436
      %v2438 = vmul.f32 %v2437, 2.1237322e-06
      %v2439 = vadd.f32 %v2438, 0.00028619796
      %v2440 = vmul.f32 %v2437, %v2439
      %v2441 = vadd.f32 %v2440, 0.0036580483
      %v2442 = vmul.f32 %v2437, %v2441
      %v2443 = vadd.f32 %v2442, 0.05243302
      %v2444 = vmul.f32 %v2437, %v2443
      %v2445 = vadd.f32 %v2444, 0.18741608
      %v2446 = vmul.f32 %v2437, %v2445
      %v2447 = vadd.f32 %v2446, 1.1283791
      %v2448 = vmul.f32 %v2182, %v2447
      %v2449 = vmul.f32 %v2437, 3.8918573e-05
      %v2450 = vadd.f32 %v2449, 0.001143296
      %v2451 = vmul.f32 %v2437, %v2450
      %v2452 = vadd.f32 %v2451, 0.014752088
      %v2453 = vmul.f32 %v2437, %v2452
      %v2454 = vadd.f32 %v2453, 0.112945676
      %v2455 = vmul.f32 %v2437, %v2454
      %v2456 = vadd.f32 %v2455, 0.4994258
      %v2457 = vmul.f32 %v2437, %v2456
      %v2458 = vadd.f32 %v2457, 1.0
      %v2459 = vrcp.pop %v2458
      %v2460 = vmul.f32 %v2458, %v2459
      %v2461 = vsub.f32 1.0, %v2460
      %v2462 = vmul.f32 %v2459, %v2461
      %v2463 = vadd.f32 %v2459, %v2462
      %vm2464 = vweird.f32 %v2458
      %vm2465 = vweird.f32 %v2459
      %vm2466 = vmor %vm2464, %vm2465
      %v2467 = vsel %vm2466, %v2459, %v2463
      %v2468 = vand.u32 2147483647, %v2458
      %vm2469 = vcmp.eq.f32.partialorder %v2468, 8.507059e+37
      %v2470 = vand.u32 %v2458, 2147483648
      %v2471 = vor.u32 1.1754944e-38, %v2470
      %v2472 = vsel %vm2469, %v2471, %v2467
      %v2473 = vmul.f32 %v2448, %v2472
      %v2474 = vmin.f32 %v2473, 1.0
      %v2475 = vmax.f32 %v2474, -1.0
      %v2476 = vmul.f32 %v2183, %v2183
      %v2477 = vmin.f32 16.0, %v2476
      %v2478 = vmul.f32 %v2477, 2.1237322e-06
      %v2479 = vadd.f32 %v2478, 0.00028619796
      %v2480 = vmul.f32 %v2477, %v2479
      %v2481 = vadd.f32 %v2480, 0.0036580483
      %v2482 = vmul.f32 %v2477, %v2481
      %v2483 = vadd.f32 %v2482, 0.05243302
      %v2484 = vmul.f32 %v2477, %v2483
      %v2485 = vadd.f32 %v2484, 0.18741608
      %v2486 = vmul.f32 %v2477, %v2485
      %v2487 = vadd.f32 %v2486, 1.1283791
      %v2488 = vmul.f32 %v2183, %v2487
      %v2489 = vmul.f32 %v2477, 3.8918573e-05
      %v2490 = vadd.f32 %v2489, 0.001143296
      %v2491 = vmul.f32 %v2477, %v2490
      %v2492 = vadd.f32 %v2491, 0.014752088
      %v2493 = vmul.f32 %v2477, %v2492
      %v2494 = vadd.f32 %v2493, 0.112945676
      %v2495 = vmul.f32 %v2477, %v2494
      %v2496 = vadd.f32 %v2495, 0.4994258
      %v2497 = vmul.f32 %v2477, %v2496
      %v2498 = vadd.f32 %v2497, 1.0
      %v2499 = vrcp.pop %v2498
      %v2500 = vmul.f32 %v2498, %v2499
      %v2501 = vsub.f32 1.0, %v2500
      %v2502 = vmul.f32 %v2499, %v2501
      %v2503 = vadd.f32 %v2499, %v2502
      %vm2504 = vweird.f32 %v2498
      %vm2505 = vweird.f32 %v2499
      %vm2506 = vmor %vm2504, %vm2505
      %v2507 = vsel %vm2506, %v2499, %v2503
      %v2508 = vand.u32 2147483647, %v2498
      %vm2509 = vcmp.eq.f32.partialorder %v2508, 8.507059e+37
      %v2510 = vand.u32 %v2498, 2147483648
      %v2511 = vor.u32 1.1754944e-38, %v2510
      %v2512 = vsel %vm2509, %v2511, %v2507
      %v2513 = vmul.f32 %v2488, %v2512
      %v2514 = vmin.f32 %v2513, 1.0
      %v2515 = vmax.f32 %v2514, -1.0
      %v2516 = vmul.f32 %v2184, %v2184
      %v2517 = vmin.f32 16.0, %v2516
      %v2518 = vmul.f32 %v2517, 2.1237322e-06
      %v2519 = vadd.f32 %v2518, 0.00028619796
      %v2520 = vmul.f32 %v2517, %v2519
      %v2521 = vadd.f32 %v2520, 0.0036580483
      %v2522 = vmul.f32 %v2517, %v2521
      %v2523 = vadd.f32 %v2522, 0.05243302
      %v2524 = vmul.f32 %v2517, %v2523
      %v2525 = vadd.f32 %v2524, 0.18741608
      %v2526 = vmul.f32 %v2517, %v2525
      %v2527 = vadd.f32 %v2526, 1.1283791
      %v2528 = vmul.f32 %v2184, %v2527
      %v2529 = vmul.f32 %v2517, 3.8918573e-05
      %v2530 = vadd.f32 %v2529, 0.001143296
      %v2531 = vmul.f32 %v2517, %v2530
      %v2532 = vadd.f32 %v2531, 0.014752088
      %v2533 = vmul.f32 %v2517, %v2532
      %v2534 = vadd.f32 %v2533, 0.112945676
      %v2535 = vmul.f32 %v2517, %v2534
      %v2536 = vadd.f32 %v2535, 0.4994258
      %v2537 = vmul.f32 %v2517, %v2536
      %v2538 = vadd.f32 %v2537, 1.0
      %v2539 = vrcp.pop %v2538
      %v2540 = vmul.f32 %v2538, %v2539
      %v2541 = vsub.f32 1.0, %v2540
      %v2542 = vmul.f32 %v2539, %v2541
      %v2543 = vadd.f32 %v2539, %v2542
      %vm2544 = vweird.f32 %v2538
      %vm2545 = vweird.f32 %v2539
      %vm2546 = vmor %vm2544, %vm2545
      %v2547 = vsel %vm2546, %v2539, %v2543
      %v2548 = vand.u32 2147483647, %v2538
      %vm2549 = vcmp.eq.f32.partialorder %v2548, 8.507059e+37
      %v2550 = vand.u32 %v2538, 2147483648
      %v2551 = vor.u32 1.1754944e-38, %v2550
      %v2552 = vsel %vm2549, %v2551, %v2547
      %v2553 = vmul.f32 %v2528, %v2552
      %v2554 = vmin.f32 %v2553, 1.0
      %v2555 = vmax.f32 %v2554, -1.0
      %v2556 = vmul.f32 %v2185, %v2185
      %v2557 = vmin.f32 16.0, %v2556
      %v2558 = vmul.f32 %v2557, 2.1237322e-06
      %v2559 = vadd.f32 %v2558, 0.00028619796
      %v2560 = vmul.f32 %v2557, %v2559
      %v2561 = vadd.f32 %v2560, 0.0036580483
      %v2562 = vmul.f32 %v2557, %v2561
      %v2563 = vadd.f32 %v2562, 0.05243302
      %v2564 = vmul.f32 %v2557, %v2563
      %v2565 = vadd.f32 %v2564, 0.18741608
      %v2566 = vmul.f32 %v2557, %v2565
      %v2567 = vadd.f32 %v2566, 1.1283791
      %v2568 = vmul.f32 %v2185, %v2567
      %v2569 = vmul.f32 %v2557, 3.8918573e-05
      %v2570 = vadd.f32 %v2569, 0.001143296
      %v2571 = vmul.f32 %v2557, %v2570
      %v2572 = vadd.f32 %v2571, 0.014752088
      %v2573 = vmul.f32 %v2557, %v2572
      %v2574 = vadd.f32 %v2573, 0.112945676
      %v2575 = vmul.f32 %v2557, %v2574
      %v2576 = vadd.f32 %v2575, 0.4994258
      %v2577 = vmul.f32 %v2557, %v2576
      %v2578 = vadd.f32 %v2577, 1.0
      %v2579 = vrcp.pop %v2578
      %v2580 = vmul.f32 %v2578, %v2579
      %v2581 = vsub.f32 1.0, %v2580
      %v2582 = vmul.f32 %v2579, %v2581
      %v2583 = vadd.f32 %v2579, %v2582
      %vm2584 = vweird.f32 %v2578
      %vm2585 = vweird.f32 %v2579
      %vm2586 = vmor %vm2584, %vm2585
      %v2587 = vsel %vm2586, %v2579, %v2583
      %v2588 = vand.u32 2147483647, %v2578
      %vm2589 = vcmp.eq.f32.partialorder %v2588, 8.507059e+37
      %v2590 = vand.u32 %v2578, 2147483648
      %v2591 = vor.u32 1.1754944e-38, %v2590
      %v2592 = vsel %vm2589, %v2591, %v2587
      %v2593 = vmul.f32 %v2568, %v2592
      %v2594 = vmin.f32 %v2593, 1.0
      %v2595 = vmax.f32 %v2594, -1.0
      %v2596 = vmul.f32 %v2186, %v2186
      %v2597 = vmin.f32 16.0, %v2596
      %v2598 = vmul.f32 %v2597, 2.1237322e-06
      %v2599 = vadd.f32 %v2598, 0.00028619796
      %v2600 = vmul.f32 %v2597, %v2599
      %v2601 = vadd.f32 %v2600, 0.0036580483
      %v2602 = vmul.f32 %v2597, %v2601
      %v2603 = vadd.f32 %v2602, 0.05243302
      %v2604 = vmul.f32 %v2597, %v2603
      %v2605 = vadd.f32 %v2604, 0.18741608
      %v2606 = vmul.f32 %v2597, %v2605
      %v2607 = vadd.f32 %v2606, 1.1283791
      %v2608 = vmul.f32 %v2186, %v2607
      %v2609 = vmul.f32 %v2597, 3.8918573e-05
      %v2610 = vadd.f32 %v2609, 0.001143296
      %v2611 = vmul.f32 %v2597, %v2610
      %v2612 = vadd.f32 %v2611, 0.014752088
      %v2613 = vmul.f32 %v2597, %v2612
      %v2614 = vadd.f32 %v2613, 0.112945676
      %v2615 = vmul.f32 %v2597, %v2614
      %v2616 = vadd.f32 %v2615, 0.4994258
      %v2617 = vmul.f32 %v2597, %v2616
      %v2618 = vadd.f32 %v2617, 1.0
      %v2619 = vrcp.pop %v2618
      %v2620 = vmul.f32 %v2618, %v2619
      %v2621 = vsub.f32 1.0, %v2620
      %v2622 = vmul.f32 %v2619, %v2621
      %v2623 = vadd.f32 %v2619, %v2622
      %vm2624 = vweird.f32 %v2618
      %vm2625 = vweird.f32 %v2619
      %vm2626 = vmor %vm2624, %vm2625
      %v2627 = vsel %vm2626, %v2619, %v2623
      %v2628 = vand.u32 2147483647, %v2618
      %vm2629 = vcmp.eq.f32.partialorder %v2628, 8.507059e+37
      %v2630 = vand.u32 %v2618, 2147483648
      %v2631 = vor.u32 1.1754944e-38, %v2630
      %v2632 = vsel %vm2629, %v2631, %v2627
      %v2633 = vmul.f32 %v2608, %v2632
      %v2634 = vmin.f32 %v2633, 1.0
      %v2635 = vmax.f32 %v2634, -1.0
      %v2636 = vmul.f32 %v2187, %v2187
      %v2637 = vmin.f32 16.0, %v2636
      %v2638 = vmul.f32 %v2637, 2.1237322e-06
      %v2639 = vadd.f32 %v2638, 0.00028619796
      %v2640 = vmul.f32 %v2637, %v2639
      %v2641 = vadd.f32 %v2640, 0.0036580483
      %v2642 = vmul.f32 %v2637, %v2641
      %v2643 = vadd.f32 %v2642, 0.05243302
      %v2644 = vmul.f32 %v2637, %v2643
      %v2645 = vadd.f32 %v2644, 0.18741608
      %v2646 = vmul.f32 %v2637, %v2645
      %v2647 = vadd.f32 %v2646, 1.1283791
      %v2648 = vmul.f32 %v2187, %v2647
      %v2649 = vmul.f32 %v2637, 3.8918573e-05
      %v2650 = vadd.f32 %v2649, 0.001143296
      %v2651 = vmul.f32 %v2637, %v2650
      %v2652 = vadd.f32 %v2651, 0.014752088
      %v2653 = vmul.f32 %v2637, %v2652
      %v2654 = vadd.f32 %v2653, 0.112945676
      %v2655 = vmul.f32 %v2637, %v2654
      %v2656 = vadd.f32 %v2655, 0.4994258
      %v2657 = vmul.f32 %v2637, %v2656
      %v2658 = vadd.f32 %v2657, 1.0
      %v2659 = vrcp.pop %v2658
      %v2660 = vmul.f32 %v2658, %v2659
      %v2661 = vsub.f32 1.0, %v2660
      %v2662 = vmul.f32 %v2659, %v2661
      %v2663 = vadd.f32 %v2659, %v2662
      %vm2664 = vweird.f32 %v2658
      %vm2665 = vweird.f32 %v2659
      %vm2666 = vmor %vm2664, %vm2665
      %v2667 = vsel %vm2666, %v2659, %v2663
      %v2668 = vand.u32 2147483647, %v2658
      %vm2669 = vcmp.eq.f32.partialorder %v2668, 8.507059e+37
      %v2670 = vand.u32 %v2658, 2147483648
      %v2671 = vor.u32 1.1754944e-38, %v2670
      %v2672 = vsel %vm2669, %v2671, %v2667
      %v2673 = vmul.f32 %v2648, %v2672
      %v2674 = vmin.f32 %v2673, 1.0
      %v2675 = vmax.f32 %v2674, -1.0
      %v2676 = vmul.f32 %v2188, %v2188
      %v2677 = vmin.f32 16.0, %v2676
      %v2678 = vmul.f32 %v2677, 2.1237322e-06
      %v2679 = vadd.f32 %v2678, 0.00028619796
      %v2680 = vmul.f32 %v2677, %v2679
      %v2681 = vadd.f32 %v2680, 0.0036580483
      %v2682 = vmul.f32 %v2677, %v2681
      %v2683 = vadd.f32 %v2682, 0.05243302
      %v2684 = vmul.f32 %v2677, %v2683
      %v2685 = vadd.f32 %v2684, 0.18741608
      %v2686 = vmul.f32 %v2677, %v2685
      %v2687 = vadd.f32 %v2686, 1.1283791
      %v2688 = vmul.f32 %v2188, %v2687
      %v2689 = vmul.f32 %v2677, 3.8918573e-05
      %v2690 = vadd.f32 %v2689, 0.001143296
      %v2691 = vmul.f32 %v2677, %v2690
      %v2692 = vadd.f32 %v2691, 0.014752088
      %v2693 = vmul.f32 %v2677, %v2692
      %v2694 = vadd.f32 %v2693, 0.112945676
      %v2695 = vmul.f32 %v2677, %v2694
      %v2696 = vadd.f32 %v2695, 0.4994258
      %v2697 = vmul.f32 %v2677, %v2696
      %v2698 = vadd.f32 %v2697, 1.0
      %v2699 = vrcp.pop %v2698
      %v2700 = vmul.f32 %v2698, %v2699
      %v2701 = vsub.f32 1.0, %v2700
      %v2702 = vmul.f32 %v2699, %v2701
      %v2703 = vadd.f32 %v2699, %v2702
      %vm2704 = vweird.f32 %v2698
      %vm2705 = vweird.f32 %v2699
      %vm2706 = vmor %vm2704, %vm2705
      %v2707 = vsel %vm2706, %v2699, %v2703
      %v2708 = vand.u32 2147483647, %v2698
      %vm2709 = vcmp.eq.f32.partialorder %v2708, 8.507059e+37
      %v2710 = vand.u32 %v2698, 2147483648
      %v2711 = vor.u32 1.1754944e-38, %v2710
      %v2712 = vsel %vm2709, %v2711, %v2707
      %v2713 = vmul.f32 %v2688, %v2712
      %v2714 = vmin.f32 %v2713, 1.0
      %v2715 = vmax.f32 %v2714, -1.0
      %v2716 = vmul.f32 %v2189, %v2189
      %v2717 = vmin.f32 16.0, %v2716
      %v2718 = vmul.f32 %v2717, 2.1237322e-06
      %v2719 = vadd.f32 %v2718, 0.00028619796
      %v2720 = vmul.f32 %v2717, %v2719
      %v2721 = vadd.f32 %v2720, 0.0036580483
      %v2722 = vmul.f32 %v2717, %v2721
      %v2723 = vadd.f32 %v2722, 0.05243302
      %v2724 = vmul.f32 %v2717, %v2723
      %v2725 = vadd.f32 %v2724, 0.18741608
      %v2726 = vmul.f32 %v2717, %v2725
      %v2727 = vadd.f32 %v2726, 1.1283791
      %v2728 = vmul.f32 %v2189, %v2727
      %v2729 = vmul.f32 %v2717, 3.8918573e-05
      %v2730 = vadd.f32 %v2729, 0.001143296
      %v2731 = vmul.f32 %v2717, %v2730
      %v2732 = vadd.f32 %v2731, 0.014752088
      %v2733 = vmul.f32 %v2717, %v2732
      %v2734 = vadd.f32 %v2733, 0.112945676
      %v2735 = vmul.f32 %v2717, %v2734
      %v2736 = vadd.f32 %v2735, 0.4994258
      %v2737 = vmul.f32 %v2717, %v2736
      %v2738 = vadd.f32 %v2737, 1.0
      %v2739 = vrcp.pop %v2738
      %v2740 = vmul.f32 %v2738, %v2739
      %v2741 = vsub.f32 1.0, %v2740
      %v2742 = vmul.f32 %v2739, %v2741
      %v2743 = vadd.f32 %v2739, %v2742
      %vm2744 = vweird.f32 %v2738
      %vm2745 = vweird.f32 %v2739
      %vm2746 = vmor %vm2744, %vm2745
      %v2747 = vsel %vm2746, %v2739, %v2743
      %v2748 = vand.u32 2147483647, %v2738
      %vm2749 = vcmp.eq.f32.partialorder %v2748, 8.507059e+37
      %v2750 = vand.u32 %v2738, 2147483648
      %v2751 = vor.u32 1.1754944e-38, %v2750
      %v2752 = vsel %vm2749, %v2751, %v2747
      %v2753 = vmul.f32 %v2728, %v2752
      %v2754 = vmin.f32 %v2753, 1.0
      %v2755 = vmax.f32 %v2754, -1.0
      %v2756 = vmul.f32 %v2190, %v2190
      %v2757 = vmin.f32 16.0, %v2756
      %v2758 = vmul.f32 %v2757, 2.1237322e-06
      %v2759 = vadd.f32 %v2758, 0.00028619796
      %v2760 = vmul.f32 %v2757, %v2759
      %v2761 = vadd.f32 %v2760, 0.0036580483
      %v2762 = vmul.f32 %v2757, %v2761
      %v2763 = vadd.f32 %v2762, 0.05243302
      %v2764 = vmul.f32 %v2757, %v2763
      %v2765 = vadd.f32 %v2764, 0.18741608
      %v2766 = vmul.f32 %v2757, %v2765
      %v2767 = vadd.f32 %v2766, 1.1283791
      %v2768 = vmul.f32 %v2190, %v2767
      %v2769 = vmul.f32 %v2757, 3.8918573e-05
      %v2770 = vadd.f32 %v2769, 0.001143296
      %v2771 = vmul.f32 %v2757, %v2770
      %v2772 = vadd.f32 %v2771, 0.014752088
      %v2773 = vmul.f32 %v2757, %v2772
      %v2774 = vadd.f32 %v2773, 0.112945676
      %v2775 = vmul.f32 %v2757, %v2774
      %v2776 = vadd.f32 %v2775, 0.4994258
      %v2777 = vmul.f32 %v2757, %v2776
      %v2778 = vadd.f32 %v2777, 1.0
      %v2779 = vrcp.pop %v2778
      %v2780 = vmul.f32 %v2778, %v2779
      %v2781 = vsub.f32 1.0, %v2780
      %v2782 = vmul.f32 %v2779, %v2781
      %v2783 = vadd.f32 %v2779, %v2782
      %vm2784 = vweird.f32 %v2778
      %vm2785 = vweird.f32 %v2779
      %vm2786 = vmor %vm2784, %vm2785
      %v2787 = vsel %vm2786, %v2779, %v2783
      %v2788 = vand.u32 2147483647, %v2778
      %vm2789 = vcmp.eq.f32.partialorder %v2788, 8.507059e+37
      %v2790 = vand.u32 %v2778, 2147483648
      %v2791 = vor.u32 1.1754944e-38, %v2790
      %v2792 = vsel %vm2789, %v2791, %v2787
      %v2793 = vmul.f32 %v2768, %v2792
      %v2794 = vmin.f32 %v2793, 1.0
      %v2795 = vmax.f32 %v2794, -1.0
      %v2796 = vmul.f32 %v2191, %v2191
      %v2797 = vmin.f32 16.0, %v2796
      %v2798 = vmul.f32 %v2797, 2.1237322e-06
      %v2799 = vadd.f32 %v2798, 0.00028619796
      %v2800 = vmul.f32 %v2797, %v2799
      %v2801 = vadd.f32 %v2800, 0.0036580483
      %v2802 = vmul.f32 %v2797, %v2801
      %v2803 = vadd.f32 %v2802, 0.05243302
      %v2804 = vmul.f32 %v2797, %v2803
      %v2805 = vadd.f32 %v2804, 0.18741608
      %v2806 = vmul.f32 %v2797, %v2805
      %v2807 = vadd.f32 %v2806, 1.1283791
      %v2808 = vmul.f32 %v2191, %v2807
      %v2809 = vmul.f32 %v2797, 3.8918573e-05
      %v2810 = vadd.f32 %v2809, 0.001143296
      %v2811 = vmul.f32 %v2797, %v2810
      %v2812 = vadd.f32 %v2811, 0.014752088
      %v2813 = vmul.f32 %v2797, %v2812
      %v2814 = vadd.f32 %v2813, 0.112945676
      %v2815 = vmul.f32 %v2797, %v2814
      %v2816 = vadd.f32 %v2815, 0.4994258
      %v2817 = vmul.f32 %v2797, %v2816
      %v2818 = vadd.f32 %v2817, 1.0
      %v2819 = vrcp.pop %v2818
      %v2820 = vmul.f32 %v2818, %v2819
      %v2821 = vsub.f32 1.0, %v2820
      %v2822 = vmul.f32 %v2819, %v2821
      %v2823 = vadd.f32 %v2819, %v2822
      %vm2824 = vweird.f32 %v2818
      %vm2825 = vweird.f32 %v2819
      %vm2826 = vmor %vm2824, %vm2825
      %v2827 = vsel %vm2826, %v2819, %v2823
      %v2828 = vand.u32 2147483647, %v2818
      %vm2829 = vcmp.eq.f32.partialorder %v2828, 8.507059e+37
      %v2830 = vand.u32 %v2818, 2147483648
      %v2831 = vor.u32 1.1754944e-38, %v2830
      %v2832 = vsel %vm2829, %v2831, %v2827
      %v2833 = vmul.f32 %v2808, %v2832
      %v2834 = vmin.f32 %v2833, 1.0
      %v2835 = vmax.f32 %v2834, -1.0
      %v2836 = vmul.f32 %v2192, %v2192
      %v2837 = vmin.f32 16.0, %v2836
      %v2838 = vmul.f32 %v2837, 2.1237322e-06
      %v2839 = vadd.f32 %v2838, 0.00028619796
      %v2840 = vmul.f32 %v2837, %v2839
      %v2841 = vadd.f32 %v2840, 0.0036580483
      %v2842 = vmul.f32 %v2837, %v2841
      %v2843 = vadd.f32 %v2842, 0.05243302
      %v2844 = vmul.f32 %v2837, %v2843
      %v2845 = vadd.f32 %v2844, 0.18741608
      %v2846 = vmul.f32 %v2837, %v2845
      %v2847 = vadd.f32 %v2846, 1.1283791
      %v2848 = vmul.f32 %v2192, %v2847
      %v2849 = vmul.f32 %v2837, 3.8918573e-05
      %v2850 = vadd.f32 %v2849, 0.001143296
      %v2851 = vmul.f32 %v2837, %v2850
      %v2852 = vadd.f32 %v2851, 0.014752088
      %v2853 = vmul.f32 %v2837, %v2852
      %v2854 = vadd.f32 %v2853, 0.112945676
      %v2855 = vmul.f32 %v2837, %v2854
      %v2856 = vadd.f32 %v2855, 0.4994258
      %v2857 = vmul.f32 %v2837, %v2856
      %v2858 = vadd.f32 %v2857, 1.0
      %v2859 = vrcp.pop %v2858
      %v2860 = vmul.f32 %v2858, %v2859
      %v2861 = vsub.f32 1.0, %v2860
      %v2862 = vmul.f32 %v2859, %v2861
      %v2863 = vadd.f32 %v2859, %v2862
      %vm2864 = vweird.f32 %v2858
      %vm2865 = vweird.f32 %v2859
      %vm2866 = vmor %vm2864, %vm2865
      %v2867 = vsel %vm2866, %v2859, %v2863
      %v2868 = vand.u32 2147483647, %v2858
      %vm2869 = vcmp.eq.f32.partialorder %v2868, 8.507059e+37
      %v2870 = vand.u32 %v2858, 2147483648
      %v2871 = vor.u32 1.1754944e-38, %v2870
      %v2872 = vsel %vm2869, %v2871, %v2867
      %v2873 = vmul.f32 %v2848, %v2872
      %v2874 = vmin.f32 %v2873, 1.0
      %v2875 = vmax.f32 %v2874, -1.0
      %v2876 = vmul.f32 %v2193, %v2193
      %v2877 = vmin.f32 16.0, %v2876
      %v2878 = vmul.f32 %v2877, 2.1237322e-06
      %v2879 = vadd.f32 %v2878, 0.00028619796
      %v2880 = vmul.f32 %v2877, %v2879
      %v2881 = vadd.f32 %v2880, 0.0036580483
      %v2882 = vmul.f32 %v2877, %v2881
      %v2883 = vadd.f32 %v2882, 0.05243302
      %v2884 = vmul.f32 %v2877, %v2883
      %v2885 = vadd.f32 %v2884, 0.18741608
      %v2886 = vmul.f32 %v2877, %v2885
      %v2887 = vadd.f32 %v2886, 1.1283791
      %v2888 = vmul.f32 %v2193, %v2887
      %v2889 = vmul.f32 %v2877, 3.8918573e-05
      %v2890 = vadd.f32 %v2889, 0.001143296
      %v2891 = vmul.f32 %v2877, %v2890
      %v2892 = vadd.f32 %v2891, 0.014752088
      %v2893 = vmul.f32 %v2877, %v2892
      %v2894 = vadd.f32 %v2893, 0.112945676
      %v2895 = vmul.f32 %v2877, %v2894
      %v2896 = vadd.f32 %v2895, 0.4994258
      %v2897 = vmul.f32 %v2877, %v2896
      %v2898 = vadd.f32 %v2897, 1.0
      %v2899 = vrcp.pop %v2898
      %v2900 = vmul.f32 %v2898, %v2899
      %v2901 = vsub.f32 1.0, %v2900
      %v2902 = vmul.f32 %v2899, %v2901
      %v2903 = vadd.f32 %v2899, %v2902
      %vm2904 = vweird.f32 %v2898
      %vm2905 = vweird.f32 %v2899
      %vm2906 = vmor %vm2904, %vm2905
      %v2907 = vsel %vm2906, %v2899, %v2903
      %v2908 = vand.u32 2147483647, %v2898
      %vm2909 = vcmp.eq.f32.partialorder %v2908, 8.507059e+37
      %v2910 = vand.u32 %v2898, 2147483648
      %v2911 = vor.u32 1.1754944e-38, %v2910
      %v2912 = vsel %vm2909, %v2911, %v2907
      %v2913 = vmul.f32 %v2888, %v2912
      %v2914 = vmin.f32 %v2913, 1.0
      %v2915 = vmax.f32 %v2914, -1.0
      %v2916 = vmul.f32 %v2194, %v2194
      %v2917 = vmin.f32 16.0, %v2916
      %v2918 = vmul.f32 %v2917, 2.1237322e-06
      %v2919 = vadd.f32 %v2918, 0.00028619796
      %v2920 = vmul.f32 %v2917, %v2919
      %v2921 = vadd.f32 %v2920, 0.0036580483
      %v2922 = vmul.f32 %v2917, %v2921
      %v2923 = vadd.f32 %v2922, 0.05243302
      %v2924 = vmul.f32 %v2917, %v2923
      %v2925 = vadd.f32 %v2924, 0.18741608
      %v2926 = vmul.f32 %v2917, %v2925
      %v2927 = vadd.f32 %v2926, 1.1283791
      %v2928 = vmul.f32 %v2194, %v2927
      %v2929 = vmul.f32 %v2917, 3.8918573e-05
      %v2930 = vadd.f32 %v2929, 0.001143296
      %v2931 = vmul.f32 %v2917, %v2930
      %v2932 = vadd.f32 %v2931, 0.014752088
      %v2933 = vmul.f32 %v2917, %v2932
      %v2934 = vadd.f32 %v2933, 0.112945676
      %v2935 = vmul.f32 %v2917, %v2934
      %v2936 = vadd.f32 %v2935, 0.4994258
      %v2937 = vmul.f32 %v2917, %v2936
      %v2938 = vadd.f32 %v2937, 1.0
      %v2939 = vrcp.pop %v2938
      %v2940 = vmul.f32 %v2938, %v2939
      %v2941 = vsub.f32 1.0, %v2940
      %v2942 = vmul.f32 %v2939, %v2941
      %v2943 = vadd.f32 %v2939, %v2942
      %vm2944 = vweird.f32 %v2938
      %vm2945 = vweird.f32 %v2939
      %vm2946 = vmor %vm2944, %vm2945
      %v2947 = vsel %vm2946, %v2939, %v2943
      %v2948 = vand.u32 2147483647, %v2938
      %vm2949 = vcmp.eq.f32.partialorder %v2948, 8.507059e+37
      %v2950 = vand.u32 %v2938, 2147483648
      %v2951 = vor.u32 1.1754944e-38, %v2950
      %v2952 = vsel %vm2949, %v2951, %v2947
      %v2953 = vmul.f32 %v2928, %v2952
      %v2954 = vmin.f32 %v2953, 1.0
      %v2955 = vmax.f32 %v2954, -1.0
      %v2956 = vmul.f32 %v2195, %v2195
      %v2957 = vmin.f32 16.0, %v2956
      %v2958 = vmul.f32 %v2957, 2.1237322e-06
      %v2959 = vadd.f32 %v2958, 0.00028619796
      %v2960 = vmul.f32 %v2957, %v2959
      %v2961 = vadd.f32 %v2960, 0.0036580483
      %v2962 = vmul.f32 %v2957, %v2961
      %v2963 = vadd.f32 %v2962, 0.05243302
      %v2964 = vmul.f32 %v2957, %v2963
      %v2965 = vadd.f32 %v2964, 0.18741608
      %v2966 = vmul.f32 %v2957, %v2965
      %v2967 = vadd.f32 %v2966, 1.1283791
      %v2968 = vmul.f32 %v2195, %v2967
      %v2969 = vmul.f32 %v2957, 3.8918573e-05
      %v2970 = vadd.f32 %v2969, 0.001143296
      %v2971 = vmul.f32 %v2957, %v2970
      %v2972 = vadd.f32 %v2971, 0.014752088
      %v2973 = vmul.f32 %v2957, %v2972
      %v2974 = vadd.f32 %v2973, 0.112945676
      %v2975 = vmul.f32 %v2957, %v2974
      %v2976 = vadd.f32 %v2975, 0.4994258
      %v2977 = vmul.f32 %v2957, %v2976
      %v2978 = vadd.f32 %v2977, 1.0
      %v2979 = vrcp.pop %v2978
      %v2980 = vmul.f32 %v2978, %v2979
      %v2981 = vsub.f32 1.0, %v2980
      %v2982 = vmul.f32 %v2979, %v2981
      %v2983 = vadd.f32 %v2979, %v2982
      %vm2984 = vweird.f32 %v2978
      %vm2985 = vweird.f32 %v2979
      %vm2986 = vmor %vm2984, %vm2985
      %v2987 = vsel %vm2986, %v2979, %v2983
      %v2988 = vand.u32 2147483647, %v2978
      %vm2989 = vcmp.eq.f32.partialorder %v2988, 8.507059e+37
      %v2990 = vand.u32 %v2978, 2147483648
      %v2991 = vor.u32 1.1754944e-38, %v2990
      %v2992 = vsel %vm2989, %v2991, %v2987
      %v2993 = vmul.f32 %v2968, %v2992
      %v2994 = vmin.f32 %v2993, 1.0
      %v2995 = vmax.f32 %v2994, -1.0
      %v2996 = vadd.f32 %v2235, 1.0
      %v2997 = vadd.f32 %v2275, 1.0
      %v2998 = vadd.f32 %v2315, 1.0
      %v2999 = vadd.f32 %v2355, 1.0
      %v3000 = vadd.f32 %v2395, 1.0
      %v3001 = vadd.f32 %v2435, 1.0
      %v3002 = vadd.f32 %v2475, 1.0
      %v3003 = vadd.f32 %v2515, 1.0
      %v3004 = vadd.f32 %v2555, 1.0
      %v3005 = vadd.f32 %v2595, 1.0
      %v3006 = vadd.f32 %v2635, 1.0
      %v3007 = vadd.f32 %v2675, 1.0
      %v3008 = vadd.f32 %v2715, 1.0
      %v3009 = vadd.f32 %v2755, 1.0
      %v3010 = vadd.f32 %v2795, 1.0
      %v3011 = vadd.f32 %v2835, 1.0
      %v3012 = vadd.f32 %v2875, 1.0
      %v3013 = vadd.f32 %v2915, 1.0
      %v3014 = vadd.f32 %v2955, 1.0
      %v3015 = vadd.f32 %v2995, 1.0
      %v3016 = vmul.f32 %v2156, %v2996
      %v3017 = vmul.f32 %v2157, %v2997
      %v3018 = vmul.f32 %v2158, %v2998
      %v3019 = vmul.f32 %v2159, %v2999
      %v3020 = vmul.f32 %v2160, %v3000
      %v3021 = vmul.f32 %v2161, %v3001
      %v3022 = vmul.f32 %v2162, %v3002
      %v3023 = vmul.f32 %v2163, %v3003
      %v3024 = vmul.f32 %v2164, %v3004
      %v3025 = vmul.f32 %v2165, %v3005
      %v3026 = vmul.f32 %v2166, %v3006
      %v3027 = vmul.f32 %v2167, %v3007
      %v3028 = vmul.f32 %v2168, %v3008
      %v3029 = vmul.f32 %v2169, %v3009
      %v3030 = vmul.f32 %v2170, %v3010
      %v3031 = vmul.f32 %v2171, %v3011
      %v3032 = vmul.f32 %v2172, %v3012
      %v3033 = vmul.f32 %v2173, %v3013
      %v3034 = vmul.f32 %v2174, %v3014
      %v3035 = vmul.f32 %v2175, %v3015
      %v3036 = vpack.c.bf16 %v3020, %v3016
      %v3037 = vpack.c.bf16 %v3021, %v3017
      %v3038 = vpack.c.bf16 %v3022, %v3018
      %v3039 = vpack.c.bf16 %v3023, %v3019
      %v3040 = vpack.c.bf16 %v3028, %v3024
      %v3041 = vpack.c.bf16 %v3029, %v3025
      %v3042 = vpack.c.bf16 %v3030, %v3026
      %v3043 = vpack.c.bf16 %v3031, %v3027
      %v3044 = vpack.c.bf16 %v3032, %v3032
      %v3045 = vpack.c.bf16 %v3033, %v3033
      %v3046 = vpack.c.bf16 %v3034, %v3034
      %v3047 = vpack.c.bf16 %v3035, %v3035
      %v3048 = vld [vmem:[%s12] sm:$0xf]
      %v3049 = vld [vmem:[%s12 + $0x4] sm:$0xf]
      %v3050 = vld [vmem:[%s12 + $0x8] sm:$0xf]
      %v3051 = vld [vmem:[%s12 + $0xc] sm:$0xf]
      %v3052 = vld [vmem:[%s12 + $0x10] sm:$0xf]
      %v3053 = vld [vmem:[%s12 + $0x14] sm:$0xf]
      %v3054 = vld [vmem:[%s12 + $0x18] sm:$0xf]
      %v3055 = vld [vmem:[%s12 + $0x1c] sm:$0xf]
      %v3056 = vld [vmem:[%s12 + $0x20] sm:$0xf]
      %v3057 = vld [vmem:[%s12 + $0x24] sm:$0xf]
      %v3058 = vld [vmem:[%s12 + $0x28] sm:$0xf]
      %v3059 = vld [vmem:[%s12 + $0x2c] sm:$0xf]
      %v3060 = vld [vmem:[%s12 + $0x30] sm:$0xf]
      %v3061 = vld [vmem:[%s12 + $0x34] sm:$0xf]
      %v3062 = vld [vmem:[%s12 + $0x38] sm:$0xf]
      %v3063 = vld [vmem:[%s12 + $0x3c] sm:$0xf]
      %v3064 = vld [vmem:[%s12 + $0x40] sm:$0xf]
      %v3065 = vld [vmem:[%s12 + $0x44] sm:$0xf]
      %v3066 = vld [vmem:[%s12 + $0x48] sm:$0xf]
      %v3067 = vld [vmem:[%s12 + $0x4c] sm:$0xf]
      %v3068 = vld [vmem:[%s12 + $0x50] sm:$0xf]
      %v3069 = vld [vmem:[%s12 + $0x54] sm:$0xf]
      %v3070 = vld [vmem:[%s12 + $0x58] sm:$0xf]
      %v3071 = vld [vmem:[%s12 + $0x5c] sm:$0xf]
      %v3072 = vld [vmem:[%s12 + $0x60] sm:$0xf]
      %v3073 = vld [vmem:[%s12 + $0x64] sm:$0xf]
      %v3074 = vld [vmem:[%s12 + $0x68] sm:$0xf]
      %v3075 = vld [vmem:[%s12 + $0x6c] sm:$0xf]
      %v3076 = vld [vmem:[%s12 + $0x70] sm:$0xf]
      %v3077 = vld [vmem:[%s12 + $0x74] sm:$0xf]
      %v3078 = vld [vmem:[%s12 + $0x78] sm:$0xf]
      %v3079 = vld [vmem:[%s12 + $0x7c] sm:$0xf]
      %v3080 = vld [vmem:[%s12 + $0x80] sm:$0xf]
      %v3081 = vld [vmem:[%s12 + $0x84] sm:$0xf]
      %v3082 = vld [vmem:[%s12 + $0x88] sm:$0xf]
      %v3083 = vld [vmem:[%s12 + $0x8c] sm:$0xf]
      %v3084 = vld [vmem:[%s12 + $0x90] sm:$0xf]
      %v3085 = vld [vmem:[%s12 + $0x94] sm:$0xf]
      %v3086 = vld [vmem:[%s12 + $0x98] sm:$0xf]
      %v3087 = vld [vmem:[%s12 + $0x9c] sm:$0xf]
      %v3088 = vld [vmem:[%s12 + $0xa0] sm:$0xf]
      %v3089 = vld [vmem:[%s12 + $0xa4] sm:$0xf]
      %v3090 = vld [vmem:[%s12 + $0xa8] sm:$0xf]
      %v3091 = vld [vmem:[%s12 + $0xac] sm:$0xf]
      %v3092 = vld [vmem:[%s12 + $0xb0] sm:$0xf]
      %v3093 = vld [vmem:[%s12 + $0xb4] sm:$0xf]
      %v3094 = vld [vmem:[%s12 + $0xb8] sm:$0xf]
      %v3095 = vld [vmem:[%s12 + $0xbc] sm:$0xf]
      %v3096 = vld [vmem:[%s12 + $0xc0] sm:$0xf]
      %v3097 = vld [vmem:[%s12 + $0xc4] sm:$0xf]
      %v3098 = vld [vmem:[%s12 + $0xc8] sm:$0xf]
      %v3099 = vld [vmem:[%s12 + $0xcc] sm:$0xf]
      %v3100 = vld [vmem:[%s12 + $0xd0] sm:$0xf]
      %v3101 = vld [vmem:[%s12 + $0xd4] sm:$0xf]
      %v3102 = vld [vmem:[%s12 + $0xd8] sm:$0xf]
      %v3103 = vld [vmem:[%s12 + $0xdc] sm:$0xf]
      %v3104 = vld [vmem:[%s12 + $0xe0] sm:$0xf]
      %v3105 = vld [vmem:[%s12 + $0xe4] sm:$0xf]
      %v3106 = vld [vmem:[%s12 + $0xe8] sm:$0xf]
      %v3107 = vld [vmem:[%s12 + $0xec] sm:$0xf]
      %v3108 = vld [vmem:[%s12 + $0xf0] sm:$0xf]
      %v3109 = vld [vmem:[%s12 + $0xf4] sm:$0xf]
      %v3110 = vld [vmem:[%s12 + $0xf8] sm:$0xf]
      %v3111 = vld [vmem:[%s12 + $0xfc] sm:$0xf]
      %v3112 = vld [vmem:[%s13] sm:$0x1]
      %v3114 = vperm.slane %v3112, 0
      %v3180 = vunpack.c.l.b16 %v3048
      %v3181 = vunpack.c.l.b16 %v3049
      %v3182 = vunpack.c.l.b16 %v3050
      %v3183 = vunpack.c.l.b16 %v3051
      %v3184 = vunpack.c.l.b16 %v3052
      %v3185 = vunpack.c.l.b16 %v3053
      %v3186 = vunpack.c.l.b16 %v3054
      %v3187 = vunpack.c.l.b16 %v3055
      %v3188 = vunpack.c.l.b16 %v3056
      %v3189 = vunpack.c.l.b16 %v3057
      %v3190 = vunpack.c.l.b16 %v3058
      %v3191 = vunpack.c.l.b16 %v3059
      %v3192 = vunpack.c.l.b16 %v3060
      %v3193 = vunpack.c.l.b16 %v3061
      %v3194 = vunpack.c.l.b16 %v3062
      %v3195 = vunpack.c.l.b16 %v3063
      %v3196 = vunpack.c.l.b16 %v3064
      %v3197 = vunpack.c.l.b16 %v3065
      %v3198 = vunpack.c.l.b16 %v3066
      %v3199 = vunpack.c.l.b16 %v3067
      %v3200 = vunpack.c.l.b16 %v3068
      %v3201 = vunpack.c.l.b16 %v3069
      %v3202 = vunpack.c.l.b16 %v3070
      %v3203 = vunpack.c.l.b16 %v3071
      %v3204 = vunpack.c.l.b16 %v3072
      %v3205 = vunpack.c.l.b16 %v3073
      %v3206 = vunpack.c.l.b16 %v3074
      %v3207 = vunpack.c.l.b16 %v3075
      %v3208 = vunpack.c.l.b16 %v3076
      %v3209 = vunpack.c.l.b16 %v3077
      %v3210 = vunpack.c.l.b16 %v3078
      %v3211 = vunpack.c.l.b16 %v3079
      %v3212 = vunpack.c.l.b16 %v3080
      %v3213 = vunpack.c.l.b16 %v3081
      %v3214 = vunpack.c.l.b16 %v3082
      %v3215 = vunpack.c.l.b16 %v3083
      %v3216 = vunpack.c.l.b16 %v3084
      %v3217 = vunpack.c.l.b16 %v3085
      %v3218 = vunpack.c.l.b16 %v3086
      %v3219 = vunpack.c.l.b16 %v3087
      %v3220 = vunpack.c.l.b16 %v3088
      %v3221 = vunpack.c.l.b16 %v3089
      %v3222 = vunpack.c.l.b16 %v3090
      %v3223 = vunpack.c.l.b16 %v3091
      %v3224 = vunpack.c.l.b16 %v3092
      %v3225 = vunpack.c.l.b16 %v3093
      %v3226 = vunpack.c.l.b16 %v3094
      %v3227 = vunpack.c.l.b16 %v3095
      %v3228 = vunpack.c.l.b16 %v3096
      %v3229 = vunpack.c.l.b16 %v3097
      %v3230 = vunpack.c.l.b16 %v3098
      %v3231 = vunpack.c.l.b16 %v3099
      %v3232 = vunpack.c.l.b16 %v3100
      %v3233 = vunpack.c.l.b16 %v3101
      %v3234 = vunpack.c.l.b16 %v3102
      %v3235 = vunpack.c.l.b16 %v3103
      %v3236 = vunpack.c.l.b16 %v3104
      %v3237 = vunpack.c.l.b16 %v3105
      %v3238 = vunpack.c.l.b16 %v3106
      %v3239 = vunpack.c.l.b16 %v3107
      %v3240 = vunpack.c.l.b16 %v3108
      %v3241 = vunpack.c.l.b16 %v3109
      %v3242 = vunpack.c.l.b16 %v3110
      %v3243 = vunpack.c.l.b16 %v3111
      %v3244 = vpack.c.b16 %v3181, %v3180
      %v3245 = vpack.c.b16 %v3183, %v3182
      %v3246 = vpack.c.b16 %v3185, %v3184
      %v3247 = vpack.c.b16 %v3187, %v3186
      %v3248 = vpack.c.b16 %v3189, %v3188
      %v3249 = vpack.c.b16 %v3191, %v3190
      %v3250 = vpack.c.b16 %v3193, %v3192
      %v3251 = vpack.c.b16 %v3195, %v3194
      %v3252 = vpack.c.b16 %v3197, %v3196
      %v3253 = vpack.c.b16 %v3199, %v3198
      %v3254 = vpack.c.b16 %v3201, %v3200
      %v3255 = vpack.c.b16 %v3203, %v3202
      %v3256 = vpack.c.b16 %v3205, %v3204
      %v3257 = vpack.c.b16 %v3207, %v3206
      %v3258 = vpack.c.b16 %v3209, %v3208
      %v3259 = vpack.c.b16 %v3211, %v3210
      %v3260 = vpack.c.b16 %v3213, %v3212
      %v3261 = vpack.c.b16 %v3215, %v3214
      %v3262 = vpack.c.b16 %v3217, %v3216
      %v3263 = vpack.c.b16 %v3219, %v3218
      %v3264 = vpack.c.b16 %v3221, %v3220
      %v3265 = vpack.c.b16 %v3223, %v3222
      %v3266 = vpack.c.b16 %v3225, %v3224
      %v3267 = vpack.c.b16 %v3227, %v3226
      %v3268 = vpack.c.b16 %v3229, %v3228
      %v3269 = vpack.c.b16 %v3231, %v3230
      %v3270 = vpack.c.b16 %v3233, %v3232
      %v3271 = vpack.c.b16 %v3235, %v3234
      %v3272 = vpack.c.b16 %v3237, %v3236
      %v3273 = vpack.c.b16 %v3239, %v3238
      %v3274 = vpack.c.b16 %v3241, %v3240
      %v3275 = vpack.c.b16 %v3243, %v3242
      %3308 = vmatpush.bf16.msra.mxu0 %v3251
      %3309 = vmatpush.bf16.msra.mxu0 %v3250
      %3310 = vmatpush.bf16.msra.mxu0 %v3249
      %3311 = vmatpush.bf16.msra.mxu0 %v3248
      %3312 = vmatpush.bf16.msra.mxu0 %v3247
      %3313 = vmatpush.bf16.msra.mxu0 %v3246
      %3314 = vmatpush.bf16.msra.mxu0 %v3245
      %3315 = vmatpush.bf16.msra.mxu0 %v3244
      %3316 = vmatmul.bf16.gmra.mxu0 %v3036
      %v3317 = vpop.f32.mrf.mxu0
      %v3318 = vadd.f32 %v3114, %v3317
      %v3319 = vpop.f32.mrf.mxu0
      %v3320 = vadd.f32 %v3114, %v3319
      %3321 = vmatmul.bf16.gmra.mxu0 %v3040
      %v3322 = vpop.f32.mrf.mxu0
      %v3323 = vadd.f32 %v3114, %v3322
      %v3324 = vpop.f32.mrf.mxu0
      %v3325 = vadd.f32 %v3114, %v3324
      %3326 = vmatmul.bf16.gmra.mxu0 %v3044
      %v3327 = vpop.f32.mrf.mxu0
      %v3328 = vadd.f32 %v3114, %v3327
      %v3329 = vpop.f32.mrf.mxu0
      %3330 = vdwg.mxu0
      %3331 = vmatpush.bf16.msra.mxu0 %v3259
      %3332 = vmatpush.bf16.msra.mxu0 %v3258
      %3333 = vmatpush.bf16.msra.mxu0 %v3257
      %3334 = vmatpush.bf16.msra.mxu0 %v3256
      %3335 = vmatpush.bf16.msra.mxu0 %v3255
      %3336 = vmatpush.bf16.msra.mxu0 %v3254
      %3337 = vmatpush.bf16.msra.mxu0 %v3253
      %3338 = vmatpush.bf16.msra.mxu0 %v3252
      %3339 = vmatmul.bf16.gmra.mxu0 %v3037
      %v3340 = vpop.f32.mrf.mxu0
      %v3341 = vadd.f32 %v3318, %v3340
      %v3342 = vpop.f32.mrf.mxu0
      %v3343 = vadd.f32 %v3320, %v3342
      %3344 = vmatmul.bf16.gmra.mxu0 %v3041
      %v3345 = vpop.f32.mrf.mxu0
      %v3346 = vadd.f32 %v3323, %v3345
      %v3347 = vpop.f32.mrf.mxu0
      %v3348 = vadd.f32 %v3325, %v3347
      %3349 = vmatmul.bf16.gmra.mxu0 %v3045
      %v3350 = vpop.f32.mrf.mxu0
      %v3351 = vadd.f32 %v3328, %v3350
      %v3352 = vpop.f32.mrf.mxu0
      %3353 = vdwg.mxu0
      %3354 = vmatpush.bf16.msra.mxu0 %v3267
      %3355 = vmatpush.bf16.msra.mxu0 %v3266
      %3356 = vmatpush.bf16.msra.mxu0 %v3265
      %3357 = vmatpush.bf16.msra.mxu0 %v3264
      %3358 = vmatpush.bf16.msra.mxu0 %v3263
      %3359 = vmatpush.bf16.msra.mxu0 %v3262
      %3360 = vmatpush.bf16.msra.mxu0 %v3261
      %3361 = vmatpush.bf16.msra.mxu0 %v3260
      %3362 = vmatmul.bf16.gmra.mxu0 %v3038
      %v3363 = vpop.f32.mrf.mxu0
      %v3364 = vadd.f32 %v3341, %v3363
      %v3365 = vpop.f32.mrf.mxu0
      %v3366 = vadd.f32 %v3343, %v3365
      %3367 = vmatmul.bf16.gmra.mxu0 %v3042
      %v3368 = vpop.f32.mrf.mxu0
      %v3369 = vadd.f32 %v3346, %v3368
      %v3370 = vpop.f32.mrf.mxu0
      %v3371 = vadd.f32 %v3348, %v3370
      %3372 = vmatmul.bf16.gmra.mxu0 %v3046
      %v3373 = vpop.f32.mrf.mxu0
      %v3374 = vadd.f32 %v3351, %v3373
      %v3375 = vpop.f32.mrf.mxu0
      %3376 = vdwg.mxu0
      %3377 = vmatpush.bf16.msra.mxu0 %v3275
      %3378 = vmatpush.bf16.msra.mxu0 %v3274
      %3379 = vmatpush.bf16.msra.mxu0 %v3273
      %3380 = vmatpush.bf16.msra.mxu0 %v3272
      %3381 = vmatpush.bf16.msra.mxu0 %v3271
      %3382 = vmatpush.bf16.msra.mxu0 %v3270
      %3383 = vmatpush.bf16.msra.mxu0 %v3269
      %3384 = vmatpush.bf16.msra.mxu0 %v3268
      %3385 = vmatmul.bf16.gmra.mxu0 %v3039
      %v3386 = vpop.f32.mrf.mxu0
      %v3387 = vadd.f32 %v3364, %v3386
      %v3388 = vpop.f32.mrf.mxu0
      %v3389 = vadd.f32 %v3366, %v3388
      %3390 = vmatmul.bf16.gmra.mxu0 %v3043
      %v3391 = vpop.f32.mrf.mxu0
      %v3392 = vadd.f32 %v3369, %v3391
      %v3393 = vpop.f32.mrf.mxu0
      %v3394 = vadd.f32 %v3371, %v3393
      %3395 = vmatmul.bf16.gmra.mxu0 %v3047
      %v3396 = vpop.f32.mrf.mxu0
      %v3397 = vadd.f32 %v3374, %v3396
      %v3398 = vpop.f32.mrf.mxu0
      %3399 = vdwg.mxu0
      %v3400 = vadd.f32 %v1736, %v3387
      %v3401 = vadd.f32 %v1737, %v3389
      %v3402 = vadd.f32 %v1738, %v3392
      %v3403 = vadd.f32 %v1739, %v3394
      %v3404 = vadd.f32 %v1740, %v3397
      %3405 = vst [vmem:[%s467] sm:$0xff] %v3400
      %3406 = vst [vmem:[%s467 + $0x8] sm:$0xff] %v3401
      %3407 = vst [vmem:[%s467 + $0x10] sm:$0xff] %v3402
      %3408 = vst [vmem:[%s467 + $0x18] sm:$0xff] %v3403
      %3409 = vst [vmem:[%s467 + $0x20] sm:$0xff] %v3404
      %p3410 = scmp.lt.s32.totalorder %s25, 1
      %s3411 = scalar_select %p3410, %s25, 1
      %s3412 = smul.addr %s3411, 5
      %s3413 = smul.addr %s3412, 8
      %s3414 = scalar_lea.vmem %s14, %s3413
      // Predicated region
      $region77: #{_lambda_.4} parent=75 // pred_check
        %p3415 = pneg %p342
      $region78: #{_lambda_.4} parent=75 // pred_check_branch
        %3417 = sbr.rel (%p3415) target = $region80
      $region79: #{_lambda_.4} parent=75 // pred_region
        _
      $region80: #{_lambda_.4} parent=75 // pred_fallthru
        _
    $region76: #{_lambda_.4} parent=5 // pred_fallthru
      _
    %p3418 = scmp.le.s32.totalorder 2, %s20
    // Predicated region
    $region81: #{_lambda_.4} parent=5 // pred_check
      %p3419 = pneg %p3418
    $region82: #{_lambda_.4} parent=5 // pred_check_branch
      %3421 = sbr.rel (%p3419) target = $region84
    $region83: #{_lambda_.4} parent=5 // pred_region
      %s3422 = ssub.s32 %s20, 2
      // Predicated region
      $region85: #{_lambda_.4} parent=83 // pred_check
        %p3423 = pneg %p348
      $region86: #{_lambda_.4} parent=83 // pred_check_branch
        %3425 = sbr.rel (%p3423) target = $region88
      $region87: #{_lambda_.4} parent=83 // pred_region
        %p3426 = scmp.lt.s32.totalorder %s26, 1
        %s3427 = scalar_select %p3426, %s26, 1
        %s3428 = smul.addr %s3427, 5
        %s3429 = smul.addr %s3428, 8
        %s3430 = scalar_lea.vmem %s14, %s3429
      $region88: #{_lambda_.4} parent=83 // pred_fallthru
        _
    $region84: #{_lambda_.4} parent=5 // pred_fallthru
      _
  $region6: #{_lambda_.4} parent=0 // loop_footer
    %s24 = sadd.s32 1, %s20
  $region7: #{_lambda_.4} parent=0 // loop_footer_branch
    %19 = sbr.rel target = $region3
  $region8: #{_lambda_.4} parent=0 // loop_exit
    _

// kernel: _lambda_.5
$region0: #{_lambda_.5}
  #allocation0 [shape = 'u32[]', space=smem, size = 0x4, offset = 0x4, fixed_abs, tag = 'smem constant byte address 0x4 - core index']
  #allocation1 [shape = 'u32[72,128]{1,0:T(1,128)}', space=vmem, size = 0x9000, scoped, tag = 'internal scratch']
  %s0 = inlined_call_operand.vmem [shape: f32[2,40,128], index: 0, kind: input, shape index: {}]
  %s1 = inlined_call_operand.vmem [shape: f32[1,128], index: 1, kind: input, shape index: {}, may-alias: {1,7,13}]
  %s2 = inlined_call_operand.vmem [shape: f32[1,128], index: 2, kind: input, shape index: {}, may-alias: {2,6,8,12,14}]
  %s3 = inlined_call_operand.vmem [shape: bf16[128,384], index: 3, kind: input, shape index: {}]
  %s4 = inlined_call_operand.vmem [shape: f32[1,384], index: 4, kind: input, shape index: {}]
  %s5 = inlined_call_operand.vmem [shape: bf16[128,128], index: 5, kind: input, shape index: {}]
  %s6 = inlined_call_operand.vmem [shape: f32[1,128], index: 6, kind: input, shape index: {}, may-alias: {2,6,8,12,14}]
  %s7 = inlined_call_operand.vmem [shape: f32[1,128], index: 7, kind: input, shape index: {}, may-alias: {1,7,13}]
  %s8 = inlined_call_operand.vmem [shape: f32[1,128], index: 8, kind: input, shape index: {}, may-alias: {2,6,8,12,14}]
  %s9 = inlined_call_operand.vmem [shape: bf16[128,512], index: 9, kind: input, shape index: {}]
  %s10 = inlined_call_operand.vmem [shape: f32[1,512], index: 10, kind: input, shape index: {}]
  %s11 = inlined_call_operand.vmem [shape: bf16[512,128], index: 11, kind: input, shape index: {}]
  %s12 = inlined_call_operand.vmem [shape: f32[1,128], index: 12, kind: input, shape index: {}, may-alias: {2,6,8,12,14}]
  %s13 = inlined_call_operand.vmem [shape: f32[1,128], index: 13, kind: input, shape index: {}, may-alias: {1,7,13}]
  %s14 = inlined_call_operand.vmem [shape: f32[1,128], index: 14, kind: input, shape index: {}, may-alias: {2,6,8,12,14}]
  %s15 = inlined_call_operand.vmem [shape: f32[2,40,128], index: 15, kind: output, shape index: {}]
  %s16 = sld [smem:[#allocation0]]
  $region93: #{_lambda_.5} parent=0
    _
  %s18 = ssub.s32 1, %s16
  %s19 = scalar_select 0, %s18, %s16
  loop: start=0, step=1, limit=4
  $region2: #{_lambda_.5} parent=0 // loop_pre_header
    _
  $region3: #{_lambda_.5} parent=0 // loop_header
    %s21 = sphi 0, %s25
    %p22 = scmp.ge.s32.totalorder %s21, 4
    %s31 = sphi 0, %s33
    %s34 = sphi 0, %s31
    %s35 = sphi 0, %s34
    %s51 = sphi 0, %s35
    %s55 = sphi 0, %s55
    %s57 = sphi 0, %s55
    %s58 = sphi 0, %s57
    %s72 = sphi 0, %s58
    %s76 = sphi 0, %s76
    %s78 = sphi 0, %s76
    %s79 = sphi 0, %s78
    %s93 = sphi 0, %s79
    %s97 = sphi 0, %s97
    %s99 = sphi 0, %s97
    %s100 = sphi 0, %s99
    %s114 = sphi 0, %s100
    %s118 = sphi 0, %s118
    %s120 = sphi 0, %s118
    %s121 = sphi 0, %s120
    %s135 = sphi 0, %s121
    %s139 = sphi 0, %s139
    %s141 = sphi 0, %s139
    %s142 = sphi 0, %s141
    %s156 = sphi 0, %s142
    %s160 = sphi 0, %s160
    %s162 = sphi 0, %s160
    %s163 = sphi 0, %s162
    %s177 = sphi 0, %s163
    %s181 = sphi 0, %s181
    %s183 = sphi 0, %s181
    %s184 = sphi 0, %s183
    %s198 = sphi 0, %s184
    %s202 = sphi 0, %s202
    %s204 = sphi 0, %s202
    %s205 = sphi 0, %s204
    %s219 = sphi 0, %s205
    %s223 = sphi 0, %s223
    %s225 = sphi 0, %s223
    %s226 = sphi 0, %s225
    %s240 = sphi 0, %s226
    %s244 = sphi 0, %s244
    %s246 = sphi 0, %s244
    %s247 = sphi 0, %s246
    %s261 = sphi 0, %s247
    %s265 = sphi 0, %s265
    %s267 = sphi 0, %s265
    %s268 = sphi 0, %s267
    %s282 = sphi 0, %s268
    %s286 = sphi 0, %s286
    %s288 = sphi 0, %s286
    %s289 = sphi 0, %s288
    %s303 = sphi 0, %s289
    %s307 = sphi 0, %s307
    %s309 = sphi 0, %s307
    %s310 = sphi 0, %s309
    %s324 = sphi 0, %s310
    %s328 = sphi 0, %s328
    %s330 = sphi 0, %s328
    %s331 = sphi 0, %s330
    %s345 = sphi 0, %s331
    %s351 = sphi 0, %s353
    %s354 = sphi 0, %s351
    %s355 = sphi 0, %s354
    %s371 = sphi 0, %s355
  $region4: #{_lambda_.5} parent=0 // loop_header_branch
    %24 = sbr.rel (%p22) target = $region8
  $region5: #{_lambda_.5} parent=0 // loop_body
    %s26 = ssub.s32 %s21, 1
    %s27 = ssub.s32 %s21, 2
    %s28 = sadd.s32 %s21, 1
    %s29 = ssub.s32 %s21, %s28
    %p30 = scmp.eq.s32.totalorder %s29, 0
    %s32 = sadd.s32 %s31, 1
    %s33 = scalar_select %p30, %s31, %s32
    %p36 = pneg %p30
    %p37 = scmp.eq.s32.totalorder %s21, 1
    %p38 = por %p36, %p37
    %p39 = scmp.ne.s32.totalorder %s31, %s34
    %p40 = scmp.eq.s32.totalorder %s21, 0
    %p41 = por %p39, %p40
    %p42 = scmp.ne.s32.totalorder %s31, %s34
    %p43 = scmp.eq.s32.totalorder %s26, 1
    %p44 = por %p42, %p43
    %p45 = scmp.ne.s32.totalorder %s34, %s35
    %p46 = scmp.eq.s32.totalorder %s26, 0
    %p47 = por %p45, %p46
    %p48 = scmp.ne.s32.totalorder %s34, %s35
    %p49 = scmp.eq.s32.totalorder %s27, 1
    %p50 = por %p48, %p49
    %p52 = scmp.ne.s32.totalorder %s35, %s51
    %p53 = scmp.eq.s32.totalorder %s27, 0
    %p54 = por %p52, %p53
    %s56 = sadd.s32 %s55, 1
    %p59 = scmp.eq.s32.totalorder %s21, 1
    %p60 = scmp.ne.s32.totalorder %s55, %s57
    %p61 = scmp.eq.s32.totalorder %s21, 0
    %p62 = por %p60, %p61
    %p63 = scmp.ne.s32.totalorder %s55, %s57
    %p64 = scmp.eq.s32.totalorder %s26, 1
    %p65 = por %p63, %p64
    %p66 = scmp.ne.s32.totalorder %s57, %s58
    %p67 = scmp.eq.s32.totalorder %s26, 0
    %p68 = por %p66, %p67
    %p69 = scmp.ne.s32.totalorder %s57, %s58
    %p70 = scmp.eq.s32.totalorder %s27, 1
    %p71 = por %p69, %p70
    %p73 = scmp.ne.s32.totalorder %s58, %s72
    %p74 = scmp.eq.s32.totalorder %s27, 0
    %p75 = por %p73, %p74
    %s77 = sadd.s32 %s76, 1
    %p80 = scmp.eq.s32.totalorder %s21, 1
    %p81 = scmp.ne.s32.totalorder %s76, %s78
    %p82 = scmp.eq.s32.totalorder %s21, 0
    %p83 = por %p81, %p82
    %p84 = scmp.ne.s32.totalorder %s76, %s78
    %p85 = scmp.eq.s32.totalorder %s26, 1
    %p86 = por %p84, %p85
    %p87 = scmp.ne.s32.totalorder %s78, %s79
    %p88 = scmp.eq.s32.totalorder %s26, 0
    %p89 = por %p87, %p88
    %p90 = scmp.ne.s32.totalorder %s78, %s79
    %p91 = scmp.eq.s32.totalorder %s27, 1
    %p92 = por %p90, %p91
    %p94 = scmp.ne.s32.totalorder %s79, %s93
    %p95 = scmp.eq.s32.totalorder %s27, 0
    %p96 = por %p94, %p95
    %s98 = sadd.s32 %s97, 1
    %p101 = scmp.eq.s32.totalorder %s21, 1
    %p102 = scmp.ne.s32.totalorder %s97, %s99
    %p103 = scmp.eq.s32.totalorder %s21, 0
    %p104 = por %p102, %p103
    %p105 = scmp.ne.s32.totalorder %s97, %s99
    %p106 = scmp.eq.s32.totalorder %s26, 1
    %p107 = por %p105, %p106
    %p108 = scmp.ne.s32.totalorder %s99, %s100
    %p109 = scmp.eq.s32.totalorder %s26, 0
    %p110 = por %p108, %p109
    %p111 = scmp.ne.s32.totalorder %s99, %s100
    %p112 = scmp.eq.s32.totalorder %s27, 1
    %p113 = por %p111, %p112
    %p115 = scmp.ne.s32.totalorder %s100, %s114
    %p116 = scmp.eq.s32.totalorder %s27, 0
    %p117 = por %p115, %p116
    %s119 = sadd.s32 %s118, 1
    %p122 = scmp.eq.s32.totalorder %s21, 1
    %p123 = scmp.ne.s32.totalorder %s118, %s120
    %p124 = scmp.eq.s32.totalorder %s21, 0
    %p125 = por %p123, %p124
    %p126 = scmp.ne.s32.totalorder %s118, %s120
    %p127 = scmp.eq.s32.totalorder %s26, 1
    %p128 = por %p126, %p127
    %p129 = scmp.ne.s32.totalorder %s120, %s121
    %p130 = scmp.eq.s32.totalorder %s26, 0
    %p131 = por %p129, %p130
    %p132 = scmp.ne.s32.totalorder %s120, %s121
    %p133 = scmp.eq.s32.totalorder %s27, 1
    %p134 = por %p132, %p133
    %p136 = scmp.ne.s32.totalorder %s121, %s135
    %p137 = scmp.eq.s32.totalorder %s27, 0
    %p138 = por %p136, %p137
    %s140 = sadd.s32 %s139, 1
    %p143 = scmp.eq.s32.totalorder %s21, 1
    %p144 = scmp.ne.s32.totalorder %s139, %s141
    %p145 = scmp.eq.s32.totalorder %s21, 0
    %p146 = por %p144, %p145
    %p147 = scmp.ne.s32.totalorder %s139, %s141
    %p148 = scmp.eq.s32.totalorder %s26, 1
    %p149 = por %p147, %p148
    %p150 = scmp.ne.s32.totalorder %s141, %s142
    %p151 = scmp.eq.s32.totalorder %s26, 0
    %p152 = por %p150, %p151
    %p153 = scmp.ne.s32.totalorder %s141, %s142
    %p154 = scmp.eq.s32.totalorder %s27, 1
    %p155 = por %p153, %p154
    %p157 = scmp.ne.s32.totalorder %s142, %s156
    %p158 = scmp.eq.s32.totalorder %s27, 0
    %p159 = por %p157, %p158
    %s161 = sadd.s32 %s160, 1
    %p164 = scmp.eq.s32.totalorder %s21, 1
    %p165 = scmp.ne.s32.totalorder %s160, %s162
    %p166 = scmp.eq.s32.totalorder %s21, 0
    %p167 = por %p165, %p166
    %p168 = scmp.ne.s32.totalorder %s160, %s162
    %p169 = scmp.eq.s32.totalorder %s26, 1
    %p170 = por %p168, %p169
    %p171 = scmp.ne.s32.totalorder %s162, %s163
    %p172 = scmp.eq.s32.totalorder %s26, 0
    %p173 = por %p171, %p172
    %p174 = scmp.ne.s32.totalorder %s162, %s163
    %p175 = scmp.eq.s32.totalorder %s27, 1
    %p176 = por %p174, %p175
    %p178 = scmp.ne.s32.totalorder %s163, %s177
    %p179 = scmp.eq.s32.totalorder %s27, 0
    %p180 = por %p178, %p179
    %s182 = sadd.s32 %s181, 1
    %p185 = scmp.eq.s32.totalorder %s21, 1
    %p186 = scmp.ne.s32.totalorder %s181, %s183
    %p187 = scmp.eq.s32.totalorder %s21, 0
    %p188 = por %p186, %p187
    %p189 = scmp.ne.s32.totalorder %s181, %s183
    %p190 = scmp.eq.s32.totalorder %s26, 1
    %p191 = por %p189, %p190
    %p192 = scmp.ne.s32.totalorder %s183, %s184
    %p193 = scmp.eq.s32.totalorder %s26, 0
    %p194 = por %p192, %p193
    %p195 = scmp.ne.s32.totalorder %s183, %s184
    %p196 = scmp.eq.s32.totalorder %s27, 1
    %p197 = por %p195, %p196
    %p199 = scmp.ne.s32.totalorder %s184, %s198
    %p200 = scmp.eq.s32.totalorder %s27, 0
    %p201 = por %p199, %p200
    %s203 = sadd.s32 %s202, 1
    %p206 = scmp.eq.s32.totalorder %s21, 1
    %p207 = scmp.ne.s32.totalorder %s202, %s204
    %p208 = scmp.eq.s32.totalorder %s21, 0
    %p209 = por %p207, %p208
    %p210 = scmp.ne.s32.totalorder %s202, %s204
    %p211 = scmp.eq.s32.totalorder %s26, 1
    %p212 = por %p210, %p211
    %p213 = scmp.ne.s32.totalorder %s204, %s205
    %p214 = scmp.eq.s32.totalorder %s26, 0
    %p215 = por %p213, %p214
    %p216 = scmp.ne.s32.totalorder %s204, %s205
    %p217 = scmp.eq.s32.totalorder %s27, 1
    %p218 = por %p216, %p217
    %p220 = scmp.ne.s32.totalorder %s205, %s219
    %p221 = scmp.eq.s32.totalorder %s27, 0
    %p222 = por %p220, %p221
    %s224 = sadd.s32 %s223, 1
    %p227 = scmp.eq.s32.totalorder %s21, 1
    %p228 = scmp.ne.s32.totalorder %s223, %s225
    %p229 = scmp.eq.s32.totalorder %s21, 0
    %p230 = por %p228, %p229
    %p231 = scmp.ne.s32.totalorder %s223, %s225
    %p232 = scmp.eq.s32.totalorder %s26, 1
    %p233 = por %p231, %p232
    %p234 = scmp.ne.s32.totalorder %s225, %s226
    %p235 = scmp.eq.s32.totalorder %s26, 0
    %p236 = por %p234, %p235
    %p237 = scmp.ne.s32.totalorder %s225, %s226
    %p238 = scmp.eq.s32.totalorder %s27, 1
    %p239 = por %p237, %p238
    %p241 = scmp.ne.s32.totalorder %s226, %s240
    %p242 = scmp.eq.s32.totalorder %s27, 0
    %p243 = por %p241, %p242
    %s245 = sadd.s32 %s244, 1
    %p248 = scmp.eq.s32.totalorder %s21, 1
    %p249 = scmp.ne.s32.totalorder %s244, %s246
    %p250 = scmp.eq.s32.totalorder %s21, 0
    %p251 = por %p249, %p250
    %p252 = scmp.ne.s32.totalorder %s244, %s246
    %p253 = scmp.eq.s32.totalorder %s26, 1
    %p254 = por %p252, %p253
    %p255 = scmp.ne.s32.totalorder %s246, %s247
    %p256 = scmp.eq.s32.totalorder %s26, 0
    %p257 = por %p255, %p256
    %p258 = scmp.ne.s32.totalorder %s246, %s247
    %p259 = scmp.eq.s32.totalorder %s27, 1
    %p260 = por %p258, %p259
    %p262 = scmp.ne.s32.totalorder %s247, %s261
    %p263 = scmp.eq.s32.totalorder %s27, 0
    %p264 = por %p262, %p263
    %s266 = sadd.s32 %s265, 1
    %p269 = scmp.eq.s32.totalorder %s21, 1
    %p270 = scmp.ne.s32.totalorder %s265, %s267
    %p271 = scmp.eq.s32.totalorder %s21, 0
    %p272 = por %p270, %p271
    %p273 = scmp.ne.s32.totalorder %s265, %s267
    %p274 = scmp.eq.s32.totalorder %s26, 1
    %p275 = por %p273, %p274
    %p276 = scmp.ne.s32.totalorder %s267, %s268
    %p277 = scmp.eq.s32.totalorder %s26, 0
    %p278 = por %p276, %p277
    %p279 = scmp.ne.s32.totalorder %s267, %s268
    %p280 = scmp.eq.s32.totalorder %s27, 1
    %p281 = por %p279, %p280
    %p283 = scmp.ne.s32.totalorder %s268, %s282
    %p284 = scmp.eq.s32.totalorder %s27, 0
    %p285 = por %p283, %p284
    %s287 = sadd.s32 %s286, 1
    %p290 = scmp.eq.s32.totalorder %s21, 1
    %p291 = scmp.ne.s32.totalorder %s286, %s288
    %p292 = scmp.eq.s32.totalorder %s21, 0
    %p293 = por %p291, %p292
    %p294 = scmp.ne.s32.totalorder %s286, %s288
    %p295 = scmp.eq.s32.totalorder %s26, 1
    %p296 = por %p294, %p295
    %p297 = scmp.ne.s32.totalorder %s288, %s289
    %p298 = scmp.eq.s32.totalorder %s26, 0
    %p299 = por %p297, %p298
    %p300 = scmp.ne.s32.totalorder %s288, %s289
    %p301 = scmp.eq.s32.totalorder %s27, 1
    %p302 = por %p300, %p301
    %p304 = scmp.ne.s32.totalorder %s289, %s303
    %p305 = scmp.eq.s32.totalorder %s27, 0
    %p306 = por %p304, %p305
    %s308 = sadd.s32 %s307, 1
    %p311 = scmp.eq.s32.totalorder %s21, 1
    %p312 = scmp.ne.s32.totalorder %s307, %s309
    %p313 = scmp.eq.s32.totalorder %s21, 0
    %p314 = por %p312, %p313
    %p315 = scmp.ne.s32.totalorder %s307, %s309
    %p316 = scmp.eq.s32.totalorder %s26, 1
    %p317 = por %p315, %p316
    %p318 = scmp.ne.s32.totalorder %s309, %s310
    %p319 = scmp.eq.s32.totalorder %s26, 0
    %p320 = por %p318, %p319
    %p321 = scmp.ne.s32.totalorder %s309, %s310
    %p322 = scmp.eq.s32.totalorder %s27, 1
    %p323 = por %p321, %p322
    %p325 = scmp.ne.s32.totalorder %s310, %s324
    %p326 = scmp.eq.s32.totalorder %s27, 0
    %p327 = por %p325, %p326
    %s329 = sadd.s32 %s328, 1
    %p332 = scmp.eq.s32.totalorder %s21, 1
    %p333 = scmp.ne.s32.totalorder %s328, %s330
    %p334 = scmp.eq.s32.totalorder %s21, 0
    %p335 = por %p333, %p334
    %p336 = scmp.ne.s32.totalorder %s328, %s330
    %p337 = scmp.eq.s32.totalorder %s26, 1
    %p338 = por %p336, %p337
    %p339 = scmp.ne.s32.totalorder %s330, %s331
    %p340 = scmp.eq.s32.totalorder %s26, 0
    %p341 = por %p339, %p340
    %p342 = scmp.ne.s32.totalorder %s330, %s331
    %p343 = scmp.eq.s32.totalorder %s27, 1
    %p344 = por %p342, %p343
    %p346 = scmp.ne.s32.totalorder %s331, %s345
    %p347 = scmp.eq.s32.totalorder %s27, 0
    %p348 = por %p346, %p347
    %s349 = ssub.s32 %s21, %s28
    %p350 = scmp.eq.s32.totalorder %s349, 0
    %s352 = sadd.s32 %s351, 1
    %s353 = scalar_select %p350, %s351, %s352
    %p356 = pneg %p350
    %p357 = scmp.eq.s32.totalorder %s21, 1
    %p358 = por %p356, %p357
    %p359 = scmp.ne.s32.totalorder %s351, %s354
    %p360 = scmp.eq.s32.totalorder %s21, 0
    %p361 = por %p359, %p360
    %p362 = scmp.ne.s32.totalorder %s351, %s354
    %p363 = scmp.eq.s32.totalorder %s26, 1
    %p364 = por %p362, %p363
    %p365 = scmp.ne.s32.totalorder %s354, %s355
    %p366 = scmp.eq.s32.totalorder %s26, 0
    %p367 = por %p365, %p366
    %p368 = scmp.ne.s32.totalorder %s354, %s355
    %p369 = scmp.eq.s32.totalorder %s27, 1
    %p370 = por %p368, %p369
    %p372 = scmp.ne.s32.totalorder %s355, %s371
    %p373 = scmp.eq.s32.totalorder %s27, 0
    %p374 = por %p372, %p373
    %p375 = scmp.le.s32.totalorder 1, %s21
    %p376 = scmp.lt.s32.totalorder %s21, 3
    %p377 = pnand %p375, %p376
    %p378 = pneg %p377
    // Predicated region
    $region9: #{_lambda_.5} parent=5 // pred_check
      _
    $region10: #{_lambda_.5} parent=5 // pred_check_branch
      %380 = sbr.rel (%p377) target = $region12
    $region11: #{_lambda_.5} parent=5 // pred_region
      %s381 = ssub.s32 %s21, 1
      // Predicated region
      $region13: #{_lambda_.5} parent=11 // pred_check
        %p382 = pneg %p68
      $region14: #{_lambda_.5} parent=11 // pred_check_branch
        %384 = sbr.rel (%p382) target = $region16
      $region15: #{_lambda_.5} parent=11 // pred_region
        _
      $region16: #{_lambda_.5} parent=11 // pred_fallthru
        _
      // Predicated region
      $region17: #{_lambda_.5} parent=11 // pred_check
        %p385 = pneg %p89
      $region18: #{_lambda_.5} parent=11 // pred_check_branch
        %387 = sbr.rel (%p385) target = $region20
      $region19: #{_lambda_.5} parent=11 // pred_region
        _
      $region20: #{_lambda_.5} parent=11 // pred_fallthru
        _
      // Predicated region
      $region21: #{_lambda_.5} parent=11 // pred_check
        %p388 = pneg %p110
      $region22: #{_lambda_.5} parent=11 // pred_check_branch
        %390 = sbr.rel (%p388) target = $region24
      $region23: #{_lambda_.5} parent=11 // pred_region
        _
      $region24: #{_lambda_.5} parent=11 // pred_fallthru
        _
      // Predicated region
      $region25: #{_lambda_.5} parent=11 // pred_check
        %p391 = pneg %p131
      $region26: #{_lambda_.5} parent=11 // pred_check_branch
        %393 = sbr.rel (%p391) target = $region28
      $region27: #{_lambda_.5} parent=11 // pred_region
        _
      $region28: #{_lambda_.5} parent=11 // pred_fallthru
        _
      // Predicated region
      $region29: #{_lambda_.5} parent=11 // pred_check
        %p394 = pneg %p152
      $region30: #{_lambda_.5} parent=11 // pred_check_branch
        %396 = sbr.rel (%p394) target = $region32
      $region31: #{_lambda_.5} parent=11 // pred_region
        _
      $region32: #{_lambda_.5} parent=11 // pred_fallthru
        _
      // Predicated region
      $region33: #{_lambda_.5} parent=11 // pred_check
        %p397 = pneg %p173
      $region34: #{_lambda_.5} parent=11 // pred_check_branch
        %399 = sbr.rel (%p397) target = $region36
      $region35: #{_lambda_.5} parent=11 // pred_region
        _
      $region36: #{_lambda_.5} parent=11 // pred_fallthru
        _
      // Predicated region
      $region37: #{_lambda_.5} parent=11 // pred_check
        %p400 = pneg %p194
      $region38: #{_lambda_.5} parent=11 // pred_check_branch
        %402 = sbr.rel (%p400) target = $region40
      $region39: #{_lambda_.5} parent=11 // pred_region
        _
      $region40: #{_lambda_.5} parent=11 // pred_fallthru
        _
      // Predicated region
      $region41: #{_lambda_.5} parent=11 // pred_check
        %p403 = pneg %p215
      $region42: #{_lambda_.5} parent=11 // pred_check_branch
        %405 = sbr.rel (%p403) target = $region44
      $region43: #{_lambda_.5} parent=11 // pred_region
        _
      $region44: #{_lambda_.5} parent=11 // pred_fallthru
        _
      // Predicated region
      $region45: #{_lambda_.5} parent=11 // pred_check
        %p406 = pneg %p236
      $region46: #{_lambda_.5} parent=11 // pred_check_branch
        %408 = sbr.rel (%p406) target = $region48
      $region47: #{_lambda_.5} parent=11 // pred_region
        _
      $region48: #{_lambda_.5} parent=11 // pred_fallthru
        _
      // Predicated region
      $region49: #{_lambda_.5} parent=11 // pred_check
        %p409 = pneg %p257
      $region50: #{_lambda_.5} parent=11 // pred_check_branch
        %411 = sbr.rel (%p409) target = $region52
      $region51: #{_lambda_.5} parent=11 // pred_region
        _
      $region52: #{_lambda_.5} parent=11 // pred_fallthru
        _
      // Predicated region
      $region53: #{_lambda_.5} parent=11 // pred_check
        %p412 = pneg %p278
      $region54: #{_lambda_.5} parent=11 // pred_check_branch
        %414 = sbr.rel (%p412) target = $region56
      $region55: #{_lambda_.5} parent=11 // pred_region
        _
      $region56: #{_lambda_.5} parent=11 // pred_fallthru
        _
      // Predicated region
      $region57: #{_lambda_.5} parent=11 // pred_check
        %p415 = pneg %p299
      $region58: #{_lambda_.5} parent=11 // pred_check_branch
        %417 = sbr.rel (%p415) target = $region60
      $region59: #{_lambda_.5} parent=11 // pred_region
        _
      $region60: #{_lambda_.5} parent=11 // pred_fallthru
        _
      // Predicated region
      $region61: #{_lambda_.5} parent=11 // pred_check
        %p418 = pneg %p320
      $region62: #{_lambda_.5} parent=11 // pred_check_branch
        %420 = sbr.rel (%p418) target = $region64
      $region63: #{_lambda_.5} parent=11 // pred_region
        _
      $region64: #{_lambda_.5} parent=11 // pred_fallthru
        _
      // Predicated region
      $region65: #{_lambda_.5} parent=11 // pred_check
        %p421 = pneg %p341
      $region66: #{_lambda_.5} parent=11 // pred_check_branch
        %423 = sbr.rel (%p421) target = $region68
      $region67: #{_lambda_.5} parent=11 // pred_region
        _
      $region68: #{_lambda_.5} parent=11 // pred_fallthru
        _
    $region12: #{_lambda_.5} parent=5 // pred_fallthru
      _
    %p424 = scmp.lt.s32.totalorder %s21, 2
    // Predicated region
    $region69: #{_lambda_.5} parent=5 // pred_check
      %p425 = pneg %p424
    $region70: #{_lambda_.5} parent=5 // pred_check_branch
      %427 = sbr.rel (%p425) target = $region72
    $region71: #{_lambda_.5} parent=5 // pred_region
      // Predicated region
      $region73: #{_lambda_.5} parent=71 // pred_check
        %p428 = pneg %p41
      $region74: #{_lambda_.5} parent=71 // pred_check_branch
        %430 = sbr.rel (%p428) target = $region76
      $region75: #{_lambda_.5} parent=71 // pred_region
        %p431 = scmp.lt.s32.totalorder %s21, 1
        %s432 = scalar_select %p431, %s21, 1
        %s433 = smul.addr %s432, 5
        %s434 = smul.addr %s433, 8
        %s435 = scalar_lea.vmem %s0, %s434
      $region76: #{_lambda_.5} parent=71 // pred_fallthru
        _
    $region72: #{_lambda_.5} parent=5 // pred_fallthru
      _
    %p436 = scmp.le.s32.totalorder 1, %s21
    %p437 = scmp.lt.s32.totalorder %s21, 3
    %p438 = pnand %p436, %p437
    %p439 = pneg %p438
    // Predicated region
    $region77: #{_lambda_.5} parent=5 // pred_check
      _
    $region78: #{_lambda_.5} parent=5 // pred_check_branch
      %441 = sbr.rel (%p438) target = $region80
    $region79: #{_lambda_.5} parent=5 // pred_region
      %s442 = ssub.s32 %s21, 1
      %p443 = scmp.lt.s32.totalorder %s26, 1
      %s444 = scalar_select %p443, %s26, 1
      %s445 = smul.addr %s444, 5
      %s446 = smul.addr %s445, 8
      %s447 = scalar_lea.vmem %s0, %s446
      %p448 = pneg %p47
      %p449 = pneg %p44
      %p450 = pneg %p68
      %p451 = pneg %p65
      %p452 = pneg %p89
      %p453 = pneg %p86
      %p454 = pneg %p110
      %p455 = pneg %p107
      %p456 = pneg %p131
      %p457 = pneg %p128
      %p458 = pneg %p152
      %p459 = pneg %p149
      %p460 = pneg %p173
      %p461 = pneg %p170
      %p462 = pneg %p194
      %p463 = pneg %p191
      %p464 = pneg %p215
      %p465 = pneg %p212
      %p466 = pneg %p236
      %p467 = pneg %p233
      %p468 = pneg %p257
      %p469 = pneg %p254
      %p470 = pneg %p278
      %p471 = pneg %p275
      %p472 = pneg %p299
      %p473 = pneg %p296
      %p474 = pneg %p320
      %p475 = pneg %p317
      %p476 = pneg %p341
      %p477 = pneg %p338
      %p478 = pneg %p367
      %p479 = pneg %p364
      %p480 = scmp.lt.s32.totalorder %s26, 1
      %s481 = scalar_select %p480, %s26, 1
      %s482 = smul.addr %s481, 5
      %s483 = smul.addr %s482, 8
      %s484 = scalar_lea.vmem %s15, %s483
      %p485 = scmp.lt.s32.totalorder %s26, 1
      %s486 = scalar_select %p485, %s26, 1
      %s487 = smul.addr %s486, 5
      %s488 = smul.addr %s487, 8
      %s489 = scalar_lea.vmem %s0, %s488
      %p490 = scmp.lt.s32.totalorder %s26, 1
      %s491 = scalar_select %p490, %s26, 1
      %s492 = smul.addr %s491, 5
      %s493 = smul.addr %s492, 8
      %s494 = scalar_lea.vmem %s15, %s493
      %v496 = vld [vmem:[%s489] sm:$0xff]
      %v497 = vld [vmem:[%s489 + $0x8] sm:$0xff]
      %v498 = vld [vmem:[%s489 + $0x10] sm:$0xff]
      %v499 = vld [vmem:[%s489 + $0x18] sm:$0xff]
      %v500 = vld [vmem:[%s489 + $0x20] sm:$0xff]
      %v501 = vld [vmem:[%s1] sm:$0x1]
      %v502 = vld [vmem:[%s2] sm:$0x1]
      %503 = vadd.xlane.f32.xlu0 %v496
      %v504 = vpop.xlane.xlu0 %503
      %505 = vadd.xlane.f32.xlu0 %v497
      %v506 = vpop.xlane.xlu0 %505
      %507 = vadd.xlane.f32.xlu0 %v498
      %v508 = vpop.xlane.xlu0 %507
      %509 = vadd.xlane.f32.xlu0 %v499
      %v510 = vpop.xlane.xlu0 %509
      %511 = vadd.xlane.f32.xlu0 %v500
      %v512 = vpop.xlane.xlu0 %511
      %v513 = vrcp.pop 128.0
      %v514 = vmul.f32 128.0, %v513
      %v515 = vsub.f32 1.0, %v514
      %v516 = vmul.f32 %v513, %v515
      %v517 = vadd.f32 %v513, %v516
      %vm518 = vweird.f32 %v513
      %v519 = vsel %vm518, %v513, %v517
      %v520 = vmul.f32 %v504, %v519
      %v521 = vmul.f32 %v506, %v519
      %v522 = vmul.f32 %v508, %v519
      %v523 = vmul.f32 %v510, %v519
      %v524 = vmul.f32 %v512, %v519
      %v525 = vsub.f32 %v496, %v520
      %v526 = vsub.f32 %v497, %v521
      %v527 = vsub.f32 %v498, %v522
      %v528 = vsub.f32 %v499, %v523
      %v529 = vsub.f32 %v500, %v524
      %v530 = vmul.f32 %v525, %v525
      %v531 = vmul.f32 %v526, %v526
      %v532 = vmul.f32 %v527, %v527
      %v533 = vmul.f32 %v528, %v528
      %v534 = vmul.f32 %v529, %v529
      %535 = vadd.xlane.f32.xlu0 %v530
      %v536 = vpop.xlane.xlu0 %535
      %537 = vadd.xlane.f32.xlu0 %v531
      %v538 = vpop.xlane.xlu0 %537
      %539 = vadd.xlane.f32.xlu0 %v532
      %v540 = vpop.xlane.xlu0 %539
      %541 = vadd.xlane.f32.xlu0 %v533
      %v542 = vpop.xlane.xlu0 %541
      %543 = vadd.xlane.f32.xlu0 %v534
      %v544 = vpop.xlane.xlu0 %543
      %v545 = vmul.f32 %v536, %v519
      %v546 = vmul.f32 %v538, %v519
      %v547 = vmul.f32 %v540, %v519
      %v548 = vmul.f32 %v542, %v519
      %v549 = vmul.f32 %v544, %v519
      %v550 = vadd.f32 %v545, 1e-06
      %v551 = vadd.f32 %v546, 1e-06
      %v552 = vadd.f32 %v547, 1e-06
      %v553 = vadd.f32 %v548, 1e-06
      %v554 = vadd.f32 %v549, 1e-06
      %v555 = vrsqrt.pop %v550
      %v556 = vmul.f32 %v555, %v550
      %v557 = vmul.f32 %v556, %v555
      %v558 = vmul.f32 0.5, %v557
      %v559 = vsub.f32 1.5, %v558
      %v560 = vmul.f32 %v555, %v559
      %vm561 = vweird.f32 %v550
      %vm562 = vweird.f32 %v555
      %vm563 = vmor %vm561, %vm562
      %v564 = vsel %vm563, %v555, %v560
      %v565 = vrsqrt.pop %v551
      %v566 = vmul.f32 %v565, %v551
      %v567 = vmul.f32 %v566, %v565
      %v568 = vmul.f32 0.5, %v567
      %v569 = vsub.f32 1.5, %v568
      %v570 = vmul.f32 %v565, %v569
      %vm571 = vweird.f32 %v551
      %vm572 = vweird.f32 %v565
      %vm573 = vmor %vm571, %vm572
      %v574 = vsel %vm573, %v565, %v570
      %v575 = vrsqrt.pop %v552
      %v576 = vmul.f32 %v575, %v552
      %v577 = vmul.f32 %v576, %v575
      %v578 = vmul.f32 0.5, %v577
      %v579 = vsub.f32 1.5, %v578
      %v580 = vmul.f32 %v575, %v579
      %vm581 = vweird.f32 %v552
      %vm582 = vweird.f32 %v575
      %vm583 = vmor %vm581, %vm582
      %v584 = vsel %vm583, %v575, %v580
      %v585 = vrsqrt.pop %v553
      %v586 = vmul.f32 %v585, %v553
      %v587 = vmul.f32 %v586, %v585
      %v588 = vmul.f32 0.5, %v587
      %v589 = vsub.f32 1.5, %v588
      %v590 = vmul.f32 %v585, %v589
      %vm591 = vweird.f32 %v553
      %vm592 = vweird.f32 %v585
      %vm593 = vmor %vm591, %vm592
      %v594 = vsel %vm593, %v585, %v590
      %v595 = vrsqrt.pop %v554
      %v596 = vmul.f32 %v595, %v554
      %v597 = vmul.f32 %v596, %v595
      %v598 = vmul.f32 0.5, %v597
      %v599 = vsub.f32 1.5, %v598
      %v600 = vmul.f32 %v595, %v599
      %vm601 = vweird.f32 %v554
      %vm602 = vweird.f32 %v595
      %vm603 = vmor %vm601, %vm602
      %v604 = vsel %vm603, %v595, %v600
      %v605 = vmul.f32 %v525, %v564
      %v606 = vmul.f32 %v526, %v574
      %v607 = vmul.f32 %v527, %v584
      %v608 = vmul.f32 %v528, %v594
      %v609 = vmul.f32 %v529, %v604
      %v611 = vperm.slane %v501, 0
      %v613 = vmul.f32 %v605, %v611
      %v614 = vmul.f32 %v606, %v611
      %v615 = vmul.f32 %v607, %v611
      %v616 = vmul.f32 %v608, %v611
      %v617 = vmul.f32 %v609, %v611
      %v619 = vperm.slane %v502, 0
      %v621 = vadd.f32 %v613, %v619
      %v622 = vadd.f32 %v614, %v619
      %v623 = vadd.f32 %v615, %v619
      %v624 = vadd.f32 %v616, %v619
      %v625 = vadd.f32 %v617, %v619
      %v626 = vpack.c.bf16 %v622, %v621
      %v627 = vpack.c.bf16 %v624, %v623
      %v628 = vpack.c.bf16 %v625, %v625
      %v629 = vld [vmem:[%s3] sm:$0xff]
      %v630 = vld [vmem:[%s3 + $0x8] sm:$0xf]
      %v631 = vld [vmem:[%s3 + $0xc] sm:$0xff]
      %v632 = vld [vmem:[%s3 + $0x14] sm:$0xf]
      %v633 = vld [vmem:[%s3 + $0x18] sm:$0xff]
      %v634 = vld [vmem:[%s3 + $0x20] sm:$0xf]
      %v635 = vld [vmem:[%s3 + $0x24] sm:$0xff]
      %v636 = vld [vmem:[%s3 + $0x2c] sm:$0xf]
      %v637 = vld [vmem:[%s3 + $0x30] sm:$0xff]
      %v638 = vld [vmem:[%s3 + $0x38] sm:$0xf]
      %v639 = vld [vmem:[%s3 + $0x3c] sm:$0xff]
      %v640 = vld [vmem:[%s3 + $0x44] sm:$0xf]
      %v641 = vld [vmem:[%s3 + $0x48] sm:$0xff]
      %v642 = vld [vmem:[%s3 + $0x50] sm:$0xf]
      %v643 = vld [vmem:[%s3 + $0x54] sm:$0xff]
      %v644 = vld [vmem:[%s3 + $0x5c] sm:$0xf]
      %v645 = vld [vmem:[%s3 + $0x60] sm:$0xff]
      %v646 = vld [vmem:[%s3 + $0x68] sm:$0xf]
      %v647 = vld [vmem:[%s3 + $0x6c] sm:$0xff]
      %v648 = vld [vmem:[%s3 + $0x74] sm:$0xf]
      %v649 = vld [vmem:[%s3 + $0x78] sm:$0xff]
      %v650 = vld [vmem:[%s3 + $0x80] sm:$0xf]
      %v651 = vld [vmem:[%s3 + $0x84] sm:$0xff]
      %v652 = vld [vmem:[%s3 + $0x8c] sm:$0xf]
      %v653 = vld [vmem:[%s3 + $0x90] sm:$0xff]
      %v654 = vld [vmem:[%s3 + $0x98] sm:$0xf]
      %v655 = vld [vmem:[%s3 + $0x9c] sm:$0xff]
      %v656 = vld [vmem:[%s3 + $0xa4] sm:$0xf]
      %v657 = vld [vmem:[%s3 + $0xa8] sm:$0xff]
      %v658 = vld [vmem:[%s3 + $0xb0] sm:$0xf]
      %v659 = vld [vmem:[%s3 + $0xb4] sm:$0xff]
      %v660 = vld [vmem:[%s3 + $0xbc] sm:$0xf]
      %v661 = vld [vmem:[%s4] sm:$0x7]
      %v663 = vperm.slane %v661, 0
      %v664 = vperm.slane %v661, 1
      %v665 = vperm.slane %v661, 2
      %v701 = vunpack.c.l.b16 %v629
      %v702 = vunpack.c.h.b16 %v629
      %v703 = vunpack.c.l.b16 %v630
      %v704 = vunpack.c.l.b16 %v631
      %v705 = vunpack.c.h.b16 %v631
      %v706 = vunpack.c.l.b16 %v632
      %v707 = vunpack.c.l.b16 %v633
      %v708 = vunpack.c.h.b16 %v633
      %v709 = vunpack.c.l.b16 %v634
      %v710 = vunpack.c.l.b16 %v635
      %v711 = vunpack.c.h.b16 %v635
      %v712 = vunpack.c.l.b16 %v636
      %v713 = vunpack.c.l.b16 %v637
      %v714 = vunpack.c.h.b16 %v637
      %v715 = vunpack.c.l.b16 %v638
      %v716 = vunpack.c.l.b16 %v639
      %v717 = vunpack.c.h.b16 %v639
      %v718 = vunpack.c.l.b16 %v640
      %v719 = vunpack.c.l.b16 %v641
      %v720 = vunpack.c.h.b16 %v641
      %v721 = vunpack.c.l.b16 %v642
      %v722 = vunpack.c.l.b16 %v643
      %v723 = vunpack.c.h.b16 %v643
      %v724 = vunpack.c.l.b16 %v644
      %v725 = vunpack.c.l.b16 %v645
      %v726 = vunpack.c.h.b16 %v645
      %v727 = vunpack.c.l.b16 %v646
      %v728 = vunpack.c.l.b16 %v647
      %v729 = vunpack.c.h.b16 %v647
      %v730 = vunpack.c.l.b16 %v648
      %v731 = vunpack.c.l.b16 %v649
      %v732 = vunpack.c.h.b16 %v649
      %v733 = vunpack.c.l.b16 %v650
      %v734 = vunpack.c.l.b16 %v651
      %v735 = vunpack.c.h.b16 %v651
      %v736 = vunpack.c.l.b16 %v652
      %v737 = vunpack.c.l.b16 %v653
      %v738 = vunpack.c.h.b16 %v653
      %v739 = vunpack.c.l.b16 %v654
      %v740 = vunpack.c.l.b16 %v655
      %v741 = vunpack.c.h.b16 %v655
      %v742 = vunpack.c.l.b16 %v656
      %v743 = vunpack.c.l.b16 %v657
      %v744 = vunpack.c.h.b16 %v657
      %v745 = vunpack.c.l.b16 %v658
      %v746 = vunpack.c.l.b16 %v659
      %v747 = vunpack.c.h.b16 %v659
      %v748 = vunpack.c.l.b16 %v660
      %v749 = vpack.c.b16 %v704, %v701
      %v750 = vpack.c.b16 %v705, %v702
      %v751 = vpack.c.b16 %v706, %v703
      %v752 = vpack.c.b16 %v710, %v707
      %v753 = vpack.c.b16 %v711, %v708
      %v754 = vpack.c.b16 %v712, %v709
      %v755 = vpack.c.b16 %v716, %v713
      %v756 = vpack.c.b16 %v717, %v714
      %v757 = vpack.c.b16 %v718, %v715
      %v758 = vpack.c.b16 %v722, %v719
      %v759 = vpack.c.b16 %v723, %v720
      %v760 = vpack.c.b16 %v724, %v721
      %v761 = vpack.c.b16 %v728, %v725
      %v762 = vpack.c.b16 %v729, %v726
      %v763 = vpack.c.b16 %v730, %v727
      %v764 = vpack.c.b16 %v734, %v731
      %v765 = vpack.c.b16 %v735, %v732
      %v766 = vpack.c.b16 %v736, %v733
      %v767 = vpack.c.b16 %v740, %v737
      %v768 = vpack.c.b16 %v741, %v738
      %v769 = vpack.c.b16 %v742, %v739
      %v770 = vpack.c.b16 %v746, %v743
      %v771 = vpack.c.b16 %v747, %v744
      %v772 = vpack.c.b16 %v748, %v745
      %797 = vmatpush.bf16.msra.mxu0 %v770
      %798 = vmatpush.bf16.msra.mxu0 %v767
      %799 = vmatpush.bf16.msra.mxu0 %v764
      %800 = vmatpush.bf16.msra.mxu0 %v761
      %801 = vmatpush.bf16.msra.mxu0 %v758
      %802 = vmatpush.bf16.msra.mxu0 %v755
      %803 = vmatpush.bf16.msra.mxu0 %v752
      %804 = vmatpush.bf16.msra.mxu0 %v749
      %805 = vmatmul.bf16.gmra.mxu0 %v626
      %v806 = vpop.f32.mrf.mxu0
      %v807 = vadd.f32 %v663, %v806
      %v808 = vpop.f32.mrf.mxu0
      %v809 = vadd.f32 %v663, %v808
      %810 = vmatmul.bf16.gmra.mxu0 %v627
      %v811 = vpop.f32.mrf.mxu0
      %v812 = vadd.f32 %v663, %v811
      %v813 = vpop.f32.mrf.mxu0
      %v814 = vadd.f32 %v663, %v813
      %815 = vmatmul.bf16.gmra.mxu0 %v628
      %v816 = vpop.f32.mrf.mxu0
      %v817 = vadd.f32 %v663, %v816
      %v818 = vpop.f32.mrf.mxu0
      %819 = vdwg.mxu0
      %820 = vmatpush.bf16.msra.mxu0 %v771
      %821 = vmatpush.bf16.msra.mxu0 %v768
      %822 = vmatpush.bf16.msra.mxu0 %v765
      %823 = vmatpush.bf16.msra.mxu0 %v762
      %824 = vmatpush.bf16.msra.mxu0 %v759
      %825 = vmatpush.bf16.msra.mxu0 %v756
      %826 = vmatpush.bf16.msra.mxu0 %v753
      %827 = vmatpush.bf16.msra.mxu0 %v750
      %828 = vmatmul.bf16.gmra.mxu0 %v626
      %v829 = vpop.f32.mrf.mxu0
      %v830 = vadd.f32 %v664, %v829
      %v831 = vpop.f32.mrf.mxu0
      %v832 = vadd.f32 %v664, %v831
      %833 = vmatmul.bf16.gmra.mxu0 %v627
      %v834 = vpop.f32.mrf.mxu0
      %v835 = vadd.f32 %v664, %v834
      %v836 = vpop.f32.mrf.mxu0
      %v837 = vadd.f32 %v664, %v836
      %838 = vmatmul.bf16.gmra.mxu0 %v628
      %v839 = vpop.f32.mrf.mxu0
      %v840 = vadd.f32 %v664, %v839
      %v841 = vpop.f32.mrf.mxu0
      %842 = vdwg.mxu0
      %843 = vmatpush.bf16.msra.mxu0 %v772
      %844 = vmatpush.bf16.msra.mxu0 %v769
      %845 = vmatpush.bf16.msra.mxu0 %v766
      %846 = vmatpush.bf16.msra.mxu0 %v763
      %847 = vmatpush.bf16.msra.mxu0 %v760
      %848 = vmatpush.bf16.msra.mxu0 %v757
      %849 = vmatpush.bf16.msra.mxu0 %v754
      %850 = vmatpush.bf16.msra.mxu0 %v751
      %851 = vmatmul.bf16.gmra.mxu0 %v626
      %v852 = vpop.f32.mrf.mxu0
      %v853 = vadd.f32 %v665, %v852
      %v854 = vpop.f32.mrf.mxu0
      %v855 = vadd.f32 %v665, %v854
      %856 = vmatmul.bf16.gmra.mxu0 %v627
      %v857 = vpop.f32.mrf.mxu0
      %v858 = vadd.f32 %v665, %v857
      %v859 = vpop.f32.mrf.mxu0
      %v860 = vadd.f32 %v665, %v859
      %861 = vmatmul.bf16.gmra.mxu0 %v628
      %v862 = vpop.f32.mrf.mxu0
      %v863 = vadd.f32 %v665, %v862
      %v864 = vpop.f32.mrf.mxu0
      %865 = vdwg.mxu0
      %v866 = vmul.f32 %v807, 0.17677669
      %v867 = vmul.f32 %v809, 0.17677669
      %v868 = vmul.f32 %v812, 0.17677669
      %v869 = vmul.f32 %v814, 0.17677669
      %v870 = vmul.f32 %v817, 0.17677669
      %v871 = vpack.c.bf16 %v866, %v866
      %v872 = vpack.c.bf16 %v867, %v867
      %v873 = vpack.c.bf16 %v868, %v868
      %v874 = vpack.c.bf16 %v869, %v869
      %v875 = vpack.c.bf16 %v870, %v870
      %v876 = vpack.c.bf16 %v830, %v830
      %v877 = vpack.c.bf16 %v832, %v832
      %v878 = vpack.c.bf16 %v835, %v835
      %v879 = vpack.c.bf16 %v837, %v837
      %v880 = vpack.c.bf16 %v840, %v840
      %v881 = vpack.c.bf16 %v853, %v853
      %v882 = vpack.c.bf16 %v855, %v855
      %v883 = vpack.c.bf16 %v858, %v858
      %v884 = vpack.c.bf16 %v860, %v860
      %v885 = vpack.c.bf16 %v863, %v863
      %v886 = vlaneseq
      %v887 = vand.u32 %v886, 127
      %vm888 = vcmp.lt.s32.totalorder %v887, 35
      %v889 = vsel %vm888, 0.0, -1e+30
      %v895 = vunpack.c.l.b16 %v871
      %v896 = vunpack.c.l.b16 %v872
      %v897 = vunpack.c.l.b16 %v873
      %v898 = vunpack.c.l.b16 %v874
      %v899 = vunpack.c.l.b16 %v875
      %v900 = vpack.c.b16 %v896, %v895
      %v901 = vpack.c.b16 %v898, %v897
      %v902 = vpack.c.b16 %v899, %v899
      %v908 = vunpack.c.l.b16 %v876
      %v909 = vunpack.c.l.b16 %v877
      %v910 = vunpack.c.l.b16 %v878
      %v911 = vunpack.c.l.b16 %v879
      %v912 = vunpack.c.l.b16 %v880
      %v913 = vpack.c.b16 %v909, %v908
      %v914 = vpack.c.b16 %v911, %v910
      %v915 = vpack.c.b16 %v912, %v912
      %vm916 = vcmask 261120
      %v918 = vsel %vm916, %v900, 0
      %v921 = vsel %vm916, %v901, 0
      %v924 = vsel %vm916, %v902, 0
      %v927 = vsel %vm916, %v913, 0
      %v930 = vsel %vm916, %v914, 0
      %v933 = vsel %vm916, %v915, 0
      %935 = vmatpush.bf16.xpose.msra.mxu0 0
      %936 = vmatpush.bf16.xpose.msra.mxu0 0
      %937 = vmatpush.bf16.xpose.msra.mxu0 0
      %938 = vmatpush.bf16.xpose.msra.mxu0 0
      %939 = vmatpush.bf16.xpose.msra.mxu0 0
      %940 = vmatpush.bf16.xpose.msra.mxu0 %v933
      %941 = vmatpush.bf16.xpose.msra.mxu0 %v930
      %942 = vmatpush.bf16.xpose.msra.mxu0 %v927
      %943 = vmatmul.bf16.gmra.mxu0 %v918
      %v944 = vpop.f32.mrf.mxu0
      %v945 = vadd.f32 %v889, %v944
      %v946 = vpop.f32.mrf.mxu0
      %v947 = vadd.f32 %v889, %v946
      %948 = vmatmul.bf16.gmra.mxu0 %v921
      %v949 = vpop.f32.mrf.mxu0
      %v950 = vadd.f32 %v889, %v949
      %v951 = vpop.f32.mrf.mxu0
      %v952 = vadd.f32 %v889, %v951
      %953 = vmatmul.bf16.gmra.mxu0 %v924
      %v954 = vpop.f32.mrf.mxu0
      %v955 = vadd.f32 %v889, %v954
      %v956 = vpop.f32.mrf.mxu0
      %957 = vdwg.mxu0
      %vm958 = vcmask 326656
      %v959 = vsel %vm958, %v945, -inf
      %960 = vmax.xlane.f32.xlu0 %v959
      %v961 = vpop.xlane.xlu0 %960
      %v962 = vsel %vm958, %v947, -inf
      %963 = vmax.xlane.f32.xlu0 %v962
      %v964 = vpop.xlane.xlu0 %963
      %v965 = vsel %vm958, %v950, -inf
      %966 = vmax.xlane.f32.xlu0 %v965
      %v967 = vpop.xlane.xlu0 %966
      %v968 = vsel %vm958, %v952, -inf
      %969 = vmax.xlane.f32.xlu0 %v968
      %v970 = vpop.xlane.xlu0 %969
      %v971 = vsel %vm958, %v955, -inf
      %972 = vmax.xlane.f32.xlu0 %v971
      %v973 = vpop.xlane.xlu0 %972
      %v974 = vsub.f32 %v945, %v961
      %v975 = vsub.f32 %v947, %v964
      %v976 = vsub.f32 %v950, %v967
      %v977 = vsub.f32 %v952, %v970
      %v978 = vsub.f32 %v955, %v973
      %v979 = vmul.f32 %v974, 1.442695
      %v980 = vpow.pop %v979
      %v981 = vmul.f32 %v975, 1.442695
      %v982 = vpow.pop %v981
      %v983 = vmul.f32 %v976, 1.442695
      %v984 = vpow.pop %v983
      %v985 = vmul.f32 %v977, 1.442695
      %v986 = vpow.pop %v985
      %v987 = vmul.f32 %v978, 1.442695
      %v988 = vpow.pop %v987
      %v989 = vsel %vm958, %v980, 0.0
      %990 = vadd.xlane.f32.xlu0 %v989
      %v991 = vpop.xlane.xlu0 %990
      %v992 = vsel %vm958, %v982, 0.0
      %993 = vadd.xlane.f32.xlu0 %v992
      %v994 = vpop.xlane.xlu0 %993
      %v995 = vsel %vm958, %v984, 0.0
      %996 = vadd.xlane.f32.xlu0 %v995
      %v997 = vpop.xlane.xlu0 %996
      %v998 = vsel %vm958, %v986, 0.0
      %999 = vadd.xlane.f32.xlu0 %v998
      %v1000 = vpop.xlane.xlu0 %999
      %v1001 = vsel %vm958, %v988, 0.0
      %1002 = vadd.xlane.f32.xlu0 %v1001
      %v1003 = vpop.xlane.xlu0 %1002
      %v1004 = vrcp.pop %v991
      %v1005 = vrcp.pop %v994
      %v1006 = vrcp.pop %v997
      %v1007 = vrcp.pop %v1000
      %v1008 = vrcp.pop %v1003
      %v1009 = vmul.f32 %v980, %v1004
      %v1010 = vmul.f32 %v982, %v1005
      %v1011 = vmul.f32 %v984, %v1006
      %v1012 = vmul.f32 %v986, %v1007
      %v1013 = vmul.f32 %v988, %v1008
      %v1014 = vpack.c.bf16 %v1010, %v1009
      %v1015 = vpack.c.bf16 %v1012, %v1011
      %v1016 = vpack.c.bf16 %v1013, %v1013
      %v1022 = vunpack.c.l.b16 %v881
      %v1023 = vunpack.c.l.b16 %v882
      %v1024 = vunpack.c.l.b16 %v883
      %v1025 = vunpack.c.l.b16 %v884
      %v1026 = vunpack.c.l.b16 %v885
      %v1027 = vpack.c.b16 %v1023, %v1022
      %v1028 = vpack.c.b16 %v1025, %v1024
      %v1029 = vpack.c.b16 %v1026, %v1026
      %v1033 = vsel %vm958, %v1014, 0
      %v1036 = vsel %vm958, %v1015, 0
      %v1039 = vsel %vm958, %v1016, 0
      %vm1041 = vcmask 1043456
      %v1043 = vsel %vm1041, %v1029, 0
      %1045 = vmatpush.bf16.msra.mxu0 0
      %1046 = vmatpush.bf16.msra.mxu0 0
      %1047 = vmatpush.bf16.msra.mxu0 0
      %1048 = vmatpush.bf16.msra.mxu0 0
      %1049 = vmatpush.bf16.msra.mxu0 0
      %1050 = vmatpush.bf16.msra.mxu0 %v1043
      %1051 = vmatpush.bf16.msra.mxu0 %v1028
      %1052 = vmatpush.bf16.msra.mxu0 %v1027
      %1053 = vmatmul.bf16.gmra.mxu0 %v1033
      %v1054 = vpop.f32.mrf.mxu0
      %v1055 = vadd.f32 0.0, %v1054
      %v1056 = vpop.f32.mrf.mxu0
      %v1057 = vadd.f32 0.0, %v1056
      %1058 = vmatmul.bf16.gmra.mxu0 %v1036
      %v1059 = vpop.f32.mrf.mxu0
      %v1060 = vadd.f32 0.0, %v1059
      %v1061 = vpop.f32.mrf.mxu0
      %v1062 = vadd.f32 0.0, %v1061
      %1063 = vmatmul.bf16.gmra.mxu0 %v1039
      %v1064 = vpop.f32.mrf.mxu0
      %v1065 = vadd.f32 0.0, %v1064
      %v1066 = vpop.f32.mrf.mxu0
      %1067 = vdwg.mxu0
      %v1068 = vpack.c.bf16 %v1057, %v1055
      %v1069 = vpack.c.bf16 %v1062, %v1060
      %v1070 = vpack.c.bf16 %v1065, %v1065
      %v1071 = vld [vmem:[%s5] sm:$0xf]
      %v1072 = vld [vmem:[%s5 + $0x4] sm:$0xf]
      %v1073 = vld [vmem:[%s5 + $0x8] sm:$0xf]
      %v1074 = vld [vmem:[%s5 + $0xc] sm:$0xf]
      %1075 = vrot.lane.b32.xlu0 %v900, 96
      %v1076 = vpop.permute.xlu0 %1075
      %1077 = vrot.lane.b32.xlu0 %v901, 96
      %v1078 = vpop.permute.xlu0 %1077
      %1079 = vrot.lane.b32.xlu0 %v902, 96
      %v1080 = vpop.permute.xlu0 %1079
      %1081 = vrot.lane.b32.xlu0 %v913, 96
      %v1082 = vpop.permute.xlu0 %1081
      %1083 = vrot.lane.b32.xlu0 %v914, 96
      %v1084 = vpop.permute.xlu0 %1083
      %1085 = vrot.lane.b32.xlu0 %v915, 96
      %v1086 = vpop.permute.xlu0 %1085
      %v1088 = vsel %vm916, %v1076, 0
      %v1091 = vsel %vm916, %v1078, 0
      %v1094 = vsel %vm916, %v1080, 0
      %v1097 = vsel %vm916, %v1082, 0
      %v1100 = vsel %vm916, %v1084, 0
      %v1103 = vsel %vm916, %v1086, 0
      %1105 = vmatpush.bf16.xpose.msra.mxu0 0
      %1106 = vmatpush.bf16.xpose.msra.mxu0 0
      %1107 = vmatpush.bf16.xpose.msra.mxu0 0
      %1108 = vmatpush.bf16.xpose.msra.mxu0 0
      %1109 = vmatpush.bf16.xpose.msra.mxu0 0
      %1110 = vmatpush.bf16.xpose.msra.mxu0 %v1103
      %1111 = vmatpush.bf16.xpose.msra.mxu0 %v1100
      %1112 = vmatpush.bf16.xpose.msra.mxu0 %v1097
      %1113 = vmatmul.bf16.gmra.mxu0 %v1088
      %v1114 = vpop.f32.mrf.mxu0
      %v1115 = vadd.f32 %v889, %v1114
      %v1116 = vpop.f32.mrf.mxu0
      %v1117 = vadd.f32 %v889, %v1116
      %1118 = vmatmul.bf16.gmra.mxu0 %v1091
      %v1119 = vpop.f32.mrf.mxu0
      %v1120 = vadd.f32 %v889, %v1119
      %v1121 = vpop.f32.mrf.mxu0
      %v1122 = vadd.f32 %v889, %v1121
      %1123 = vmatmul.bf16.gmra.mxu0 %v1094
      %v1124 = vpop.f32.mrf.mxu0
      %v1125 = vadd.f32 %v889, %v1124
      %v1126 = vpop.f32.mrf.mxu0
      %1127 = vdwg.mxu0
      %v1128 = vsel %vm958, %v1115, -inf
      %1129 = vmax.xlane.f32.xlu0 %v1128
      %v1130 = vpop.xlane.xlu0 %1129
      %v1131 = vsel %vm958, %v1117, -inf
      %1132 = vmax.xlane.f32.xlu0 %v1131
      %v1133 = vpop.xlane.xlu0 %1132
      %v1134 = vsel %vm958, %v1120, -inf
      %1135 = vmax.xlane.f32.xlu0 %v1134
      %v1136 = vpop.xlane.xlu0 %1135
      %v1137 = vsel %vm958, %v1122, -inf
      %1138 = vmax.xlane.f32.xlu0 %v1137
      %v1139 = vpop.xlane.xlu0 %1138
      %v1140 = vsel %vm958, %v1125, -inf
      %1141 = vmax.xlane.f32.xlu0 %v1140
      %v1142 = vpop.xlane.xlu0 %1141
      %v1143 = vsub.f32 %v1115, %v1130
      %v1144 = vsub.f32 %v1117, %v1133
      %v1145 = vsub.f32 %v1120, %v1136
      %v1146 = vsub.f32 %v1122, %v1139
      %v1147 = vsub.f32 %v1125, %v1142
      %v1148 = vmul.f32 %v1143, 1.442695
      %v1149 = vpow.pop %v1148
      %v1150 = vmul.f32 %v1144, 1.442695
      %v1151 = vpow.pop %v1150
      %v1152 = vmul.f32 %v1145, 1.442695
      %v1153 = vpow.pop %v1152
      %v1154 = vmul.f32 %v1146, 1.442695
      %v1155 = vpow.pop %v1154
      %v1156 = vmul.f32 %v1147, 1.442695
      %v1157 = vpow.pop %v1156
      %v1158 = vsel %vm958, %v1149, 0.0
      %1159 = vadd.xlane.f32.xlu0 %v1158
      %v1160 = vpop.xlane.xlu0 %1159
      %v1161 = vsel %vm958, %v1151, 0.0
      %1162 = vadd.xlane.f32.xlu0 %v1161
      %v1163 = vpop.xlane.xlu0 %1162
      %v1164 = vsel %vm958, %v1153, 0.0
      %1165 = vadd.xlane.f32.xlu0 %v1164
      %v1166 = vpop.xlane.xlu0 %1165
      %v1167 = vsel %vm958, %v1155, 0.0
      %1168 = vadd.xlane.f32.xlu0 %v1167
      %v1169 = vpop.xlane.xlu0 %1168
      %v1170 = vsel %vm958, %v1157, 0.0
      %1171 = vadd.xlane.f32.xlu0 %v1170
      %v1172 = vpop.xlane.xlu0 %1171
      %v1173 = vrcp.pop %v1160
      %v1174 = vrcp.pop %v1163
      %v1175 = vrcp.pop %v1166
      %v1176 = vrcp.pop %v1169
      %v1177 = vrcp.pop %v1172
      %v1178 = vmul.f32 %v1149, %v1173
      %v1179 = vmul.f32 %v1151, %v1174
      %v1180 = vmul.f32 %v1153, %v1175
      %v1181 = vmul.f32 %v1155, %v1176
      %v1182 = vmul.f32 %v1157, %v1177
      %v1183 = vpack.c.bf16 %v1179, %v1178
      %v1184 = vpack.c.bf16 %v1181, %v1180
      %v1185 = vpack.c.bf16 %v1182, %v1182
      %1186 = vrot.lane.b32.xlu0 %v1027, 96
      %v1187 = vpop.permute.xlu0 %1186
      %1188 = vrot.lane.b32.xlu0 %v1028, 96
      %v1189 = vpop.permute.xlu0 %1188
      %1190 = vrot.lane.b32.xlu0 %v1029, 96
      %v1191 = vpop.permute.xlu0 %1190
      %v1195 = vsel %vm958, %v1183, 0
      %v1198 = vsel %vm958, %v1184, 0
      %v1201 = vsel %vm958, %v1185, 0
      %v1204 = vsel %vm1041, %v1191, 0
      %1206 = vmatpush.bf16.msra.mxu0 0
      %1207 = vmatpush.bf16.msra.mxu0 0
      %1208 = vmatpush.bf16.msra.mxu0 0
      %1209 = vmatpush.bf16.msra.mxu0 0
      %1210 = vmatpush.bf16.msra.mxu0 0
      %1211 = vmatpush.bf16.msra.mxu0 %v1204
      %1212 = vmatpush.bf16.msra.mxu0 %v1189
      %1213 = vmatpush.bf16.msra.mxu0 %v1187
      %1214 = vmatmul.bf16.gmra.mxu0 %v1195
      %v1215 = vpop.f32.mrf.mxu0
      %v1216 = vadd.f32 0.0, %v1215
      %v1217 = vpop.f32.mrf.mxu0
      %v1218 = vadd.f32 0.0, %v1217
      %1219 = vmatmul.bf16.gmra.mxu0 %v1198
      %v1220 = vpop.f32.mrf.mxu0
      %v1221 = vadd.f32 0.0, %v1220
      %v1222 = vpop.f32.mrf.mxu0
      %v1223 = vadd.f32 0.0, %v1222
      %1224 = vmatmul.bf16.gmra.mxu0 %v1201
      %v1225 = vpop.f32.mrf.mxu0
      %v1226 = vadd.f32 0.0, %v1225
      %v1227 = vpop.f32.mrf.mxu0
      %1228 = vdwg.mxu0
      %v1229 = vpack.c.bf16 %v1218, %v1216
      %v1230 = vpack.c.bf16 %v1223, %v1221
      %v1231 = vpack.c.bf16 %v1226, %v1226
      %v1232 = vld [vmem:[%s5 + $0x10] sm:$0xf]
      %v1233 = vld [vmem:[%s5 + $0x14] sm:$0xf]
      %v1234 = vld [vmem:[%s5 + $0x18] sm:$0xf]
      %v1235 = vld [vmem:[%s5 + $0x1c] sm:$0xf]
      %v1240 = vunpack.c.l.b16 %v1232
      %v1241 = vunpack.c.l.b16 %v1233
      %v1242 = vunpack.c.l.b16 %v1234
      %v1243 = vunpack.c.l.b16 %v1235
      %v1244 = vpack.c.b16 %v1241, %v1240
      %v1245 = vpack.c.b16 %v1243, %v1242
      %v1249 = vsel %vm916, %v1229, 0
      %v1252 = vsel %vm916, %v1230, 0
      %v1255 = vsel %vm916, %v1231, 0
      %1257 = vmatpush.bf16.msra.mxu0 0
      %1258 = vmatpush.bf16.msra.mxu0 0
      %1259 = vmatpush.bf16.msra.mxu0 0
      %1260 = vmatpush.bf16.msra.mxu0 0
      %1261 = vmatpush.bf16.msra.mxu0 0
      %1262 = vmatpush.bf16.msra.mxu0 0
      %1263 = vmatpush.bf16.msra.mxu0 %v1245
      %1264 = vmatpush.bf16.msra.mxu0 %v1244
      %1265 = vmatmul.bf16.gmra.mxu0 %v1249
      %v1266 = vpop.f32.mrf.mxu0
      %v1267 = vadd.f32 0.0, %v1266
      %v1268 = vpop.f32.mrf.mxu0
      %v1269 = vadd.f32 0.0, %v1268
      %1270 = vmatmul.bf16.gmra.mxu0 %v1252
      %v1271 = vpop.f32.mrf.mxu0
      %v1272 = vadd.f32 0.0, %v1271
      %v1273 = vpop.f32.mrf.mxu0
      %v1274 = vadd.f32 0.0, %v1273
      %1275 = vmatmul.bf16.gmra.mxu0 %v1255
      %v1276 = vpop.f32.mrf.mxu0
      %v1277 = vadd.f32 0.0, %v1276
      %v1278 = vpop.f32.mrf.mxu0
      %1279 = vdwg.mxu0
      %v1284 = vunpack.c.l.b16 %v1071
      %v1285 = vunpack.c.l.b16 %v1072
      %v1286 = vunpack.c.l.b16 %v1073
      %v1287 = vunpack.c.l.b16 %v1074
      %v1288 = vpack.c.b16 %v1285, %v1284
      %v1289 = vpack.c.b16 %v1287, %v1286
      %v1293 = vsel %vm916, %v1068, 0
      %v1296 = vsel %vm916, %v1069, 0
      %v1299 = vsel %vm916, %v1070, 0
      %1301 = vmatpush.bf16.msra.mxu0 0
      %1302 = vmatpush.bf16.msra.mxu0 0
      %1303 = vmatpush.bf16.msra.mxu0 0
      %1304 = vmatpush.bf16.msra.mxu0 0
      %1305 = vmatpush.bf16.msra.mxu0 0
      %1306 = vmatpush.bf16.msra.mxu0 0
      %1307 = vmatpush.bf16.msra.mxu0 %v1289
      %1308 = vmatpush.bf16.msra.mxu0 %v1288
      %1309 = vmatmul.bf16.gmra.mxu0 %v1293
      %v1310 = vpop.f32.mrf.mxu0
      %v1311 = vadd.f32 %v1267, %v1310
      %v1312 = vpop.f32.mrf.mxu0
      %v1313 = vadd.f32 %v1269, %v1312
      %1314 = vmatmul.bf16.gmra.mxu0 %v1296
      %v1315 = vpop.f32.mrf.mxu0
      %v1316 = vadd.f32 %v1272, %v1315
      %v1317 = vpop.f32.mrf.mxu0
      %v1318 = vadd.f32 %v1274, %v1317
      %1319 = vmatmul.bf16.gmra.mxu0 %v1299
      %v1320 = vpop.f32.mrf.mxu0
      %v1321 = vadd.f32 %v1277, %v1320
      %v1322 = vpop.f32.mrf.mxu0
      %1323 = vdwg.mxu0
      %1324 = vrot.lane.b32.xlu0 %v900, 64
      %v1325 = vpop.permute.xlu0 %1324
      %1326 = vrot.lane.b32.xlu0 %v901, 64
      %v1327 = vpop.permute.xlu0 %1326
      %1328 = vrot.lane.b32.xlu0 %v902, 64
      %v1329 = vpop.permute.xlu0 %1328
      %1330 = vrot.lane.b32.xlu0 %v913, 64
      %v1331 = vpop.permute.xlu0 %1330
      %1332 = vrot.lane.b32.xlu0 %v914, 64
      %v1333 = vpop.permute.xlu0 %1332
      %1334 = vrot.lane.b32.xlu0 %v915, 64
      %v1335 = vpop.permute.xlu0 %1334
      %v1337 = vsel %vm916, %v1325, 0
      %v1340 = vsel %vm916, %v1327, 0
      %v1343 = vsel %vm916, %v1329, 0
      %v1346 = vsel %vm916, %v1331, 0
      %v1349 = vsel %vm916, %v1333, 0
      %v1352 = vsel %vm916, %v1335, 0
      %1354 = vmatpush.bf16.xpose.msra.mxu0 0
      %1355 = vmatpush.bf16.xpose.msra.mxu0 0
      %1356 = vmatpush.bf16.xpose.msra.mxu0 0
      %1357 = vmatpush.bf16.xpose.msra.mxu0 0
      %1358 = vmatpush.bf16.xpose.msra.mxu0 0
      %1359 = vmatpush.bf16.xpose.msra.mxu0 %v1352
      %1360 = vmatpush.bf16.xpose.msra.mxu0 %v1349
      %1361 = vmatpush.bf16.xpose.msra.mxu0 %v1346
      %1362 = vmatmul.bf16.gmra.mxu0 %v1337
      %v1363 = vpop.f32.mrf.mxu0
      %v1364 = vadd.f32 %v889, %v1363
      %v1365 = vpop.f32.mrf.mxu0
      %v1366 = vadd.f32 %v889, %v1365
      %1367 = vmatmul.bf16.gmra.mxu0 %v1340
      %v1368 = vpop.f32.mrf.mxu0
      %v1369 = vadd.f32 %v889, %v1368
      %v1370 = vpop.f32.mrf.mxu0
      %v1371 = vadd.f32 %v889, %v1370
      %1372 = vmatmul.bf16.gmra.mxu0 %v1343
      %v1373 = vpop.f32.mrf.mxu0
      %v1374 = vadd.f32 %v889, %v1373
      %v1375 = vpop.f32.mrf.mxu0
      %1376 = vdwg.mxu0
      %v1377 = vsel %vm958, %v1364, -inf
      %1378 = vmax.xlane.f32.xlu0 %v1377
      %v1379 = vpop.xlane.xlu0 %1378
      %v1380 = vsel %vm958, %v1366, -inf
      %1381 = vmax.xlane.f32.xlu0 %v1380
      %v1382 = vpop.xlane.xlu0 %1381
      %v1383 = vsel %vm958, %v1369, -inf
      %1384 = vmax.xlane.f32.xlu0 %v1383
      %v1385 = vpop.xlane.xlu0 %1384
      %v1386 = vsel %vm958, %v1371, -inf
      %1387 = vmax.xlane.f32.xlu0 %v1386
      %v1388 = vpop.xlane.xlu0 %1387
      %v1389 = vsel %vm958, %v1374, -inf
      %1390 = vmax.xlane.f32.xlu0 %v1389
      %v1391 = vpop.xlane.xlu0 %1390
      %v1392 = vsub.f32 %v1364, %v1379
      %v1393 = vsub.f32 %v1366, %v1382
      %v1394 = vsub.f32 %v1369, %v1385
      %v1395 = vsub.f32 %v1371, %v1388
      %v1396 = vsub.f32 %v1374, %v1391
      %v1397 = vmul.f32 %v1392, 1.442695
      %v1398 = vpow.pop %v1397
      %v1399 = vmul.f32 %v1393, 1.442695
      %v1400 = vpow.pop %v1399
      %v1401 = vmul.f32 %v1394, 1.442695
      %v1402 = vpow.pop %v1401
      %v1403 = vmul.f32 %v1395, 1.442695
      %v1404 = vpow.pop %v1403
      %v1405 = vmul.f32 %v1396, 1.442695
      %v1406 = vpow.pop %v1405
      %v1407 = vsel %vm958, %v1398, 0.0
      %1408 = vadd.xlane.f32.xlu0 %v1407
      %v1409 = vpop.xlane.xlu0 %1408
      %v1410 = vsel %vm958, %v1400, 0.0
      %1411 = vadd.xlane.f32.xlu0 %v1410
      %v1412 = vpop.xlane.xlu0 %1411
      %v1413 = vsel %vm958, %v1402, 0.0
      %1414 = vadd.xlane.f32.xlu0 %v1413
      %v1415 = vpop.xlane.xlu0 %1414
      %v1416 = vsel %vm958, %v1404, 0.0
      %1417 = vadd.xlane.f32.xlu0 %v1416
      %v1418 = vpop.xlane.xlu0 %1417
      %v1419 = vsel %vm958, %v1406, 0.0
      %1420 = vadd.xlane.f32.xlu0 %v1419
      %v1421 = vpop.xlane.xlu0 %1420
      %v1422 = vrcp.pop %v1409
      %v1423 = vrcp.pop %v1412
      %v1424 = vrcp.pop %v1415
      %v1425 = vrcp.pop %v1418
      %v1426 = vrcp.pop %v1421
      %v1427 = vmul.f32 %v1398, %v1422
      %v1428 = vmul.f32 %v1400, %v1423
      %v1429 = vmul.f32 %v1402, %v1424
      %v1430 = vmul.f32 %v1404, %v1425
      %v1431 = vmul.f32 %v1406, %v1426
      %v1432 = vpack.c.bf16 %v1428, %v1427
      %v1433 = vpack.c.bf16 %v1430, %v1429
      %v1434 = vpack.c.bf16 %v1431, %v1431
      %1435 = vrot.lane.b32.xlu0 %v1027, 64
      %v1436 = vpop.permute.xlu0 %1435
      %1437 = vrot.lane.b32.xlu0 %v1028, 64
      %v1438 = vpop.permute.xlu0 %1437
      %1439 = vrot.lane.b32.xlu0 %v1029, 64
      %v1440 = vpop.permute.xlu0 %1439
      %v1444 = vsel %vm958, %v1432, 0
      %v1447 = vsel %vm958, %v1433, 0
      %v1450 = vsel %vm958, %v1434, 0
      %v1453 = vsel %vm1041, %v1440, 0
      %1455 = vmatpush.bf16.msra.mxu0 0
      %1456 = vmatpush.bf16.msra.mxu0 0
      %1457 = vmatpush.bf16.msra.mxu0 0
      %1458 = vmatpush.bf16.msra.mxu0 0
      %1459 = vmatpush.bf16.msra.mxu0 0
      %1460 = vmatpush.bf16.msra.mxu0 %v1453
      %1461 = vmatpush.bf16.msra.mxu0 %v1438
      %1462 = vmatpush.bf16.msra.mxu0 %v1436
      %1463 = vmatmul.bf16.gmra.mxu0 %v1444
      %v1464 = vpop.f32.mrf.mxu0
      %v1465 = vadd.f32 0.0, %v1464
      %v1466 = vpop.f32.mrf.mxu0
      %v1467 = vadd.f32 0.0, %v1466
      %1468 = vmatmul.bf16.gmra.mxu0 %v1447
      %v1469 = vpop.f32.mrf.mxu0
      %v1470 = vadd.f32 0.0, %v1469
      %v1471 = vpop.f32.mrf.mxu0
      %v1472 = vadd.f32 0.0, %v1471
      %1473 = vmatmul.bf16.gmra.mxu0 %v1450
      %v1474 = vpop.f32.mrf.mxu0
      %v1475 = vadd.f32 0.0, %v1474
      %v1476 = vpop.f32.mrf.mxu0
      %1477 = vdwg.mxu0
      %v1478 = vpack.c.bf16 %v1467, %v1465
      %v1479 = vpack.c.bf16 %v1472, %v1470
      %v1480 = vpack.c.bf16 %v1475, %v1475
      %v1481 = vld [vmem:[%s5 + $0x20] sm:$0xf]
      %v1482 = vld [vmem:[%s5 + $0x24] sm:$0xf]
      %v1483 = vld [vmem:[%s5 + $0x28] sm:$0xf]
      %v1484 = vld [vmem:[%s5 + $0x2c] sm:$0xf]
      %v1489 = vunpack.c.l.b16 %v1481
      %v1490 = vunpack.c.l.b16 %v1482
      %v1491 = vunpack.c.l.b16 %v1483
      %v1492 = vunpack.c.l.b16 %v1484
      %v1493 = vpack.c.b16 %v1490, %v1489
      %v1494 = vpack.c.b16 %v1492, %v1491
      %v1498 = vsel %vm916, %v1478, 0
      %v1501 = vsel %vm916, %v1479, 0
      %v1504 = vsel %vm916, %v1480, 0
      %1506 = vmatpush.bf16.msra.mxu0 0
      %1507 = vmatpush.bf16.msra.mxu0 0
      %1508 = vmatpush.bf16.msra.mxu0 0
      %1509 = vmatpush.bf16.msra.mxu0 0
      %1510 = vmatpush.bf16.msra.mxu0 0
      %1511 = vmatpush.bf16.msra.mxu0 0
      %1512 = vmatpush.bf16.msra.mxu0 %v1494
      %1513 = vmatpush.bf16.msra.mxu0 %v1493
      %1514 = vmatmul.bf16.gmra.mxu0 %v1498
      %v1515 = vpop.f32.mrf.mxu0
      %v1516 = vadd.f32 0.0, %v1515
      %v1517 = vpop.f32.mrf.mxu0
      %v1518 = vadd.f32 0.0, %v1517
      %1519 = vmatmul.bf16.gmra.mxu0 %v1501
      %v1520 = vpop.f32.mrf.mxu0
      %v1521 = vadd.f32 0.0, %v1520
      %v1522 = vpop.f32.mrf.mxu0
      %v1523 = vadd.f32 0.0, %v1522
      %1524 = vmatmul.bf16.gmra.mxu0 %v1504
      %v1525 = vpop.f32.mrf.mxu0
      %v1526 = vadd.f32 0.0, %v1525
      %v1527 = vpop.f32.mrf.mxu0
      %1528 = vdwg.mxu0
      %v1529 = vadd.f32 %v1311, %v1516
      %v1530 = vadd.f32 %v1313, %v1518
      %v1531 = vadd.f32 %v1316, %v1521
      %v1532 = vadd.f32 %v1318, %v1523
      %v1533 = vadd.f32 %v1321, %v1526
      %1534 = vrot.lane.b32.xlu0 %v900, 32
      %v1535 = vpop.permute.xlu0 %1534
      %1536 = vrot.lane.b32.xlu0 %v901, 32
      %v1537 = vpop.permute.xlu0 %1536
      %1538 = vrot.lane.b32.xlu0 %v902, 32
      %v1539 = vpop.permute.xlu0 %1538
      %1540 = vrot.lane.b32.xlu0 %v913, 32
      %v1541 = vpop.permute.xlu0 %1540
      %1542 = vrot.lane.b32.xlu0 %v914, 32
      %v1543 = vpop.permute.xlu0 %1542
      %1544 = vrot.lane.b32.xlu0 %v915, 32
      %v1545 = vpop.permute.xlu0 %1544
      %v1547 = vsel %vm916, %v1535, 0
      %v1550 = vsel %vm916, %v1537, 0
      %v1553 = vsel %vm916, %v1539, 0
      %v1556 = vsel %vm916, %v1541, 0
      %v1559 = vsel %vm916, %v1543, 0
      %v1562 = vsel %vm916, %v1545, 0
      %1564 = vmatpush.bf16.xpose.msra.mxu0 0
      %1565 = vmatpush.bf16.xpose.msra.mxu0 0
      %1566 = vmatpush.bf16.xpose.msra.mxu0 0
      %1567 = vmatpush.bf16.xpose.msra.mxu0 0
      %1568 = vmatpush.bf16.xpose.msra.mxu0 0
      %1569 = vmatpush.bf16.xpose.msra.mxu0 %v1562
      %1570 = vmatpush.bf16.xpose.msra.mxu0 %v1559
      %1571 = vmatpush.bf16.xpose.msra.mxu0 %v1556
      %1572 = vmatmul.bf16.gmra.mxu0 %v1547
      %v1573 = vpop.f32.mrf.mxu0
      %v1574 = vadd.f32 %v889, %v1573
      %v1575 = vpop.f32.mrf.mxu0
      %v1576 = vadd.f32 %v889, %v1575
      %1577 = vmatmul.bf16.gmra.mxu0 %v1550
      %v1578 = vpop.f32.mrf.mxu0
      %v1579 = vadd.f32 %v889, %v1578
      %v1580 = vpop.f32.mrf.mxu0
      %v1581 = vadd.f32 %v889, %v1580
      %1582 = vmatmul.bf16.gmra.mxu0 %v1553
      %v1583 = vpop.f32.mrf.mxu0
      %v1584 = vadd.f32 %v889, %v1583
      %v1585 = vpop.f32.mrf.mxu0
      %1586 = vdwg.mxu0
      %v1587 = vsel %vm958, %v1574, -inf
      %1588 = vmax.xlane.f32.xlu0 %v1587
      %v1589 = vpop.xlane.xlu0 %1588
      %v1590 = vsel %vm958, %v1576, -inf
      %1591 = vmax.xlane.f32.xlu0 %v1590
      %v1592 = vpop.xlane.xlu0 %1591
      %v1593 = vsel %vm958, %v1579, -inf
      %1594 = vmax.xlane.f32.xlu0 %v1593
      %v1595 = vpop.xlane.xlu0 %1594
      %v1596 = vsel %vm958, %v1581, -inf
      %1597 = vmax.xlane.f32.xlu0 %v1596
      %v1598 = vpop.xlane.xlu0 %1597
      %v1599 = vsel %vm958, %v1584, -inf
      %1600 = vmax.xlane.f32.xlu0 %v1599
      %v1601 = vpop.xlane.xlu0 %1600
      %v1602 = vsub.f32 %v1574, %v1589
      %v1603 = vsub.f32 %v1576, %v1592
      %v1604 = vsub.f32 %v1579, %v1595
      %v1605 = vsub.f32 %v1581, %v1598
      %v1606 = vsub.f32 %v1584, %v1601
      %v1607 = vmul.f32 %v1602, 1.442695
      %v1608 = vpow.pop %v1607
      %v1609 = vmul.f32 %v1603, 1.442695
      %v1610 = vpow.pop %v1609
      %v1611 = vmul.f32 %v1604, 1.442695
      %v1612 = vpow.pop %v1611
      %v1613 = vmul.f32 %v1605, 1.442695
      %v1614 = vpow.pop %v1613
      %v1615 = vmul.f32 %v1606, 1.442695
      %v1616 = vpow.pop %v1615
      %v1617 = vsel %vm958, %v1608, 0.0
      %1618 = vadd.xlane.f32.xlu0 %v1617
      %v1619 = vpop.xlane.xlu0 %1618
      %v1620 = vsel %vm958, %v1610, 0.0
      %1621 = vadd.xlane.f32.xlu0 %v1620
      %v1622 = vpop.xlane.xlu0 %1621
      %v1623 = vsel %vm958, %v1612, 0.0
      %1624 = vadd.xlane.f32.xlu0 %v1623
      %v1625 = vpop.xlane.xlu0 %1624
      %v1626 = vsel %vm958, %v1614, 0.0
      %1627 = vadd.xlane.f32.xlu0 %v1626
      %v1628 = vpop.xlane.xlu0 %1627
      %v1629 = vsel %vm958, %v1616, 0.0
      %1630 = vadd.xlane.f32.xlu0 %v1629
      %v1631 = vpop.xlane.xlu0 %1630
      %v1632 = vrcp.pop %v1619
      %v1633 = vrcp.pop %v1622
      %v1634 = vrcp.pop %v1625
      %v1635 = vrcp.pop %v1628
      %v1636 = vrcp.pop %v1631
      %v1637 = vmul.f32 %v1608, %v1632
      %v1638 = vmul.f32 %v1610, %v1633
      %v1639 = vmul.f32 %v1612, %v1634
      %v1640 = vmul.f32 %v1614, %v1635
      %v1641 = vmul.f32 %v1616, %v1636
      %v1642 = vpack.c.bf16 %v1638, %v1637
      %v1643 = vpack.c.bf16 %v1640, %v1639
      %v1644 = vpack.c.bf16 %v1641, %v1641
      %1645 = vrot.lane.b32.xlu0 %v1027, 32
      %v1646 = vpop.permute.xlu0 %1645
      %1647 = vrot.lane.b32.xlu0 %v1028, 32
      %v1648 = vpop.permute.xlu0 %1647
      %1649 = vrot.lane.b32.xlu0 %v1029, 32
      %v1650 = vpop.permute.xlu0 %1649
      %v1654 = vsel %vm958, %v1642, 0
      %v1657 = vsel %vm958, %v1643, 0
      %v1660 = vsel %vm958, %v1644, 0
      %v1663 = vsel %vm1041, %v1650, 0
      %1665 = vmatpush.bf16.msra.mxu0 0
      %1666 = vmatpush.bf16.msra.mxu0 0
      %1667 = vmatpush.bf16.msra.mxu0 0
      %1668 = vmatpush.bf16.msra.mxu0 0
      %1669 = vmatpush.bf16.msra.mxu0 0
      %1670 = vmatpush.bf16.msra.mxu0 %v1663
      %1671 = vmatpush.bf16.msra.mxu0 %v1648
      %1672 = vmatpush.bf16.msra.mxu0 %v1646
      %1673 = vmatmul.bf16.gmra.mxu0 %v1654
      %v1674 = vpop.f32.mrf.mxu0
      %v1675 = vadd.f32 0.0, %v1674
      %v1676 = vpop.f32.mrf.mxu0
      %v1677 = vadd.f32 0.0, %v1676
      %1678 = vmatmul.bf16.gmra.mxu0 %v1657
      %v1679 = vpop.f32.mrf.mxu0
      %v1680 = vadd.f32 0.0, %v1679
      %v1681 = vpop.f32.mrf.mxu0
      %v1682 = vadd.f32 0.0, %v1681
      %1683 = vmatmul.bf16.gmra.mxu0 %v1660
      %v1684 = vpop.f32.mrf.mxu0
      %v1685 = vadd.f32 0.0, %v1684
      %v1686 = vpop.f32.mrf.mxu0
      %1687 = vdwg.mxu0
      %v1688 = vpack.c.bf16 %v1677, %v1675
      %v1689 = vpack.c.bf16 %v1682, %v1680
      %v1690 = vpack.c.bf16 %v1685, %v1685
      %v1691 = vld [vmem:[%s5 + $0x30] sm:$0xf]
      %v1692 = vld [vmem:[%s5 + $0x34] sm:$0xf]
      %v1693 = vld [vmem:[%s5 + $0x38] sm:$0xf]
      %v1694 = vld [vmem:[%s5 + $0x3c] sm:$0xf]
      %v1699 = vunpack.c.l.b16 %v1691
      %v1700 = vunpack.c.l.b16 %v1692
      %v1701 = vunpack.c.l.b16 %v1693
      %v1702 = vunpack.c.l.b16 %v1694
      %v1703 = vpack.c.b16 %v1700, %v1699
      %v1704 = vpack.c.b16 %v1702, %v1701
      %v1708 = vsel %vm916, %v1688, 0
      %v1711 = vsel %vm916, %v1689, 0
      %v1714 = vsel %vm916, %v1690, 0
      %1716 = vmatpush.bf16.msra.mxu0 0
      %1717 = vmatpush.bf16.msra.mxu0 0
      %1718 = vmatpush.bf16.msra.mxu0 0
      %1719 = vmatpush.bf16.msra.mxu0 0
      %1720 = vmatpush.bf16.msra.mxu0 0
      %1721 = vmatpush.bf16.msra.mxu0 0
      %1722 = vmatpush.bf16.msra.mxu0 %v1704
      %1723 = vmatpush.bf16.msra.mxu0 %v1703
      %1724 = vmatmul.bf16.gmra.mxu0 %v1708
      %v1725 = vpop.f32.mrf.mxu0
      %v1726 = vadd.f32 0.0, %v1725
      %v1727 = vpop.f32.mrf.mxu0
      %v1728 = vadd.f32 0.0, %v1727
      %1729 = vmatmul.bf16.gmra.mxu0 %v1711
      %v1730 = vpop.f32.mrf.mxu0
      %v1731 = vadd.f32 0.0, %v1730
      %v1732 = vpop.f32.mrf.mxu0
      %v1733 = vadd.f32 0.0, %v1732
      %1734 = vmatmul.bf16.gmra.mxu0 %v1714
      %v1735 = vpop.f32.mrf.mxu0
      %v1736 = vadd.f32 0.0, %v1735
      %v1737 = vpop.f32.mrf.mxu0
      %1738 = vdwg.mxu0
      %v1739 = vadd.f32 %v1529, %v1726
      %v1740 = vadd.f32 %v1530, %v1728
      %v1741 = vadd.f32 %v1531, %v1731
      %v1742 = vadd.f32 %v1532, %v1733
      %v1743 = vadd.f32 %v1533, %v1736
      %v1744 = vadd.f32 %v496, %v1739
      %v1745 = vadd.f32 %v497, %v1740
      %v1746 = vadd.f32 %v498, %v1741
      %v1747 = vadd.f32 %v499, %v1742
      %v1748 = vadd.f32 %v500, %v1743
      %v1749 = vld [vmem:[%s6] sm:$0x1]
      %v1751 = vperm.slane %v1749, 0
      %v1753 = vadd.f32 %v1744, %v1751
      %v1754 = vadd.f32 %v1745, %v1751
      %v1755 = vadd.f32 %v1746, %v1751
      %v1756 = vadd.f32 %v1747, %v1751
      %v1757 = vadd.f32 %v1748, %v1751
      %v1758 = vld [vmem:[%s7] sm:$0x1]
      %v1759 = vld [vmem:[%s8] sm:$0x1]
      %1760 = vadd.xlane.f32.xlu0 %v1753
      %v1761 = vpop.xlane.xlu0 %1760
      %1762 = vadd.xlane.f32.xlu0 %v1754
      %v1763 = vpop.xlane.xlu0 %1762
      %1764 = vadd.xlane.f32.xlu0 %v1755
      %v1765 = vpop.xlane.xlu0 %1764
      %1766 = vadd.xlane.f32.xlu0 %v1756
      %v1767 = vpop.xlane.xlu0 %1766
      %1768 = vadd.xlane.f32.xlu0 %v1757
      %v1769 = vpop.xlane.xlu0 %1768
      %v1770 = vmul.f32 %v1761, %v519
      %v1771 = vmul.f32 %v1763, %v519
      %v1772 = vmul.f32 %v1765, %v519
      %v1773 = vmul.f32 %v1767, %v519
      %v1774 = vmul.f32 %v1769, %v519
      %v1775 = vsub.f32 %v1753, %v1770
      %v1776 = vsub.f32 %v1754, %v1771
      %v1777 = vsub.f32 %v1755, %v1772
      %v1778 = vsub.f32 %v1756, %v1773
      %v1779 = vsub.f32 %v1757, %v1774
      %v1780 = vmul.f32 %v1775, %v1775
      %v1781 = vmul.f32 %v1776, %v1776
      %v1782 = vmul.f32 %v1777, %v1777
      %v1783 = vmul.f32 %v1778, %v1778
      %v1784 = vmul.f32 %v1779, %v1779
      %1785 = vadd.xlane.f32.xlu0 %v1780
      %v1786 = vpop.xlane.xlu0 %1785
      %1787 = vadd.xlane.f32.xlu0 %v1781
      %v1788 = vpop.xlane.xlu0 %1787
      %1789 = vadd.xlane.f32.xlu0 %v1782
      %v1790 = vpop.xlane.xlu0 %1789
      %1791 = vadd.xlane.f32.xlu0 %v1783
      %v1792 = vpop.xlane.xlu0 %1791
      %1793 = vadd.xlane.f32.xlu0 %v1784
      %v1794 = vpop.xlane.xlu0 %1793
      %v1795 = vmul.f32 %v1786, %v519
      %v1796 = vmul.f32 %v1788, %v519
      %v1797 = vmul.f32 %v1790, %v519
      %v1798 = vmul.f32 %v1792, %v519
      %v1799 = vmul.f32 %v1794, %v519
      %v1800 = vadd.f32 %v1795, 1e-06
      %v1801 = vadd.f32 %v1796, 1e-06
      %v1802 = vadd.f32 %v1797, 1e-06
      %v1803 = vadd.f32 %v1798, 1e-06
      %v1804 = vadd.f32 %v1799, 1e-06
      %v1805 = vrsqrt.pop %v1800
      %v1806 = vmul.f32 %v1805, %v1800
      %v1807 = vmul.f32 %v1806, %v1805
      %v1808 = vmul.f32 0.5, %v1807
      %v1809 = vsub.f32 1.5, %v1808
      %v1810 = vmul.f32 %v1805, %v1809
      %vm1811 = vweird.f32 %v1800
      %vm1812 = vweird.f32 %v1805
      %vm1813 = vmor %vm1811, %vm1812
      %v1814 = vsel %vm1813, %v1805, %v1810
      %v1815 = vrsqrt.pop %v1801
      %v1816 = vmul.f32 %v1815, %v1801
      %v1817 = vmul.f32 %v1816, %v1815
      %v1818 = vmul.f32 0.5, %v1817
      %v1819 = vsub.f32 1.5, %v1818
      %v1820 = vmul.f32 %v1815, %v1819
      %vm1821 = vweird.f32 %v1801
      %vm1822 = vweird.f32 %v1815
      %vm1823 = vmor %vm1821, %vm1822
      %v1824 = vsel %vm1823, %v1815, %v1820
      %v1825 = vrsqrt.pop %v1802
      %v1826 = vmul.f32 %v1825, %v1802
      %v1827 = vmul.f32 %v1826, %v1825
      %v1828 = vmul.f32 0.5, %v1827
      %v1829 = vsub.f32 1.5, %v1828
      %v1830 = vmul.f32 %v1825, %v1829
      %vm1831 = vweird.f32 %v1802
      %vm1832 = vweird.f32 %v1825
      %vm1833 = vmor %vm1831, %vm1832
      %v1834 = vsel %vm1833, %v1825, %v1830
      %v1835 = vrsqrt.pop %v1803
      %v1836 = vmul.f32 %v1835, %v1803
      %v1837 = vmul.f32 %v1836, %v1835
      %v1838 = vmul.f32 0.5, %v1837
      %v1839 = vsub.f32 1.5, %v1838
      %v1840 = vmul.f32 %v1835, %v1839
      %vm1841 = vweird.f32 %v1803
      %vm1842 = vweird.f32 %v1835
      %vm1843 = vmor %vm1841, %vm1842
      %v1844 = vsel %vm1843, %v1835, %v1840
      %v1845 = vrsqrt.pop %v1804
      %v1846 = vmul.f32 %v1845, %v1804
      %v1847 = vmul.f32 %v1846, %v1845
      %v1848 = vmul.f32 0.5, %v1847
      %v1849 = vsub.f32 1.5, %v1848
      %v1850 = vmul.f32 %v1845, %v1849
      %vm1851 = vweird.f32 %v1804
      %vm1852 = vweird.f32 %v1845
      %vm1853 = vmor %vm1851, %vm1852
      %v1854 = vsel %vm1853, %v1845, %v1850
      %v1855 = vmul.f32 %v1775, %v1814
      %v1856 = vmul.f32 %v1776, %v1824
      %v1857 = vmul.f32 %v1777, %v1834
      %v1858 = vmul.f32 %v1778, %v1844
      %v1859 = vmul.f32 %v1779, %v1854
      %v1861 = vperm.slane %v1758, 0
      %v1863 = vmul.f32 %v1855, %v1861
      %v1864 = vmul.f32 %v1856, %v1861
      %v1865 = vmul.f32 %v1857, %v1861
      %v1866 = vmul.f32 %v1858, %v1861
      %v1867 = vmul.f32 %v1859, %v1861
      %v1869 = vperm.slane %v1759, 0
      %v1871 = vadd.f32 %v1863, %v1869
      %v1872 = vadd.f32 %v1864, %v1869
      %v1873 = vadd.f32 %v1865, %v1869
      %v1874 = vadd.f32 %v1866, %v1869
      %v1875 = vadd.f32 %v1867, %v1869
      %v1876 = vpack.c.bf16 %v1872, %v1871
      %v1877 = vpack.c.bf16 %v1874, %v1873
      %v1878 = vpack.c.bf16 %v1875, %v1875
      %v1879 = vld [vmem:[%s9] sm:$0xff]
      %v1880 = vld [vmem:[%s9 + $0x8] sm:$0xff]
      %v1881 = vld [vmem:[%s9 + $0x10] sm:$0xff]
      %v1882 = vld [vmem:[%s9 + $0x18] sm:$0xff]
      %v1883 = vld [vmem:[%s9 + $0x20] sm:$0xff]
      %v1884 = vld [vmem:[%s9 + $0x28] sm:$0xff]
      %v1885 = vld [vmem:[%s9 + $0x30] sm:$0xff]
      %v1886 = vld [vmem:[%s9 + $0x38] sm:$0xff]
      %v1887 = vld [vmem:[%s9 + $0x40] sm:$0xff]
      %v1888 = vld [vmem:[%s9 + $0x48] sm:$0xff]
      %v1889 = vld [vmem:[%s9 + $0x50] sm:$0xff]
      %v1890 = vld [vmem:[%s9 + $0x58] sm:$0xff]
      %v1891 = vld [vmem:[%s9 + $0x60] sm:$0xff]
      %v1892 = vld [vmem:[%s9 + $0x68] sm:$0xff]
      %v1893 = vld [vmem:[%s9 + $0x70] sm:$0xff]
      %v1894 = vld [vmem:[%s9 + $0x78] sm:$0xff]
      %v1895 = vld [vmem:[%s9 + $0x80] sm:$0xff]
      %v1896 = vld [vmem:[%s9 + $0x88] sm:$0xff]
      %v1897 = vld [vmem:[%s9 + $0x90] sm:$0xff]
      %v1898 = vld [vmem:[%s9 + $0x98] sm:$0xff]
      %v1899 = vld [vmem:[%s9 + $0xa0] sm:$0xff]
      %v1900 = vld [vmem:[%s9 + $0xa8] sm:$0xff]
      %v1901 = vld [vmem:[%s9 + $0xb0] sm:$0xff]
      %v1902 = vld [vmem:[%s9 + $0xb8] sm:$0xff]
      %v1903 = vld [vmem:[%s9 + $0xc0] sm:$0xff]
      %v1904 = vld [vmem:[%s9 + $0xc8] sm:$0xff]
      %v1905 = vld [vmem:[%s9 + $0xd0] sm:$0xff]
      %v1906 = vld [vmem:[%s9 + $0xd8] sm:$0xff]
      %v1907 = vld [vmem:[%s9 + $0xe0] sm:$0xff]
      %v1908 = vld [vmem:[%s9 + $0xe8] sm:$0xff]
      %v1909 = vld [vmem:[%s9 + $0xf0] sm:$0xff]
      %v1910 = vld [vmem:[%s9 + $0xf8] sm:$0xff]
      %v1911 = vld [vmem:[%s10] sm:$0xf]
      %v1913 = vperm.slane %v1911, 0
      %v1914 = vperm.slane %v1911, 1
      %v1915 = vperm.slane %v1911, 2
      %v1916 = vperm.slane %v1911, 3
      %v1953 = vunpack.c.l.b16 %v1879
      %v1954 = vunpack.c.h.b16 %v1879
      %v1955 = vunpack.c.l.b16 %v1880
      %v1956 = vunpack.c.h.b16 %v1880
      %v1957 = vunpack.c.l.b16 %v1881
      %v1958 = vunpack.c.h.b16 %v1881
      %v1959 = vunpack.c.l.b16 %v1882
      %v1960 = vunpack.c.h.b16 %v1882
      %v1961 = vunpack.c.l.b16 %v1883
      %v1962 = vunpack.c.h.b16 %v1883
      %v1963 = vunpack.c.l.b16 %v1884
      %v1964 = vunpack.c.h.b16 %v1884
      %v1965 = vunpack.c.l.b16 %v1885
      %v1966 = vunpack.c.h.b16 %v1885
      %v1967 = vunpack.c.l.b16 %v1886
      %v1968 = vunpack.c.h.b16 %v1886
      %v1969 = vunpack.c.l.b16 %v1887
      %v1970 = vunpack.c.h.b16 %v1887
      %v1971 = vunpack.c.l.b16 %v1888
      %v1972 = vunpack.c.h.b16 %v1888
      %v1973 = vunpack.c.l.b16 %v1889
      %v1974 = vunpack.c.h.b16 %v1889
      %v1975 = vunpack.c.l.b16 %v1890
      %v1976 = vunpack.c.h.b16 %v1890
      %v1977 = vunpack.c.l.b16 %v1891
      %v1978 = vunpack.c.h.b16 %v1891
      %v1979 = vunpack.c.l.b16 %v1892
      %v1980 = vunpack.c.h.b16 %v1892
      %v1981 = vunpack.c.l.b16 %v1893
      %v1982 = vunpack.c.h.b16 %v1893
      %v1983 = vunpack.c.l.b16 %v1894
      %v1984 = vunpack.c.h.b16 %v1894
      %v1985 = vunpack.c.l.b16 %v1895
      %v1986 = vunpack.c.h.b16 %v1895
      %v1987 = vunpack.c.l.b16 %v1896
      %v1988 = vunpack.c.h.b16 %v1896
      %v1989 = vunpack.c.l.b16 %v1897
      %v1990 = vunpack.c.h.b16 %v1897
      %v1991 = vunpack.c.l.b16 %v1898
      %v1992 = vunpack.c.h.b16 %v1898
      %v1993 = vunpack.c.l.b16 %v1899
      %v1994 = vunpack.c.h.b16 %v1899
      %v1995 = vunpack.c.l.b16 %v1900
      %v1996 = vunpack.c.h.b16 %v1900
      %v1997 = vunpack.c.l.b16 %v1901
      %v1998 = vunpack.c.h.b16 %v1901
      %v1999 = vunpack.c.l.b16 %v1902
      %v2000 = vunpack.c.h.b16 %v1902
      %v2001 = vunpack.c.l.b16 %v1903
      %v2002 = vunpack.c.h.b16 %v1903
      %v2003 = vunpack.c.l.b16 %v1904
      %v2004 = vunpack.c.h.b16 %v1904
      %v2005 = vunpack.c.l.b16 %v1905
      %v2006 = vunpack.c.h.b16 %v1905
      %v2007 = vunpack.c.l.b16 %v1906
      %v2008 = vunpack.c.h.b16 %v1906
      %v2009 = vunpack.c.l.b16 %v1907
      %v2010 = vunpack.c.h.b16 %v1907
      %v2011 = vunpack.c.l.b16 %v1908
      %v2012 = vunpack.c.h.b16 %v1908
      %v2013 = vunpack.c.l.b16 %v1909
      %v2014 = vunpack.c.h.b16 %v1909
      %v2015 = vunpack.c.l.b16 %v1910
      %v2016 = vunpack.c.h.b16 %v1910
      %v2017 = vpack.c.b16 %v1957, %v1953
      %v2018 = vpack.c.b16 %v1958, %v1954
      %v2019 = vpack.c.b16 %v1959, %v1955
      %v2020 = vpack.c.b16 %v1960, %v1956
      %v2021 = vpack.c.b16 %v1965, %v1961
      %v2022 = vpack.c.b16 %v1966, %v1962
      %v2023 = vpack.c.b16 %v1967, %v1963
      %v2024 = vpack.c.b16 %v1968, %v1964
      %v2025 = vpack.c.b16 %v1973, %v1969
      %v2026 = vpack.c.b16 %v1974, %v1970
      %v2027 = vpack.c.b16 %v1975, %v1971
      %v2028 = vpack.c.b16 %v1976, %v1972
      %v2029 = vpack.c.b16 %v1981, %v1977
      %v2030 = vpack.c.b16 %v1982, %v1978
      %v2031 = vpack.c.b16 %v1983, %v1979
      %v2032 = vpack.c.b16 %v1984, %v1980
      %v2033 = vpack.c.b16 %v1989, %v1985
      %v2034 = vpack.c.b16 %v1990, %v1986
      %v2035 = vpack.c.b16 %v1991, %v1987
      %v2036 = vpack.c.b16 %v1992, %v1988
      %v2037 = vpack.c.b16 %v1997, %v1993
      %v2038 = vpack.c.b16 %v1998, %v1994
      %v2039 = vpack.c.b16 %v1999, %v1995
      %v2040 = vpack.c.b16 %v2000, %v1996
      %v2041 = vpack.c.b16 %v2005, %v2001
      %v2042 = vpack.c.b16 %v2006, %v2002
      %v2043 = vpack.c.b16 %v2007, %v2003
      %v2044 = vpack.c.b16 %v2008, %v2004
      %v2045 = vpack.c.b16 %v2013, %v2009
      %v2046 = vpack.c.b16 %v2014, %v2010
      %v2047 = vpack.c.b16 %v2015, %v2011
      %v2048 = vpack.c.b16 %v2016, %v2012
      %2081 = vmatpush.bf16.msra.mxu0 %v2045
      %2082 = vmatpush.bf16.msra.mxu0 %v2041
      %2083 = vmatpush.bf16.msra.mxu0 %v2037
      %2084 = vmatpush.bf16.msra.mxu0 %v2033
      %2085 = vmatpush.bf16.msra.mxu0 %v2029
      %2086 = vmatpush.bf16.msra.mxu0 %v2025
      %2087 = vmatpush.bf16.msra.mxu0 %v2021
      %2088 = vmatpush.bf16.msra.mxu0 %v2017
      %2089 = vmatmul.bf16.gmra.mxu0 %v1876
      %v2090 = vpop.f32.mrf.mxu0
      %v2091 = vadd.f32 %v1913, %v2090
      %v2092 = vpop.f32.mrf.mxu0
      %v2093 = vadd.f32 %v1913, %v2092
      %2094 = vmatmul.bf16.gmra.mxu0 %v1877
      %v2095 = vpop.f32.mrf.mxu0
      %v2096 = vadd.f32 %v1913, %v2095
      %v2097 = vpop.f32.mrf.mxu0
      %v2098 = vadd.f32 %v1913, %v2097
      %2099 = vmatmul.bf16.gmra.mxu0 %v1878
      %v2100 = vpop.f32.mrf.mxu0
      %v2101 = vadd.f32 %v1913, %v2100
      %v2102 = vpop.f32.mrf.mxu0
      %2103 = vdwg.mxu0
      %2104 = vmatpush.bf16.msra.mxu0 %v2046
      %2105 = vmatpush.bf16.msra.mxu0 %v2042
      %2106 = vmatpush.bf16.msra.mxu0 %v2038
      %2107 = vmatpush.bf16.msra.mxu0 %v2034
      %2108 = vmatpush.bf16.msra.mxu0 %v2030
      %2109 = vmatpush.bf16.msra.mxu0 %v2026
      %2110 = vmatpush.bf16.msra.mxu0 %v2022
      %2111 = vmatpush.bf16.msra.mxu0 %v2018
      %2112 = vmatmul.bf16.gmra.mxu0 %v1876
      %v2113 = vpop.f32.mrf.mxu0
      %v2114 = vadd.f32 %v1914, %v2113
      %v2115 = vpop.f32.mrf.mxu0
      %v2116 = vadd.f32 %v1914, %v2115
      %2117 = vmatmul.bf16.gmra.mxu0 %v1877
      %v2118 = vpop.f32.mrf.mxu0
      %v2119 = vadd.f32 %v1914, %v2118
      %v2120 = vpop.f32.mrf.mxu0
      %v2121 = vadd.f32 %v1914, %v2120
      %2122 = vmatmul.bf16.gmra.mxu0 %v1878
      %v2123 = vpop.f32.mrf.mxu0
      %v2124 = vadd.f32 %v1914, %v2123
      %v2125 = vpop.f32.mrf.mxu0
      %2126 = vdwg.mxu0
      %2127 = vmatpush.bf16.msra.mxu0 %v2047
      %2128 = vmatpush.bf16.msra.mxu0 %v2043
      %2129 = vmatpush.bf16.msra.mxu0 %v2039
      %2130 = vmatpush.bf16.msra.mxu0 %v2035
      %2131 = vmatpush.bf16.msra.mxu0 %v2031
      %2132 = vmatpush.bf16.msra.mxu0 %v2027
      %2133 = vmatpush.bf16.msra.mxu0 %v2023
      %2134 = vmatpush.bf16.msra.mxu0 %v2019
      %2135 = vmatmul.bf16.gmra.mxu0 %v1876
      %v2136 = vpop.f32.mrf.mxu0
      %v2137 = vadd.f32 %v1915, %v2136
      %v2138 = vpop.f32.mrf.mxu0
      %v2139 = vadd.f32 %v1915, %v2138
      %2140 = vmatmul.bf16.gmra.mxu0 %v1877
      %v2141 = vpop.f32.mrf.mxu0
      %v2142 = vadd.f32 %v1915, %v2141
      %v2143 = vpop.f32.mrf.mxu0
      %v2144 = vadd.f32 %v1915, %v2143
      %2145 = vmatmul.bf16.gmra.mxu0 %v1878
      %v2146 = vpop.f32.mrf.mxu0
      %v2147 = vadd.f32 %v1915, %v2146
      %v2148 = vpop.f32.mrf.mxu0
      %2149 = vdwg.mxu0
      %2150 = vmatpush.bf16.msra.mxu0 %v2048
      %2151 = vmatpush.bf16.msra.mxu0 %v2044
      %2152 = vmatpush.bf16.msra.mxu0 %v2040
      %2153 = vmatpush.bf16.msra.mxu0 %v2036
      %2154 = vmatpush.bf16.msra.mxu0 %v2032
      %2155 = vmatpush.bf16.msra.mxu0 %v2028
      %2156 = vmatpush.bf16.msra.mxu0 %v2024
      %2157 = vmatpush.bf16.msra.mxu0 %v2020
      %2158 = vmatmul.bf16.gmra.mxu0 %v1876
      %v2159 = vpop.f32.mrf.mxu0
      %v2160 = vadd.f32 %v1916, %v2159
      %v2161 = vpop.f32.mrf.mxu0
      %v2162 = vadd.f32 %v1916, %v2161
      %2163 = vmatmul.bf16.gmra.mxu0 %v1877
      %v2164 = vpop.f32.mrf.mxu0
      %v2165 = vadd.f32 %v1916, %v2164
      %v2166 = vpop.f32.mrf.mxu0
      %v2167 = vadd.f32 %v1916, %v2166
      %2168 = vmatmul.bf16.gmra.mxu0 %v1878
      %v2169 = vpop.f32.mrf.mxu0
      %v2170 = vadd.f32 %v1916, %v2169
      %v2171 = vpop.f32.mrf.mxu0
      %2172 = vdwg.mxu0
      %v2173 = vmul.f32 %v2091, 0.5
      %v2174 = vmul.f32 %v2114, 0.5
      %v2175 = vmul.f32 %v2137, 0.5
      %v2176 = vmul.f32 %v2160, 0.5
      %v2177 = vmul.f32 %v2093, 0.5
      %v2178 = vmul.f32 %v2116, 0.5
      %v2179 = vmul.f32 %v2139, 0.5
      %v2180 = vmul.f32 %v2162, 0.5
      %v2181 = vmul.f32 %v2096, 0.5
      %v2182 = vmul.f32 %v2119, 0.5
      %v2183 = vmul.f32 %v2142, 0.5
      %v2184 = vmul.f32 %v2165, 0.5
      %v2185 = vmul.f32 %v2098, 0.5
      %v2186 = vmul.f32 %v2121, 0.5
      %v2187 = vmul.f32 %v2144, 0.5
      %v2188 = vmul.f32 %v2167, 0.5
      %v2189 = vmul.f32 %v2101, 0.5
      %v2190 = vmul.f32 %v2124, 0.5
      %v2191 = vmul.f32 %v2147, 0.5
      %v2192 = vmul.f32 %v2170, 0.5
      %v2193 = vmul.f32 %v2091, 0.70710677
      %v2194 = vmul.f32 %v2114, 0.70710677
      %v2195 = vmul.f32 %v2137, 0.70710677
      %v2196 = vmul.f32 %v2160, 0.70710677
      %v2197 = vmul.f32 %v2093, 0.70710677
      %v2198 = vmul.f32 %v2116, 0.70710677
      %v2199 = vmul.f32 %v2139, 0.70710677
      %v2200 = vmul.f32 %v2162, 0.70710677
      %v2201 = vmul.f32 %v2096, 0.70710677
      %v2202 = vmul.f32 %v2119, 0.70710677
      %v2203 = vmul.f32 %v2142, 0.70710677
      %v2204 = vmul.f32 %v2165, 0.70710677
      %v2205 = vmul.f32 %v2098, 0.70710677
      %v2206 = vmul.f32 %v2121, 0.70710677
      %v2207 = vmul.f32 %v2144, 0.70710677
      %v2208 = vmul.f32 %v2167, 0.70710677
      %v2209 = vmul.f32 %v2101, 0.70710677
      %v2210 = vmul.f32 %v2124, 0.70710677
      %v2211 = vmul.f32 %v2147, 0.70710677
      %v2212 = vmul.f32 %v2170, 0.70710677
      %v2213 = vmul.f32 %v2193, %v2193
      %v2214 = vmin.f32 16.0, %v2213
      %v2215 = vmul.f32 %v2214, 2.1237322e-06
      %v2216 = vadd.f32 %v2215, 0.00028619796
      %v2217 = vmul.f32 %v2214, %v2216
      %v2218 = vadd.f32 %v2217, 0.0036580483
      %v2219 = vmul.f32 %v2214, %v2218
      %v2220 = vadd.f32 %v2219, 0.05243302
      %v2221 = vmul.f32 %v2214, %v2220
      %v2222 = vadd.f32 %v2221, 0.18741608
      %v2223 = vmul.f32 %v2214, %v2222
      %v2224 = vadd.f32 %v2223, 1.1283791
      %v2225 = vmul.f32 %v2193, %v2224
      %v2226 = vmul.f32 %v2214, 3.8918573e-05
      %v2227 = vadd.f32 %v2226, 0.001143296
      %v2228 = vmul.f32 %v2214, %v2227
      %v2229 = vadd.f32 %v2228, 0.014752088
      %v2230 = vmul.f32 %v2214, %v2229
      %v2231 = vadd.f32 %v2230, 0.112945676
      %v2232 = vmul.f32 %v2214, %v2231
      %v2233 = vadd.f32 %v2232, 0.4994258
      %v2234 = vmul.f32 %v2214, %v2233
      %v2235 = vadd.f32 %v2234, 1.0
      %v2236 = vrcp.pop %v2235
      %v2237 = vmul.f32 %v2235, %v2236
      %v2238 = vsub.f32 1.0, %v2237
      %v2239 = vmul.f32 %v2236, %v2238
      %v2240 = vadd.f32 %v2236, %v2239
      %vm2241 = vweird.f32 %v2235
      %vm2242 = vweird.f32 %v2236
      %vm2243 = vmor %vm2241, %vm2242
      %v2244 = vsel %vm2243, %v2236, %v2240
      %v2245 = vand.u32 2147483647, %v2235
      %vm2246 = vcmp.eq.f32.partialorder %v2245, 8.507059e+37
      %v2247 = vand.u32 %v2235, 2147483648
      %v2248 = vor.u32 1.1754944e-38, %v2247
      %v2249 = vsel %vm2246, %v2248, %v2244
      %v2250 = vmul.f32 %v2225, %v2249
      %v2251 = vmin.f32 %v2250, 1.0
      %v2252 = vmax.f32 %v2251, -1.0
      %v2253 = vmul.f32 %v2194, %v2194
      %v2254 = vmin.f32 16.0, %v2253
      %v2255 = vmul.f32 %v2254, 2.1237322e-06
      %v2256 = vadd.f32 %v2255, 0.00028619796
      %v2257 = vmul.f32 %v2254, %v2256
      %v2258 = vadd.f32 %v2257, 0.0036580483
      %v2259 = vmul.f32 %v2254, %v2258
      %v2260 = vadd.f32 %v2259, 0.05243302
      %v2261 = vmul.f32 %v2254, %v2260
      %v2262 = vadd.f32 %v2261, 0.18741608
      %v2263 = vmul.f32 %v2254, %v2262
      %v2264 = vadd.f32 %v2263, 1.1283791
      %v2265 = vmul.f32 %v2194, %v2264
      %v2266 = vmul.f32 %v2254, 3.8918573e-05
      %v2267 = vadd.f32 %v2266, 0.001143296
      %v2268 = vmul.f32 %v2254, %v2267
      %v2269 = vadd.f32 %v2268, 0.014752088
      %v2270 = vmul.f32 %v2254, %v2269
      %v2271 = vadd.f32 %v2270, 0.112945676
      %v2272 = vmul.f32 %v2254, %v2271
      %v2273 = vadd.f32 %v2272, 0.4994258
      %v2274 = vmul.f32 %v2254, %v2273
      %v2275 = vadd.f32 %v2274, 1.0
      %v2276 = vrcp.pop %v2275
      %v2277 = vmul.f32 %v2275, %v2276
      %v2278 = vsub.f32 1.0, %v2277
      %v2279 = vmul.f32 %v2276, %v2278
      %v2280 = vadd.f32 %v2276, %v2279
      %vm2281 = vweird.f32 %v2275
      %vm2282 = vweird.f32 %v2276
      %vm2283 = vmor %vm2281, %vm2282
      %v2284 = vsel %vm2283, %v2276, %v2280
      %v2285 = vand.u32 2147483647, %v2275
      %vm2286 = vcmp.eq.f32.partialorder %v2285, 8.507059e+37
      %v2287 = vand.u32 %v2275, 2147483648
      %v2288 = vor.u32 1.1754944e-38, %v2287
      %v2289 = vsel %vm2286, %v2288, %v2284
      %v2290 = vmul.f32 %v2265, %v2289
      %v2291 = vmin.f32 %v2290, 1.0
      %v2292 = vmax.f32 %v2291, -1.0
      %v2293 = vmul.f32 %v2195, %v2195
      %v2294 = vmin.f32 16.0, %v2293
      %v2295 = vmul.f32 %v2294, 2.1237322e-06
      %v2296 = vadd.f32 %v2295, 0.00028619796
      %v2297 = vmul.f32 %v2294, %v2296
      %v2298 = vadd.f32 %v2297, 0.0036580483
      %v2299 = vmul.f32 %v2294, %v2298
      %v2300 = vadd.f32 %v2299, 0.05243302
      %v2301 = vmul.f32 %v2294, %v2300
      %v2302 = vadd.f32 %v2301, 0.18741608
      %v2303 = vmul.f32 %v2294, %v2302
      %v2304 = vadd.f32 %v2303, 1.1283791
      %v2305 = vmul.f32 %v2195, %v2304
      %v2306 = vmul.f32 %v2294, 3.8918573e-05
      %v2307 = vadd.f32 %v2306, 0.001143296
      %v2308 = vmul.f32 %v2294, %v2307
      %v2309 = vadd.f32 %v2308, 0.014752088
      %v2310 = vmul.f32 %v2294, %v2309
      %v2311 = vadd.f32 %v2310, 0.112945676
      %v2312 = vmul.f32 %v2294, %v2311
      %v2313 = vadd.f32 %v2312, 0.4994258
      %v2314 = vmul.f32 %v2294, %v2313
      %v2315 = vadd.f32 %v2314, 1.0
      %v2316 = vrcp.pop %v2315
      %v2317 = vmul.f32 %v2315, %v2316
      %v2318 = vsub.f32 1.0, %v2317
      %v2319 = vmul.f32 %v2316, %v2318
      %v2320 = vadd.f32 %v2316, %v2319
      %vm2321 = vweird.f32 %v2315
      %vm2322 = vweird.f32 %v2316
      %vm2323 = vmor %vm2321, %vm2322
      %v2324 = vsel %vm2323, %v2316, %v2320
      %v2325 = vand.u32 2147483647, %v2315
      %vm2326 = vcmp.eq.f32.partialorder %v2325, 8.507059e+37
      %v2327 = vand.u32 %v2315, 2147483648
      %v2328 = vor.u32 1.1754944e-38, %v2327
      %v2329 = vsel %vm2326, %v2328, %v2324
      %v2330 = vmul.f32 %v2305, %v2329
      %v2331 = vmin.f32 %v2330, 1.0
      %v2332 = vmax.f32 %v2331, -1.0
      %v2333 = vmul.f32 %v2196, %v2196
      %v2334 = vmin.f32 16.0, %v2333
      %v2335 = vmul.f32 %v2334, 2.1237322e-06
      %v2336 = vadd.f32 %v2335, 0.00028619796
      %v2337 = vmul.f32 %v2334, %v2336
      %v2338 = vadd.f32 %v2337, 0.0036580483
      %v2339 = vmul.f32 %v2334, %v2338
      %v2340 = vadd.f32 %v2339, 0.05243302
      %v2341 = vmul.f32 %v2334, %v2340
      %v2342 = vadd.f32 %v2341, 0.18741608
      %v2343 = vmul.f32 %v2334, %v2342
      %v2344 = vadd.f32 %v2343, 1.1283791
      %v2345 = vmul.f32 %v2196, %v2344
      %v2346 = vmul.f32 %v2334, 3.8918573e-05
      %v2347 = vadd.f32 %v2346, 0.001143296
      %v2348 = vmul.f32 %v2334, %v2347
      %v2349 = vadd.f32 %v2348, 0.014752088
      %v2350 = vmul.f32 %v2334, %v2349
      %v2351 = vadd.f32 %v2350, 0.112945676
      %v2352 = vmul.f32 %v2334, %v2351
      %v2353 = vadd.f32 %v2352, 0.4994258
      %v2354 = vmul.f32 %v2334, %v2353
      %v2355 = vadd.f32 %v2354, 1.0
      %v2356 = vrcp.pop %v2355
      %v2357 = vmul.f32 %v2355, %v2356
      %v2358 = vsub.f32 1.0, %v2357
      %v2359 = vmul.f32 %v2356, %v2358
      %v2360 = vadd.f32 %v2356, %v2359
      %vm2361 = vweird.f32 %v2355
      %vm2362 = vweird.f32 %v2356
      %vm2363 = vmor %vm2361, %vm2362
      %v2364 = vsel %vm2363, %v2356, %v2360
      %v2365 = vand.u32 2147483647, %v2355
      %vm2366 = vcmp.eq.f32.partialorder %v2365, 8.507059e+37
      %v2367 = vand.u32 %v2355, 2147483648
      %v2368 = vor.u32 1.1754944e-38, %v2367
      %v2369 = vsel %vm2366, %v2368, %v2364
      %v2370 = vmul.f32 %v2345, %v2369
      %v2371 = vmin.f32 %v2370, 1.0
      %v2372 = vmax.f32 %v2371, -1.0
      %v2373 = vmul.f32 %v2197, %v2197
      %v2374 = vmin.f32 16.0, %v2373
      %v2375 = vmul.f32 %v2374, 2.1237322e-06
      %v2376 = vadd.f32 %v2375, 0.00028619796
      %v2377 = vmul.f32 %v2374, %v2376
      %v2378 = vadd.f32 %v2377, 0.0036580483
      %v2379 = vmul.f32 %v2374, %v2378
      %v2380 = vadd.f32 %v2379, 0.05243302
      %v2381 = vmul.f32 %v2374, %v2380
      %v2382 = vadd.f32 %v2381, 0.18741608
      %v2383 = vmul.f32 %v2374, %v2382
      %v2384 = vadd.f32 %v2383, 1.1283791
      %v2385 = vmul.f32 %v2197, %v2384
      %v2386 = vmul.f32 %v2374, 3.8918573e-05
      %v2387 = vadd.f32 %v2386, 0.001143296
      %v2388 = vmul.f32 %v2374, %v2387
      %v2389 = vadd.f32 %v2388, 0.014752088
      %v2390 = vmul.f32 %v2374, %v2389
      %v2391 = vadd.f32 %v2390, 0.112945676
      %v2392 = vmul.f32 %v2374, %v2391
      %v2393 = vadd.f32 %v2392, 0.4994258
      %v2394 = vmul.f32 %v2374, %v2393
      %v2395 = vadd.f32 %v2394, 1.0
      %v2396 = vrcp.pop %v2395
      %v2397 = vmul.f32 %v2395, %v2396
      %v2398 = vsub.f32 1.0, %v2397
      %v2399 = vmul.f32 %v2396, %v2398
      %v2400 = vadd.f32 %v2396, %v2399
      %vm2401 = vweird.f32 %v2395
      %vm2402 = vweird.f32 %v2396
      %vm2403 = vmor %vm2401, %vm2402
      %v2404 = vsel %vm2403, %v2396, %v2400
      %v2405 = vand.u32 2147483647, %v2395
      %vm2406 = vcmp.eq.f32.partialorder %v2405, 8.507059e+37
      %v2407 = vand.u32 %v2395, 2147483648
      %v2408 = vor.u32 1.1754944e-38, %v2407
      %v2409 = vsel %vm2406, %v2408, %v2404
      %v2410 = vmul.f32 %v2385, %v2409
      %v2411 = vmin.f32 %v2410, 1.0
      %v2412 = vmax.f32 %v2411, -1.0
      %v2413 = vmul.f32 %v2198, %v2198
      %v2414 = vmin.f32 16.0, %v2413
      %v2415 = vmul.f32 %v2414, 2.1237322e-06
      %v2416 = vadd.f32 %v2415, 0.00028619796
      %v2417 = vmul.f32 %v2414, %v2416
      %v2418 = vadd.f32 %v2417, 0.0036580483
      %v2419 = vmul.f32 %v2414, %v2418
      %v2420 = vadd.f32 %v2419, 0.05243302
      %v2421 = vmul.f32 %v2414, %v2420
      %v2422 = vadd.f32 %v2421, 0.18741608
      %v2423 = vmul.f32 %v2414, %v2422
      %v2424 = vadd.f32 %v2423, 1.1283791
      %v2425 = vmul.f32 %v2198, %v2424
      %v2426 = vmul.f32 %v2414, 3.8918573e-05
      %v2427 = vadd.f32 %v2426, 0.001143296
      %v2428 = vmul.f32 %v2414, %v2427
      %v2429 = vadd.f32 %v2428, 0.014752088
      %v2430 = vmul.f32 %v2414, %v2429
      %v2431 = vadd.f32 %v2430, 0.112945676
      %v2432 = vmul.f32 %v2414, %v2431
      %v2433 = vadd.f32 %v2432, 0.4994258
      %v2434 = vmul.f32 %v2414, %v2433
      %v2435 = vadd.f32 %v2434, 1.0
      %v2436 = vrcp.pop %v2435
      %v2437 = vmul.f32 %v2435, %v2436
      %v2438 = vsub.f32 1.0, %v2437
      %v2439 = vmul.f32 %v2436, %v2438
      %v2440 = vadd.f32 %v2436, %v2439
      %vm2441 = vweird.f32 %v2435
      %vm2442 = vweird.f32 %v2436
      %vm2443 = vmor %vm2441, %vm2442
      %v2444 = vsel %vm2443, %v2436, %v2440
      %v2445 = vand.u32 2147483647, %v2435
      %vm2446 = vcmp.eq.f32.partialorder %v2445, 8.507059e+37
      %v2447 = vand.u32 %v2435, 2147483648
      %v2448 = vor.u32 1.1754944e-38, %v2447
      %v2449 = vsel %vm2446, %v2448, %v2444
      %v2450 = vmul.f32 %v2425, %v2449
      %v2451 = vmin.f32 %v2450, 1.0
      %v2452 = vmax.f32 %v2451, -1.0
      %v2453 = vmul.f32 %v2199, %v2199
      %v2454 = vmin.f32 16.0, %v2453
      %v2455 = vmul.f32 %v2454, 2.1237322e-06
      %v2456 = vadd.f32 %v2455, 0.00028619796
      %v2457 = vmul.f32 %v2454, %v2456
      %v2458 = vadd.f32 %v2457, 0.0036580483
      %v2459 = vmul.f32 %v2454, %v2458
      %v2460 = vadd.f32 %v2459, 0.05243302
      %v2461 = vmul.f32 %v2454, %v2460
      %v2462 = vadd.f32 %v2461, 0.18741608
      %v2463 = vmul.f32 %v2454, %v2462
      %v2464 = vadd.f32 %v2463, 1.1283791
      %v2465 = vmul.f32 %v2199, %v2464
      %v2466 = vmul.f32 %v2454, 3.8918573e-05
      %v2467 = vadd.f32 %v2466, 0.001143296
      %v2468 = vmul.f32 %v2454, %v2467
      %v2469 = vadd.f32 %v2468, 0.014752088
      %v2470 = vmul.f32 %v2454, %v2469
      %v2471 = vadd.f32 %v2470, 0.112945676
      %v2472 = vmul.f32 %v2454, %v2471
      %v2473 = vadd.f32 %v2472, 0.4994258
      %v2474 = vmul.f32 %v2454, %v2473
      %v2475 = vadd.f32 %v2474, 1.0
      %v2476 = vrcp.pop %v2475
      %v2477 = vmul.f32 %v2475, %v2476
      %v2478 = vsub.f32 1.0, %v2477
      %v2479 = vmul.f32 %v2476, %v2478
      %v2480 = vadd.f32 %v2476, %v2479
      %vm2481 = vweird.f32 %v2475
      %vm2482 = vweird.f32 %v2476
      %vm2483 = vmor %vm2481, %vm2482
      %v2484 = vsel %vm2483, %v2476, %v2480
      %v2485 = vand.u32 2147483647, %v2475
      %vm2486 = vcmp.eq.f32.partialorder %v2485, 8.507059e+37
      %v2487 = vand.u32 %v2475, 2147483648
      %v2488 = vor.u32 1.1754944e-38, %v2487
      %v2489 = vsel %vm2486, %v2488, %v2484
      %v2490 = vmul.f32 %v2465, %v2489
      %v2491 = vmin.f32 %v2490, 1.0
      %v2492 = vmax.f32 %v2491, -1.0
      %v2493 = vmul.f32 %v2200, %v2200
      %v2494 = vmin.f32 16.0, %v2493
      %v2495 = vmul.f32 %v2494, 2.1237322e-06
      %v2496 = vadd.f32 %v2495, 0.00028619796
      %v2497 = vmul.f32 %v2494, %v2496
      %v2498 = vadd.f32 %v2497, 0.0036580483
      %v2499 = vmul.f32 %v2494, %v2498
      %v2500 = vadd.f32 %v2499, 0.05243302
      %v2501 = vmul.f32 %v2494, %v2500
      %v2502 = vadd.f32 %v2501, 0.18741608
      %v2503 = vmul.f32 %v2494, %v2502
      %v2504 = vadd.f32 %v2503, 1.1283791
      %v2505 = vmul.f32 %v2200, %v2504
      %v2506 = vmul.f32 %v2494, 3.8918573e-05
      %v2507 = vadd.f32 %v2506, 0.001143296
      %v2508 = vmul.f32 %v2494, %v2507
      %v2509 = vadd.f32 %v2508, 0.014752088
      %v2510 = vmul.f32 %v2494, %v2509
      %v2511 = vadd.f32 %v2510, 0.112945676
      %v2512 = vmul.f32 %v2494, %v2511
      %v2513 = vadd.f32 %v2512, 0.4994258
      %v2514 = vmul.f32 %v2494, %v2513
      %v2515 = vadd.f32 %v2514, 1.0
      %v2516 = vrcp.pop %v2515
      %v2517 = vmul.f32 %v2515, %v2516
      %v2518 = vsub.f32 1.0, %v2517
      %v2519 = vmul.f32 %v2516, %v2518
      %v2520 = vadd.f32 %v2516, %v2519
      %vm2521 = vweird.f32 %v2515
      %vm2522 = vweird.f32 %v2516
      %vm2523 = vmor %vm2521, %vm2522
      %v2524 = vsel %vm2523, %v2516, %v2520
      %v2525 = vand.u32 2147483647, %v2515
      %vm2526 = vcmp.eq.f32.partialorder %v2525, 8.507059e+37
      %v2527 = vand.u32 %v2515, 2147483648
      %v2528 = vor.u32 1.1754944e-38, %v2527
      %v2529 = vsel %vm2526, %v2528, %v2524
      %v2530 = vmul.f32 %v2505, %v2529
      %v2531 = vmin.f32 %v2530, 1.0
      %v2532 = vmax.f32 %v2531, -1.0
      %v2533 = vmul.f32 %v2201, %v2201
      %v2534 = vmin.f32 16.0, %v2533
      %v2535 = vmul.f32 %v2534, 2.1237322e-06
      %v2536 = vadd.f32 %v2535, 0.00028619796
      %v2537 = vmul.f32 %v2534, %v2536
      %v2538 = vadd.f32 %v2537, 0.0036580483
      %v2539 = vmul.f32 %v2534, %v2538
      %v2540 = vadd.f32 %v2539, 0.05243302
      %v2541 = vmul.f32 %v2534, %v2540
      %v2542 = vadd.f32 %v2541, 0.18741608
      %v2543 = vmul.f32 %v2534, %v2542
      %v2544 = vadd.f32 %v2543, 1.1283791
      %v2545 = vmul.f32 %v2201, %v2544
      %v2546 = vmul.f32 %v2534, 3.8918573e-05
      %v2547 = vadd.f32 %v2546, 0.001143296
      %v2548 = vmul.f32 %v2534, %v2547
      %v2549 = vadd.f32 %v2548, 0.014752088
      %v2550 = vmul.f32 %v2534, %v2549
      %v2551 = vadd.f32 %v2550, 0.112945676
      %v2552 = vmul.f32 %v2534, %v2551
      %v2553 = vadd.f32 %v2552, 0.4994258
      %v2554 = vmul.f32 %v2534, %v2553
      %v2555 = vadd.f32 %v2554, 1.0
      %v2556 = vrcp.pop %v2555
      %v2557 = vmul.f32 %v2555, %v2556
      %v2558 = vsub.f32 1.0, %v2557
      %v2559 = vmul.f32 %v2556, %v2558
      %v2560 = vadd.f32 %v2556, %v2559
      %vm2561 = vweird.f32 %v2555
      %vm2562 = vweird.f32 %v2556
      %vm2563 = vmor %vm2561, %vm2562
      %v2564 = vsel %vm2563, %v2556, %v2560
      %v2565 = vand.u32 2147483647, %v2555
      %vm2566 = vcmp.eq.f32.partialorder %v2565, 8.507059e+37
      %v2567 = vand.u32 %v2555, 2147483648
      %v2568 = vor.u32 1.1754944e-38, %v2567
      %v2569 = vsel %vm2566, %v2568, %v2564
      %v2570 = vmul.f32 %v2545, %v2569
      %v2571 = vmin.f32 %v2570, 1.0
      %v2572 = vmax.f32 %v2571, -1.0
      %v2573 = vmul.f32 %v2202, %v2202
      %v2574 = vmin.f32 16.0, %v2573
      %v2575 = vmul.f32 %v2574, 2.1237322e-06
      %v2576 = vadd.f32 %v2575, 0.00028619796
      %v2577 = vmul.f32 %v2574, %v2576
      %v2578 = vadd.f32 %v2577, 0.0036580483
      %v2579 = vmul.f32 %v2574, %v2578
      %v2580 = vadd.f32 %v2579, 0.05243302
      %v2581 = vmul.f32 %v2574, %v2580
      %v2582 = vadd.f32 %v2581, 0.18741608
      %v2583 = vmul.f32 %v2574, %v2582
      %v2584 = vadd.f32 %v2583, 1.1283791
      %v2585 = vmul.f32 %v2202, %v2584
      %v2586 = vmul.f32 %v2574, 3.8918573e-05
      %v2587 = vadd.f32 %v2586, 0.001143296
      %v2588 = vmul.f32 %v2574, %v2587
      %v2589 = vadd.f32 %v2588, 0.014752088
      %v2590 = vmul.f32 %v2574, %v2589
      %v2591 = vadd.f32 %v2590, 0.112945676
      %v2592 = vmul.f32 %v2574, %v2591
      %v2593 = vadd.f32 %v2592, 0.4994258
      %v2594 = vmul.f32 %v2574, %v2593
      %v2595 = vadd.f32 %v2594, 1.0
      %v2596 = vrcp.pop %v2595
      %v2597 = vmul.f32 %v2595, %v2596
      %v2598 = vsub.f32 1.0, %v2597
      %v2599 = vmul.f32 %v2596, %v2598
      %v2600 = vadd.f32 %v2596, %v2599
      %vm2601 = vweird.f32 %v2595
      %vm2602 = vweird.f32 %v2596
      %vm2603 = vmor %vm2601, %vm2602
      %v2604 = vsel %vm2603, %v2596, %v2600
      %v2605 = vand.u32 2147483647, %v2595
      %vm2606 = vcmp.eq.f32.partialorder %v2605, 8.507059e+37
      %v2607 = vand.u32 %v2595, 2147483648
      %v2608 = vor.u32 1.1754944e-38, %v2607
      %v2609 = vsel %vm2606, %v2608, %v2604
      %v2610 = vmul.f32 %v2585, %v2609
      %v2611 = vmin.f32 %v2610, 1.0
      %v2612 = vmax.f32 %v2611, -1.0
      %v2613 = vmul.f32 %v2203, %v2203
      %v2614 = vmin.f32 16.0, %v2613
      %v2615 = vmul.f32 %v2614, 2.1237322e-06
      %v2616 = vadd.f32 %v2615, 0.00028619796
      %v2617 = vmul.f32 %v2614, %v2616
      %v2618 = vadd.f32 %v2617, 0.0036580483
      %v2619 = vmul.f32 %v2614, %v2618
      %v2620 = vadd.f32 %v2619, 0.05243302
      %v2621 = vmul.f32 %v2614, %v2620
      %v2622 = vadd.f32 %v2621, 0.18741608
      %v2623 = vmul.f32 %v2614, %v2622
      %v2624 = vadd.f32 %v2623, 1.1283791
      %v2625 = vmul.f32 %v2203, %v2624
      %v2626 = vmul.f32 %v2614, 3.8918573e-05
      %v2627 = vadd.f32 %v2626, 0.001143296
      %v2628 = vmul.f32 %v2614, %v2627
      %v2629 = vadd.f32 %v2628, 0.014752088
      %v2630 = vmul.f32 %v2614, %v2629
      %v2631 = vadd.f32 %v2630, 0.112945676
      %v2632 = vmul.f32 %v2614, %v2631
      %v2633 = vadd.f32 %v2632, 0.4994258
      %v2634 = vmul.f32 %v2614, %v2633
      %v2635 = vadd.f32 %v2634, 1.0
      %v2636 = vrcp.pop %v2635
      %v2637 = vmul.f32 %v2635, %v2636
      %v2638 = vsub.f32 1.0, %v2637
      %v2639 = vmul.f32 %v2636, %v2638
      %v2640 = vadd.f32 %v2636, %v2639
      %vm2641 = vweird.f32 %v2635
      %vm2642 = vweird.f32 %v2636
      %vm2643 = vmor %vm2641, %vm2642
      %v2644 = vsel %vm2643, %v2636, %v2640
      %v2645 = vand.u32 2147483647, %v2635
      %vm2646 = vcmp.eq.f32.partialorder %v2645, 8.507059e+37
      %v2647 = vand.u32 %v2635, 2147483648
      %v2648 = vor.u32 1.1754944e-38, %v2647
      %v2649 = vsel %vm2646, %v2648, %v2644
      %v2650 = vmul.f32 %v2625, %v2649
      %v2651 = vmin.f32 %v2650, 1.0
      %v2652 = vmax.f32 %v2651, -1.0
      %v2653 = vmul.f32 %v2204, %v2204
      %v2654 = vmin.f32 16.0, %v2653
      %v2655 = vmul.f32 %v2654, 2.1237322e-06
      %v2656 = vadd.f32 %v2655, 0.00028619796
      %v2657 = vmul.f32 %v2654, %v2656
      %v2658 = vadd.f32 %v2657, 0.0036580483
      %v2659 = vmul.f32 %v2654, %v2658
      %v2660 = vadd.f32 %v2659, 0.05243302
      %v2661 = vmul.f32 %v2654, %v2660
      %v2662 = vadd.f32 %v2661, 0.18741608
      %v2663 = vmul.f32 %v2654, %v2662
      %v2664 = vadd.f32 %v2663, 1.1283791
      %v2665 = vmul.f32 %v2204, %v2664
      %v2666 = vmul.f32 %v2654, 3.8918573e-05
      %v2667 = vadd.f32 %v2666, 0.001143296
      %v2668 = vmul.f32 %v2654, %v2667
      %v2669 = vadd.f32 %v2668, 0.014752088
      %v2670 = vmul.f32 %v2654, %v2669
      %v2671 = vadd.f32 %v2670, 0.112945676
      %v2672 = vmul.f32 %v2654, %v2671
      %v2673 = vadd.f32 %v2672, 0.4994258
      %v2674 = vmul.f32 %v2654, %v2673
      %v2675 = vadd.f32 %v2674, 1.0
      %v2676 = vrcp.pop %v2675
      %v2677 = vmul.f32 %v2675, %v2676
      %v2678 = vsub.f32 1.0, %v2677
      %v2679 = vmul.f32 %v2676, %v2678
      %v2680 = vadd.f32 %v2676, %v2679
      %vm2681 = vweird.f32 %v2675
      %vm2682 = vweird.f32 %v2676
      %vm2683 = vmor %vm2681, %vm2682
      %v2684 = vsel %vm2683, %v2676, %v2680
      %v2685 = vand.u32 2147483647, %v2675
      %vm2686 = vcmp.eq.f32.partialorder %v2685, 8.507059e+37
      %v2687 = vand.u32 %v2675, 2147483648
      %v2688 = vor.u32 1.1754944e-38, %v2687
      %v2689 = vsel %vm2686, %v2688, %v2684
      %v2690 = vmul.f32 %v2665, %v2689
      %v2691 = vmin.f32 %v2690, 1.0
      %v2692 = vmax.f32 %v2691, -1.0
      %v2693 = vmul.f32 %v2205, %v2205
      %v2694 = vmin.f32 16.0, %v2693
      %v2695 = vmul.f32 %v2694, 2.1237322e-06
      %v2696 = vadd.f32 %v2695, 0.00028619796
      %v2697 = vmul.f32 %v2694, %v2696
      %v2698 = vadd.f32 %v2697, 0.0036580483
      %v2699 = vmul.f32 %v2694, %v2698
      %v2700 = vadd.f32 %v2699, 0.05243302
      %v2701 = vmul.f32 %v2694, %v2700
      %v2702 = vadd.f32 %v2701, 0.18741608
      %v2703 = vmul.f32 %v2694, %v2702
      %v2704 = vadd.f32 %v2703, 1.1283791
      %v2705 = vmul.f32 %v2205, %v2704
      %v2706 = vmul.f32 %v2694, 3.8918573e-05
      %v2707 = vadd.f32 %v2706, 0.001143296
      %v2708 = vmul.f32 %v2694, %v2707
      %v2709 = vadd.f32 %v2708, 0.014752088
      %v2710 = vmul.f32 %v2694, %v2709
      %v2711 = vadd.f32 %v2710, 0.112945676
      %v2712 = vmul.f32 %v2694, %v2711
      %v2713 = vadd.f32 %v2712, 0.4994258
      %v2714 = vmul.f32 %v2694, %v2713
      %v2715 = vadd.f32 %v2714, 1.0
      %v2716 = vrcp.pop %v2715
      %v2717 = vmul.f32 %v2715, %v2716
      %v2718 = vsub.f32 1.0, %v2717
      %v2719 = vmul.f32 %v2716, %v2718
      %v2720 = vadd.f32 %v2716, %v2719
      %vm2721 = vweird.f32 %v2715
      %vm2722 = vweird.f32 %v2716
      %vm2723 = vmor %vm2721, %vm2722
      %v2724 = vsel %vm2723, %v2716, %v2720
      %v2725 = vand.u32 2147483647, %v2715
      %vm2726 = vcmp.eq.f32.partialorder %v2725, 8.507059e+37
      %v2727 = vand.u32 %v2715, 2147483648
      %v2728 = vor.u32 1.1754944e-38, %v2727
      %v2729 = vsel %vm2726, %v2728, %v2724
      %v2730 = vmul.f32 %v2705, %v2729
      %v2731 = vmin.f32 %v2730, 1.0
      %v2732 = vmax.f32 %v2731, -1.0
      %v2733 = vmul.f32 %v2206, %v2206
      %v2734 = vmin.f32 16.0, %v2733
      %v2735 = vmul.f32 %v2734, 2.1237322e-06
      %v2736 = vadd.f32 %v2735, 0.00028619796
      %v2737 = vmul.f32 %v2734, %v2736
      %v2738 = vadd.f32 %v2737, 0.0036580483
      %v2739 = vmul.f32 %v2734, %v2738
      %v2740 = vadd.f32 %v2739, 0.05243302
      %v2741 = vmul.f32 %v2734, %v2740
      %v2742 = vadd.f32 %v2741, 0.18741608
      %v2743 = vmul.f32 %v2734, %v2742
      %v2744 = vadd.f32 %v2743, 1.1283791
      %v2745 = vmul.f32 %v2206, %v2744
      %v2746 = vmul.f32 %v2734, 3.8918573e-05
      %v2747 = vadd.f32 %v2746, 0.001143296
      %v2748 = vmul.f32 %v2734, %v2747
      %v2749 = vadd.f32 %v2748, 0.014752088
      %v2750 = vmul.f32 %v2734, %v2749
      %v2751 = vadd.f32 %v2750, 0.112945676
      %v2752 = vmul.f32 %v2734, %v2751
      %v2753 = vadd.f32 %v2752, 0.4994258
      %v2754 = vmul.f32 %v2734, %v2753
      %v2755 = vadd.f32 %v2754, 1.0
      %v2756 = vrcp.pop %v2755
      %v2757 = vmul.f32 %v2755, %v2756
      %v2758 = vsub.f32 1.0, %v2757
      %v2759 = vmul.f32 %v2756, %v2758
      %v2760 = vadd.f32 %v2756, %v2759
      %vm2761 = vweird.f32 %v2755
      %vm2762 = vweird.f32 %v2756
      %vm2763 = vmor %vm2761, %vm2762
      %v2764 = vsel %vm2763, %v2756, %v2760
      %v2765 = vand.u32 2147483647, %v2755
      %vm2766 = vcmp.eq.f32.partialorder %v2765, 8.507059e+37
      %v2767 = vand.u32 %v2755, 2147483648
      %v2768 = vor.u32 1.1754944e-38, %v2767
      %v2769 = vsel %vm2766, %v2768, %v2764
      %v2770 = vmul.f32 %v2745, %v2769
      %v2771 = vmin.f32 %v2770, 1.0
      %v2772 = vmax.f32 %v2771, -1.0
      %v2773 = vmul.f32 %v2207, %v2207
      %v2774 = vmin.f32 16.0, %v2773
      %v2775 = vmul.f32 %v2774, 2.1237322e-06
      %v2776 = vadd.f32 %v2775, 0.00028619796
      %v2777 = vmul.f32 %v2774, %v2776
      %v2778 = vadd.f32 %v2777, 0.0036580483
      %v2779 = vmul.f32 %v2774, %v2778
      %v2780 = vadd.f32 %v2779, 0.05243302
      %v2781 = vmul.f32 %v2774, %v2780
      %v2782 = vadd.f32 %v2781, 0.18741608
      %v2783 = vmul.f32 %v2774, %v2782
      %v2784 = vadd.f32 %v2783, 1.1283791
      %v2785 = vmul.f32 %v2207, %v2784
      %v2786 = vmul.f32 %v2774, 3.8918573e-05
      %v2787 = vadd.f32 %v2786, 0.001143296
      %v2788 = vmul.f32 %v2774, %v2787
      %v2789 = vadd.f32 %v2788, 0.014752088
      %v2790 = vmul.f32 %v2774, %v2789
      %v2791 = vadd.f32 %v2790, 0.112945676
      %v2792 = vmul.f32 %v2774, %v2791
      %v2793 = vadd.f32 %v2792, 0.4994258
      %v2794 = vmul.f32 %v2774, %v2793
      %v2795 = vadd.f32 %v2794, 1.0
      %v2796 = vrcp.pop %v2795
      %v2797 = vmul.f32 %v2795, %v2796
      %v2798 = vsub.f32 1.0, %v2797
      %v2799 = vmul.f32 %v2796, %v2798
      %v2800 = vadd.f32 %v2796, %v2799
      %vm2801 = vweird.f32 %v2795
      %vm2802 = vweird.f32 %v2796
      %vm2803 = vmor %vm2801, %vm2802
      %v2804 = vsel %vm2803, %v2796, %v2800
      %v2805 = vand.u32 2147483647, %v2795
      %vm2806 = vcmp.eq.f32.partialorder %v2805, 8.507059e+37
      %v2807 = vand.u32 %v2795, 2147483648
      %v2808 = vor.u32 1.1754944e-38, %v2807
      %v2809 = vsel %vm2806, %v2808, %v2804
      %v2810 = vmul.f32 %v2785, %v2809
      %v2811 = vmin.f32 %v2810, 1.0
      %v2812 = vmax.f32 %v2811, -1.0
      %v2813 = vmul.f32 %v2208, %v2208
      %v2814 = vmin.f32 16.0, %v2813
      %v2815 = vmul.f32 %v2814, 2.1237322e-06
      %v2816 = vadd.f32 %v2815, 0.00028619796
      %v2817 = vmul.f32 %v2814, %v2816
      %v2818 = vadd.f32 %v2817, 0.0036580483
      %v2819 = vmul.f32 %v2814, %v2818
      %v2820 = vadd.f32 %v2819, 0.05243302
      %v2821 = vmul.f32 %v2814, %v2820
      %v2822 = vadd.f32 %v2821, 0.18741608
      %v2823 = vmul.f32 %v2814, %v2822
      %v2824 = vadd.f32 %v2823, 1.1283791
      %v2825 = vmul.f32 %v2208, %v2824
      %v2826 = vmul.f32 %v2814, 3.8918573e-05
      %v2827 = vadd.f32 %v2826, 0.001143296
      %v2828 = vmul.f32 %v2814, %v2827
      %v2829 = vadd.f32 %v2828, 0.014752088
      %v2830 = vmul.f32 %v2814, %v2829
      %v2831 = vadd.f32 %v2830, 0.112945676
      %v2832 = vmul.f32 %v2814, %v2831
      %v2833 = vadd.f32 %v2832, 0.4994258
      %v2834 = vmul.f32 %v2814, %v2833
      %v2835 = vadd.f32 %v2834, 1.0
      %v2836 = vrcp.pop %v2835
      %v2837 = vmul.f32 %v2835, %v2836
      %v2838 = vsub.f32 1.0, %v2837
      %v2839 = vmul.f32 %v2836, %v2838
      %v2840 = vadd.f32 %v2836, %v2839
      %vm2841 = vweird.f32 %v2835
      %vm2842 = vweird.f32 %v2836
      %vm2843 = vmor %vm2841, %vm2842
      %v2844 = vsel %vm2843, %v2836, %v2840
      %v2845 = vand.u32 2147483647, %v2835
      %vm2846 = vcmp.eq.f32.partialorder %v2845, 8.507059e+37
      %v2847 = vand.u32 %v2835, 2147483648
      %v2848 = vor.u32 1.1754944e-38, %v2847
      %v2849 = vsel %vm2846, %v2848, %v2844
      %v2850 = vmul.f32 %v2825, %v2849
      %v2851 = vmin.f32 %v2850, 1.0
      %v2852 = vmax.f32 %v2851, -1.0
      %v2853 = vmul.f32 %v2209, %v2209
      %v2854 = vmin.f32 16.0, %v2853
      %v2855 = vmul.f32 %v2854, 2.1237322e-06
      %v2856 = vadd.f32 %v2855, 0.00028619796
      %v2857 = vmul.f32 %v2854, %v2856
      %v2858 = vadd.f32 %v2857, 0.0036580483
      %v2859 = vmul.f32 %v2854, %v2858
      %v2860 = vadd.f32 %v2859, 0.05243302
      %v2861 = vmul.f32 %v2854, %v2860
      %v2862 = vadd.f32 %v2861, 0.18741608
      %v2863 = vmul.f32 %v2854, %v2862
      %v2864 = vadd.f32 %v2863, 1.1283791
      %v2865 = vmul.f32 %v2209, %v2864
      %v2866 = vmul.f32 %v2854, 3.8918573e-05
      %v2867 = vadd.f32 %v2866, 0.001143296
      %v2868 = vmul.f32 %v2854, %v2867
      %v2869 = vadd.f32 %v2868, 0.014752088
      %v2870 = vmul.f32 %v2854, %v2869
      %v2871 = vadd.f32 %v2870, 0.112945676
      %v2872 = vmul.f32 %v2854, %v2871
      %v2873 = vadd.f32 %v2872, 0.4994258
      %v2874 = vmul.f32 %v2854, %v2873
      %v2875 = vadd.f32 %v2874, 1.0
      %v2876 = vrcp.pop %v2875
      %v2877 = vmul.f32 %v2875, %v2876
      %v2878 = vsub.f32 1.0, %v2877
      %v2879 = vmul.f32 %v2876, %v2878
      %v2880 = vadd.f32 %v2876, %v2879
      %vm2881 = vweird.f32 %v2875
      %vm2882 = vweird.f32 %v2876
      %vm2883 = vmor %vm2881, %vm2882
      %v2884 = vsel %vm2883, %v2876, %v2880
      %v2885 = vand.u32 2147483647, %v2875
      %vm2886 = vcmp.eq.f32.partialorder %v2885, 8.507059e+37
      %v2887 = vand.u32 %v2875, 2147483648
      %v2888 = vor.u32 1.1754944e-38, %v2887
      %v2889 = vsel %vm2886, %v2888, %v2884
      %v2890 = vmul.f32 %v2865, %v2889
      %v2891 = vmin.f32 %v2890, 1.0
      %v2892 = vmax.f32 %v2891, -1.0
      %v2893 = vmul.f32 %v2210, %v2210
      %v2894 = vmin.f32 16.0, %v2893
      %v2895 = vmul.f32 %v2894, 2.1237322e-06
      %v2896 = vadd.f32 %v2895, 0.00028619796
      %v2897 = vmul.f32 %v2894, %v2896
      %v2898 = vadd.f32 %v2897, 0.0036580483
      %v2899 = vmul.f32 %v2894, %v2898
      %v2900 = vadd.f32 %v2899, 0.05243302
      %v2901 = vmul.f32 %v2894, %v2900
      %v2902 = vadd.f32 %v2901, 0.18741608
      %v2903 = vmul.f32 %v2894, %v2902
      %v2904 = vadd.f32 %v2903, 1.1283791
      %v2905 = vmul.f32 %v2210, %v2904
      %v2906 = vmul.f32 %v2894, 3.8918573e-05
      %v2907 = vadd.f32 %v2906, 0.001143296
      %v2908 = vmul.f32 %v2894, %v2907
      %v2909 = vadd.f32 %v2908, 0.014752088
      %v2910 = vmul.f32 %v2894, %v2909
      %v2911 = vadd.f32 %v2910, 0.112945676
      %v2912 = vmul.f32 %v2894, %v2911
      %v2913 = vadd.f32 %v2912, 0.4994258
      %v2914 = vmul.f32 %v2894, %v2913
      %v2915 = vadd.f32 %v2914, 1.0
      %v2916 = vrcp.pop %v2915
      %v2917 = vmul.f32 %v2915, %v2916
      %v2918 = vsub.f32 1.0, %v2917
      %v2919 = vmul.f32 %v2916, %v2918
      %v2920 = vadd.f32 %v2916, %v2919
      %vm2921 = vweird.f32 %v2915
      %vm2922 = vweird.f32 %v2916
      %vm2923 = vmor %vm2921, %vm2922
      %v2924 = vsel %vm2923, %v2916, %v2920
      %v2925 = vand.u32 2147483647, %v2915
      %vm2926 = vcmp.eq.f32.partialorder %v2925, 8.507059e+37
      %v2927 = vand.u32 %v2915, 2147483648
      %v2928 = vor.u32 1.1754944e-38, %v2927
      %v2929 = vsel %vm2926, %v2928, %v2924
      %v2930 = vmul.f32 %v2905, %v2929
      %v2931 = vmin.f32 %v2930, 1.0
      %v2932 = vmax.f32 %v2931, -1.0
      %v2933 = vmul.f32 %v2211, %v2211
      %v2934 = vmin.f32 16.0, %v2933
      %v2935 = vmul.f32 %v2934, 2.1237322e-06
      %v2936 = vadd.f32 %v2935, 0.00028619796
      %v2937 = vmul.f32 %v2934, %v2936
      %v2938 = vadd.f32 %v2937, 0.0036580483
      %v2939 = vmul.f32 %v2934, %v2938
      %v2940 = vadd.f32 %v2939, 0.05243302
      %v2941 = vmul.f32 %v2934, %v2940
      %v2942 = vadd.f32 %v2941, 0.18741608
      %v2943 = vmul.f32 %v2934, %v2942
      %v2944 = vadd.f32 %v2943, 1.1283791
      %v2945 = vmul.f32 %v2211, %v2944
      %v2946 = vmul.f32 %v2934, 3.8918573e-05
      %v2947 = vadd.f32 %v2946, 0.001143296
      %v2948 = vmul.f32 %v2934, %v2947
      %v2949 = vadd.f32 %v2948, 0.014752088
      %v2950 = vmul.f32 %v2934, %v2949
      %v2951 = vadd.f32 %v2950, 0.112945676
      %v2952 = vmul.f32 %v2934, %v2951
      %v2953 = vadd.f32 %v2952, 0.4994258
      %v2954 = vmul.f32 %v2934, %v2953
      %v2955 = vadd.f32 %v2954, 1.0
      %v2956 = vrcp.pop %v2955
      %v2957 = vmul.f32 %v2955, %v2956
      %v2958 = vsub.f32 1.0, %v2957
      %v2959 = vmul.f32 %v2956, %v2958
      %v2960 = vadd.f32 %v2956, %v2959
      %vm2961 = vweird.f32 %v2955
      %vm2962 = vweird.f32 %v2956
      %vm2963 = vmor %vm2961, %vm2962
      %v2964 = vsel %vm2963, %v2956, %v2960
      %v2965 = vand.u32 2147483647, %v2955
      %vm2966 = vcmp.eq.f32.partialorder %v2965, 8.507059e+37
      %v2967 = vand.u32 %v2955, 2147483648
      %v2968 = vor.u32 1.1754944e-38, %v2967
      %v2969 = vsel %vm2966, %v2968, %v2964
      %v2970 = vmul.f32 %v2945, %v2969
      %v2971 = vmin.f32 %v2970, 1.0
      %v2972 = vmax.f32 %v2971, -1.0
      %v2973 = vmul.f32 %v2212, %v2212
      %v2974 = vmin.f32 16.0, %v2973
      %v2975 = vmul.f32 %v2974, 2.1237322e-06
      %v2976 = vadd.f32 %v2975, 0.00028619796
      %v2977 = vmul.f32 %v2974, %v2976
      %v2978 = vadd.f32 %v2977, 0.0036580483
      %v2979 = vmul.f32 %v2974, %v2978
      %v2980 = vadd.f32 %v2979, 0.05243302
      %v2981 = vmul.f32 %v2974, %v2980
      %v2982 = vadd.f32 %v2981, 0.18741608
      %v2983 = vmul.f32 %v2974, %v2982
      %v2984 = vadd.f32 %v2983, 1.1283791
      %v2985 = vmul.f32 %v2212, %v2984
      %v2986 = vmul.f32 %v2974, 3.8918573e-05
      %v2987 = vadd.f32 %v2986, 0.001143296
      %v2988 = vmul.f32 %v2974, %v2987
      %v2989 = vadd.f32 %v2988, 0.014752088
      %v2990 = vmul.f32 %v2974, %v2989
      %v2991 = vadd.f32 %v2990, 0.112945676
      %v2992 = vmul.f32 %v2974, %v2991
      %v2993 = vadd.f32 %v2992, 0.4994258
      %v2994 = vmul.f32 %v2974, %v2993
      %v2995 = vadd.f32 %v2994, 1.0
      %v2996 = vrcp.pop %v2995
      %v2997 = vmul.f32 %v2995, %v2996
      %v2998 = vsub.f32 1.0, %v2997
      %v2999 = vmul.f32 %v2996, %v2998
      %v3000 = vadd.f32 %v2996, %v2999
      %vm3001 = vweird.f32 %v2995
      %vm3002 = vweird.f32 %v2996
      %vm3003 = vmor %vm3001, %vm3002
      %v3004 = vsel %vm3003, %v2996, %v3000
      %v3005 = vand.u32 2147483647, %v2995
      %vm3006 = vcmp.eq.f32.partialorder %v3005, 8.507059e+37
      %v3007 = vand.u32 %v2995, 2147483648
      %v3008 = vor.u32 1.1754944e-38, %v3007
      %v3009 = vsel %vm3006, %v3008, %v3004
      %v3010 = vmul.f32 %v2985, %v3009
      %v3011 = vmin.f32 %v3010, 1.0
      %v3012 = vmax.f32 %v3011, -1.0
      %v3013 = vadd.f32 %v2252, 1.0
      %v3014 = vadd.f32 %v2292, 1.0
      %v3015 = vadd.f32 %v2332, 1.0
      %v3016 = vadd.f32 %v2372, 1.0
      %v3017 = vadd.f32 %v2412, 1.0
      %v3018 = vadd.f32 %v2452, 1.0
      %v3019 = vadd.f32 %v2492, 1.0
      %v3020 = vadd.f32 %v2532, 1.0
      %v3021 = vadd.f32 %v2572, 1.0
      %v3022 = vadd.f32 %v2612, 1.0
      %v3023 = vadd.f32 %v2652, 1.0
      %v3024 = vadd.f32 %v2692, 1.0
      %v3025 = vadd.f32 %v2732, 1.0
      %v3026 = vadd.f32 %v2772, 1.0
      %v3027 = vadd.f32 %v2812, 1.0
      %v3028 = vadd.f32 %v2852, 1.0
      %v3029 = vadd.f32 %v2892, 1.0
      %v3030 = vadd.f32 %v2932, 1.0
      %v3031 = vadd.f32 %v2972, 1.0
      %v3032 = vadd.f32 %v3012, 1.0
      %v3033 = vmul.f32 %v2173, %v3013
      %v3034 = vmul.f32 %v2174, %v3014
      %v3035 = vmul.f32 %v2175, %v3015
      %v3036 = vmul.f32 %v2176, %v3016
      %v3037 = vmul.f32 %v2177, %v3017
      %v3038 = vmul.f32 %v2178, %v3018
      %v3039 = vmul.f32 %v2179, %v3019
      %v3040 = vmul.f32 %v2180, %v3020
      %v3041 = vmul.f32 %v2181, %v3021
      %v3042 = vmul.f32 %v2182, %v3022
      %v3043 = vmul.f32 %v2183, %v3023
      %v3044 = vmul.f32 %v2184, %v3024
      %v3045 = vmul.f32 %v2185, %v3025
      %v3046 = vmul.f32 %v2186, %v3026
      %v3047 = vmul.f32 %v2187, %v3027
      %v3048 = vmul.f32 %v2188, %v3028
      %v3049 = vmul.f32 %v2189, %v3029
      %v3050 = vmul.f32 %v2190, %v3030
      %v3051 = vmul.f32 %v2191, %v3031
      %v3052 = vmul.f32 %v2192, %v3032
      %v3053 = vpack.c.bf16 %v3037, %v3033
      %v3054 = vpack.c.bf16 %v3038, %v3034
      %v3055 = vpack.c.bf16 %v3039, %v3035
      %v3056 = vpack.c.bf16 %v3040, %v3036
      %v3057 = vpack.c.bf16 %v3045, %v3041
      %v3058 = vpack.c.bf16 %v3046, %v3042
      %v3059 = vpack.c.bf16 %v3047, %v3043
      %v3060 = vpack.c.bf16 %v3048, %v3044
      %v3061 = vpack.c.bf16 %v3049, %v3049
      %v3062 = vpack.c.bf16 %v3050, %v3050
      %v3063 = vpack.c.bf16 %v3051, %v3051
      %v3064 = vpack.c.bf16 %v3052, %v3052
      %v3065 = vld [vmem:[%s11] sm:$0xf]
      %v3066 = vld [vmem:[%s11 + $0x4] sm:$0xf]
      %v3067 = vld [vmem:[%s11 + $0x8] sm:$0xf]
      %v3068 = vld [vmem:[%s11 + $0xc] sm:$0xf]
      %v3069 = vld [vmem:[%s11 + $0x10] sm:$0xf]
      %v3070 = vld [vmem:[%s11 + $0x14] sm:$0xf]
      %v3071 = vld [vmem:[%s11 + $0x18] sm:$0xf]
      %v3072 = vld [vmem:[%s11 + $0x1c] sm:$0xf]
      %v3073 = vld [vmem:[%s11 + $0x20] sm:$0xf]
      %v3074 = vld [vmem:[%s11 + $0x24] sm:$0xf]
      %v3075 = vld [vmem:[%s11 + $0x28] sm:$0xf]
      %v3076 = vld [vmem:[%s11 + $0x2c] sm:$0xf]
      %v3077 = vld [vmem:[%s11 + $0x30] sm:$0xf]
      %v3078 = vld [vmem:[%s11 + $0x34] sm:$0xf]
      %v3079 = vld [vmem:[%s11 + $0x38] sm:$0xf]
      %v3080 = vld [vmem:[%s11 + $0x3c] sm:$0xf]
      %v3081 = vld [vmem:[%s11 + $0x40] sm:$0xf]
      %v3082 = vld [vmem:[%s11 + $0x44] sm:$0xf]
      %v3083 = vld [vmem:[%s11 + $0x48] sm:$0xf]
      %v3084 = vld [vmem:[%s11 + $0x4c] sm:$0xf]
      %v3085 = vld [vmem:[%s11 + $0x50] sm:$0xf]
      %v3086 = vld [vmem:[%s11 + $0x54] sm:$0xf]
      %v3087 = vld [vmem:[%s11 + $0x58] sm:$0xf]
      %v3088 = vld [vmem:[%s11 + $0x5c] sm:$0xf]
      %v3089 = vld [vmem:[%s11 + $0x60] sm:$0xf]
      %v3090 = vld [vmem:[%s11 + $0x64] sm:$0xf]
      %v3091 = vld [vmem:[%s11 + $0x68] sm:$0xf]
      %v3092 = vld [vmem:[%s11 + $0x6c] sm:$0xf]
      %v3093 = vld [vmem:[%s11 + $0x70] sm:$0xf]
      %v3094 = vld [vmem:[%s11 + $0x74] sm:$0xf]
      %v3095 = vld [vmem:[%s11 + $0x78] sm:$0xf]
      %v3096 = vld [vmem:[%s11 + $0x7c] sm:$0xf]
      %v3097 = vld [vmem:[%s11 + $0x80] sm:$0xf]
      %v3098 = vld [vmem:[%s11 + $0x84] sm:$0xf]
      %v3099 = vld [vmem:[%s11 + $0x88] sm:$0xf]
      %v3100 = vld [vmem:[%s11 + $0x8c] sm:$0xf]
      %v3101 = vld [vmem:[%s11 + $0x90] sm:$0xf]
      %v3102 = vld [vmem:[%s11 + $0x94] sm:$0xf]
      %v3103 = vld [vmem:[%s11 + $0x98] sm:$0xf]
      %v3104 = vld [vmem:[%s11 + $0x9c] sm:$0xf]
      %v3105 = vld [vmem:[%s11 + $0xa0] sm:$0xf]
      %v3106 = vld [vmem:[%s11 + $0xa4] sm:$0xf]
      %v3107 = vld [vmem:[%s11 + $0xa8] sm:$0xf]
      %v3108 = vld [vmem:[%s11 + $0xac] sm:$0xf]
      %v3109 = vld [vmem:[%s11 + $0xb0] sm:$0xf]
      %v3110 = vld [vmem:[%s11 + $0xb4] sm:$0xf]
      %v3111 = vld [vmem:[%s11 + $0xb8] sm:$0xf]
      %v3112 = vld [vmem:[%s11 + $0xbc] sm:$0xf]
      %v3113 = vld [vmem:[%s11 + $0xc0] sm:$0xf]
      %v3114 = vld [vmem:[%s11 + $0xc4] sm:$0xf]
      %v3115 = vld [vmem:[%s11 + $0xc8] sm:$0xf]
      %v3116 = vld [vmem:[%s11 + $0xcc] sm:$0xf]
      %v3117 = vld [vmem:[%s11 + $0xd0] sm:$0xf]
      %v3118 = vld [vmem:[%s11 + $0xd4] sm:$0xf]
      %v3119 = vld [vmem:[%s11 + $0xd8] sm:$0xf]
      %v3120 = vld [vmem:[%s11 + $0xdc] sm:$0xf]
      %v3121 = vld [vmem:[%s11 + $0xe0] sm:$0xf]
      %v3122 = vld [vmem:[%s11 + $0xe4] sm:$0xf]
      %v3123 = vld [vmem:[%s11 + $0xe8] sm:$0xf]
      %v3124 = vld [vmem:[%s11 + $0xec] sm:$0xf]
      %v3125 = vld [vmem:[%s11 + $0xf0] sm:$0xf]
      %v3126 = vld [vmem:[%s11 + $0xf4] sm:$0xf]
      %v3127 = vld [vmem:[%s11 + $0xf8] sm:$0xf]
      %v3128 = vld [vmem:[%s11 + $0xfc] sm:$0xf]
      %v3129 = vld [vmem:[%s12] sm:$0x1]
      %v3131 = vperm.slane %v3129, 0
      %v3197 = vunpack.c.l.b16 %v3065
      %v3198 = vunpack.c.l.b16 %v3066
      %v3199 = vunpack.c.l.b16 %v3067
      %v3200 = vunpack.c.l.b16 %v3068
      %v3201 = vunpack.c.l.b16 %v3069
      %v3202 = vunpack.c.l.b16 %v3070
      %v3203 = vunpack.c.l.b16 %v3071
      %v3204 = vunpack.c.l.b16 %v3072
      %v3205 = vunpack.c.l.b16 %v3073
      %v3206 = vunpack.c.l.b16 %v3074
      %v3207 = vunpack.c.l.b16 %v3075
      %v3208 = vunpack.c.l.b16 %v3076
      %v3209 = vunpack.c.l.b16 %v3077
      %v3210 = vunpack.c.l.b16 %v3078
      %v3211 = vunpack.c.l.b16 %v3079
      %v3212 = vunpack.c.l.b16 %v3080
      %v3213 = vunpack.c.l.b16 %v3081
      %v3214 = vunpack.c.l.b16 %v3082
      %v3215 = vunpack.c.l.b16 %v3083
      %v3216 = vunpack.c.l.b16 %v3084
      %v3217 = vunpack.c.l.b16 %v3085
      %v3218 = vunpack.c.l.b16 %v3086
      %v3219 = vunpack.c.l.b16 %v3087
      %v3220 = vunpack.c.l.b16 %v3088
      %v3221 = vunpack.c.l.b16 %v3089
      %v3222 = vunpack.c.l.b16 %v3090
      %v3223 = vunpack.c.l.b16 %v3091
      %v3224 = vunpack.c.l.b16 %v3092
      %v3225 = vunpack.c.l.b16 %v3093
      %v3226 = vunpack.c.l.b16 %v3094
      %v3227 = vunpack.c.l.b16 %v3095
      %v3228 = vunpack.c.l.b16 %v3096
      %v3229 = vunpack.c.l.b16 %v3097
      %v3230 = vunpack.c.l.b16 %v3098
      %v3231 = vunpack.c.l.b16 %v3099
      %v3232 = vunpack.c.l.b16 %v3100
      %v3233 = vunpack.c.l.b16 %v3101
      %v3234 = vunpack.c.l.b16 %v3102
      %v3235 = vunpack.c.l.b16 %v3103
      %v3236 = vunpack.c.l.b16 %v3104
      %v3237 = vunpack.c.l.b16 %v3105
      %v3238 = vunpack.c.l.b16 %v3106
      %v3239 = vunpack.c.l.b16 %v3107
      %v3240 = vunpack.c.l.b16 %v3108
      %v3241 = vunpack.c.l.b16 %v3109
      %v3242 = vunpack.c.l.b16 %v3110
      %v3243 = vunpack.c.l.b16 %v3111
      %v3244 = vunpack.c.l.b16 %v3112
      %v3245 = vunpack.c.l.b16 %v3113
      %v3246 = vunpack.c.l.b16 %v3114
      %v3247 = vunpack.c.l.b16 %v3115
      %v3248 = vunpack.c.l.b16 %v3116
      %v3249 = vunpack.c.l.b16 %v3117
      %v3250 = vunpack.c.l.b16 %v3118
      %v3251 = vunpack.c.l.b16 %v3119
      %v3252 = vunpack.c.l.b16 %v3120
      %v3253 = vunpack.c.l.b16 %v3121
      %v3254 = vunpack.c.l.b16 %v3122
      %v3255 = vunpack.c.l.b16 %v3123
      %v3256 = vunpack.c.l.b16 %v3124
      %v3257 = vunpack.c.l.b16 %v3125
      %v3258 = vunpack.c.l.b16 %v3126
      %v3259 = vunpack.c.l.b16 %v3127
      %v3260 = vunpack.c.l.b16 %v3128
      %v3261 = vpack.c.b16 %v3198, %v3197
      %v3262 = vpack.c.b16 %v3200, %v3199
      %v3263 = vpack.c.b16 %v3202, %v3201
      %v3264 = vpack.c.b16 %v3204, %v3203
      %v3265 = vpack.c.b16 %v3206, %v3205
      %v3266 = vpack.c.b16 %v3208, %v3207
      %v3267 = vpack.c.b16 %v3210, %v3209
      %v3268 = vpack.c.b16 %v3212, %v3211
      %v3269 = vpack.c.b16 %v3214, %v3213
      %v3270 = vpack.c.b16 %v3216, %v3215
      %v3271 = vpack.c.b16 %v3218, %v3217
      %v3272 = vpack.c.b16 %v3220, %v3219
      %v3273 = vpack.c.b16 %v3222, %v3221
      %v3274 = vpack.c.b16 %v3224, %v3223
      %v3275 = vpack.c.b16 %v3226, %v3225
      %v3276 = vpack.c.b16 %v3228, %v3227
      %v3277 = vpack.c.b16 %v3230, %v3229
      %v3278 = vpack.c.b16 %v3232, %v3231
      %v3279 = vpack.c.b16 %v3234, %v3233
      %v3280 = vpack.c.b16 %v3236, %v3235
      %v3281 = vpack.c.b16 %v3238, %v3237
      %v3282 = vpack.c.b16 %v3240, %v3239
      %v3283 = vpack.c.b16 %v3242, %v3241
      %v3284 = vpack.c.b16 %v3244, %v3243
      %v3285 = vpack.c.b16 %v3246, %v3245
      %v3286 = vpack.c.b16 %v3248, %v3247
      %v3287 = vpack.c.b16 %v3250, %v3249
      %v3288 = vpack.c.b16 %v3252, %v3251
      %v3289 = vpack.c.b16 %v3254, %v3253
      %v3290 = vpack.c.b16 %v3256, %v3255
      %v3291 = vpack.c.b16 %v3258, %v3257
      %v3292 = vpack.c.b16 %v3260, %v3259
      %3325 = vmatpush.bf16.msra.mxu0 %v3268
      %3326 = vmatpush.bf16.msra.mxu0 %v3267
      %3327 = vmatpush.bf16.msra.mxu0 %v3266
      %3328 = vmatpush.bf16.msra.mxu0 %v3265
      %3329 = vmatpush.bf16.msra.mxu0 %v3264
      %3330 = vmatpush.bf16.msra.mxu0 %v3263
      %3331 = vmatpush.bf16.msra.mxu0 %v3262
      %3332 = vmatpush.bf16.msra.mxu0 %v3261
      %3333 = vmatmul.bf16.gmra.mxu0 %v3053
      %v3334 = vpop.f32.mrf.mxu0
      %v3335 = vadd.f32 %v3131, %v3334
      %v3336 = vpop.f32.mrf.mxu0
      %v3337 = vadd.f32 %v3131, %v3336
      %3338 = vmatmul.bf16.gmra.mxu0 %v3057
      %v3339 = vpop.f32.mrf.mxu0
      %v3340 = vadd.f32 %v3131, %v3339
      %v3341 = vpop.f32.mrf.mxu0
      %v3342 = vadd.f32 %v3131, %v3341
      %3343 = vmatmul.bf16.gmra.mxu0 %v3061
      %v3344 = vpop.f32.mrf.mxu0
      %v3345 = vadd.f32 %v3131, %v3344
      %v3346 = vpop.f32.mrf.mxu0
      %3347 = vdwg.mxu0
      %3348 = vmatpush.bf16.msra.mxu0 %v3276
      %3349 = vmatpush.bf16.msra.mxu0 %v3275
      %3350 = vmatpush.bf16.msra.mxu0 %v3274
      %3351 = vmatpush.bf16.msra.mxu0 %v3273
      %3352 = vmatpush.bf16.msra.mxu0 %v3272
      %3353 = vmatpush.bf16.msra.mxu0 %v3271
      %3354 = vmatpush.bf16.msra.mxu0 %v3270
      %3355 = vmatpush.bf16.msra.mxu0 %v3269
      %3356 = vmatmul.bf16.gmra.mxu0 %v3054
      %v3357 = vpop.f32.mrf.mxu0
      %v3358 = vadd.f32 %v3335, %v3357
      %v3359 = vpop.f32.mrf.mxu0
      %v3360 = vadd.f32 %v3337, %v3359
      %3361 = vmatmul.bf16.gmra.mxu0 %v3058
      %v3362 = vpop.f32.mrf.mxu0
      %v3363 = vadd.f32 %v3340, %v3362
      %v3364 = vpop.f32.mrf.mxu0
      %v3365 = vadd.f32 %v3342, %v3364
      %3366 = vmatmul.bf16.gmra.mxu0 %v3062
      %v3367 = vpop.f32.mrf.mxu0
      %v3368 = vadd.f32 %v3345, %v3367
      %v3369 = vpop.f32.mrf.mxu0
      %3370 = vdwg.mxu0
      %3371 = vmatpush.bf16.msra.mxu0 %v3284
      %3372 = vmatpush.bf16.msra.mxu0 %v3283
      %3373 = vmatpush.bf16.msra.mxu0 %v3282
      %3374 = vmatpush.bf16.msra.mxu0 %v3281
      %3375 = vmatpush.bf16.msra.mxu0 %v3280
      %3376 = vmatpush.bf16.msra.mxu0 %v3279
      %3377 = vmatpush.bf16.msra.mxu0 %v3278
      %3378 = vmatpush.bf16.msra.mxu0 %v3277
      %3379 = vmatmul.bf16.gmra.mxu0 %v3055
      %v3380 = vpop.f32.mrf.mxu0
      %v3381 = vadd.f32 %v3358, %v3380
      %v3382 = vpop.f32.mrf.mxu0
      %v3383 = vadd.f32 %v3360, %v3382
      %3384 = vmatmul.bf16.gmra.mxu0 %v3059
      %v3385 = vpop.f32.mrf.mxu0
      %v3386 = vadd.f32 %v3363, %v3385
      %v3387 = vpop.f32.mrf.mxu0
      %v3388 = vadd.f32 %v3365, %v3387
      %3389 = vmatmul.bf16.gmra.mxu0 %v3063
      %v3390 = vpop.f32.mrf.mxu0
      %v3391 = vadd.f32 %v3368, %v3390
      %v3392 = vpop.f32.mrf.mxu0
      %3393 = vdwg.mxu0
      %3394 = vmatpush.bf16.msra.mxu0 %v3292
      %3395 = vmatpush.bf16.msra.mxu0 %v3291
      %3396 = vmatpush.bf16.msra.mxu0 %v3290
      %3397 = vmatpush.bf16.msra.mxu0 %v3289
      %3398 = vmatpush.bf16.msra.mxu0 %v3288
      %3399 = vmatpush.bf16.msra.mxu0 %v3287
      %3400 = vmatpush.bf16.msra.mxu0 %v3286
      %3401 = vmatpush.bf16.msra.mxu0 %v3285
      %3402 = vmatmul.bf16.gmra.mxu0 %v3056
      %v3403 = vpop.f32.mrf.mxu0
      %v3404 = vadd.f32 %v3381, %v3403
      %v3405 = vpop.f32.mrf.mxu0
      %v3406 = vadd.f32 %v3383, %v3405
      %3407 = vmatmul.bf16.gmra.mxu0 %v3060
      %v3408 = vpop.f32.mrf.mxu0
      %v3409 = vadd.f32 %v3386, %v3408
      %v3410 = vpop.f32.mrf.mxu0
      %v3411 = vadd.f32 %v3388, %v3410
      %3412 = vmatmul.bf16.gmra.mxu0 %v3064
      %v3413 = vpop.f32.mrf.mxu0
      %v3414 = vadd.f32 %v3391, %v3413
      %v3415 = vpop.f32.mrf.mxu0
      %3416 = vdwg.mxu0
      %v3417 = vadd.f32 %v1753, %v3404
      %v3418 = vadd.f32 %v1754, %v3406
      %v3419 = vadd.f32 %v1755, %v3409
      %v3420 = vadd.f32 %v1756, %v3411
      %v3421 = vadd.f32 %v1757, %v3414
      %v3422 = vld [vmem:[%s13] sm:$0x1]
      %v3423 = vld [vmem:[%s14] sm:$0x1]
      %3424 = vadd.xlane.f32.xlu0 %v3417
      %v3425 = vpop.xlane.xlu0 %3424
      %3426 = vadd.xlane.f32.xlu0 %v3418
      %v3427 = vpop.xlane.xlu0 %3426
      %3428 = vadd.xlane.f32.xlu0 %v3419
      %v3429 = vpop.xlane.xlu0 %3428
      %3430 = vadd.xlane.f32.xlu0 %v3420
      %v3431 = vpop.xlane.xlu0 %3430
      %3432 = vadd.xlane.f32.xlu0 %v3421
      %v3433 = vpop.xlane.xlu0 %3432
      %v3434 = vmul.f32 %v3425, %v519
      %v3435 = vmul.f32 %v3427, %v519
      %v3436 = vmul.f32 %v3429, %v519
      %v3437 = vmul.f32 %v3431, %v519
      %v3438 = vmul.f32 %v3433, %v519
      %v3439 = vsub.f32 %v3417, %v3434
      %v3440 = vsub.f32 %v3418, %v3435
      %v3441 = vsub.f32 %v3419, %v3436
      %v3442 = vsub.f32 %v3420, %v3437
      %v3443 = vsub.f32 %v3421, %v3438
      %v3444 = vmul.f32 %v3439, %v3439
      %v3445 = vmul.f32 %v3440, %v3440
      %v3446 = vmul.f32 %v3441, %v3441
      %v3447 = vmul.f32 %v3442, %v3442
      %v3448 = vmul.f32 %v3443, %v3443
      %3449 = vadd.xlane.f32.xlu0 %v3444
      %v3450 = vpop.xlane.xlu0 %3449
      %3451 = vadd.xlane.f32.xlu0 %v3445
      %v3452 = vpop.xlane.xlu0 %3451
      %3453 = vadd.xlane.f32.xlu0 %v3446
      %v3454 = vpop.xlane.xlu0 %3453
      %3455 = vadd.xlane.f32.xlu0 %v3447
      %v3456 = vpop.xlane.xlu0 %3455
      %3457 = vadd.xlane.f32.xlu0 %v3448
      %v3458 = vpop.xlane.xlu0 %3457
      %v3459 = vmul.f32 %v3450, %v519
      %v3460 = vmul.f32 %v3452, %v519
      %v3461 = vmul.f32 %v3454, %v519
      %v3462 = vmul.f32 %v3456, %v519
      %v3463 = vmul.f32 %v3458, %v519
      %v3464 = vadd.f32 %v3459, 1e-06
      %v3465 = vadd.f32 %v3460, 1e-06
      %v3466 = vadd.f32 %v3461, 1e-06
      %v3467 = vadd.f32 %v3462, 1e-06
      %v3468 = vadd.f32 %v3463, 1e-06
      %v3469 = vrsqrt.pop %v3464
      %v3470 = vmul.f32 %v3469, %v3464
      %v3471 = vmul.f32 %v3470, %v3469
      %v3472 = vmul.f32 0.5, %v3471
      %v3473 = vsub.f32 1.5, %v3472
      %v3474 = vmul.f32 %v3469, %v3473
      %vm3475 = vweird.f32 %v3464
      %vm3476 = vweird.f32 %v3469
      %vm3477 = vmor %vm3475, %vm3476
      %v3478 = vsel %vm3477, %v3469, %v3474
      %v3479 = vrsqrt.pop %v3465
      %v3480 = vmul.f32 %v3479, %v3465
      %v3481 = vmul.f32 %v3480, %v3479
      %v3482 = vmul.f32 0.5, %v3481
      %v3483 = vsub.f32 1.5, %v3482
      %v3484 = vmul.f32 %v3479, %v3483
      %vm3485 = vweird.f32 %v3465
      %vm3486 = vweird.f32 %v3479
      %vm3487 = vmor %vm3485, %vm3486
      %v3488 = vsel %vm3487, %v3479, %v3484
      %v3489 = vrsqrt.pop %v3466
      %v3490 = vmul.f32 %v3489, %v3466
      %v3491 = vmul.f32 %v3490, %v3489
      %v3492 = vmul.f32 0.5, %v3491
      %v3493 = vsub.f32 1.5, %v3492
      %v3494 = vmul.f32 %v3489, %v3493
      %vm3495 = vweird.f32 %v3466
      %vm3496 = vweird.f32 %v3489
      %vm3497 = vmor %vm3495, %vm3496
      %v3498 = vsel %vm3497, %v3489, %v3494
      %v3499 = vrsqrt.pop %v3467
      %v3500 = vmul.f32 %v3499, %v3467
      %v3501 = vmul.f32 %v3500, %v3499
      %v3502 = vmul.f32 0.5, %v3501
      %v3503 = vsub.f32 1.5, %v3502
      %v3504 = vmul.f32 %v3499, %v3503
      %vm3505 = vweird.f32 %v3467
      %vm3506 = vweird.f32 %v3499
      %vm3507 = vmor %vm3505, %vm3506
      %v3508 = vsel %vm3507, %v3499, %v3504
      %v3509 = vrsqrt.pop %v3468
      %v3510 = vmul.f32 %v3509, %v3468
      %v3511 = vmul.f32 %v3510, %v3509
      %v3512 = vmul.f32 0.5, %v3511
      %v3513 = vsub.f32 1.5, %v3512
      %v3514 = vmul.f32 %v3509, %v3513
      %vm3515 = vweird.f32 %v3468
      %vm3516 = vweird.f32 %v3509
      %vm3517 = vmor %vm3515, %vm3516
      %v3518 = vsel %vm3517, %v3509, %v3514
      %v3519 = vmul.f32 %v3439, %v3478
      %v3520 = vmul.f32 %v3440, %v3488
      %v3521 = vmul.f32 %v3441, %v3498
      %v3522 = vmul.f32 %v3442, %v3508
      %v3523 = vmul.f32 %v3443, %v3518
      %v3525 = vperm.slane %v3422, 0
      %v3527 = vmul.f32 %v3519, %v3525
      %v3528 = vmul.f32 %v3520, %v3525
      %v3529 = vmul.f32 %v3521, %v3525
      %v3530 = vmul.f32 %v3522, %v3525
      %v3531 = vmul.f32 %v3523, %v3525
      %v3533 = vperm.slane %v3423, 0
      %v3535 = vadd.f32 %v3527, %v3533
      %v3536 = vadd.f32 %v3528, %v3533
      %v3537 = vadd.f32 %v3529, %v3533
      %v3538 = vadd.f32 %v3530, %v3533
      %v3539 = vadd.f32 %v3531, %v3533
      %3540 = vst [vmem:[%s494] sm:$0xff] %v3535
      %3541 = vst [vmem:[%s494 + $0x8] sm:$0xff] %v3536
      %3542 = vst [vmem:[%s494 + $0x10] sm:$0xff] %v3537
      %3543 = vst [vmem:[%s494 + $0x18] sm:$0xff] %v3538
      %3544 = vst [vmem:[%s494 + $0x20] sm:$0xff] %v3539
      %p3545 = scmp.lt.s32.totalorder %s26, 1
      %s3546 = scalar_select %p3545, %s26, 1
      %s3547 = smul.addr %s3546, 5
      %s3548 = smul.addr %s3547, 8
      %s3549 = scalar_lea.vmem %s15, %s3548
      // Predicated region
      $region81: #{_lambda_.5} parent=79 // pred_check
        %p3550 = pneg %p364
      $region82: #{_lambda_.5} parent=79 // pred_check_branch
        %3552 = sbr.rel (%p3550) target = $region84
      $region83: #{_lambda_.5} parent=79 // pred_region
        _
      $region84: #{_lambda_.5} parent=79 // pred_fallthru
        _
    $region80: #{_lambda_.5} parent=5 // pred_fallthru
      _
    %p3553 = scmp.le.s32.totalorder 2, %s21
    // Predicated region
    $region85: #{_lambda_.5} parent=5 // pred_check
      %p3554 = pneg %p3553
    $region86: #{_lambda_.5} parent=5 // pred_check_branch
      %3556 = sbr.rel (%p3554) target = $region88
    $region87: #{_lambda_.5} parent=5 // pred_region
      %s3557 = ssub.s32 %s21, 2
      // Predicated region
      $region89: #{_lambda_.5} parent=87 // pred_check
        %p3558 = pneg %p370
      $region90: #{_lambda_.5} parent=87 // pred_check_branch
        %3560 = sbr.rel (%p3558) target = $region92
      $region91: #{_lambda_.5} parent=87 // pred_region
        %p3561 = scmp.lt.s32.totalorder %s27, 1
        %s3562 = scalar_select %p3561, %s27, 1
        %s3563 = smul.addr %s3562, 5
        %s3564 = smul.addr %s3563, 8
        %s3565 = scalar_lea.vmem %s15, %s3564
      $region92: #{_lambda_.5} parent=87 // pred_fallthru
        _
    $region88: #{_lambda_.5} parent=5 // pred_fallthru
      _
  $region6: #{_lambda_.5} parent=0 // loop_footer
    %s25 = sadd.s32 1, %s21
  $region7: #{_lambda_.5} parent=0 // loop_footer_branch
    %20 = sbr.rel target = $region3
  $region8: #{_lambda_.5} parent=0 // loop_exit
    _

</llo_original>
